<compile_context>
chip_gen: v6e
topology: v6e:2x2x1
jax: 0.10.0
libtpu: 0.0.40
codegen_flags: <defaults>
</compile_context>

<pallas_src>
import functools

import jax
import jax.numpy as jnp
from jax.experimental import pallas as pl
from jax.experimental.pallas import tpu as pltpu


# --------------------------------------------------------------------------
# Static configuration (never passed through jit -> strides stay Python ints).
# --------------------------------------------------------------------------
CFG = dict(
    num_class=1,
    layer_nums=[2, 2, 2],
    layer_strides=[1, 2, 2],
    num_filters=[32, 64, 64],
    upsample_strides=[1, 2, 4],
    num_upsample_filters=[64, 64, 64],
    num_input_features=32,
    num_anchor_per_loc=2,
    box_code_size=7,
)


# --------------------------------------------------------------------------
# Pallas kernels
# --------------------------------------------------------------------------
def _block_kernel(x_ref, w_ref, b_ref, dw_ref, db_ref, feat_ref, up_ref,
                  *pad_refs, num_layers, h, w, nf):
    """Fused RPN block: `num_layers` (3x3, s1, pad1) convs + bias + ReLU,
    followed by the deblock ConvTranspose(k=s, stride=s) as a per-pixel matmul.

    x_ref   : (1, h+2, w+2, nf)        bf16  zero-padded block input
    w_ref   : (num_layers, 9, nf, nf)  bf16  conv weights (BN scale folded)
    b_ref   : (num_layers, 1, nf)      f32   conv biases  (BN folded)
    dw_ref  : (nf, s*s*cout)           bf16  deconv weight (BN scale folded)
    db_ref  : (1, s*s*cout)            f32   deconv bias
    feat_ref: (1, h, w, nf)            bf16  conv-chain output (next block input)
    up_ref  : (1, h, w, s*s*cout)      bf16  deconv output (pre pixel-shuffle)
    pad_refs: (num_layers-1) x (h+2, w+2, nf) bf16 VMEM scratch (padded acts)
    """
    # Zero the padded scratch buffers once per grid step (borders must be 0).
    for p in pad_refs:
        p[...] = jnp.zeros_like(p)

    zrow = jnp.zeros((1, nf), jnp.bfloat16)
    dbias = db_ref[...]                                      # (1, s*s*cout) f32

    def conv_row(read_tap, layer, y):
        """One output row of conv `layer`: 9 taps, f32 accumulate, bias+ReLU."""
        acc = jnp.zeros((w, nf), jnp.float32) + b_ref[layer]
        for kh in range(3):
            for kw in range(3):
                acc = acc + jnp.dot(read_tap(y + kh, kw),
                                    w_ref[layer, kh * 3 + kw],
                                    preferred_element_type=jnp.float32)
        return jnp.maximum(acc, 0.0).astype(jnp.bfloat16)    # (w, nf)

    def read_from_x(r, kw):
        return x_ref[0, r, pl.ds(kw, w), :]

    def make_reader(p):
        return lambda r, kw: p[r, pl.ds(kw, w), :]

    read = read_from_x
    # Intermediate conv layers: write full padded rows into VMEM scratch
    # (aligned, full-width stores at a dynamic major index).
    for layer in range(num_layers - 1):
        dst = pad_refs[layer]

        def body(y, carry, read=read, dst=dst, layer=layer):
            v = conv_row(read, layer, y)                     # (w, nf)
            dst[y + 1] = jnp.concatenate([zrow, v, zrow], axis=0)   # (w+2, nf)
            return carry

        jax.lax.fori_loop(0, h, body, 0)
        read = make_reader(dst)

    # Last conv layer fused with the deconv matmul; both written row by row.
    def last_body(y, carry, read=read):
        act = conv_row(read, num_layers - 1, y)              # (w, nf) bf16
        feat_ref[0, y] = act
        dec = jnp.dot(act, dw_ref[...],
                      preferred_element_type=jnp.float32) + dbias
        up_ref[0, y] = jnp.maximum(dec, 0.0).astype(up_ref.dtype)
        return carry

    jax.lax.fori_loop(0, h, last_body, 0)


def _matmul_bias_kernel(x_ref, w_ref, b_ref, o_ref, *, apply_relu):
    """out = maybe_relu(x @ w + bias); bf16 inputs, f32 accumulate/affine."""
    acc = jnp.dot(x_ref[...], w_ref[...], preferred_element_type=jnp.float32)
    out = acc + b_ref[...]
    if apply_relu:
        out = jnp.maximum(out, 0.0)
    o_ref[...] = out.astype(o_ref.dtype)


# --------------------------------------------------------------------------
# Kernel wrappers
# --------------------------------------------------------------------------
def fused_block(x, w_stack, b_stack, dw, db, upsample):
    """Run one fused RPN block + its deblock.  Returns (block_out, upsampled)."""
    n, h, wd, nf = x.shape
    num_layers = w_stack.shape[0]
    s2cout = dw.shape[1]
    cout = s2cout // (upsample * upsample)
    xp = jnp.pad(x, ((0, 0), (1, 1), (1, 1), (0, 0)))
    kernel = functools.partial(_block_kernel, num_layers=num_layers,
                               h=h, w=wd, nf=nf)
    feat, up = pl.pallas_call(
        kernel,
        out_shape=(jax.ShapeDtypeStruct((n, h, wd, nf), jnp.bfloat16),
                   jax.ShapeDtypeStruct((n, h, wd, s2cout), jnp.bfloat16)),
        grid=(n,),
        in_specs=[
            pl.BlockSpec((1, h + 2, wd + 2, nf), lambda i: (i, 0, 0, 0)),
            pl.BlockSpec((num_layers, 9, nf, nf), lambda i: (0, 0, 0, 0)),
            pl.BlockSpec((num_layers, 1, nf), lambda i: (0, 0, 0)),
            pl.BlockSpec((nf, s2cout), lambda i: (0, 0)),
            pl.BlockSpec((1, s2cout), lambda i: (0, 0)),
        ],
        out_specs=(pl.BlockSpec((1, h, wd, nf), lambda i: (i, 0, 0, 0)),
                   pl.BlockSpec((1, h, wd, s2cout), lambda i: (i, 0, 0, 0))),
        scratch_shapes=[pltpu.VMEM((h + 2, wd + 2, nf), jnp.bfloat16)
                        for _ in range(num_layers - 1)],
        compiler_params=pltpu.CompilerParams(dimension_semantics=("parallel",)),
    )(xp.astype(jnp.bfloat16), w_stack, b_stack, dw,
      db.reshape(1, s2cout).astype(jnp.float32))

    if upsample == 1:
        up_img = up
    else:
        # Pixel shuffle for ConvTranspose(k=s, stride=s): cheap host relayout.
        up = up.reshape(n, h, wd, upsample, upsample, cout)
        up_img = up.transpose(0, 1, 3, 2, 4, 5).reshape(
            n, h * upsample, wd * upsample, cout)
    return feat, up_img


def _pick_tm(m):
    """Largest tile <= 256, multiple of 8, dividing M (minimize grid steps)."""
    for cand in (256, 128, 64, 32, 16, 8):
        if m % cand == 0:
            return cand
    return m


def fused_matmul_bias(x, w, bias, *, relu, out_dtype):
    """(x @ w) + bias (+ReLU). x:(M,K), w:(K,N). bf16 MXU inputs, f32 affine."""
    m, k = x.shape
    k2, nout = w.shape
    assert k == k2
    tm = _pick_tm(m)
    x = x.astype(jnp.bfloat16)
    w = w.astype(jnp.bfloat16)
    b2 = bias.reshape(1, nout).astype(jnp.float32)
    return pl.pallas_call(
        functools.partial(_matmul_bias_kernel, apply_relu=relu),
        out_shape=jax.ShapeDtypeStruct((m, nout), out_dtype),
        grid=(m // tm,),
        in_specs=[
            pl.BlockSpec((tm, k), lambda i: (i, 0)),
            pl.BlockSpec((k, nout), lambda i: (0, 0)),
            pl.BlockSpec((1, nout), lambda i: (0, 0)),
        ],
        out_specs=pl.BlockSpec((tm, nout), lambda i: (i, 0)),
        compiler_params=pltpu.CompilerParams(dimension_semantics=("parallel",)),
    )(x, w, b2)


def conv3x3_strided(x, w_flat, bias, stride):
    """Strided 3x3 conv (pad=1) via small host im2col + fused matmul kernel."""
    n, h, wd, cin = x.shape
    cout = w_flat.shape[-1]
    xp = jnp.pad(x, ((0, 0), (1, 1), (1, 1), (0, 0)))
    ho = (h + 2 - 3) // stride + 1
    wo = (wd + 2 - 3) // stride + 1
    cols = []
    for kh in range(3):
        for kw in range(3):
            cols.append(
                xp[:, kh:kh + (ho - 1) * stride + 1:stride,
                   kw:kw + (wo - 1) * stride + 1:stride, :])
    patches = jnp.concatenate(cols, axis=-1).reshape(n * ho * wo, 9 * cin)
    y = fused_matmul_bias(patches, w_flat, bias, relu=True, out_dtype=jnp.bfloat16)
    return y.reshape(n, ho, wo, cout)


# --------------------------------------------------------------------------
# Parameters (deterministic synthetic init; BN pre-folded to scale/bias)
# --------------------------------------------------------------------------
def fold_bn(gamma, beta, mean, var, eps=1e-3):
    scale = gamma / jnp.sqrt(var + eps)
    return scale, beta - mean * scale


def _bn_params(key, c):
    k1, k2, k3, k4 = jax.random.split(key, 4)
    gamma = 1.0 + 0.1 * jax.random.normal(k1, (c,), jnp.float32)
    beta = 0.1 * jax.random.normal(k2, (c,), jnp.float32)
    mean = 0.1 * jax.random.normal(k3, (c,), jnp.float32)
    var = 1.0 + 0.1 * jnp.abs(jax.random.normal(k4, (c,), jnp.float32))
    return fold_bn(gamma, beta, mean, var)


def init_rpnv2_params(key, cfg):
    params = {"blocks": [], "deblocks": []}
    in_filters = [cfg["num_input_features"]] + cfg["num_filters"][:-1]
    keys = iter(jax.random.split(key, 256))

    for i, layer_num in enumerate(cfg["layer_nums"]):
        nf = cfg["num_filters"][i]
        block = []
        # first conv: ZeroPad2d(1) + Conv(3, stride=layer_strides[i]) + BN + ReLU
        w = 0.05 * jax.random.normal(next(keys), (3, 3, in_filters[i], nf), jnp.float32)
        s, b = _bn_params(next(keys), nf)
        block.append(dict(w=w, scale=s, bias=b))
        # layer_num x (Conv(3, pad=1, stride=1) + BN + ReLU)
        for _ in range(layer_num):
            w = 0.05 * jax.random.normal(next(keys), (3, 3, nf, nf), jnp.float32)
            s, b = _bn_params(next(keys), nf)
            block.append(dict(w=w, scale=s, bias=b))
        params["blocks"].append(block)

        # deblock: ConvTranspose(k=us, stride=us) + BN + ReLU
        # TODO(synk): PyTorch ConvTranspose2d stores (Cin, Cout, kH, kW); a permute
        # would be needed to load real checkpoints (synthetic init here).
        us = cfg["upsample_strides"][i]
        nuf = cfg["num_upsample_filters"][i]
        w = 0.05 * jax.random.normal(next(keys), (nf, us, us, nuf), jnp.float32)
        s, b = _bn_params(next(keys), nuf)
        params["deblocks"].append(dict(w=w, scale=s, bias=b))

    # header (1x1 convs for cls / reg)
    c_in = sum(cfg["num_upsample_filters"])
    n_cls = cfg["num_anchor_per_loc"] * cfg["num_class"]
    n_reg = cfg["num_anchor_per_loc"] * cfg["box_code_size"]
    params["header"] = dict(
        wc=0.05 * jax.random.normal(next(keys), (c_in, n_cls), jnp.float32),
        bc=0.05 * jax.random.normal(next(keys), (n_cls,), jnp.float32),
        wr=0.05 * jax.random.normal(next(keys), (c_in, n_reg), jnp.float32),
        br=0.05 * jax.random.normal(next(keys), (n_reg,), jnp.float32),
    )
    return params


# --------------------------------------------------------------------------
# RPNV2 forward (external interface keeps PyTorch's NCHW)
# --------------------------------------------------------------------------
def rpnv2_forward(params, x_nchw):
    cfg = CFG  # static config (strides etc. stay Python ints)
    x = jnp.transpose(x_nchw, (0, 2, 3, 1)).astype(jnp.bfloat16)  # NCHW -> NHWC

    ups = []
    for i, block in enumerate(params["blocks"]):
        layers = block
        stride0 = cfg["layer_strides"][i]
        nf = cfg["num_filters"][i]

        if stride0 != 1:
            # strided first conv: host im2col + one fused matmul kernel
            lyr = layers[0]
            cin = lyr["w"].shape[2]
            wf = (lyr["w"] * lyr["scale"]).astype(jnp.bfloat16).reshape(9 * cin, nf)
            x = conv3x3_strided(x, wf, lyr["bias"], stride0)
            layers = layers[1:]

        # stack the remaining stride-1 convs (all nf -> nf) for the fused kernel
        w_stack = jnp.stack(
            [(l["w"] * l["scale"]).astype(jnp.bfloat16).reshape(9, nf, nf)
             for l in layers])                                   # (L, 9, nf, nf)
        b_stack = jnp.stack(
            [l["bias"].astype(jnp.float32).reshape(1, nf) for l in layers])

        d = params["deblocks"][i]
        s = cfg["upsample_strides"][i]
        cout_up = d["w"].shape[-1]
        dwf = (d["w"] * d["scale"]).astype(jnp.bfloat16).reshape(nf, s * s * cout_up)
        db_t = jnp.tile(d["bias"], s * s)

        x, up = fused_block(x, w_stack, b_stack, dwf, db_t, s)
        ups.append(up)

    feat = jnp.concatenate(ups, axis=-1) if len(ups) > 1 else ups[0]

    # fused cls/reg header: one matmul, weights concatenated along N
    h = params["header"]
    n, hh, ww, c = feat.shape
    n_cls = h["wc"].shape[1]
    wcr = jnp.concatenate([h["wc"], h["wr"]], axis=1)
    bcr = jnp.concatenate([h["bc"], h["br"]])
    y = fused_matmul_bias(feat.reshape(n * hh * ww, c), wcr, bcr,
                          relu=False, out_dtype=jnp.float32)
    cls = y[:, :n_cls].reshape(n, hh, ww, n_cls)
    reg = y[:, n_cls:].reshape(n, hh, ww, -1)
    # back to PyTorch NCHW convention
    return jnp.transpose(cls, (0, 3, 1, 2)), jnp.transpose(reg, (0, 3, 1, 2))


# --------------------------------------------------------------------------
if __name__ == "__main__":
    key = jax.random.PRNGKey(0)
    k_param, k_input = jax.random.split(key)
    params = init_rpnv2_params(k_param, CFG)

    batch, spatial = 2, 16
    x = jax.random.normal(
        k_input, (batch, CFG["num_input_features"], spatial, spatial), jnp.float32)

    fwd = jax.jit(rpnv2_forward)
    cls, reg = fwd(params, x)
    jax.block_until_ready(cls)
    jax.block_until_ready(reg)

    assert cls.shape == (batch, CFG["num_anchor_per_loc"] * CFG["num_class"],
                         spatial, spatial), cls.shape
    assert reg.shape == (batch, CFG["num_anchor_per_loc"] * CFG["box_code_size"],
                         spatial, spatial), reg.shape
    assert bool(jnp.all(jnp.isfinite(cls))) and bool(jnp.all(jnp.isfinite(reg)))
    print("KERNEL_OK")
</pallas_src>

<mosaic_0001>
module attributes {stable_mosaic.version = 11 : i64} {
  func.func @_block_kernel(%arg0: i32, %arg1: memref<1x18x18x32xbf16, #tpu.memory_space<vmem>>, %arg2: memref<3x9x32x32xbf16, #tpu.memory_space<vmem>>, %arg3: memref<3x1x32xf32, #tpu.memory_space<vmem>>, %arg4: memref<32x64xbf16, #tpu.memory_space<vmem>>, %arg5: memref<1x64xf32, #tpu.memory_space<vmem>>, %arg6: memref<1x16x16x32xbf16, #tpu.memory_space<vmem>>, %arg7: memref<1x16x16x64xbf16, #tpu.memory_space<vmem>>, %arg8: memref<18x18x32xbf16, #tpu.memory_space<vmem>>, %arg9: memref<18x18x32xbf16, #tpu.memory_space<vmem>>) attributes {dimension_semantics = [#tpu.dimension_semantics<parallel>], iteration_bounds = array<i64: 2>, scalar_prefetch = 0 : i64, scratch_operands = 2 : i64, tpu.core_type = #tpu.core_type<tc>, window_params = [{transform_indices = @transform_0, window_bounds = array<i64: 1, 18, 18, 32>}, {pipeline_mode = #tpu.pipeline_mode<synchronous>, transform_indices = @transform_1, window_bounds = array<i64: 3, 9, 32, 32>}, {pipeline_mode = #tpu.pipeline_mode<synchronous>, transform_indices = @transform_2, window_bounds = array<i64: 3, 1, 32>}, {pipeline_mode = #tpu.pipeline_mode<synchronous>, transform_indices = @transform_3, window_bounds = array<i64: 32, 64>}, {pipeline_mode = #tpu.pipeline_mode<synchronous>, transform_indices = @transform_4, window_bounds = array<i64: 1, 64>}, {transform_indices = @transform_5, window_bounds = array<i64: 1, 16, 16, 32>}, {transform_indices = @transform_6, window_bounds = array<i64: 1, 16, 16, 64>}]} {
    %cst = arith.constant 0.000000e+00 : bf16
    %0 = vector.broadcast %cst : bf16 to vector<18x18x32xbf16>
    %c0 = arith.constant 0 : index
    %c0_0 = arith.constant 0 : index
    %c0_1 = arith.constant 0 : index
    %1 = vector.load %arg8[%c0, %c0_0, %c0_1] : memref<18x18x32xbf16, #tpu.memory_space<vmem>>, vector<18x18x32xbf16>
    tpu.vector_store %arg8[%c0, %c0_0, %c0_1], %0 {strides = array<i32>} : memref<18x18x32xbf16, #tpu.memory_space<vmem>>, vector<18x18x32xbf16>,
    %cst_2 = arith.constant 0.000000e+00 : bf16
    %2 = vector.broadcast %cst_2 : bf16 to vector<18x18x32xbf16>
    %c0_3 = arith.constant 0 : index
    %c0_4 = arith.constant 0 : index
    %c0_5 = arith.constant 0 : index
    %3 = vector.load %arg9[%c0_3, %c0_4, %c0_5] : memref<18x18x32xbf16, #tpu.memory_space<vmem>>, vector<18x18x32xbf16>
    tpu.vector_store %arg9[%c0_3, %c0_4, %c0_5], %2 {strides = array<i32>} : memref<18x18x32xbf16, #tpu.memory_space<vmem>>, vector<18x18x32xbf16>,
    %cst_6 = arith.constant 0.000000e+00 : bf16
    %4 = vector.broadcast %cst_6 : bf16 to vector<1x32xbf16>
    %c0_7 = arith.constant 0 : index
    %c0_8 = arith.constant 0 : index
    %5 = vector.load %arg5[%c0_7, %c0_8] : memref<1x64xf32, #tpu.memory_space<vmem>>, vector<1x64xf32>
    %c0_i32 = arith.constant 0 : i32
    %c16_i32 = arith.constant 16 : i32
    %6 = arith.addi %c0_i32, %c16_i32 : i32
    %c1_i32 = arith.constant 1 : i32
    scf.for %arg10 = %c0_i32 to %6 step %c1_i32  : i32 {
      %cst_18 = arith.constant 0.000000e+00 : f32
      %9 = vector.broadcast %cst_18 : f32 to vector<16x32xf32>
      %c0_19 = arith.constant 0 : index
      %c0_20 = arith.constant 0 : index
      %c0_21 = arith.constant 0 : index
      %10 = vector.load %arg3[%c0_19, %c0_20, %c0_21] : memref<3x1x32xf32, #tpu.memory_space<vmem>>, vector<1x1x32xf32>
      %11 = vector.shape_cast %10 : vector<1x1x32xf32> to vector<1x32xf32>
      %12 = vector.broadcast %11 : vector<1x32xf32> to vector<16x32xf32>
      %13 = arith.addf %9, %12 : vector<16x32xf32>
      %c0_i32_22 = arith.constant 0 : i32
      %14 = arith.addi %arg10, %c0_i32_22 : i32
      %c0_23 = arith.constant 0 : index
      %15 = arith.index_cast %14 : i32 to index
      %c0_24 = arith.constant 0 : index
      %c0_25 = arith.constant 0 : index
      %16 = vector.load %arg1[%c0_23, %15, %c0_24, %c0_25] : memref<1x18x18x32xbf16, #tpu.memory_space<vmem>>, vector<1x1x16x32xbf16>
      %17 = vector.shape_cast %16 : vector<1x1x16x32xbf16> to vector<16x32xbf16>
      %c0_26 = arith.constant 0 : index
      %c0_27 = arith.constant 0 : index
      %c0_28 = arith.constant 0 : index
      %c0_29 = arith.constant 0 : index
      %18 = vector.load %arg2[%c0_26, %c0_27, %c0_28, %c0_29] : memref<3x9x32x32xbf16, #tpu.memory_space<vmem>>, vector<1x1x32x32xbf16>
      %19 = vector.shape_cast %18 : vector<1x1x32x32xbf16> to vector<32x32xbf16>
      %cst_30 = arith.constant dense<0.000000e+00> : vector<16x32xf32>
      %20 = tpu.matmul %17, %19, %cst_30 {dimension_numbers = #tpu.dot_dimension_numbers<[1], [0], [0], [1], [0, 0, 1, 1], [], []>} : vector<16x32xbf16>, vector<32x32xbf16>, vector<16x32xf32> -> vector<16x32xf32>
      %21 = arith.addf %13, %20 : vector<16x32xf32>
      %c0_i32_31 = arith.constant 0 : i32
      %22 = arith.addi %arg10, %c0_i32_31 : i32
      %c0_32 = arith.constant 0 : index
      %23 = arith.index_cast %22 : i32 to index
      %c1 = arith.constant 1 : index
      %c0_33 = arith.constant 0 : index
      %24 = vector.load %arg1[%c0_32, %23, %c1, %c0_33] : memref<1x18x18x32xbf16, #tpu.memory_space<vmem>>, vector<1x1x16x32xbf16>
      %25 = vector.shape_cast %24 : vector<1x1x16x32xbf16> to vector<16x32xbf16>
      %c0_34 = arith.constant 0 : index
      %c1_35 = arith.constant 1 : index
      %c0_36 = arith.constant 0 : index
      %c0_37 = arith.constant 0 : index
      %26 = vector.load %arg2[%c0_34, %c1_35, %c0_36, %c0_37] : memref<3x9x32x32xbf16, #tpu.memory_space<vmem>>, vector<1x1x32x32xbf16>
      %27 = vector.shape_cast %26 : vector<1x1x32x32xbf16> to vector<32x32xbf16>
      %cst_38 = arith.constant dense<0.000000e+00> : vector<16x32xf32>
      %28 = tpu.matmul %25, %27, %cst_38 {dimension_numbers = #tpu.dot_dimension_numbers<[1], [0], [0], [1], [0, 0, 1, 1], [], []>} : vector<16x32xbf16>, vector<32x32xbf16>, vector<16x32xf32> -> vector<16x32xf32>
      %29 = arith.addf %21, %28 : vector<16x32xf32>
      %c0_i32_39 = arith.constant 0 : i32
      %30 = arith.addi %arg10, %c0_i32_39 : i32
      %c0_40 = arith.constant 0 : index
      %31 = arith.index_cast %30 : i32 to index
      %c2 = arith.constant 2 : index
      %c0_41 = arith.constant 0 : index
      %32 = vector.load %arg1[%c0_40, %31, %c2, %c0_41] : memref<1x18x18x32xbf16, #tpu.memory_space<vmem>>, vector<1x1x16x32xbf16>
      %33 = vector.shape_cast %32 : vector<1x1x16x32xbf16> to vector<16x32xbf16>
      %c0_42 = arith.constant 0 : index
      %c2_43 = arith.constant 2 : index
      %c0_44 = arith.constant 0 : index
      %c0_45 = arith.constant 0 : index
      %34 = vector.load %arg2[%c0_42, %c2_43, %c0_44, %c0_45] : memref<3x9x32x32xbf16, #tpu.memory_space<vmem>>, vector<1x1x32x32xbf16>
      %35 = vector.shape_cast %34 : vector<1x1x32x32xbf16> to vector<32x32xbf16>
      %cst_46 = arith.constant dense<0.000000e+00> : vector<16x32xf32>
      %36 = tpu.matmul %33, %35, %cst_46 {dimension_numbers = #tpu.dot_dimension_numbers<[1], [0], [0], [1], [0, 0, 1, 1], [], []>} : vector<16x32xbf16>, vector<32x32xbf16>, vector<16x32xf32> -> vector<16x32xf32>
      %37 = arith.addf %29, %36 : vector<16x32xf32>
      %c1_i32_47 = arith.constant 1 : i32
      %38 = arith.addi %arg10, %c1_i32_47 : i32
      %c0_48 = arith.constant 0 : index
      %39 = arith.index_cast %38 : i32 to index
      %c0_49 = arith.constant 0 : index
      %c0_50 = arith.constant 0 : index
      %40 = vector.load %arg1[%c0_48, %39, %c0_49, %c0_50] : memref<1x18x18x32xbf16, #tpu.memory_space<vmem>>, vector<1x1x16x32xbf16>
      %41 = vector.shape_cast %40 : vector<1x1x16x32xbf16> to vector<16x32xbf16>
      %c0_51 = arith.constant 0 : index
      %c3 = arith.constant 3 : index
      %c0_52 = arith.constant 0 : index
      %c0_53 = arith.constant 0 : index
      %42 = vector.load %arg2[%c0_51, %c3, %c0_52, %c0_53] : memref<3x9x32x32xbf16, #tpu.memory_space<vmem>>, vector<1x1x32x32xbf16>
      %43 = vector.shape_cast %42 : vector<1x1x32x32xbf16> to vector<32x32xbf16>
      %cst_54 = arith.constant dense<0.000000e+00> : vector<16x32xf32>
      %44 = tpu.matmul %41, %43, %cst_54 {dimension_numbers = #tpu.dot_dimension_numbers<[1], [0], [0], [1], [0, 0, 1, 1], [], []>} : vector<16x32xbf16>, vector<32x32xbf16>, vector<16x32xf32> -> vector<16x32xf32>
      %45 = arith.addf %37, %44 : vector<16x32xf32>
      %c1_i32_55 = arith.constant 1 : i32
      %46 = arith.addi %arg10, %c1_i32_55 : i32
      %c0_56 = arith.constant 0 : index
      %47 = arith.index_cast %46 : i32 to index
      %c1_57 = arith.constant 1 : index
      %c0_58 = arith.constant 0 : index
      %48 = vector.load %arg1[%c0_56, %47, %c1_57, %c0_58] : memref<1x18x18x32xbf16, #tpu.memory_space<vmem>>, vector<1x1x16x32xbf16>
      %49 = vector.shape_cast %48 : vector<1x1x16x32xbf16> to vector<16x32xbf16>
      %c0_59 = arith.constant 0 : index
      %c4 = arith.constant 4 : index
      %c0_60 = arith.constant 0 : index
      %c0_61 = arith.constant 0 : index
      %50 = vector.load %arg2[%c0_59, %c4, %c0_60, %c0_61] : memref<3x9x32x32xbf16, #tpu.memory_space<vmem>>, vector<1x1x32x32xbf16>
      %51 = vector.shape_cast %50 : vector<1x1x32x32xbf16> to vector<32x32xbf16>
      %cst_62 = arith.constant dense<0.000000e+00> : vector<16x32xf32>
      %52 = tpu.matmul %49, %51, %cst_62 {dimension_numbers = #tpu.dot_dimension_numbers<[1], [0], [0], [1], [0, 0, 1, 1], [], []>} : vector<16x32xbf16>, vector<32x32xbf16>, vector<16x32xf32> -> vector<16x32xf32>
      %53 = arith.addf %45, %52 : vector<16x32xf32>
      %c1_i32_63 = arith.constant 1 : i32
      %54 = arith.addi %arg10, %c1_i32_63 : i32
      %c0_64 = arith.constant 0 : index
      %55 = arith.index_cast %54 : i32 to index
      %c2_65 = arith.constant 2 : index
      %c0_66 = arith.constant 0 : index
      %56 = vector.load %arg1[%c0_64, %55, %c2_65, %c0_66] : memref<1x18x18x32xbf16, #tpu.memory_space<vmem>>, vector<1x1x16x32xbf16>
      %57 = vector.shape_cast %56 : vector<1x1x16x32xbf16> to vector<16x32xbf16>
      %c0_67 = arith.constant 0 : index
      %c5 = arith.constant 5 : index
      %c0_68 = arith.constant 0 : index
      %c0_69 = arith.constant 0 : index
      %58 = vector.load %arg2[%c0_67, %c5, %c0_68, %c0_69] : memref<3x9x32x32xbf16, #tpu.memory_space<vmem>>, vector<1x1x32x32xbf16>
      %59 = vector.shape_cast %58 : vector<1x1x32x32xbf16> to vector<32x32xbf16>
      %cst_70 = arith.constant dense<0.000000e+00> : vector<16x32xf32>
      %60 = tpu.matmul %57, %59, %cst_70 {dimension_numbers = #tpu.dot_dimension_numbers<[1], [0], [0], [1], [0, 0, 1, 1], [], []>} : vector<16x32xbf16>, vector<32x32xbf16>, vector<16x32xf32> -> vector<16x32xf32>
      %61 = arith.addf %53, %60 : vector<16x32xf32>
      %c2_i32 = arith.constant 2 : i32
      %62 = arith.addi %arg10, %c2_i32 : i32
      %c0_71 = arith.constant 0 : index
      %63 = arith.index_cast %62 : i32 to index
      %c0_72 = arith.constant 0 : index
      %c0_73 = arith.constant 0 : index
      %64 = vector.load %arg1[%c0_71, %63, %c0_72, %c0_73] : memref<1x18x18x32xbf16, #tpu.memory_space<vmem>>, vector<1x1x16x32xbf16>
      %65 = vector.shape_cast %64 : vector<1x1x16x32xbf16> to vector<16x32xbf16>
      %c0_74 = arith.constant 0 : index
      %c6 = arith.constant 6 : index
      %c0_75 = arith.constant 0 : index
      %c0_76 = arith.constant 0 : index
      %66 = vector.load %arg2[%c0_74, %c6, %c0_75, %c0_76] : memref<3x9x32x32xbf16, #tpu.memory_space<vmem>>, vector<1x1x32x32xbf16>
      %67 = vector.shape_cast %66 : vector<1x1x32x32xbf16> to vector<32x32xbf16>
      %cst_77 = arith.constant dense<0.000000e+00> : vector<16x32xf32>
      %68 = tpu.matmul %65, %67, %cst_77 {dimension_numbers = #tpu.dot_dimension_numbers<[1], [0], [0], [1], [0, 0, 1, 1], [], []>} : vector<16x32xbf16>, vector<32x32xbf16>, vector<16x32xf32> -> vector<16x32xf32>
      %69 = arith.addf %61, %68 : vector<16x32xf32>
      %c2_i32_78 = arith.constant 2 : i32
      %70 = arith.addi %arg10, %c2_i32_78 : i32
      %c0_79 = arith.constant 0 : index
      %71 = arith.index_cast %70 : i32 to index
      %c1_80 = arith.constant 1 : index
      %c0_81 = arith.constant 0 : index
      %72 = vector.load %arg1[%c0_79, %71, %c1_80, %c0_81] : memref<1x18x18x32xbf16, #tpu.memory_space<vmem>>, vector<1x1x16x32xbf16>
      %73 = vector.shape_cast %72 : vector<1x1x16x32xbf16> to vector<16x32xbf16>
      %c0_82 = arith.constant 0 : index
      %c7 = arith.constant 7 : index
      %c0_83 = arith.constant 0 : index
      %c0_84 = arith.constant 0 : index
      %74 = vector.load %arg2[%c0_82, %c7, %c0_83, %c0_84] : memref<3x9x32x32xbf16, #tpu.memory_space<vmem>>, vector<1x1x32x32xbf16>
      %75 = vector.shape_cast %74 : vector<1x1x32x32xbf16> to vector<32x32xbf16>
      %cst_85 = arith.constant dense<0.000000e+00> : vector<16x32xf32>
      %76 = tpu.matmul %73, %75, %cst_85 {dimension_numbers = #tpu.dot_dimension_numbers<[1], [0], [0], [1], [0, 0, 1, 1], [], []>} : vector<16x32xbf16>, vector<32x32xbf16>, vector<16x32xf32> -> vector<16x32xf32>
      %77 = arith.addf %69, %76 : vector<16x32xf32>
      %c2_i32_86 = arith.constant 2 : i32
      %78 = arith.addi %arg10, %c2_i32_86 : i32
      %c0_87 = arith.constant 0 : index
      %79 = arith.index_cast %78 : i32 to index
      %c2_88 = arith.constant 2 : index
      %c0_89 = arith.constant 0 : index
      %80 = vector.load %arg1[%c0_87, %79, %c2_88, %c0_89] : memref<1x18x18x32xbf16, #tpu.memory_space<vmem>>, vector<1x1x16x32xbf16>
      %81 = vector.shape_cast %80 : vector<1x1x16x32xbf16> to vector<16x32xbf16>
      %c0_90 = arith.constant 0 : index
      %c8 = arith.constant 8 : index
      %c0_91 = arith.constant 0 : index
      %c0_92 = arith.constant 0 : index
      %82 = vector.load %arg2[%c0_90, %c8, %c0_91, %c0_92] : memref<3x9x32x32xbf16, #tpu.memory_space<vmem>>, vector<1x1x32x32xbf16>
      %83 = vector.shape_cast %82 : vector<1x1x32x32xbf16> to vector<32x32xbf16>
      %cst_93 = arith.constant dense<0.000000e+00> : vector<16x32xf32>
      %84 = tpu.matmul %81, %83, %cst_93 {dimension_numbers = #tpu.dot_dimension_numbers<[1], [0], [0], [1], [0, 0, 1, 1], [], []>} : vector<16x32xbf16>, vector<32x32xbf16>, vector<16x32xf32> -> vector<16x32xf32>
      %85 = arith.addf %77, %84 : vector<16x32xf32>
      %cst_94 = arith.constant 0.000000e+00 : f32
      %86 = vector.broadcast %cst_94 : f32 to vector<16x32xf32>
      %87 = arith.maximumf %85, %86 : vector<16x32xf32>
      %88 = arith.truncf %87 : vector<16x32xf32> to vector<16x32xbf16>
      %89 = tpu.concatenate %4, %88, %4 in 0 : vector<1x32xbf16>, vector<16x32xbf16>, vector<1x32xbf16> -> vector<18x32xbf16>
      %c1_i32_95 = arith.constant 1 : i32
      %90 = arith.addi %arg10, %c1_i32_95 : i32
      %91 = arith.index_cast %90 : i32 to index
      %c0_96 = arith.constant 0 : index
      %c0_97 = arith.constant 0 : index
      %92 = vector.load %arg8[%91, %c0_96, %c0_97] : memref<18x18x32xbf16, #tpu.memory_space<vmem>>, vector<1x18x32xbf16>
      %93 = vector.shape_cast %92 : vector<1x18x32xbf16> to vector<18x32xbf16>
      %94 = vector.shape_cast %89 : vector<18x32xbf16> to vector<1x18x32xbf16>
      tpu.vector_store %arg8[%91, %c0_96, %c0_97], %94 {strides = array<i32>} : memref<18x18x32xbf16, #tpu.memory_space<vmem>>, vector<1x18x32xbf16>,
    }
    %c16_i32_9 = arith.constant 16 : i32
    %c0_i32_10 = arith.constant 0 : i32
    %c16_i32_11 = arith.constant 16 : i32
    %7 = arith.addi %c0_i32_10, %c16_i32_11 : i32
    %c1_i32_12 = arith.constant 1 : i32
    scf.for %arg10 = %c0_i32_10 to %7 step %c1_i32_12  : i32 {
      %cst_18 = arith.constant 0.000000e+00 : f32
      %9 = vector.broadcast %cst_18 : f32 to vector<16x32xf32>
      %c1 = arith.constant 1 : index
      %c0_19 = arith.constant 0 : index
      %c0_20 = arith.constant 0 : index
      %10 = vector.load %arg3[%c1, %c0_19, %c0_20] : memref<3x1x32xf32, #tpu.memory_space<vmem>>, vector<1x1x32xf32>
      %11 = vector.shape_cast %10 : vector<1x1x32xf32> to vector<1x32xf32>
      %12 = vector.broadcast %11 : vector<1x32xf32> to vector<16x32xf32>
      %13 = arith.addf %9, %12 : vector<16x32xf32>
      %c0_i32_21 = arith.constant 0 : i32
      %14 = arith.addi %arg10, %c0_i32_21 : i32
      %15 = arith.index_cast %14 : i32 to index
      %c0_22 = arith.constant 0 : index
      %c0_23 = arith.constant 0 : index
      %16 = vector.load %arg8[%15, %c0_22, %c0_23] : memref<18x18x32xbf16, #tpu.memory_space<vmem>>, vector<1x16x32xbf16>
      %17 = vector.shape_cast %16 : vector<1x16x32xbf16> to vector<16x32xbf16>
      %c1_24 = arith.constant 1 : index
      %c0_25 = arith.constant 0 : index
      %c0_26 = arith.constant 0 : index
      %c0_27 = arith.constant 0 : index
      %18 = vector.load %arg2[%c1_24, %c0_25, %c0_26, %c0_27] : memref<3x9x32x32xbf16, #tpu.memory_space<vmem>>, vector<1x1x32x32xbf16>
      %19 = vector.shape_cast %18 : vector<1x1x32x32xbf16> to vector<32x32xbf16>
      %cst_28 = arith.constant dense<0.000000e+00> : vector<16x32xf32>
      %20 = tpu.matmul %17, %19, %cst_28 {dimension_numbers = #tpu.dot_dimension_numbers<[1], [0], [0], [1], [0, 0, 1, 1], [], []>} : vector<16x32xbf16>, vector<32x32xbf16>, vector<16x32xf32> -> vector<16x32xf32>
      %21 = arith.addf %13, %20 : vector<16x32xf32>
      %c0_i32_29 = arith.constant 0 : i32
      %22 = arith.addi %arg10, %c0_i32_29 : i32
      %23 = arith.index_cast %22 : i32 to index
      %c1_30 = arith.constant 1 : index
      %c0_31 = arith.constant 0 : index
      %24 = vector.load %arg8[%23, %c1_30, %c0_31] : memref<18x18x32xbf16, #tpu.memory_space<vmem>>, vector<1x16x32xbf16>
      %25 = vector.shape_cast %24 : vector<1x16x32xbf16> to vector<16x32xbf16>
      %c1_32 = arith.constant 1 : index
      %c1_33 = arith.constant 1 : index
      %c0_34 = arith.constant 0 : index
      %c0_35 = arith.constant 0 : index
      %26 = vector.load %arg2[%c1_32, %c1_33, %c0_34, %c0_35] : memref<3x9x32x32xbf16, #tpu.memory_space<vmem>>, vector<1x1x32x32xbf16>
      %27 = vector.shape_cast %26 : vector<1x1x32x32xbf16> to vector<32x32xbf16>
      %cst_36 = arith.constant dense<0.000000e+00> : vector<16x32xf32>
      %28 = tpu.matmul %25, %27, %cst_36 {dimension_numbers = #tpu.dot_dimension_numbers<[1], [0], [0], [1], [0, 0, 1, 1], [], []>} : vector<16x32xbf16>, vector<32x32xbf16>, vector<16x32xf32> -> vector<16x32xf32>
      %29 = arith.addf %21, %28 : vector<16x32xf32>
      %c0_i32_37 = arith.constant 0 : i32
      %30 = arith.addi %arg10, %c0_i32_37 : i32
      %31 = arith.index_cast %30 : i32 to index
      %c2 = arith.constant 2 : index
      %c0_38 = arith.constant 0 : index
      %32 = vector.load %arg8[%31, %c2, %c0_38] : memref<18x18x32xbf16, #tpu.memory_space<vmem>>, vector<1x16x32xbf16>
      %33 = vector.shape_cast %32 : vector<1x16x32xbf16> to vector<16x32xbf16>
      %c1_39 = arith.constant 1 : index
      %c2_40 = arith.constant 2 : index
      %c0_41 = arith.constant 0 : index
      %c0_42 = arith.constant 0 : index
      %34 = vector.load %arg2[%c1_39, %c2_40, %c0_41, %c0_42] : memref<3x9x32x32xbf16, #tpu.memory_space<vmem>>, vector<1x1x32x32xbf16>
      %35 = vector.shape_cast %34 : vector<1x1x32x32xbf16> to vector<32x32xbf16>
      %cst_43 = arith.constant dense<0.000000e+00> : vector<16x32xf32>
      %36 = tpu.matmul %33, %35, %cst_43 {dimension_numbers = #tpu.dot_dimension_numbers<[1], [0], [0], [1], [0, 0, 1, 1], [], []>} : vector<16x32xbf16>, vector<32x32xbf16>, vector<16x32xf32> -> vector<16x32xf32>
      %37 = arith.addf %29, %36 : vector<16x32xf32>
      %c1_i32_44 = arith.constant 1 : i32
      %38 = arith.addi %arg10, %c1_i32_44 : i32
      %39 = arith.index_cast %38 : i32 to index
      %c0_45 = arith.constant 0 : index
      %c0_46 = arith.constant 0 : index
      %40 = vector.load %arg8[%39, %c0_45, %c0_46] : memref<18x18x32xbf16, #tpu.memory_space<vmem>>, vector<1x16x32xbf16>
      %41 = vector.shape_cast %40 : vector<1x16x32xbf16> to vector<16x32xbf16>
      %c1_47 = arith.constant 1 : index
      %c3 = arith.constant 3 : index
      %c0_48 = arith.constant 0 : index
      %c0_49 = arith.constant 0 : index
      %42 = vector.load %arg2[%c1_47, %c3, %c0_48, %c0_49] : memref<3x9x32x32xbf16, #tpu.memory_space<vmem>>, vector<1x1x32x32xbf16>
      %43 = vector.shape_cast %42 : vector<1x1x32x32xbf16> to vector<32x32xbf16>
      %cst_50 = arith.constant dense<0.000000e+00> : vector<16x32xf32>
      %44 = tpu.matmul %41, %43, %cst_50 {dimension_numbers = #tpu.dot_dimension_numbers<[1], [0], [0], [1], [0, 0, 1, 1], [], []>} : vector<16x32xbf16>, vector<32x32xbf16>, vector<16x32xf32> -> vector<16x32xf32>
      %45 = arith.addf %37, %44 : vector<16x32xf32>
      %c1_i32_51 = arith.constant 1 : i32
      %46 = arith.addi %arg10, %c1_i32_51 : i32
      %47 = arith.index_cast %46 : i32 to index
      %c1_52 = arith.constant 1 : index
      %c0_53 = arith.constant 0 : index
      %48 = vector.load %arg8[%47, %c1_52, %c0_53] : memref<18x18x32xbf16, #tpu.memory_space<vmem>>, vector<1x16x32xbf16>
      %49 = vector.shape_cast %48 : vector<1x16x32xbf16> to vector<16x32xbf16>
      %c1_54 = arith.constant 1 : index
      %c4 = arith.constant 4 : index
      %c0_55 = arith.constant 0 : index
      %c0_56 = arith.constant 0 : index
      %50 = vector.load %arg2[%c1_54, %c4, %c0_55, %c0_56] : memref<3x9x32x32xbf16, #tpu.memory_space<vmem>>, vector<1x1x32x32xbf16>
      %51 = vector.shape_cast %50 : vector<1x1x32x32xbf16> to vector<32x32xbf16>
      %cst_57 = arith.constant dense<0.000000e+00> : vector<16x32xf32>
      %52 = tpu.matmul %49, %51, %cst_57 {dimension_numbers = #tpu.dot_dimension_numbers<[1], [0], [0], [1], [0, 0, 1, 1], [], []>} : vector<16x32xbf16>, vector<32x32xbf16>, vector<16x32xf32> -> vector<16x32xf32>
      %53 = arith.addf %45, %52 : vector<16x32xf32>
      %c1_i32_58 = arith.constant 1 : i32
      %54 = arith.addi %arg10, %c1_i32_58 : i32
      %55 = arith.index_cast %54 : i32 to index
      %c2_59 = arith.constant 2 : index
      %c0_60 = arith.constant 0 : index
      %56 = vector.load %arg8[%55, %c2_59, %c0_60] : memref<18x18x32xbf16, #tpu.memory_space<vmem>>, vector<1x16x32xbf16>
      %57 = vector.shape_cast %56 : vector<1x16x32xbf16> to vector<16x32xbf16>
      %c1_61 = arith.constant 1 : index
      %c5 = arith.constant 5 : index
      %c0_62 = arith.constant 0 : index
      %c0_63 = arith.constant 0 : index
      %58 = vector.load %arg2[%c1_61, %c5, %c0_62, %c0_63] : memref<3x9x32x32xbf16, #tpu.memory_space<vmem>>, vector<1x1x32x32xbf16>
      %59 = vector.shape_cast %58 : vector<1x1x32x32xbf16> to vector<32x32xbf16>
      %cst_64 = arith.constant dense<0.000000e+00> : vector<16x32xf32>
      %60 = tpu.matmul %57, %59, %cst_64 {dimension_numbers = #tpu.dot_dimension_numbers<[1], [0], [0], [1], [0, 0, 1, 1], [], []>} : vector<16x32xbf16>, vector<32x32xbf16>, vector<16x32xf32> -> vector<16x32xf32>
      %61 = arith.addf %53, %60 : vector<16x32xf32>
      %c2_i32 = arith.constant 2 : i32
      %62 = arith.addi %arg10, %c2_i32 : i32
      %63 = arith.index_cast %62 : i32 to index
      %c0_65 = arith.constant 0 : index
      %c0_66 = arith.constant 0 : index
      %64 = vector.load %arg8[%63, %c0_65, %c0_66] : memref<18x18x32xbf16, #tpu.memory_space<vmem>>, vector<1x16x32xbf16>
      %65 = vector.shape_cast %64 : vector<1x16x32xbf16> to vector<16x32xbf16>
      %c1_67 = arith.constant 1 : index
      %c6 = arith.constant 6 : index
      %c0_68 = arith.constant 0 : index
      %c0_69 = arith.constant 0 : index
      %66 = vector.load %arg2[%c1_67, %c6, %c0_68, %c0_69] : memref<3x9x32x32xbf16, #tpu.memory_space<vmem>>, vector<1x1x32x32xbf16>
      %67 = vector.shape_cast %66 : vector<1x1x32x32xbf16> to vector<32x32xbf16>
      %cst_70 = arith.constant dense<0.000000e+00> : vector<16x32xf32>
      %68 = tpu.matmul %65, %67, %cst_70 {dimension_numbers = #tpu.dot_dimension_numbers<[1], [0], [0], [1], [0, 0, 1, 1], [], []>} : vector<16x32xbf16>, vector<32x32xbf16>, vector<16x32xf32> -> vector<16x32xf32>
      %69 = arith.addf %61, %68 : vector<16x32xf32>
      %c2_i32_71 = arith.constant 2 : i32
      %70 = arith.addi %arg10, %c2_i32_71 : i32
      %71 = arith.index_cast %70 : i32 to index
      %c1_72 = arith.constant 1 : index
      %c0_73 = arith.constant 0 : index
      %72 = vector.load %arg8[%71, %c1_72, %c0_73] : memref<18x18x32xbf16, #tpu.memory_space<vmem>>, vector<1x16x32xbf16>
      %73 = vector.shape_cast %72 : vector<1x16x32xbf16> to vector<16x32xbf16>
      %c1_74 = arith.constant 1 : index
      %c7 = arith.constant 7 : index
      %c0_75 = arith.constant 0 : index
      %c0_76 = arith.constant 0 : index
      %74 = vector.load %arg2[%c1_74, %c7, %c0_75, %c0_76] : memref<3x9x32x32xbf16, #tpu.memory_space<vmem>>, vector<1x1x32x32xbf16>
      %75 = vector.shape_cast %74 : vector<1x1x32x32xbf16> to vector<32x32xbf16>
      %cst_77 = arith.constant dense<0.000000e+00> : vector<16x32xf32>
      %76 = tpu.matmul %73, %75, %cst_77 {dimension_numbers = #tpu.dot_dimension_numbers<[1], [0], [0], [1], [0, 0, 1, 1], [], []>} : vector<16x32xbf16>, vector<32x32xbf16>, vector<16x32xf32> -> vector<16x32xf32>
      %77 = arith.addf %69, %76 : vector<16x32xf32>
      %c2_i32_78 = arith.constant 2 : i32
      %78 = arith.addi %arg10, %c2_i32_78 : i32
      %79 = arith.index_cast %78 : i32 to index
      %c2_79 = arith.constant 2 : index
      %c0_80 = arith.constant 0 : index
      %80 = vector.load %arg8[%79, %c2_79, %c0_80] : memref<18x18x32xbf16, #tpu.memory_space<vmem>>, vector<1x16x32xbf16>
      %81 = vector.shape_cast %80 : vector<1x16x32xbf16> to vector<16x32xbf16>
      %c1_81 = arith.constant 1 : index
      %c8 = arith.constant 8 : index
      %c0_82 = arith.constant 0 : index
      %c0_83 = arith.constant 0 : index
      %82 = vector.load %arg2[%c1_81, %c8, %c0_82, %c0_83] : memref<3x9x32x32xbf16, #tpu.memory_space<vmem>>, vector<1x1x32x32xbf16>
      %83 = vector.shape_cast %82 : vector<1x1x32x32xbf16> to vector<32x32xbf16>
      %cst_84 = arith.constant dense<0.000000e+00> : vector<16x32xf32>
      %84 = tpu.matmul %81, %83, %cst_84 {dimension_numbers = #tpu.dot_dimension_numbers<[1], [0], [0], [1], [0, 0, 1, 1], [], []>} : vector<16x32xbf16>, vector<32x32xbf16>, vector<16x32xf32> -> vector<16x32xf32>
      %85 = arith.addf %77, %84 : vector<16x32xf32>
      %cst_85 = arith.constant 0.000000e+00 : f32
      %86 = vector.broadcast %cst_85 : f32 to vector<16x32xf32>
      %87 = arith.maximumf %85, %86 : vector<16x32xf32>
      %88 = arith.truncf %87 : vector<16x32xf32> to vector<16x32xbf16>
      %89 = tpu.concatenate %4, %88, %4 in 0 : vector<1x32xbf16>, vector<16x32xbf16>, vector<1x32xbf16> -> vector<18x32xbf16>
      %c1_i32_86 = arith.constant 1 : i32
      %90 = arith.addi %arg10, %c1_i32_86 : i32
      %91 = arith.index_cast %90 : i32 to index
      %c0_87 = arith.constant 0 : index
      %c0_88 = arith.constant 0 : index
      %92 = vector.load %arg9[%91, %c0_87, %c0_88] : memref<18x18x32xbf16, #tpu.memory_space<vmem>>, vector<1x18x32xbf16>
      %93 = vector.shape_cast %92 : vector<1x18x32xbf16> to vector<18x32xbf16>
      %94 = vector.shape_cast %89 : vector<18x32xbf16> to vector<1x18x32xbf16>
      tpu.vector_store %arg9[%91, %c0_87, %c0_88], %94 {strides = array<i32>} : memref<18x18x32xbf16, #tpu.memory_space<vmem>>, vector<1x18x32xbf16>,
    }
    %c16_i32_13 = arith.constant 16 : i32
    %c0_i32_14 = arith.constant 0 : i32
    %c16_i32_15 = arith.constant 16 : i32
    %8 = arith.addi %c0_i32_14, %c16_i32_15 : i32
    %c1_i32_16 = arith.constant 1 : i32
    scf.for %arg10 = %c0_i32_14 to %8 step %c1_i32_16  : i32 {
      %cst_18 = arith.constant 0.000000e+00 : f32
      %9 = vector.broadcast %cst_18 : f32 to vector<16x32xf32>
      %c2 = arith.constant 2 : index
      %c0_19 = arith.constant 0 : index
      %c0_20 = arith.constant 0 : index
      %10 = vector.load %arg3[%c2, %c0_19, %c0_20] : memref<3x1x32xf32, #tpu.memory_space<vmem>>, vector<1x1x32xf32>
      %11 = vector.shape_cast %10 : vector<1x1x32xf32> to vector<1x32xf32>
      %12 = vector.broadcast %11 : vector<1x32xf32> to vector<16x32xf32>
      %13 = arith.addf %9, %12 : vector<16x32xf32>
      %c0_i32_21 = arith.constant 0 : i32
      %14 = arith.addi %arg10, %c0_i32_21 : i32
      %15 = arith.index_cast %14 : i32 to index
      %c0_22 = arith.constant 0 : index
      %c0_23 = arith.constant 0 : index
      %16 = vector.load %arg9[%15, %c0_22, %c0_23] : memref<18x18x32xbf16, #tpu.memory_space<vmem>>, vector<1x16x32xbf16>
      %17 = vector.shape_cast %16 : vector<1x16x32xbf16> to vector<16x32xbf16>
      %c2_24 = arith.constant 2 : index
      %c0_25 = arith.constant 0 : index
      %c0_26 = arith.constant 0 : index
      %c0_27 = arith.constant 0 : index
      %18 = vector.load %arg2[%c2_24, %c0_25, %c0_26, %c0_27] : memref<3x9x32x32xbf16, #tpu.memory_space<vmem>>, vector<1x1x32x32xbf16>
      %19 = vector.shape_cast %18 : vector<1x1x32x32xbf16> to vector<32x32xbf16>
      %cst_28 = arith.constant dense<0.000000e+00> : vector<16x32xf32>
      %20 = tpu.matmul %17, %19, %cst_28 {dimension_numbers = #tpu.dot_dimension_numbers<[1], [0], [0], [1], [0, 0, 1, 1], [], []>} : vector<16x32xbf16>, vector<32x32xbf16>, vector<16x32xf32> -> vector<16x32xf32>
      %21 = arith.addf %13, %20 : vector<16x32xf32>
      %c0_i32_29 = arith.constant 0 : i32
      %22 = arith.addi %arg10, %c0_i32_29 : i32
      %23 = arith.index_cast %22 : i32 to index
      %c1 = arith.constant 1 : index
      %c0_30 = arith.constant 0 : index
      %24 = vector.load %arg9[%23, %c1, %c0_30] : memref<18x18x32xbf16, #tpu.memory_space<vmem>>, vector<1x16x32xbf16>
      %25 = vector.shape_cast %24 : vector<1x16x32xbf16> to vector<16x32xbf16>
      %c2_31 = arith.constant 2 : index
      %c1_32 = arith.constant 1 : index
      %c0_33 = arith.constant 0 : index
      %c0_34 = arith.constant 0 : index
      %26 = vector.load %arg2[%c2_31, %c1_32, %c0_33, %c0_34] : memref<3x9x32x32xbf16, #tpu.memory_space<vmem>>, vector<1x1x32x32xbf16>
      %27 = vector.shape_cast %26 : vector<1x1x32x32xbf16> to vector<32x32xbf16>
      %cst_35 = arith.constant dense<0.000000e+00> : vector<16x32xf32>
      %28 = tpu.matmul %25, %27, %cst_35 {dimension_numbers = #tpu.dot_dimension_numbers<[1], [0], [0], [1], [0, 0, 1, 1], [], []>} : vector<16x32xbf16>, vector<32x32xbf16>, vector<16x32xf32> -> vector<16x32xf32>
      %29 = arith.addf %21, %28 : vector<16x32xf32>
      %c0_i32_36 = arith.constant 0 : i32
      %30 = arith.addi %arg10, %c0_i32_36 : i32
      %31 = arith.index_cast %30 : i32 to index
      %c2_37 = arith.constant 2 : index
      %c0_38 = arith.constant 0 : index
      %32 = vector.load %arg9[%31, %c2_37, %c0_38] : memref<18x18x32xbf16, #tpu.memory_space<vmem>>, vector<1x16x32xbf16>
      %33 = vector.shape_cast %32 : vector<1x16x32xbf16> to vector<16x32xbf16>
      %c2_39 = arith.constant 2 : index
      %c2_40 = arith.constant 2 : index
      %c0_41 = arith.constant 0 : index
      %c0_42 = arith.constant 0 : index
      %34 = vector.load %arg2[%c2_39, %c2_40, %c0_41, %c0_42] : memref<3x9x32x32xbf16, #tpu.memory_space<vmem>>, vector<1x1x32x32xbf16>
      %35 = vector.shape_cast %34 : vector<1x1x32x32xbf16> to vector<32x32xbf16>
      %cst_43 = arith.constant dense<0.000000e+00> : vector<16x32xf32>
      %36 = tpu.matmul %33, %35, %cst_43 {dimension_numbers = #tpu.dot_dimension_numbers<[1], [0], [0], [1], [0, 0, 1, 1], [], []>} : vector<16x32xbf16>, vector<32x32xbf16>, vector<16x32xf32> -> vector<16x32xf32>
      %37 = arith.addf %29, %36 : vector<16x32xf32>
      %c1_i32_44 = arith.constant 1 : i32
      %38 = arith.addi %arg10, %c1_i32_44 : i32
      %39 = arith.index_cast %38 : i32 to index
      %c0_45 = arith.constant 0 : index
      %c0_46 = arith.constant 0 : index
      %40 = vector.load %arg9[%39, %c0_45, %c0_46] : memref<18x18x32xbf16, #tpu.memory_space<vmem>>, vector<1x16x32xbf16>
      %41 = vector.shape_cast %40 : vector<1x16x32xbf16> to vector<16x32xbf16>
      %c2_47 = arith.constant 2 : index
      %c3 = arith.constant 3 : index
      %c0_48 = arith.constant 0 : index
      %c0_49 = arith.constant 0 : index
      %42 = vector.load %arg2[%c2_47, %c3, %c0_48, %c0_49] : memref<3x9x32x32xbf16, #tpu.memory_space<vmem>>, vector<1x1x32x32xbf16>
      %43 = vector.shape_cast %42 : vector<1x1x32x32xbf16> to vector<32x32xbf16>
      %cst_50 = arith.constant dense<0.000000e+00> : vector<16x32xf32>
      %44 = tpu.matmul %41, %43, %cst_50 {dimension_numbers = #tpu.dot_dimension_numbers<[1], [0], [0], [1], [0, 0, 1, 1], [], []>} : vector<16x32xbf16>, vector<32x32xbf16>, vector<16x32xf32> -> vector<16x32xf32>
      %45 = arith.addf %37, %44 : vector<16x32xf32>
      %c1_i32_51 = arith.constant 1 : i32
      %46 = arith.addi %arg10, %c1_i32_51 : i32
      %47 = arith.index_cast %46 : i32 to index
      %c1_52 = arith.constant 1 : index
      %c0_53 = arith.constant 0 : index
      %48 = vector.load %arg9[%47, %c1_52, %c0_53] : memref<18x18x32xbf16, #tpu.memory_space<vmem>>, vector<1x16x32xbf16>
      %49 = vector.shape_cast %48 : vector<1x16x32xbf16> to vector<16x32xbf16>
      %c2_54 = arith.constant 2 : index
      %c4 = arith.constant 4 : index
      %c0_55 = arith.constant 0 : index
      %c0_56 = arith.constant 0 : index
      %50 = vector.load %arg2[%c2_54, %c4, %c0_55, %c0_56] : memref<3x9x32x32xbf16, #tpu.memory_space<vmem>>, vector<1x1x32x32xbf16>
      %51 = vector.shape_cast %50 : vector<1x1x32x32xbf16> to vector<32x32xbf16>
      %cst_57 = arith.constant dense<0.000000e+00> : vector<16x32xf32>
      %52 = tpu.matmul %49, %51, %cst_57 {dimension_numbers = #tpu.dot_dimension_numbers<[1], [0], [0], [1], [0, 0, 1, 1], [], []>} : vector<16x32xbf16>, vector<32x32xbf16>, vector<16x32xf32> -> vector<16x32xf32>
      %53 = arith.addf %45, %52 : vector<16x32xf32>
      %c1_i32_58 = arith.constant 1 : i32
      %54 = arith.addi %arg10, %c1_i32_58 : i32
      %55 = arith.index_cast %54 : i32 to index
      %c2_59 = arith.constant 2 : index
      %c0_60 = arith.constant 0 : index
      %56 = vector.load %arg9[%55, %c2_59, %c0_60] : memref<18x18x32xbf16, #tpu.memory_space<vmem>>, vector<1x16x32xbf16>
      %57 = vector.shape_cast %56 : vector<1x16x32xbf16> to vector<16x32xbf16>
      %c2_61 = arith.constant 2 : index
      %c5 = arith.constant 5 : index
      %c0_62 = arith.constant 0 : index
      %c0_63 = arith.constant 0 : index
      %58 = vector.load %arg2[%c2_61, %c5, %c0_62, %c0_63] : memref<3x9x32x32xbf16, #tpu.memory_space<vmem>>, vector<1x1x32x32xbf16>
      %59 = vector.shape_cast %58 : vector<1x1x32x32xbf16> to vector<32x32xbf16>
      %cst_64 = arith.constant dense<0.000000e+00> : vector<16x32xf32>
      %60 = tpu.matmul %57, %59, %cst_64 {dimension_numbers = #tpu.dot_dimension_numbers<[1], [0], [0], [1], [0, 0, 1, 1], [], []>} : vector<16x32xbf16>, vector<32x32xbf16>, vector<16x32xf32> -> vector<16x32xf32>
      %61 = arith.addf %53, %60 : vector<16x32xf32>
      %c2_i32 = arith.constant 2 : i32
      %62 = arith.addi %arg10, %c2_i32 : i32
      %63 = arith.index_cast %62 : i32 to index
      %c0_65 = arith.constant 0 : index
      %c0_66 = arith.constant 0 : index
      %64 = vector.load %arg9[%63, %c0_65, %c0_66] : memref<18x18x32xbf16, #tpu.memory_space<vmem>>, vector<1x16x32xbf16>
      %65 = vector.shape_cast %64 : vector<1x16x32xbf16> to vector<16x32xbf16>
      %c2_67 = arith.constant 2 : index
      %c6 = arith.constant 6 : index
      %c0_68 = arith.constant 0 : index
      %c0_69 = arith.constant 0 : index
      %66 = vector.load %arg2[%c2_67, %c6, %c0_68, %c0_69] : memref<3x9x32x32xbf16, #tpu.memory_space<vmem>>, vector<1x1x32x32xbf16>
      %67 = vector.shape_cast %66 : vector<1x1x32x32xbf16> to vector<32x32xbf16>
      %cst_70 = arith.constant dense<0.000000e+00> : vector<16x32xf32>
      %68 = tpu.matmul %65, %67, %cst_70 {dimension_numbers = #tpu.dot_dimension_numbers<[1], [0], [0], [1], [0, 0, 1, 1], [], []>} : vector<16x32xbf16>, vector<32x32xbf16>, vector<16x32xf32> -> vector<16x32xf32>
      %69 = arith.addf %61, %68 : vector<16x32xf32>
      %c2_i32_71 = arith.constant 2 : i32
      %70 = arith.addi %arg10, %c2_i32_71 : i32
      %71 = arith.index_cast %70 : i32 to index
      %c1_72 = arith.constant 1 : index
      %c0_73 = arith.constant 0 : index
      %72 = vector.load %arg9[%71, %c1_72, %c0_73] : memref<18x18x32xbf16, #tpu.memory_space<vmem>>, vector<1x16x32xbf16>
      %73 = vector.shape_cast %72 : vector<1x16x32xbf16> to vector<16x32xbf16>
      %c2_74 = arith.constant 2 : index
      %c7 = arith.constant 7 : index
      %c0_75 = arith.constant 0 : index
      %c0_76 = arith.constant 0 : index
      %74 = vector.load %arg2[%c2_74, %c7, %c0_75, %c0_76] : memref<3x9x32x32xbf16, #tpu.memory_space<vmem>>, vector<1x1x32x32xbf16>
      %75 = vector.shape_cast %74 : vector<1x1x32x32xbf16> to vector<32x32xbf16>
      %cst_77 = arith.constant dense<0.000000e+00> : vector<16x32xf32>
      %76 = tpu.matmul %73, %75, %cst_77 {dimension_numbers = #tpu.dot_dimension_numbers<[1], [0], [0], [1], [0, 0, 1, 1], [], []>} : vector<16x32xbf16>, vector<32x32xbf16>, vector<16x32xf32> -> vector<16x32xf32>
      %77 = arith.addf %69, %76 : vector<16x32xf32>
      %c2_i32_78 = arith.constant 2 : i32
      %78 = arith.addi %arg10, %c2_i32_78 : i32
      %79 = arith.index_cast %78 : i32 to index
      %c2_79 = arith.constant 2 : index
      %c0_80 = arith.constant 0 : index
      %80 = vector.load %arg9[%79, %c2_79, %c0_80] : memref<18x18x32xbf16, #tpu.memory_space<vmem>>, vector<1x16x32xbf16>
      %81 = vector.shape_cast %80 : vector<1x16x32xbf16> to vector<16x32xbf16>
      %c2_81 = arith.constant 2 : index
      %c8 = arith.constant 8 : index
      %c0_82 = arith.constant 0 : index
      %c0_83 = arith.constant 0 : index
      %82 = vector.load %arg2[%c2_81, %c8, %c0_82, %c0_83] : memref<3x9x32x32xbf16, #tpu.memory_space<vmem>>, vector<1x1x32x32xbf16>
      %83 = vector.shape_cast %82 : vector<1x1x32x32xbf16> to vector<32x32xbf16>
      %cst_84 = arith.constant dense<0.000000e+00> : vector<16x32xf32>
      %84 = tpu.matmul %81, %83, %cst_84 {dimension_numbers = #tpu.dot_dimension_numbers<[1], [0], [0], [1], [0, 0, 1, 1], [], []>} : vector<16x32xbf16>, vector<32x32xbf16>, vector<16x32xf32> -> vector<16x32xf32>
      %85 = arith.addf %77, %84 : vector<16x32xf32>
      %cst_85 = arith.constant 0.000000e+00 : f32
      %86 = vector.broadcast %cst_85 : f32 to vector<16x32xf32>
      %87 = arith.maximumf %85, %86 : vector<16x32xf32>
      %88 = arith.truncf %87 : vector<16x32xf32> to vector<16x32xbf16>
      %c0_86 = arith.constant 0 : index
      %89 = arith.index_cast %arg10 : i32 to index
      %c0_87 = arith.constant 0 : index
      %c0_88 = arith.constant 0 : index
      %90 = vector.load %arg6[%c0_86, %89, %c0_87, %c0_88] : memref<1x16x16x32xbf16, #tpu.memory_space<vmem>>, vector<1x1x16x32xbf16>
      %91 = vector.shape_cast %90 : vector<1x1x16x32xbf16> to vector<16x32xbf16>
      %92 = vector.shape_cast %88 : vector<16x32xbf16> to vector<1x1x16x32xbf16>
      tpu.vector_store %arg6[%c0_86, %89, %c0_87, %c0_88], %92 {strides = array<i32>} : memref<1x16x16x32xbf16, #tpu.memory_space<vmem>>, vector<1x1x16x32xbf16>,
      %c0_89 = arith.constant 0 : index
      %c0_90 = arith.constant 0 : index
      %93 = vector.load %arg4[%c0_89, %c0_90] : memref<32x64xbf16, #tpu.memory_space<vmem>>, vector<32x64xbf16>
      %cst_91 = arith.constant dense<0.000000e+00> : vector<16x64xf32>
      %94 = tpu.matmul %88, %93, %cst_91 {dimension_numbers = #tpu.dot_dimension_numbers<[1], [0], [0], [1], [0, 0, 1, 1], [], []>} : vector<16x32xbf16>, vector<32x64xbf16>, vector<16x64xf32> -> vector<16x64xf32>
      %95 = vector.broadcast %5 : vector<1x64xf32> to vector<16x64xf32>
      %96 = arith.addf %94, %95 : vector<16x64xf32>
      %cst_92 = arith.constant 0.000000e+00 : f32
      %97 = vector.broadcast %cst_92 : f32 to vector<16x64xf32>
      %98 = arith.maximumf %96, %97 : vector<16x64xf32>
      %99 = arith.truncf %98 : vector<16x64xf32> to vector<16x64xbf16>
      %c0_93 = arith.constant 0 : index
      %100 = arith.index_cast %arg10 : i32 to index
      %c0_94 = arith.constant 0 : index
      %c0_95 = arith.constant 0 : index
      %101 = vector.load %arg7[%c0_93, %100, %c0_94, %c0_95] : memref<1x16x16x64xbf16, #tpu.memory_space<vmem>>, vector<1x1x16x64xbf16>
      %102 = vector.shape_cast %101 : vector<1x1x16x64xbf16> to vector<16x64xbf16>
      %103 = vector.shape_cast %99 : vector<16x64xbf16> to vector<1x1x16x64xbf16>
      tpu.vector_store %arg7[%c0_93, %100, %c0_94, %c0_95], %103 {strides = array<i32>} : memref<1x16x16x64xbf16, #tpu.memory_space<vmem>>, vector<1x1x16x64xbf16>,
    }
    %c16_i32_17 = arith.constant 16 : i32
    return
  }
  func.func @transform_0(%arg0: i32) -> (i32, i32, i32, i32) {
    %c0_i32 = arith.constant 0 : i32
    %c0_i32_0 = arith.constant 0 : i32
    %c0_i32_1 = arith.constant 0 : i32
    %c0_i32_2 = arith.constant 0 : i32
    return %arg0, %c0_i32, %c0_i32_0, %c0_i32_1 : i32, i32, i32, i32
  }
  func.func @transform_1(%arg0: i32) -> (i32, i32, i32, i32) {
    %c0_i32 = arith.constant 0 : i32
    %c0_i32_0 = arith.constant 0 : i32
    %c0_i32_1 = arith.constant 0 : i32
    %c0_i32_2 = arith.constant 0 : i32
    %c0_i32_3 = arith.constant 0 : i32
    return %c0_i32, %c0_i32_0, %c0_i32_1, %c0_i32_2 : i32, i32, i32, i32
  }
  func.func @transform_2(%arg0: i32) -> (i32, i32, i32) {
    %c0_i32 = arith.constant 0 : i32
    %c0_i32_0 = arith.constant 0 : i32
    %c0_i32_1 = arith.constant 0 : i32
    %c0_i32_2 = arith.constant 0 : i32
    return %c0_i32, %c0_i32_0, %c0_i32_1 : i32, i32, i32
  }
  func.func @transform_3(%arg0: i32) -> (i32, i32) {
    %c0_i32 = arith.constant 0 : i32
    %c0_i32_0 = arith.constant 0 : i32
    %c0_i32_1 = arith.constant 0 : i32
    return %c0_i32, %c0_i32_0 : i32, i32
  }
  func.func @transform_4(%arg0: i32) -> (i32, i32) {
    %c0_i32 = arith.constant 0 : i32
    %c0_i32_0 = arith.constant 0 : i32
    %c0_i32_1 = arith.constant 0 : i32
    return %c0_i32, %c0_i32_0 : i32, i32
  }
  func.func @transform_5(%arg0: i32) -> (i32, i32, i32, i32) {
    %c0_i32 = arith.constant 0 : i32
    %c0_i32_0 = arith.constant 0 : i32
    %c0_i32_1 = arith.constant 0 : i32
    %c0_i32_2 = arith.constant 0 : i32
    return %arg0, %c0_i32, %c0_i32_0, %c0_i32_1 : i32, i32, i32, i32
  }
  func.func @transform_6(%arg0: i32) -> (i32, i32, i32, i32) {
    %c0_i32 = arith.constant 0 : i32
    %c0_i32_0 = arith.constant 0 : i32
    %c0_i32_1 = arith.constant 0 : i32
    %c0_i32_2 = arith.constant 0 : i32
    return %arg0, %c0_i32, %c0_i32_0, %c0_i32_1 : i32, i32, i32, i32
  }
}

module attributes {stable_mosaic.version = 11 : i64} {
  func.func @_matmul_bias_kernel(%arg0: i32, %arg1: memref<128x288xbf16, #tpu.memory_space<vmem>>, %arg2: memref<288x64xbf16, #tpu.memory_space<vmem>>, %arg3: memref<1x64xf32, #tpu.memory_space<vmem>>, %arg4: memref<128x64xbf16, #tpu.memory_space<vmem>>) attributes {dimension_semantics = [#tpu.dimension_semantics<parallel>], iteration_bounds = array<i64: 1>, scalar_prefetch = 0 : i64, scratch_operands = 0 : i64, tpu.core_type = #tpu.core_type<tc>, window_params = [{transform_indices = @transform_0, window_bounds = array<i64: 128, 288>}, {pipeline_mode = #tpu.pipeline_mode<synchronous>, transform_indices = @transform_1, window_bounds = array<i64: 288, 64>}, {pipeline_mode = #tpu.pipeline_mode<synchronous>, transform_indices = @transform_2, window_bounds = array<i64: 1, 64>}, {transform_indices = @transform_3, window_bounds = array<i64: 128, 64>}]} {
    %c0 = arith.constant 0 : index
    %c0_0 = arith.constant 0 : index
    %0 = vector.load %arg1[%c0, %c0_0] : memref<128x288xbf16, #tpu.memory_space<vmem>>, vector<128x288xbf16>
    %c0_1 = arith.constant 0 : index
    %c0_2 = arith.constant 0 : index
    %1 = vector.load %arg2[%c0_1, %c0_2] : memref<288x64xbf16, #tpu.memory_space<vmem>>, vector<288x64xbf16>
    %cst = arith.constant dense<0.000000e+00> : vector<128x64xf32>
    %2 = tpu.matmul %0, %1, %cst {dimension_numbers = #tpu.dot_dimension_numbers<[1], [0], [0], [1], [0, 0, 1, 1], [], []>} : vector<128x288xbf16>, vector<288x64xbf16>, vector<128x64xf32> -> vector<128x64xf32>
    %c0_3 = arith.constant 0 : index
    %c0_4 = arith.constant 0 : index
    %3 = vector.load %arg3[%c0_3, %c0_4] : memref<1x64xf32, #tpu.memory_space<vmem>>, vector<1x64xf32>
    %4 = vector.broadcast %3 : vector<1x64xf32> to vector<128x64xf32>
    %5 = arith.addf %2, %4 : vector<128x64xf32>
    %cst_5 = arith.constant 0.000000e+00 : f32
    %6 = vector.broadcast %cst_5 : f32 to vector<128x64xf32>
    %7 = arith.maximumf %5, %6 : vector<128x64xf32>
    %8 = arith.truncf %7 : vector<128x64xf32> to vector<128x64xbf16>
    %c0_6 = arith.constant 0 : index
    %c0_7 = arith.constant 0 : index
    %9 = vector.load %arg4[%c0_6, %c0_7] : memref<128x64xbf16, #tpu.memory_space<vmem>>, vector<128x64xbf16>
    tpu.vector_store %arg4[%c0_6, %c0_7], %8 {strides = array<i32>} : memref<128x64xbf16, #tpu.memory_space<vmem>>, vector<128x64xbf16>,
    return
  }
  func.func @transform_0(%arg0: i32) -> (i32, i32) {
    %c0_i32 = arith.constant 0 : i32
    %c0_i32_0 = arith.constant 0 : i32
    return %arg0, %c0_i32 : i32, i32
  }
  func.func @transform_1(%arg0: i32) -> (i32, i32) {
    %c0_i32 = arith.constant 0 : i32
    %c0_i32_0 = arith.constant 0 : i32
    %c0_i32_1 = arith.constant 0 : i32
    return %c0_i32, %c0_i32_0 : i32, i32
  }
  func.func @transform_2(%arg0: i32) -> (i32, i32) {
    %c0_i32 = arith.constant 0 : i32
    %c0_i32_0 = arith.constant 0 : i32
    %c0_i32_1 = arith.constant 0 : i32
    return %c0_i32, %c0_i32_0 : i32, i32
  }
  func.func @transform_3(%arg0: i32) -> (i32, i32) {
    %c0_i32 = arith.constant 0 : i32
    %c0_i32_0 = arith.constant 0 : i32
    return %arg0, %c0_i32 : i32, i32
  }
}

module attributes {stable_mosaic.version = 11 : i64} {
  func.func @_block_kernel(%arg0: i32, %arg1: memref<1x10x10x64xbf16, #tpu.memory_space<vmem>>, %arg2: memref<2x9x64x64xbf16, #tpu.memory_space<vmem>>, %arg3: memref<2x1x64xf32, #tpu.memory_space<vmem>>, %arg4: memref<64x256xbf16, #tpu.memory_space<vmem>>, %arg5: memref<1x256xf32, #tpu.memory_space<vmem>>, %arg6: memref<1x8x8x64xbf16, #tpu.memory_space<vmem>>, %arg7: memref<1x8x8x256xbf16, #tpu.memory_space<vmem>>, %arg8: memref<10x10x64xbf16, #tpu.memory_space<vmem>>) attributes {dimension_semantics = [#tpu.dimension_semantics<parallel>], iteration_bounds = array<i64: 2>, scalar_prefetch = 0 : i64, scratch_operands = 1 : i64, tpu.core_type = #tpu.core_type<tc>, window_params = [{transform_indices = @transform_0, window_bounds = array<i64: 1, 10, 10, 64>}, {pipeline_mode = #tpu.pipeline_mode<synchronous>, transform_indices = @transform_1, window_bounds = array<i64: 2, 9, 64, 64>}, {pipeline_mode = #tpu.pipeline_mode<synchronous>, transform_indices = @transform_2, window_bounds = array<i64: 2, 1, 64>}, {pipeline_mode = #tpu.pipeline_mode<synchronous>, transform_indices = @transform_3, window_bounds = array<i64: 64, 256>}, {pipeline_mode = #tpu.pipeline_mode<synchronous>, transform_indices = @transform_4, window_bounds = array<i64: 1, 256>}, {transform_indices = @transform_5, window_bounds = array<i64: 1, 8, 8, 64>}, {transform_indices = @transform_6, window_bounds = array<i64: 1, 8, 8, 256>}]} {
    %cst = arith.constant 0.000000e+00 : bf16
    %0 = vector.broadcast %cst : bf16 to vector<10x10x64xbf16>
    %c0 = arith.constant 0 : index
    %c0_0 = arith.constant 0 : index
    %c0_1 = arith.constant 0 : index
    %1 = vector.load %arg8[%c0, %c0_0, %c0_1] : memref<10x10x64xbf16, #tpu.memory_space<vmem>>, vector<10x10x64xbf16>
    tpu.vector_store %arg8[%c0, %c0_0, %c0_1], %0 {strides = array<i32>} : memref<10x10x64xbf16, #tpu.memory_space<vmem>>, vector<10x10x64xbf16>,
    %cst_2 = arith.constant 0.000000e+00 : bf16
    %2 = vector.broadcast %cst_2 : bf16 to vector<1x64xbf16>
    %c0_3 = arith.constant 0 : index
    %c0_4 = arith.constant 0 : index
    %3 = vector.load %arg5[%c0_3, %c0_4] : memref<1x256xf32, #tpu.memory_space<vmem>>, vector<1x256xf32>
    %c0_i32 = arith.constant 0 : i32
    %c8_i32 = arith.constant 8 : i32
    %4 = arith.addi %c0_i32, %c8_i32 : i32
    %c1_i32 = arith.constant 1 : i32
    scf.for %arg9 = %c0_i32 to %4 step %c1_i32  : i32 {
      %cst_10 = arith.constant 0.000000e+00 : f32
      %6 = vector.broadcast %cst_10 : f32 to vector<8x64xf32>
      %c0_11 = arith.constant 0 : index
      %c0_12 = arith.constant 0 : index
      %c0_13 = arith.constant 0 : index
      %7 = vector.load %arg3[%c0_11, %c0_12, %c0_13] : memref<2x1x64xf32, #tpu.memory_space<vmem>>, vector<1x1x64xf32>
      %8 = vector.shape_cast %7 : vector<1x1x64xf32> to vector<1x64xf32>
      %9 = vector.broadcast %8 : vector<1x64xf32> to vector<8x64xf32>
      %10 = arith.addf %6, %9 : vector<8x64xf32>
      %c0_i32_14 = arith.constant 0 : i32
      %11 = arith.addi %arg9, %c0_i32_14 : i32
      %c0_15 = arith.constant 0 : index
      %12 = arith.index_cast %11 : i32 to index
      %c0_16 = arith.constant 0 : index
      %c0_17 = arith.constant 0 : index
      %13 = vector.load %arg1[%c0_15, %12, %c0_16, %c0_17] : memref<1x10x10x64xbf16, #tpu.memory_space<vmem>>, vector<1x1x8x64xbf16>
      %14 = vector.shape_cast %13 : vector<1x1x8x64xbf16> to vector<8x64xbf16>
      %c0_18 = arith.constant 0 : index
      %c0_19 = arith.constant 0 : index
      %c0_20 = arith.constant 0 : index
      %c0_21 = arith.constant 0 : index
      %15 = vector.load %arg2[%c0_18, %c0_19, %c0_20, %c0_21] : memref<2x9x64x64xbf16, #tpu.memory_space<vmem>>, vector<1x1x64x64xbf16>
      %16 = vector.shape_cast %15 : vector<1x1x64x64xbf16> to vector<64x64xbf16>
      %cst_22 = arith.constant dense<0.000000e+00> : vector<8x64xf32>
      %17 = tpu.matmul %14, %16, %cst_22 {dimension_numbers = #tpu.dot_dimension_numbers<[1], [0], [0], [1], [0, 0, 1, 1], [], []>} : vector<8x64xbf16>, vector<64x64xbf16>, vector<8x64xf32> -> vector<8x64xf32>
      %18 = arith.addf %10, %17 : vector<8x64xf32>
      %c0_i32_23 = arith.constant 0 : i32
      %19 = arith.addi %arg9, %c0_i32_23 : i32
      %c0_24 = arith.constant 0 : index
      %20 = arith.index_cast %19 : i32 to index
      %c1 = arith.constant 1 : index
      %c0_25 = arith.constant 0 : index
      %21 = vector.load %arg1[%c0_24, %20, %c1, %c0_25] : memref<1x10x10x64xbf16, #tpu.memory_space<vmem>>, vector<1x1x8x64xbf16>
      %22 = vector.shape_cast %21 : vector<1x1x8x64xbf16> to vector<8x64xbf16>
      %c0_26 = arith.constant 0 : index
      %c1_27 = arith.constant 1 : index
      %c0_28 = arith.constant 0 : index
      %c0_29 = arith.constant 0 : index
      %23 = vector.load %arg2[%c0_26, %c1_27, %c0_28, %c0_29] : memref<2x9x64x64xbf16, #tpu.memory_space<vmem>>, vector<1x1x64x64xbf16>
      %24 = vector.shape_cast %23 : vector<1x1x64x64xbf16> to vector<64x64xbf16>
      %cst_30 = arith.constant dense<0.000000e+00> : vector<8x64xf32>
      %25 = tpu.matmul %22, %24, %cst_30 {dimension_numbers = #tpu.dot_dimension_numbers<[1], [0], [0], [1], [0, 0, 1, 1], [], []>} : vector<8x64xbf16>, vector<64x64xbf16>, vector<8x64xf32> -> vector<8x64xf32>
      %26 = arith.addf %18, %25 : vector<8x64xf32>
      %c0_i32_31 = arith.constant 0 : i32
      %27 = arith.addi %arg9, %c0_i32_31 : i32
      %c0_32 = arith.constant 0 : index
      %28 = arith.index_cast %27 : i32 to index
      %c2 = arith.constant 2 : index
      %c0_33 = arith.constant 0 : index
      %29 = vector.load %arg1[%c0_32, %28, %c2, %c0_33] : memref<1x10x10x64xbf16, #tpu.memory_space<vmem>>, vector<1x1x8x64xbf16>
      %30 = vector.shape_cast %29 : vector<1x1x8x64xbf16> to vector<8x64xbf16>
      %c0_34 = arith.constant 0 : index
      %c2_35 = arith.constant 2 : index
      %c0_36 = arith.constant 0 : index
      %c0_37 = arith.constant 0 : index
      %31 = vector.load %arg2[%c0_34, %c2_35, %c0_36, %c0_37] : memref<2x9x64x64xbf16, #tpu.memory_space<vmem>>, vector<1x1x64x64xbf16>
      %32 = vector.shape_cast %31 : vector<1x1x64x64xbf16> to vector<64x64xbf16>
      %cst_38 = arith.constant dense<0.000000e+00> : vector<8x64xf32>
      %33 = tpu.matmul %30, %32, %cst_38 {dimension_numbers = #tpu.dot_dimension_numbers<[1], [0], [0], [1], [0, 0, 1, 1], [], []>} : vector<8x64xbf16>, vector<64x64xbf16>, vector<8x64xf32> -> vector<8x64xf32>
      %34 = arith.addf %26, %33 : vector<8x64xf32>
      %c1_i32_39 = arith.constant 1 : i32
      %35 = arith.addi %arg9, %c1_i32_39 : i32
      %c0_40 = arith.constant 0 : index
      %36 = arith.index_cast %35 : i32 to index
      %c0_41 = arith.constant 0 : index
      %c0_42 = arith.constant 0 : index
      %37 = vector.load %arg1[%c0_40, %36, %c0_41, %c0_42] : memref<1x10x10x64xbf16, #tpu.memory_space<vmem>>, vector<1x1x8x64xbf16>
      %38 = vector.shape_cast %37 : vector<1x1x8x64xbf16> to vector<8x64xbf16>
      %c0_43 = arith.constant 0 : index
      %c3 = arith.constant 3 : index
      %c0_44 = arith.constant 0 : index
      %c0_45 = arith.constant 0 : index
      %39 = vector.load %arg2[%c0_43, %c3, %c0_44, %c0_45] : memref<2x9x64x64xbf16, #tpu.memory_space<vmem>>, vector<1x1x64x64xbf16>
      %40 = vector.shape_cast %39 : vector<1x1x64x64xbf16> to vector<64x64xbf16>
      %cst_46 = arith.constant dense<0.000000e+00> : vector<8x64xf32>
      %41 = tpu.matmul %38, %40, %cst_46 {dimension_numbers = #tpu.dot_dimension_numbers<[1], [0], [0], [1], [0, 0, 1, 1], [], []>} : vector<8x64xbf16>, vector<64x64xbf16>, vector<8x64xf32> -> vector<8x64xf32>
      %42 = arith.addf %34, %41 : vector<8x64xf32>
      %c1_i32_47 = arith.constant 1 : i32
      %43 = arith.addi %arg9, %c1_i32_47 : i32
      %c0_48 = arith.constant 0 : index
      %44 = arith.index_cast %43 : i32 to index
      %c1_49 = arith.constant 1 : index
      %c0_50 = arith.constant 0 : index
      %45 = vector.load %arg1[%c0_48, %44, %c1_49, %c0_50] : memref<1x10x10x64xbf16, #tpu.memory_space<vmem>>, vector<1x1x8x64xbf16>
      %46 = vector.shape_cast %45 : vector<1x1x8x64xbf16> to vector<8x64xbf16>
      %c0_51 = arith.constant 0 : index
      %c4 = arith.constant 4 : index
      %c0_52 = arith.constant 0 : index
      %c0_53 = arith.constant 0 : index
      %47 = vector.load %arg2[%c0_51, %c4, %c0_52, %c0_53] : memref<2x9x64x64xbf16, #tpu.memory_space<vmem>>, vector<1x1x64x64xbf16>
      %48 = vector.shape_cast %47 : vector<1x1x64x64xbf16> to vector<64x64xbf16>
      %cst_54 = arith.constant dense<0.000000e+00> : vector<8x64xf32>
      %49 = tpu.matmul %46, %48, %cst_54 {dimension_numbers = #tpu.dot_dimension_numbers<[1], [0], [0], [1], [0, 0, 1, 1], [], []>} : vector<8x64xbf16>, vector<64x64xbf16>, vector<8x64xf32> -> vector<8x64xf32>
      %50 = arith.addf %42, %49 : vector<8x64xf32>
      %c1_i32_55 = arith.constant 1 : i32
      %51 = arith.addi %arg9, %c1_i32_55 : i32
      %c0_56 = arith.constant 0 : index
      %52 = arith.index_cast %51 : i32 to index
      %c2_57 = arith.constant 2 : index
      %c0_58 = arith.constant 0 : index
      %53 = vector.load %arg1[%c0_56, %52, %c2_57, %c0_58] : memref<1x10x10x64xbf16, #tpu.memory_space<vmem>>, vector<1x1x8x64xbf16>
      %54 = vector.shape_cast %53 : vector<1x1x8x64xbf16> to vector<8x64xbf16>
      %c0_59 = arith.constant 0 : index
      %c5 = arith.constant 5 : index
      %c0_60 = arith.constant 0 : index
      %c0_61 = arith.constant 0 : index
      %55 = vector.load %arg2[%c0_59, %c5, %c0_60, %c0_61] : memref<2x9x64x64xbf16, #tpu.memory_space<vmem>>, vector<1x1x64x64xbf16>
      %56 = vector.shape_cast %55 : vector<1x1x64x64xbf16> to vector<64x64xbf16>
      %cst_62 = arith.constant dense<0.000000e+00> : vector<8x64xf32>
      %57 = tpu.matmul %54, %56, %cst_62 {dimension_numbers = #tpu.dot_dimension_numbers<[1], [0], [0], [1], [0, 0, 1, 1], [], []>} : vector<8x64xbf16>, vector<64x64xbf16>, vector<8x64xf32> -> vector<8x64xf32>
      %58 = arith.addf %50, %57 : vector<8x64xf32>
      %c2_i32 = arith.constant 2 : i32
      %59 = arith.addi %arg9, %c2_i32 : i32
      %c0_63 = arith.constant 0 : index
      %60 = arith.index_cast %59 : i32 to index
      %c0_64 = arith.constant 0 : index
      %c0_65 = arith.constant 0 : index
      %61 = vector.load %arg1[%c0_63, %60, %c0_64, %c0_65] : memref<1x10x10x64xbf16, #tpu.memory_space<vmem>>, vector<1x1x8x64xbf16>
      %62 = vector.shape_cast %61 : vector<1x1x8x64xbf16> to vector<8x64xbf16>
      %c0_66 = arith.constant 0 : index
      %c6 = arith.constant 6 : index
      %c0_67 = arith.constant 0 : index
      %c0_68 = arith.constant 0 : index
      %63 = vector.load %arg2[%c0_66, %c6, %c0_67, %c0_68] : memref<2x9x64x64xbf16, #tpu.memory_space<vmem>>, vector<1x1x64x64xbf16>
      %64 = vector.shape_cast %63 : vector<1x1x64x64xbf16> to vector<64x64xbf16>
      %cst_69 = arith.constant dense<0.000000e+00> : vector<8x64xf32>
      %65 = tpu.matmul %62, %64, %cst_69 {dimension_numbers = #tpu.dot_dimension_numbers<[1], [0], [0], [1], [0, 0, 1, 1], [], []>} : vector<8x64xbf16>, vector<64x64xbf16>, vector<8x64xf32> -> vector<8x64xf32>
      %66 = arith.addf %58, %65 : vector<8x64xf32>
      %c2_i32_70 = arith.constant 2 : i32
      %67 = arith.addi %arg9, %c2_i32_70 : i32
      %c0_71 = arith.constant 0 : index
      %68 = arith.index_cast %67 : i32 to index
      %c1_72 = arith.constant 1 : index
      %c0_73 = arith.constant 0 : index
      %69 = vector.load %arg1[%c0_71, %68, %c1_72, %c0_73] : memref<1x10x10x64xbf16, #tpu.memory_space<vmem>>, vector<1x1x8x64xbf16>
      %70 = vector.shape_cast %69 : vector<1x1x8x64xbf16> to vector<8x64xbf16>
      %c0_74 = arith.constant 0 : index
      %c7 = arith.constant 7 : index
      %c0_75 = arith.constant 0 : index
      %c0_76 = arith.constant 0 : index
      %71 = vector.load %arg2[%c0_74, %c7, %c0_75, %c0_76] : memref<2x9x64x64xbf16, #tpu.memory_space<vmem>>, vector<1x1x64x64xbf16>
      %72 = vector.shape_cast %71 : vector<1x1x64x64xbf16> to vector<64x64xbf16>
      %cst_77 = arith.constant dense<0.000000e+00> : vector<8x64xf32>
      %73 = tpu.matmul %70, %72, %cst_77 {dimension_numbers = #tpu.dot_dimension_numbers<[1], [0], [0], [1], [0, 0, 1, 1], [], []>} : vector<8x64xbf16>, vector<64x64xbf16>, vector<8x64xf32> -> vector<8x64xf32>
      %74 = arith.addf %66, %73 : vector<8x64xf32>
      %c2_i32_78 = arith.constant 2 : i32
      %75 = arith.addi %arg9, %c2_i32_78 : i32
      %c0_79 = arith.constant 0 : index
      %76 = arith.index_cast %75 : i32 to index
      %c2_80 = arith.constant 2 : index
      %c0_81 = arith.constant 0 : index
      %77 = vector.load %arg1[%c0_79, %76, %c2_80, %c0_81] : memref<1x10x10x64xbf16, #tpu.memory_space<vmem>>, vector<1x1x8x64xbf16>
      %78 = vector.shape_cast %77 : vector<1x1x8x64xbf16> to vector<8x64xbf16>
      %c0_82 = arith.constant 0 : index
      %c8 = arith.constant 8 : index
      %c0_83 = arith.constant 0 : index
      %c0_84 = arith.constant 0 : index
      %79 = vector.load %arg2[%c0_82, %c8, %c0_83, %c0_84] : memref<2x9x64x64xbf16, #tpu.memory_space<vmem>>, vector<1x1x64x64xbf16>
      %80 = vector.shape_cast %79 : vector<1x1x64x64xbf16> to vector<64x64xbf16>
      %cst_85 = arith.constant dense<0.000000e+00> : vector<8x64xf32>
      %81 = tpu.matmul %78, %80, %cst_85 {dimension_numbers = #tpu.dot_dimension_numbers<[1], [0], [0], [1], [0, 0, 1, 1], [], []>} : vector<8x64xbf16>, vector<64x64xbf16>, vector<8x64xf32> -> vector<8x64xf32>
      %82 = arith.addf %74, %81 : vector<8x64xf32>
      %cst_86 = arith.constant 0.000000e+00 : f32
      %83 = vector.broadcast %cst_86 : f32 to vector<8x64xf32>
      %84 = arith.maximumf %82, %83 : vector<8x64xf32>
      %85 = arith.truncf %84 : vector<8x64xf32> to vector<8x64xbf16>
      %86 = tpu.concatenate %2, %85, %2 in 0 : vector<1x64xbf16>, vector<8x64xbf16>, vector<1x64xbf16> -> vector<10x64xbf16>
      %c1_i32_87 = arith.constant 1 : i32
      %87 = arith.addi %arg9, %c1_i32_87 : i32
      %88 = arith.index_cast %87 : i32 to index
      %c0_88 = arith.constant 0 : index
      %c0_89 = arith.constant 0 : index
      %89 = vector.load %arg8[%88, %c0_88, %c0_89] : memref<10x10x64xbf16, #tpu.memory_space<vmem>>, vector<1x10x64xbf16>
      %90 = vector.shape_cast %89 : vector<1x10x64xbf16> to vector<10x64xbf16>
      %91 = vector.shape_cast %86 : vector<10x64xbf16> to vector<1x10x64xbf16>
      tpu.vector_store %arg8[%88, %c0_88, %c0_89], %91 {strides = array<i32>} : memref<10x10x64xbf16, #tpu.memory_space<vmem>>, vector<1x10x64xbf16>,
    }
    %c8_i32_5 = arith.constant 8 : i32
    %c0_i32_6 = arith.constant 0 : i32
    %c8_i32_7 = arith.constant 8 : i32
    %5 = arith.addi %c0_i32_6, %c8_i32_7 : i32
    %c1_i32_8 = arith.constant 1 : i32
    scf.for %arg9 = %c0_i32_6 to %5 step %c1_i32_8  : i32 {
      %cst_10 = arith.constant 0.000000e+00 : f32
      %6 = vector.broadcast %cst_10 : f32 to vector<8x64xf32>
      %c1 = arith.constant 1 : index
      %c0_11 = arith.constant 0 : index
      %c0_12 = arith.constant 0 : index
      %7 = vector.load %arg3[%c1, %c0_11, %c0_12] : memref<2x1x64xf32, #tpu.memory_space<vmem>>, vector<1x1x64xf32>
      %8 = vector.shape_cast %7 : vector<1x1x64xf32> to vector<1x64xf32>
      %9 = vector.broadcast %8 : vector<1x64xf32> to vector<8x64xf32>
      %10 = arith.addf %6, %9 : vector<8x64xf32>
      %c0_i32_13 = arith.constant 0 : i32
      %11 = arith.addi %arg9, %c0_i32_13 : i32
      %12 = arith.index_cast %11 : i32 to index
      %c0_14 = arith.constant 0 : index
      %c0_15 = arith.constant 0 : index
      %13 = vector.load %arg8[%12, %c0_14, %c0_15] : memref<10x10x64xbf16, #tpu.memory_space<vmem>>, vector<1x8x64xbf16>
      %14 = vector.shape_cast %13 : vector<1x8x64xbf16> to vector<8x64xbf16>
      %c1_16 = arith.constant 1 : index
      %c0_17 = arith.constant 0 : index
      %c0_18 = arith.constant 0 : index
      %c0_19 = arith.constant 0 : index
      %15 = vector.load %arg2[%c1_16, %c0_17, %c0_18, %c0_19] : memref<2x9x64x64xbf16, #tpu.memory_space<vmem>>, vector<1x1x64x64xbf16>
      %16 = vector.shape_cast %15 : vector<1x1x64x64xbf16> to vector<64x64xbf16>
      %cst_20 = arith.constant dense<0.000000e+00> : vector<8x64xf32>
      %17 = tpu.matmul %14, %16, %cst_20 {dimension_numbers = #tpu.dot_dimension_numbers<[1], [0], [0], [1], [0, 0, 1, 1], [], []>} : vector<8x64xbf16>, vector<64x64xbf16>, vector<8x64xf32> -> vector<8x64xf32>
      %18 = arith.addf %10, %17 : vector<8x64xf32>
      %c0_i32_21 = arith.constant 0 : i32
      %19 = arith.addi %arg9, %c0_i32_21 : i32
      %20 = arith.index_cast %19 : i32 to index
      %c1_22 = arith.constant 1 : index
      %c0_23 = arith.constant 0 : index
      %21 = vector.load %arg8[%20, %c1_22, %c0_23] : memref<10x10x64xbf16, #tpu.memory_space<vmem>>, vector<1x8x64xbf16>
      %22 = vector.shape_cast %21 : vector<1x8x64xbf16> to vector<8x64xbf16>
      %c1_24 = arith.constant 1 : index
      %c1_25 = arith.constant 1 : index
      %c0_26 = arith.constant 0 : index
      %c0_27 = arith.constant 0 : index
      %23 = vector.load %arg2[%c1_24, %c1_25, %c0_26, %c0_27] : memref<2x9x64x64xbf16, #tpu.memory_space<vmem>>, vector<1x1x64x64xbf16>
      %24 = vector.shape_cast %23 : vector<1x1x64x64xbf16> to vector<64x64xbf16>
      %cst_28 = arith.constant dense<0.000000e+00> : vector<8x64xf32>
      %25 = tpu.matmul %22, %24, %cst_28 {dimension_numbers = #tpu.dot_dimension_numbers<[1], [0], [0], [1], [0, 0, 1, 1], [], []>} : vector<8x64xbf16>, vector<64x64xbf16>, vector<8x64xf32> -> vector<8x64xf32>
      %26 = arith.addf %18, %25 : vector<8x64xf32>
      %c0_i32_29 = arith.constant 0 : i32
      %27 = arith.addi %arg9, %c0_i32_29 : i32
      %28 = arith.index_cast %27 : i32 to index
      %c2 = arith.constant 2 : index
      %c0_30 = arith.constant 0 : index
      %29 = vector.load %arg8[%28, %c2, %c0_30] : memref<10x10x64xbf16, #tpu.memory_space<vmem>>, vector<1x8x64xbf16>
      %30 = vector.shape_cast %29 : vector<1x8x64xbf16> to vector<8x64xbf16>
      %c1_31 = arith.constant 1 : index
      %c2_32 = arith.constant 2 : index
      %c0_33 = arith.constant 0 : index
      %c0_34 = arith.constant 0 : index
      %31 = vector.load %arg2[%c1_31, %c2_32, %c0_33, %c0_34] : memref<2x9x64x64xbf16, #tpu.memory_space<vmem>>, vector<1x1x64x64xbf16>
      %32 = vector.shape_cast %31 : vector<1x1x64x64xbf16> to vector<64x64xbf16>
      %cst_35 = arith.constant dense<0.000000e+00> : vector<8x64xf32>
      %33 = tpu.matmul %30, %32, %cst_35 {dimension_numbers = #tpu.dot_dimension_numbers<[1], [0], [0], [1], [0, 0, 1, 1], [], []>} : vector<8x64xbf16>, vector<64x64xbf16>, vector<8x64xf32> -> vector<8x64xf32>
      %34 = arith.addf %26, %33 : vector<8x64xf32>
      %c1_i32_36 = arith.constant 1 : i32
      %35 = arith.addi %arg9, %c1_i32_36 : i32
      %36 = arith.index_cast %35 : i32 to index
      %c0_37 = arith.constant 0 : index
      %c0_38 = arith.constant 0 : index
      %37 = vector.load %arg8[%36, %c0_37, %c0_38] : memref<10x10x64xbf16, #tpu.memory_space<vmem>>, vector<1x8x64xbf16>
      %38 = vector.shape_cast %37 : vector<1x8x64xbf16> to vector<8x64xbf16>
      %c1_39 = arith.constant 1 : index
      %c3 = arith.constant 3 : index
      %c0_40 = arith.constant 0 : index
      %c0_41 = arith.constant 0 : index
      %39 = vector.load %arg2[%c1_39, %c3, %c0_40, %c0_41] : memref<2x9x64x64xbf16, #tpu.memory_space<vmem>>, vector<1x1x64x64xbf16>
      %40 = vector.shape_cast %39 : vector<1x1x64x64xbf16> to vector<64x64xbf16>
      %cst_42 = arith.constant dense<0.000000e+00> : vector<8x64xf32>
      %41 = tpu.matmul %38, %40, %cst_42 {dimension_numbers = #tpu.dot_dimension_numbers<[1], [0], [0], [1], [0, 0, 1, 1], [], []>} : vector<8x64xbf16>, vector<64x64xbf16>, vector<8x64xf32> -> vector<8x64xf32>
      %42 = arith.addf %34, %41 : vector<8x64xf32>
      %c1_i32_43 = arith.constant 1 : i32
      %43 = arith.addi %arg9, %c1_i32_43 : i32
      %44 = arith.index_cast %43 : i32 to index
      %c1_44 = arith.constant 1 : index
      %c0_45 = arith.constant 0 : index
      %45 = vector.load %arg8[%44, %c1_44, %c0_45] : memref<10x10x64xbf16, #tpu.memory_space<vmem>>, vector<1x8x64xbf16>
      %46 = vector.shape_cast %45 : vector<1x8x64xbf16> to vector<8x64xbf16>
      %c1_46 = arith.constant 1 : index
      %c4 = arith.constant 4 : index
      %c0_47 = arith.constant 0 : index
      %c0_48 = arith.constant 0 : index
      %47 = vector.load %arg2[%c1_46, %c4, %c0_47, %c0_48] : memref<2x9x64x64xbf16, #tpu.memory_space<vmem>>, vector<1x1x64x64xbf16>
      %48 = vector.shape_cast %47 : vector<1x1x64x64xbf16> to vector<64x64xbf16>
      %cst_49 = arith.constant dense<0.000000e+00> : vector<8x64xf32>
      %49 = tpu.matmul %46, %48, %cst_49 {dimension_numbers = #tpu.dot_dimension_numbers<[1], [0], [0], [1], [0, 0, 1, 1], [], []>} : vector<8x64xbf16>, vector<64x64xbf16>, vector<8x64xf32> -> vector<8x64xf32>
      %50 = arith.addf %42, %49 : vector<8x64xf32>
      %c1_i32_50 = arith.constant 1 : i32
      %51 = arith.addi %arg9, %c1_i32_50 : i32
      %52 = arith.index_cast %51 : i32 to index
      %c2_51 = arith.constant 2 : index
      %c0_52 = arith.constant 0 : index
      %53 = vector.load %arg8[%52, %c2_51, %c0_52] : memref<10x10x64xbf16, #tpu.memory_space<vmem>>, vector<1x8x64xbf16>
      %54 = vector.shape_cast %53 : vector<1x8x64xbf16> to vector<8x64xbf16>
      %c1_53 = arith.constant 1 : index
      %c5 = arith.constant 5 : index
      %c0_54 = arith.constant 0 : index
      %c0_55 = arith.constant 0 : index
      %55 = vector.load %arg2[%c1_53, %c5, %c0_54, %c0_55] : memref<2x9x64x64xbf16, #tpu.memory_space<vmem>>, vector<1x1x64x64xbf16>
      %56 = vector.shape_cast %55 : vector<1x1x64x64xbf16> to vector<64x64xbf16>
      %cst_56 = arith.constant dense<0.000000e+00> : vector<8x64xf32>
      %57 = tpu.matmul %54, %56, %cst_56 {dimension_numbers = #tpu.dot_dimension_numbers<[1], [0], [0], [1], [0, 0, 1, 1], [], []>} : vector<8x64xbf16>, vector<64x64xbf16>, vector<8x64xf32> -> vector<8x64xf32>
      %58 = arith.addf %50, %57 : vector<8x64xf32>
      %c2_i32 = arith.constant 2 : i32
      %59 = arith.addi %arg9, %c2_i32 : i32
      %60 = arith.index_cast %59 : i32 to index
      %c0_57 = arith.constant 0 : index
      %c0_58 = arith.constant 0 : index
      %61 = vector.load %arg8[%60, %c0_57, %c0_58] : memref<10x10x64xbf16, #tpu.memory_space<vmem>>, vector<1x8x64xbf16>
      %62 = vector.shape_cast %61 : vector<1x8x64xbf16> to vector<8x64xbf16>
      %c1_59 = arith.constant 1 : index
      %c6 = arith.constant 6 : index
      %c0_60 = arith.constant 0 : index
      %c0_61 = arith.constant 0 : index
      %63 = vector.load %arg2[%c1_59, %c6, %c0_60, %c0_61] : memref<2x9x64x64xbf16, #tpu.memory_space<vmem>>, vector<1x1x64x64xbf16>
      %64 = vector.shape_cast %63 : vector<1x1x64x64xbf16> to vector<64x64xbf16>
      %cst_62 = arith.constant dense<0.000000e+00> : vector<8x64xf32>
      %65 = tpu.matmul %62, %64, %cst_62 {dimension_numbers = #tpu.dot_dimension_numbers<[1], [0], [0], [1], [0, 0, 1, 1], [], []>} : vector<8x64xbf16>, vector<64x64xbf16>, vector<8x64xf32> -> vector<8x64xf32>
      %66 = arith.addf %58, %65 : vector<8x64xf32>
      %c2_i32_63 = arith.constant 2 : i32
      %67 = arith.addi %arg9, %c2_i32_63 : i32
      %68 = arith.index_cast %67 : i32 to index
      %c1_64 = arith.constant 1 : index
      %c0_65 = arith.constant 0 : index
      %69 = vector.load %arg8[%68, %c1_64, %c0_65] : memref<10x10x64xbf16, #tpu.memory_space<vmem>>, vector<1x8x64xbf16>
      %70 = vector.shape_cast %69 : vector<1x8x64xbf16> to vector<8x64xbf16>
      %c1_66 = arith.constant 1 : index
      %c7 = arith.constant 7 : index
      %c0_67 = arith.constant 0 : index
      %c0_68 = arith.constant 0 : index
      %71 = vector.load %arg2[%c1_66, %c7, %c0_67, %c0_68] : memref<2x9x64x64xbf16, #tpu.memory_space<vmem>>, vector<1x1x64x64xbf16>
      %72 = vector.shape_cast %71 : vector<1x1x64x64xbf16> to vector<64x64xbf16>
      %cst_69 = arith.constant dense<0.000000e+00> : vector<8x64xf32>
      %73 = tpu.matmul %70, %72, %cst_69 {dimension_numbers = #tpu.dot_dimension_numbers<[1], [0], [0], [1], [0, 0, 1, 1], [], []>} : vector<8x64xbf16>, vector<64x64xbf16>, vector<8x64xf32> -> vector<8x64xf32>
      %74 = arith.addf %66, %73 : vector<8x64xf32>
      %c2_i32_70 = arith.constant 2 : i32
      %75 = arith.addi %arg9, %c2_i32_70 : i32
      %76 = arith.index_cast %75 : i32 to index
      %c2_71 = arith.constant 2 : index
      %c0_72 = arith.constant 0 : index
      %77 = vector.load %arg8[%76, %c2_71, %c0_72] : memref<10x10x64xbf16, #tpu.memory_space<vmem>>, vector<1x8x64xbf16>
      %78 = vector.shape_cast %77 : vector<1x8x64xbf16> to vector<8x64xbf16>
      %c1_73 = arith.constant 1 : index
      %c8 = arith.constant 8 : index
      %c0_74 = arith.constant 0 : index
      %c0_75 = arith.constant 0 : index
      %79 = vector.load %arg2[%c1_73, %c8, %c0_74, %c0_75] : memref<2x9x64x64xbf16, #tpu.memory_space<vmem>>, vector<1x1x64x64xbf16>
      %80 = vector.shape_cast %79 : vector<1x1x64x64xbf16> to vector<64x64xbf16>
      %cst_76 = arith.constant dense<0.000000e+00> : vector<8x64xf32>
      %81 = tpu.matmul %78, %80, %cst_76 {dimension_numbers = #tpu.dot_dimension_numbers<[1], [0], [0], [1], [0, 0, 1, 1], [], []>} : vector<8x64xbf16>, vector<64x64xbf16>, vector<8x64xf32> -> vector<8x64xf32>
      %82 = arith.addf %74, %81 : vector<8x64xf32>
      %cst_77 = arith.constant 0.000000e+00 : f32
      %83 = vector.broadcast %cst_77 : f32 to vector<8x64xf32>
      %84 = arith.maximumf %82, %83 : vector<8x64xf32>
      %85 = arith.truncf %84 : vector<8x64xf32> to vector<8x64xbf16>
      %c0_78 = arith.constant 0 : index
      %86 = arith.index_cast %arg9 : i32 to index
      %c0_79 = arith.constant 0 : index
      %c0_80 = arith.constant 0 : index
      %87 = vector.load %arg6[%c0_78, %86, %c0_79, %c0_80] : memref<1x8x8x64xbf16, #tpu.memory_space<vmem>>, vector<1x1x8x64xbf16>
      %88 = vector.shape_cast %87 : vector<1x1x8x64xbf16> to vector<8x64xbf16>
      %89 = vector.shape_cast %85 : vector<8x64xbf16> to vector<1x1x8x64xbf16>
      tpu.vector_store %arg6[%c0_78, %86, %c0_79, %c0_80], %89 {strides = array<i32>} : memref<1x8x8x64xbf16, #tpu.memory_space<vmem>>, vector<1x1x8x64xbf16>,
      %c0_81 = arith.constant 0 : index
      %c0_82 = arith.constant 0 : index
      %90 = vector.load %arg4[%c0_81, %c0_82] : memref<64x256xbf16, #tpu.memory_space<vmem>>, vector<64x256xbf16>
      %cst_83 = arith.constant dense<0.000000e+00> : vector<8x256xf32>
      %91 = tpu.matmul %85, %90, %cst_83 {dimension_numbers = #tpu.dot_dimension_numbers<[1], [0], [0], [1], [0, 0, 1, 1], [], []>} : vector<8x64xbf16>, vector<64x256xbf16>, vector<8x256xf32> -> vector<8x256xf32>
      %92 = vector.broadcast %3 : vector<1x256xf32> to vector<8x256xf32>
      %93 = arith.addf %91, %92 : vector<8x256xf32>
      %cst_84 = arith.constant 0.000000e+00 : f32
      %94 = vector.broadcast %cst_84 : f32 to vector<8x256xf32>
      %95 = arith.maximumf %93, %94 : vector<8x256xf32>
      %96 = arith.truncf %95 : vector<8x256xf32> to vector<8x256xbf16>
      %c0_85 = arith.constant 0 : index
      %97 = arith.index_cast %arg9 : i32 to index
      %c0_86 = arith.constant 0 : index
      %c0_87 = arith.constant 0 : index
      %98 = vector.load %arg7[%c0_85, %97, %c0_86, %c0_87] : memref<1x8x8x256xbf16, #tpu.memory_space<vmem>>, vector<1x1x8x256xbf16>
      %99 = vector.shape_cast %98 : vector<1x1x8x256xbf16> to vector<8x256xbf16>
      %100 = vector.shape_cast %96 : vector<8x256xbf16> to vector<1x1x8x256xbf16>
      tpu.vector_store %arg7[%c0_85, %97, %c0_86, %c0_87], %100 {strides = array<i32>} : memref<1x8x8x256xbf16, #tpu.memory_space<vmem>>, vector<1x1x8x256xbf16>,
    }
    %c8_i32_9 = arith.constant 8 : i32
    return
  }
  func.func @transform_0(%arg0: i32) -> (i32, i32, i32, i32) {
    %c0_i32 = arith.constant 0 : i32
    %c0_i32_0 = arith.constant 0 : i32
    %c0_i32_1 = arith.constant 0 : i32
    %c0_i32_2 = arith.constant 0 : i32
    return %arg0, %c0_i32, %c0_i32_0, %c0_i32_1 : i32, i32, i32, i32
  }
  func.func @transform_1(%arg0: i32) -> (i32, i32, i32, i32) {
    %c0_i32 = arith.constant 0 : i32
    %c0_i32_0 = arith.constant 0 : i32
    %c0_i32_1 = arith.constant 0 : i32
    %c0_i32_2 = arith.constant 0 : i32
    %c0_i32_3 = arith.constant 0 : i32
    return %c0_i32, %c0_i32_0, %c0_i32_1, %c0_i32_2 : i32, i32, i32, i32
  }
  func.func @transform_2(%arg0: i32) -> (i32, i32, i32) {
    %c0_i32 = arith.constant 0 : i32
    %c0_i32_0 = arith.constant 0 : i32
    %c0_i32_1 = arith.constant 0 : i32
    %c0_i32_2 = arith.constant 0 : i32
    return %c0_i32, %c0_i32_0, %c0_i32_1 : i32, i32, i32
  }
  func.func @transform_3(%arg0: i32) -> (i32, i32) {
    %c0_i32 = arith.constant 0 : i32
    %c0_i32_0 = arith.constant 0 : i32
    %c0_i32_1 = arith.constant 0 : i32
    return %c0_i32, %c0_i32_0 : i32, i32
  }
  func.func @transform_4(%arg0: i32) -> (i32, i32) {
    %c0_i32 = arith.constant 0 : i32
    %c0_i32_0 = arith.constant 0 : i32
    %c0_i32_1 = arith.constant 0 : i32
    return %c0_i32, %c0_i32_0 : i32, i32
  }
  func.func @transform_5(%arg0: i32) -> (i32, i32, i32, i32) {
    %c0_i32 = arith.constant 0 : i32
    %c0_i32_0 = arith.constant 0 : i32
    %c0_i32_1 = arith.constant 0 : i32
    %c0_i32_2 = arith.constant 0 : i32
    return %arg0, %c0_i32, %c0_i32_0, %c0_i32_1 : i32, i32, i32, i32
  }
  func.func @transform_6(%arg0: i32) -> (i32, i32, i32, i32) {
    %c0_i32 = arith.constant 0 : i32
    %c0_i32_0 = arith.constant 0 : i32
    %c0_i32_1 = arith.constant 0 : i32
    %c0_i32_2 = arith.constant 0 : i32
    return %arg0, %c0_i32, %c0_i32_0, %c0_i32_1 : i32, i32, i32, i32
  }
}

module attributes {stable_mosaic.version = 11 : i64} {
  func.func @_matmul_bias_kernel(%arg0: i32, %arg1: memref<32x576xbf16, #tpu.memory_space<vmem>>, %arg2: memref<576x64xbf16, #tpu.memory_space<vmem>>, %arg3: memref<1x64xf32, #tpu.memory_space<vmem>>, %arg4: memref<32x64xbf16, #tpu.memory_space<vmem>>) attributes {dimension_semantics = [#tpu.dimension_semantics<parallel>], iteration_bounds = array<i64: 1>, scalar_prefetch = 0 : i64, scratch_operands = 0 : i64, tpu.core_type = #tpu.core_type<tc>, window_params = [{transform_indices = @transform_0, window_bounds = array<i64: 32, 576>}, {pipeline_mode = #tpu.pipeline_mode<synchronous>, transform_indices = @transform_1, window_bounds = array<i64: 576, 64>}, {pipeline_mode = #tpu.pipeline_mode<synchronous>, transform_indices = @transform_2, window_bounds = array<i64: 1, 64>}, {transform_indices = @transform_3, window_bounds = array<i64: 32, 64>}]} {
    %c0 = arith.constant 0 : index
    %c0_0 = arith.constant 0 : index
    %0 = vector.load %arg1[%c0, %c0_0] : memref<32x576xbf16, #tpu.memory_space<vmem>>, vector<32x576xbf16>
    %c0_1 = arith.constant 0 : index
    %c0_2 = arith.constant 0 : index
    %1 = vector.load %arg2[%c0_1, %c0_2] : memref<576x64xbf16, #tpu.memory_space<vmem>>, vector<576x64xbf16>
    %cst = arith.constant dense<0.000000e+00> : vector<32x64xf32>
    %2 = tpu.matmul %0, %1, %cst {dimension_numbers = #tpu.dot_dimension_numbers<[1], [0], [0], [1], [0, 0, 1, 1], [], []>} : vector<32x576xbf16>, vector<576x64xbf16>, vector<32x64xf32> -> vector<32x64xf32>
    %c0_3 = arith.constant 0 : index
    %c0_4 = arith.constant 0 : index
    %3 = vector.load %arg3[%c0_3, %c0_4] : memref<1x64xf32, #tpu.memory_space<vmem>>, vector<1x64xf32>
    %4 = vector.broadcast %3 : vector<1x64xf32> to vector<32x64xf32>
    %5 = arith.addf %2, %4 : vector<32x64xf32>
    %cst_5 = arith.constant 0.000000e+00 : f32
    %6 = vector.broadcast %cst_5 : f32 to vector<32x64xf32>
    %7 = arith.maximumf %5, %6 : vector<32x64xf32>
    %8 = arith.truncf %7 : vector<32x64xf32> to vector<32x64xbf16>
    %c0_6 = arith.constant 0 : index
    %c0_7 = arith.constant 0 : index
    %9 = vector.load %arg4[%c0_6, %c0_7] : memref<32x64xbf16, #tpu.memory_space<vmem>>, vector<32x64xbf16>
    tpu.vector_store %arg4[%c0_6, %c0_7], %8 {strides = array<i32>} : memref<32x64xbf16, #tpu.memory_space<vmem>>, vector<32x64xbf16>,
    return
  }
  func.func @transform_0(%arg0: i32) -> (i32, i32) {
    %c0_i32 = arith.constant 0 : i32
    %c0_i32_0 = arith.constant 0 : i32
    return %arg0, %c0_i32 : i32, i32
  }
  func.func @transform_1(%arg0: i32) -> (i32, i32) {
    %c0_i32 = arith.constant 0 : i32
    %c0_i32_0 = arith.constant 0 : i32
    %c0_i32_1 = arith.constant 0 : i32
    return %c0_i32, %c0_i32_0 : i32, i32
  }
  func.func @transform_2(%arg0: i32) -> (i32, i32) {
    %c0_i32 = arith.constant 0 : i32
    %c0_i32_0 = arith.constant 0 : i32
    %c0_i32_1 = arith.constant 0 : i32
    return %c0_i32, %c0_i32_0 : i32, i32
  }
  func.func @transform_3(%arg0: i32) -> (i32, i32) {
    %c0_i32 = arith.constant 0 : i32
    %c0_i32_0 = arith.constant 0 : i32
    return %arg0, %c0_i32 : i32, i32
  }
}

module attributes {stable_mosaic.version = 11 : i64} {
  func.func @_block_kernel(%arg0: i32, %arg1: memref<1x6x6x64xbf16, #tpu.memory_space<vmem>>, %arg2: memref<2x9x64x64xbf16, #tpu.memory_space<vmem>>, %arg3: memref<2x1x64xf32, #tpu.memory_space<vmem>>, %arg4: memref<64x1024xbf16, #tpu.memory_space<vmem>>, %arg5: memref<1x1024xf32, #tpu.memory_space<vmem>>, %arg6: memref<1x4x4x64xbf16, #tpu.memory_space<vmem>>, %arg7: memref<1x4x4x1024xbf16, #tpu.memory_space<vmem>>, %arg8: memref<6x6x64xbf16, #tpu.memory_space<vmem>>) attributes {dimension_semantics = [#tpu.dimension_semantics<parallel>], iteration_bounds = array<i64: 2>, scalar_prefetch = 0 : i64, scratch_operands = 1 : i64, tpu.core_type = #tpu.core_type<tc>, window_params = [{transform_indices = @transform_0, window_bounds = array<i64: 1, 6, 6, 64>}, {pipeline_mode = #tpu.pipeline_mode<synchronous>, transform_indices = @transform_1, window_bounds = array<i64: 2, 9, 64, 64>}, {pipeline_mode = #tpu.pipeline_mode<synchronous>, transform_indices = @transform_2, window_bounds = array<i64: 2, 1, 64>}, {pipeline_mode = #tpu.pipeline_mode<synchronous>, transform_indices = @transform_3, window_bounds = array<i64: 64, 1024>}, {pipeline_mode = #tpu.pipeline_mode<synchronous>, transform_indices = @transform_4, window_bounds = array<i64: 1, 1024>}, {transform_indices = @transform_5, window_bounds = array<i64: 1, 4, 4, 64>}, {transform_indices = @transform_6, window_bounds = array<i64: 1, 4, 4, 1024>}]} {
    %cst = arith.constant 0.000000e+00 : bf16
    %0 = vector.broadcast %cst : bf16 to vector<6x6x64xbf16>
    %c0 = arith.constant 0 : index
    %c0_0 = arith.constant 0 : index
    %c0_1 = arith.constant 0 : index
    %1 = vector.load %arg8[%c0, %c0_0, %c0_1] : memref<6x6x64xbf16, #tpu.memory_space<vmem>>, vector<6x6x64xbf16>
    tpu.vector_store %arg8[%c0, %c0_0, %c0_1], %0 {strides = array<i32>} : memref<6x6x64xbf16, #tpu.memory_space<vmem>>, vector<6x6x64xbf16>,
    %cst_2 = arith.constant 0.000000e+00 : bf16
    %2 = vector.broadcast %cst_2 : bf16 to vector<1x64xbf16>
    %c0_3 = arith.constant 0 : index
    %c0_4 = arith.constant 0 : index
    %3 = vector.load %arg5[%c0_3, %c0_4] : memref<1x1024xf32, #tpu.memory_space<vmem>>, vector<1x1024xf32>
    %c0_i32 = arith.constant 0 : i32
    %c4_i32 = arith.constant 4 : i32
    %4 = arith.addi %c0_i32, %c4_i32 : i32
    %c1_i32 = arith.constant 1 : i32
    scf.for %arg9 = %c0_i32 to %4 step %c1_i32  : i32 {
      %cst_10 = arith.constant 0.000000e+00 : f32
      %6 = vector.broadcast %cst_10 : f32 to vector<4x64xf32>
      %c0_11 = arith.constant 0 : index
      %c0_12 = arith.constant 0 : index
      %c0_13 = arith.constant 0 : index
      %7 = vector.load %arg3[%c0_11, %c0_12, %c0_13] : memref<2x1x64xf32, #tpu.memory_space<vmem>>, vector<1x1x64xf32>
      %8 = vector.shape_cast %7 : vector<1x1x64xf32> to vector<1x64xf32>
      %9 = vector.broadcast %8 : vector<1x64xf32> to vector<4x64xf32>
      %10 = arith.addf %6, %9 : vector<4x64xf32>
      %c0_i32_14 = arith.constant 0 : i32
      %11 = arith.addi %arg9, %c0_i32_14 : i32
      %c0_15 = arith.constant 0 : index
      %12 = arith.index_cast %11 : i32 to index
      %c0_16 = arith.constant 0 : index
      %c0_17 = arith.constant 0 : index
      %13 = vector.load %arg1[%c0_15, %12, %c0_16, %c0_17] : memref<1x6x6x64xbf16, #tpu.memory_space<vmem>>, vector<1x1x4x64xbf16>
      %14 = vector.shape_cast %13 : vector<1x1x4x64xbf16> to vector<4x64xbf16>
      %c0_18 = arith.constant 0 : index
      %c0_19 = arith.constant 0 : index
      %c0_20 = arith.constant 0 : index
      %c0_21 = arith.constant 0 : index
      %15 = vector.load %arg2[%c0_18, %c0_19, %c0_20, %c0_21] : memref<2x9x64x64xbf16, #tpu.memory_space<vmem>>, vector<1x1x64x64xbf16>
      %16 = vector.shape_cast %15 : vector<1x1x64x64xbf16> to vector<64x64xbf16>
      %cst_22 = arith.constant dense<0.000000e+00> : vector<4x64xf32>
      %17 = tpu.matmul %14, %16, %cst_22 {dimension_numbers = #tpu.dot_dimension_numbers<[1], [0], [0], [1], [0, 0, 1, 1], [], []>} : vector<4x64xbf16>, vector<64x64xbf16>, vector<4x64xf32> -> vector<4x64xf32>
      %18 = arith.addf %10, %17 : vector<4x64xf32>
      %c0_i32_23 = arith.constant 0 : i32
      %19 = arith.addi %arg9, %c0_i32_23 : i32
      %c0_24 = arith.constant 0 : index
      %20 = arith.index_cast %19 : i32 to index
      %c1 = arith.constant 1 : index
      %c0_25 = arith.constant 0 : index
      %21 = vector.load %arg1[%c0_24, %20, %c1, %c0_25] : memref<1x6x6x64xbf16, #tpu.memory_space<vmem>>, vector<1x1x4x64xbf16>
      %22 = vector.shape_cast %21 : vector<1x1x4x64xbf16> to vector<4x64xbf16>
      %c0_26 = arith.constant 0 : index
      %c1_27 = arith.constant 1 : index
      %c0_28 = arith.constant 0 : index
      %c0_29 = arith.constant 0 : index
      %23 = vector.load %arg2[%c0_26, %c1_27, %c0_28, %c0_29] : memref<2x9x64x64xbf16, #tpu.memory_space<vmem>>, vector<1x1x64x64xbf16>
      %24 = vector.shape_cast %23 : vector<1x1x64x64xbf16> to vector<64x64xbf16>
      %cst_30 = arith.constant dense<0.000000e+00> : vector<4x64xf32>
      %25 = tpu.matmul %22, %24, %cst_30 {dimension_numbers = #tpu.dot_dimension_numbers<[1], [0], [0], [1], [0, 0, 1, 1], [], []>} : vector<4x64xbf16>, vector<64x64xbf16>, vector<4x64xf32> -> vector<4x64xf32>
      %26 = arith.addf %18, %25 : vector<4x64xf32>
      %c0_i32_31 = arith.constant 0 : i32
      %27 = arith.addi %arg9, %c0_i32_31 : i32
      %c0_32 = arith.constant 0 : index
      %28 = arith.index_cast %27 : i32 to index
      %c2 = arith.constant 2 : index
      %c0_33 = arith.constant 0 : index
      %29 = vector.load %arg1[%c0_32, %28, %c2, %c0_33] : memref<1x6x6x64xbf16, #tpu.memory_space<vmem>>, vector<1x1x4x64xbf16>
      %30 = vector.shape_cast %29 : vector<1x1x4x64xbf16> to vector<4x64xbf16>
      %c0_34 = arith.constant 0 : index
      %c2_35 = arith.constant 2 : index
      %c0_36 = arith.constant 0 : index
      %c0_37 = arith.constant 0 : index
      %31 = vector.load %arg2[%c0_34, %c2_35, %c0_36, %c0_37] : memref<2x9x64x64xbf16, #tpu.memory_space<vmem>>, vector<1x1x64x64xbf16>
      %32 = vector.shape_cast %31 : vector<1x1x64x64xbf16> to vector<64x64xbf16>
      %cst_38 = arith.constant dense<0.000000e+00> : vector<4x64xf32>
      %33 = tpu.matmul %30, %32, %cst_38 {dimension_numbers = #tpu.dot_dimension_numbers<[1], [0], [0], [1], [0, 0, 1, 1], [], []>} : vector<4x64xbf16>, vector<64x64xbf16>, vector<4x64xf32> -> vector<4x64xf32>
      %34 = arith.addf %26, %33 : vector<4x64xf32>
      %c1_i32_39 = arith.constant 1 : i32
      %35 = arith.addi %arg9, %c1_i32_39 : i32
      %c0_40 = arith.constant 0 : index
      %36 = arith.index_cast %35 : i32 to index
      %c0_41 = arith.constant 0 : index
      %c0_42 = arith.constant 0 : index
      %37 = vector.load %arg1[%c0_40, %36, %c0_41, %c0_42] : memref<1x6x6x64xbf16, #tpu.memory_space<vmem>>, vector<1x1x4x64xbf16>
      %38 = vector.shape_cast %37 : vector<1x1x4x64xbf16> to vector<4x64xbf16>
      %c0_43 = arith.constant 0 : index
      %c3 = arith.constant 3 : index
      %c0_44 = arith.constant 0 : index
      %c0_45 = arith.constant 0 : index
      %39 = vector.load %arg2[%c0_43, %c3, %c0_44, %c0_45] : memref<2x9x64x64xbf16, #tpu.memory_space<vmem>>, vector<1x1x64x64xbf16>
      %40 = vector.shape_cast %39 : vector<1x1x64x64xbf16> to vector<64x64xbf16>
      %cst_46 = arith.constant dense<0.000000e+00> : vector<4x64xf32>
      %41 = tpu.matmul %38, %40, %cst_46 {dimension_numbers = #tpu.dot_dimension_numbers<[1], [0], [0], [1], [0, 0, 1, 1], [], []>} : vector<4x64xbf16>, vector<64x64xbf16>, vector<4x64xf32> -> vector<4x64xf32>
      %42 = arith.addf %34, %41 : vector<4x64xf32>
      %c1_i32_47 = arith.constant 1 : i32
      %43 = arith.addi %arg9, %c1_i32_47 : i32
      %c0_48 = arith.constant 0 : index
      %44 = arith.index_cast %43 : i32 to index
      %c1_49 = arith.constant 1 : index
      %c0_50 = arith.constant 0 : index
      %45 = vector.load %arg1[%c0_48, %44, %c1_49, %c0_50] : memref<1x6x6x64xbf16, #tpu.memory_space<vmem>>, vector<1x1x4x64xbf16>
      %46 = vector.shape_cast %45 : vector<1x1x4x64xbf16> to vector<4x64xbf16>
      %c0_51 = arith.constant 0 : index
      %c4 = arith.constant 4 : index
      %c0_52 = arith.constant 0 : index
      %c0_53 = arith.constant 0 : index
      %47 = vector.load %arg2[%c0_51, %c4, %c0_52, %c0_53] : memref<2x9x64x64xbf16, #tpu.memory_space<vmem>>, vector<1x1x64x64xbf16>
      %48 = vector.shape_cast %47 : vector<1x1x64x64xbf16> to vector<64x64xbf16>
      %cst_54 = arith.constant dense<0.000000e+00> : vector<4x64xf32>
      %49 = tpu.matmul %46, %48, %cst_54 {dimension_numbers = #tpu.dot_dimension_numbers<[1], [0], [0], [1], [0, 0, 1, 1], [], []>} : vector<4x64xbf16>, vector<64x64xbf16>, vector<4x64xf32> -> vector<4x64xf32>
      %50 = arith.addf %42, %49 : vector<4x64xf32>
      %c1_i32_55 = arith.constant 1 : i32
      %51 = arith.addi %arg9, %c1_i32_55 : i32
      %c0_56 = arith.constant 0 : index
      %52 = arith.index_cast %51 : i32 to index
      %c2_57 = arith.constant 2 : index
      %c0_58 = arith.constant 0 : index
      %53 = vector.load %arg1[%c0_56, %52, %c2_57, %c0_58] : memref<1x6x6x64xbf16, #tpu.memory_space<vmem>>, vector<1x1x4x64xbf16>
      %54 = vector.shape_cast %53 : vector<1x1x4x64xbf16> to vector<4x64xbf16>
      %c0_59 = arith.constant 0 : index
      %c5 = arith.constant 5 : index
      %c0_60 = arith.constant 0 : index
      %c0_61 = arith.constant 0 : index
      %55 = vector.load %arg2[%c0_59, %c5, %c0_60, %c0_61] : memref<2x9x64x64xbf16, #tpu.memory_space<vmem>>, vector<1x1x64x64xbf16>
      %56 = vector.shape_cast %55 : vector<1x1x64x64xbf16> to vector<64x64xbf16>
      %cst_62 = arith.constant dense<0.000000e+00> : vector<4x64xf32>
      %57 = tpu.matmul %54, %56, %cst_62 {dimension_numbers = #tpu.dot_dimension_numbers<[1], [0], [0], [1], [0, 0, 1, 1], [], []>} : vector<4x64xbf16>, vector<64x64xbf16>, vector<4x64xf32> -> vector<4x64xf32>
      %58 = arith.addf %50, %57 : vector<4x64xf32>
      %c2_i32 = arith.constant 2 : i32
      %59 = arith.addi %arg9, %c2_i32 : i32
      %c0_63 = arith.constant 0 : index
      %60 = arith.index_cast %59 : i32 to index
      %c0_64 = arith.constant 0 : index
      %c0_65 = arith.constant 0 : index
      %61 = vector.load %arg1[%c0_63, %60, %c0_64, %c0_65] : memref<1x6x6x64xbf16, #tpu.memory_space<vmem>>, vector<1x1x4x64xbf16>
      %62 = vector.shape_cast %61 : vector<1x1x4x64xbf16> to vector<4x64xbf16>
      %c0_66 = arith.constant 0 : index
      %c6 = arith.constant 6 : index
      %c0_67 = arith.constant 0 : index
      %c0_68 = arith.constant 0 : index
      %63 = vector.load %arg2[%c0_66, %c6, %c0_67, %c0_68] : memref<2x9x64x64xbf16, #tpu.memory_space<vmem>>, vector<1x1x64x64xbf16>
      %64 = vector.shape_cast %63 : vector<1x1x64x64xbf16> to vector<64x64xbf16>
      %cst_69 = arith.constant dense<0.000000e+00> : vector<4x64xf32>
      %65 = tpu.matmul %62, %64, %cst_69 {dimension_numbers = #tpu.dot_dimension_numbers<[1], [0], [0], [1], [0, 0, 1, 1], [], []>} : vector<4x64xbf16>, vector<64x64xbf16>, vector<4x64xf32> -> vector<4x64xf32>
      %66 = arith.addf %58, %65 : vector<4x64xf32>
      %c2_i32_70 = arith.constant 2 : i32
      %67 = arith.addi %arg9, %c2_i32_70 : i32
      %c0_71 = arith.constant 0 : index
      %68 = arith.index_cast %67 : i32 to index
      %c1_72 = arith.constant 1 : index
      %c0_73 = arith.constant 0 : index
      %69 = vector.load %arg1[%c0_71, %68, %c1_72, %c0_73] : memref<1x6x6x64xbf16, #tpu.memory_space<vmem>>, vector<1x1x4x64xbf16>
      %70 = vector.shape_cast %69 : vector<1x1x4x64xbf16> to vector<4x64xbf16>
      %c0_74 = arith.constant 0 : index
      %c7 = arith.constant 7 : index
      %c0_75 = arith.constant 0 : index
      %c0_76 = arith.constant 0 : index
      %71 = vector.load %arg2[%c0_74, %c7, %c0_75, %c0_76] : memref<2x9x64x64xbf16, #tpu.memory_space<vmem>>, vector<1x1x64x64xbf16>
      %72 = vector.shape_cast %71 : vector<1x1x64x64xbf16> to vector<64x64xbf16>
      %cst_77 = arith.constant dense<0.000000e+00> : vector<4x64xf32>
      %73 = tpu.matmul %70, %72, %cst_77 {dimension_numbers = #tpu.dot_dimension_numbers<[1], [0], [0], [1], [0, 0, 1, 1], [], []>} : vector<4x64xbf16>, vector<64x64xbf16>, vector<4x64xf32> -> vector<4x64xf32>
      %74 = arith.addf %66, %73 : vector<4x64xf32>
      %c2_i32_78 = arith.constant 2 : i32
      %75 = arith.addi %arg9, %c2_i32_78 : i32
      %c0_79 = arith.constant 0 : index
      %76 = arith.index_cast %75 : i32 to index
      %c2_80 = arith.constant 2 : index
      %c0_81 = arith.constant 0 : index
      %77 = vector.load %arg1[%c0_79, %76, %c2_80, %c0_81] : memref<1x6x6x64xbf16, #tpu.memory_space<vmem>>, vector<1x1x4x64xbf16>
      %78 = vector.shape_cast %77 : vector<1x1x4x64xbf16> to vector<4x64xbf16>
      %c0_82 = arith.constant 0 : index
      %c8 = arith.constant 8 : index
      %c0_83 = arith.constant 0 : index
      %c0_84 = arith.constant 0 : index
      %79 = vector.load %arg2[%c0_82, %c8, %c0_83, %c0_84] : memref<2x9x64x64xbf16, #tpu.memory_space<vmem>>, vector<1x1x64x64xbf16>
      %80 = vector.shape_cast %79 : vector<1x1x64x64xbf16> to vector<64x64xbf16>
      %cst_85 = arith.constant dense<0.000000e+00> : vector<4x64xf32>
      %81 = tpu.matmul %78, %80, %cst_85 {dimension_numbers = #tpu.dot_dimension_numbers<[1], [0], [0], [1], [0, 0, 1, 1], [], []>} : vector<4x64xbf16>, vector<64x64xbf16>, vector<4x64xf32> -> vector<4x64xf32>
      %82 = arith.addf %74, %81 : vector<4x64xf32>
      %cst_86 = arith.constant 0.000000e+00 : f32
      %83 = vector.broadcast %cst_86 : f32 to vector<4x64xf32>
      %84 = arith.maximumf %82, %83 : vector<4x64xf32>
      %85 = arith.truncf %84 : vector<4x64xf32> to vector<4x64xbf16>
      %86 = tpu.concatenate %2, %85, %2 in 0 : vector<1x64xbf16>, vector<4x64xbf16>, vector<1x64xbf16> -> vector<6x64xbf16>
      %c1_i32_87 = arith.constant 1 : i32
      %87 = arith.addi %arg9, %c1_i32_87 : i32
      %88 = arith.index_cast %87 : i32 to index
      %c0_88 = arith.constant 0 : index
      %c0_89 = arith.constant 0 : index
      %89 = vector.load %arg8[%88, %c0_88, %c0_89] : memref<6x6x64xbf16, #tpu.memory_space<vmem>>, vector<1x6x64xbf16>
      %90 = vector.shape_cast %89 : vector<1x6x64xbf16> to vector<6x64xbf16>
      %91 = vector.shape_cast %86 : vector<6x64xbf16> to vector<1x6x64xbf16>
      tpu.vector_store %arg8[%88, %c0_88, %c0_89], %91 {strides = array<i32>} : memref<6x6x64xbf16, #tpu.memory_space<vmem>>, vector<1x6x64xbf16>,
    }
    %c4_i32_5 = arith.constant 4 : i32
    %c0_i32_6 = arith.constant 0 : i32
    %c4_i32_7 = arith.constant 4 : i32
    %5 = arith.addi %c0_i32_6, %c4_i32_7 : i32
    %c1_i32_8 = arith.constant 1 : i32
    scf.for %arg9 = %c0_i32_6 to %5 step %c1_i32_8  : i32 {
      %cst_10 = arith.constant 0.000000e+00 : f32
      %6 = vector.broadcast %cst_10 : f32 to vector<4x64xf32>
      %c1 = arith.constant 1 : index
      %c0_11 = arith.constant 0 : index
      %c0_12 = arith.constant 0 : index
      %7 = vector.load %arg3[%c1, %c0_11, %c0_12] : memref<2x1x64xf32, #tpu.memory_space<vmem>>, vector<1x1x64xf32>
      %8 = vector.shape_cast %7 : vector<1x1x64xf32> to vector<1x64xf32>
      %9 = vector.broadcast %8 : vector<1x64xf32> to vector<4x64xf32>
      %10 = arith.addf %6, %9 : vector<4x64xf32>
      %c0_i32_13 = arith.constant 0 : i32
      %11 = arith.addi %arg9, %c0_i32_13 : i32
      %12 = arith.index_cast %11 : i32 to index
      %c0_14 = arith.constant 0 : index
      %c0_15 = arith.constant 0 : index
      %13 = vector.load %arg8[%12, %c0_14, %c0_15] : memref<6x6x64xbf16, #tpu.memory_space<vmem>>, vector<1x4x64xbf16>
      %14 = vector.shape_cast %13 : vector<1x4x64xbf16> to vector<4x64xbf16>
      %c1_16 = arith.constant 1 : index
      %c0_17 = arith.constant 0 : index
      %c0_18 = arith.constant 0 : index
      %c0_19 = arith.constant 0 : index
      %15 = vector.load %arg2[%c1_16, %c0_17, %c0_18, %c0_19] : memref<2x9x64x64xbf16, #tpu.memory_space<vmem>>, vector<1x1x64x64xbf16>
      %16 = vector.shape_cast %15 : vector<1x1x64x64xbf16> to vector<64x64xbf16>
      %cst_20 = arith.constant dense<0.000000e+00> : vector<4x64xf32>
      %17 = tpu.matmul %14, %16, %cst_20 {dimension_numbers = #tpu.dot_dimension_numbers<[1], [0], [0], [1], [0, 0, 1, 1], [], []>} : vector<4x64xbf16>, vector<64x64xbf16>, vector<4x64xf32> -> vector<4x64xf32>
      %18 = arith.addf %10, %17 : vector<4x64xf32>
      %c0_i32_21 = arith.constant 0 : i32
      %19 = arith.addi %arg9, %c0_i32_21 : i32
      %20 = arith.index_cast %19 : i32 to index
      %c1_22 = arith.constant 1 : index
      %c0_23 = arith.constant 0 : index
      %21 = vector.load %arg8[%20, %c1_22, %c0_23] : memref<6x6x64xbf16, #tpu.memory_space<vmem>>, vector<1x4x64xbf16>
      %22 = vector.shape_cast %21 : vector<1x4x64xbf16> to vector<4x64xbf16>
      %c1_24 = arith.constant 1 : index
      %c1_25 = arith.constant 1 : index
      %c0_26 = arith.constant 0 : index
      %c0_27 = arith.constant 0 : index
      %23 = vector.load %arg2[%c1_24, %c1_25, %c0_26, %c0_27] : memref<2x9x64x64xbf16, #tpu.memory_space<vmem>>, vector<1x1x64x64xbf16>
      %24 = vector.shape_cast %23 : vector<1x1x64x64xbf16> to vector<64x64xbf16>
      %cst_28 = arith.constant dense<0.000000e+00> : vector<4x64xf32>
      %25 = tpu.matmul %22, %24, %cst_28 {dimension_numbers = #tpu.dot_dimension_numbers<[1], [0], [0], [1], [0, 0, 1, 1], [], []>} : vector<4x64xbf16>, vector<64x64xbf16>, vector<4x64xf32> -> vector<4x64xf32>
      %26 = arith.addf %18, %25 : vector<4x64xf32>
      %c0_i32_29 = arith.constant 0 : i32
      %27 = arith.addi %arg9, %c0_i32_29 : i32
      %28 = arith.index_cast %27 : i32 to index
      %c2 = arith.constant 2 : index
      %c0_30 = arith.constant 0 : index
      %29 = vector.load %arg8[%28, %c2, %c0_30] : memref<6x6x64xbf16, #tpu.memory_space<vmem>>, vector<1x4x64xbf16>
      %30 = vector.shape_cast %29 : vector<1x4x64xbf16> to vector<4x64xbf16>
      %c1_31 = arith.constant 1 : index
      %c2_32 = arith.constant 2 : index
      %c0_33 = arith.constant 0 : index
      %c0_34 = arith.constant 0 : index
      %31 = vector.load %arg2[%c1_31, %c2_32, %c0_33, %c0_34] : memref<2x9x64x64xbf16, #tpu.memory_space<vmem>>, vector<1x1x64x64xbf16>
      %32 = vector.shape_cast %31 : vector<1x1x64x64xbf16> to vector<64x64xbf16>
      %cst_35 = arith.constant dense<0.000000e+00> : vector<4x64xf32>
      %33 = tpu.matmul %30, %32, %cst_35 {dimension_numbers = #tpu.dot_dimension_numbers<[1], [0], [0], [1], [0, 0, 1, 1], [], []>} : vector<4x64xbf16>, vector<64x64xbf16>, vector<4x64xf32> -> vector<4x64xf32>
      %34 = arith.addf %26, %33 : vector<4x64xf32>
      %c1_i32_36 = arith.constant 1 : i32
      %35 = arith.addi %arg9, %c1_i32_36 : i32
      %36 = arith.index_cast %35 : i32 to index
      %c0_37 = arith.constant 0 : index
      %c0_38 = arith.constant 0 : index
      %37 = vector.load %arg8[%36, %c0_37, %c0_38] : memref<6x6x64xbf16, #tpu.memory_space<vmem>>, vector<1x4x64xbf16>
      %38 = vector.shape_cast %37 : vector<1x4x64xbf16> to vector<4x64xbf16>
      %c1_39 = arith.constant 1 : index
      %c3 = arith.constant 3 : index
      %c0_40 = arith.constant 0 : index
      %c0_41 = arith.constant 0 : index
      %39 = vector.load %arg2[%c1_39, %c3, %c0_40, %c0_41] : memref<2x9x64x64xbf16, #tpu.memory_space<vmem>>, vector<1x1x64x64xbf16>
      %40 = vector.shape_cast %39 : vector<1x1x64x64xbf16> to vector<64x64xbf16>
      %cst_42 = arith.constant dense<0.000000e+00> : vector<4x64xf32>
      %41 = tpu.matmul %38, %40, %cst_42 {dimension_numbers = #tpu.dot_dimension_numbers<[1], [0], [0], [1], [0, 0, 1, 1], [], []>} : vector<4x64xbf16>, vector<64x64xbf16>, vector<4x64xf32> -> vector<4x64xf32>
      %42 = arith.addf %34, %41 : vector<4x64xf32>
      %c1_i32_43 = arith.constant 1 : i32
      %43 = arith.addi %arg9, %c1_i32_43 : i32
      %44 = arith.index_cast %43 : i32 to index
      %c1_44 = arith.constant 1 : index
      %c0_45 = arith.constant 0 : index
      %45 = vector.load %arg8[%44, %c1_44, %c0_45] : memref<6x6x64xbf16, #tpu.memory_space<vmem>>, vector<1x4x64xbf16>
      %46 = vector.shape_cast %45 : vector<1x4x64xbf16> to vector<4x64xbf16>
      %c1_46 = arith.constant 1 : index
      %c4 = arith.constant 4 : index
      %c0_47 = arith.constant 0 : index
      %c0_48 = arith.constant 0 : index
      %47 = vector.load %arg2[%c1_46, %c4, %c0_47, %c0_48] : memref<2x9x64x64xbf16, #tpu.memory_space<vmem>>, vector<1x1x64x64xbf16>
      %48 = vector.shape_cast %47 : vector<1x1x64x64xbf16> to vector<64x64xbf16>
      %cst_49 = arith.constant dense<0.000000e+00> : vector<4x64xf32>
      %49 = tpu.matmul %46, %48, %cst_49 {dimension_numbers = #tpu.dot_dimension_numbers<[1], [0], [0], [1], [0, 0, 1, 1], [], []>} : vector<4x64xbf16>, vector<64x64xbf16>, vector<4x64xf32> -> vector<4x64xf32>
      %50 = arith.addf %42, %49 : vector<4x64xf32>
      %c1_i32_50 = arith.constant 1 : i32
      %51 = arith.addi %arg9, %c1_i32_50 : i32
      %52 = arith.index_cast %51 : i32 to index
      %c2_51 = arith.constant 2 : index
      %c0_52 = arith.constant 0 : index
      %53 = vector.load %arg8[%52, %c2_51, %c0_52] : memref<6x6x64xbf16, #tpu.memory_space<vmem>>, vector<1x4x64xbf16>
      %54 = vector.shape_cast %53 : vector<1x4x64xbf16> to vector<4x64xbf16>
      %c1_53 = arith.constant 1 : index
      %c5 = arith.constant 5 : index
      %c0_54 = arith.constant 0 : index
      %c0_55 = arith.constant 0 : index
      %55 = vector.load %arg2[%c1_53, %c5, %c0_54, %c0_55] : memref<2x9x64x64xbf16, #tpu.memory_space<vmem>>, vector<1x1x64x64xbf16>
      %56 = vector.shape_cast %55 : vector<1x1x64x64xbf16> to vector<64x64xbf16>
      %cst_56 = arith.constant dense<0.000000e+00> : vector<4x64xf32>
      %57 = tpu.matmul %54, %56, %cst_56 {dimension_numbers = #tpu.dot_dimension_numbers<[1], [0], [0], [1], [0, 0, 1, 1], [], []>} : vector<4x64xbf16>, vector<64x64xbf16>, vector<4x64xf32> -> vector<4x64xf32>
      %58 = arith.addf %50, %57 : vector<4x64xf32>
      %c2_i32 = arith.constant 2 : i32
      %59 = arith.addi %arg9, %c2_i32 : i32
      %60 = arith.index_cast %59 : i32 to index
      %c0_57 = arith.constant 0 : index
      %c0_58 = arith.constant 0 : index
      %61 = vector.load %arg8[%60, %c0_57, %c0_58] : memref<6x6x64xbf16, #tpu.memory_space<vmem>>, vector<1x4x64xbf16>
      %62 = vector.shape_cast %61 : vector<1x4x64xbf16> to vector<4x64xbf16>
      %c1_59 = arith.constant 1 : index
      %c6 = arith.constant 6 : index
      %c0_60 = arith.constant 0 : index
      %c0_61 = arith.constant 0 : index
      %63 = vector.load %arg2[%c1_59, %c6, %c0_60, %c0_61] : memref<2x9x64x64xbf16, #tpu.memory_space<vmem>>, vector<1x1x64x64xbf16>
      %64 = vector.shape_cast %63 : vector<1x1x64x64xbf16> to vector<64x64xbf16>
      %cst_62 = arith.constant dense<0.000000e+00> : vector<4x64xf32>
      %65 = tpu.matmul %62, %64, %cst_62 {dimension_numbers = #tpu.dot_dimension_numbers<[1], [0], [0], [1], [0, 0, 1, 1], [], []>} : vector<4x64xbf16>, vector<64x64xbf16>, vector<4x64xf32> -> vector<4x64xf32>
      %66 = arith.addf %58, %65 : vector<4x64xf32>
      %c2_i32_63 = arith.constant 2 : i32
      %67 = arith.addi %arg9, %c2_i32_63 : i32
      %68 = arith.index_cast %67 : i32 to index
      %c1_64 = arith.constant 1 : index
      %c0_65 = arith.constant 0 : index
      %69 = vector.load %arg8[%68, %c1_64, %c0_65] : memref<6x6x64xbf16, #tpu.memory_space<vmem>>, vector<1x4x64xbf16>
      %70 = vector.shape_cast %69 : vector<1x4x64xbf16> to vector<4x64xbf16>
      %c1_66 = arith.constant 1 : index
      %c7 = arith.constant 7 : index
      %c0_67 = arith.constant 0 : index
      %c0_68 = arith.constant 0 : index
      %71 = vector.load %arg2[%c1_66, %c7, %c0_67, %c0_68] : memref<2x9x64x64xbf16, #tpu.memory_space<vmem>>, vector<1x1x64x64xbf16>
      %72 = vector.shape_cast %71 : vector<1x1x64x64xbf16> to vector<64x64xbf16>
      %cst_69 = arith.constant dense<0.000000e+00> : vector<4x64xf32>
      %73 = tpu.matmul %70, %72, %cst_69 {dimension_numbers = #tpu.dot_dimension_numbers<[1], [0], [0], [1], [0, 0, 1, 1], [], []>} : vector<4x64xbf16>, vector<64x64xbf16>, vector<4x64xf32> -> vector<4x64xf32>
      %74 = arith.addf %66, %73 : vector<4x64xf32>
      %c2_i32_70 = arith.constant 2 : i32
      %75 = arith.addi %arg9, %c2_i32_70 : i32
      %76 = arith.index_cast %75 : i32 to index
      %c2_71 = arith.constant 2 : index
      %c0_72 = arith.constant 0 : index
      %77 = vector.load %arg8[%76, %c2_71, %c0_72] : memref<6x6x64xbf16, #tpu.memory_space<vmem>>, vector<1x4x64xbf16>
      %78 = vector.shape_cast %77 : vector<1x4x64xbf16> to vector<4x64xbf16>
      %c1_73 = arith.constant 1 : index
      %c8 = arith.constant 8 : index
      %c0_74 = arith.constant 0 : index
      %c0_75 = arith.constant 0 : index
      %79 = vector.load %arg2[%c1_73, %c8, %c0_74, %c0_75] : memref<2x9x64x64xbf16, #tpu.memory_space<vmem>>, vector<1x1x64x64xbf16>
      %80 = vector.shape_cast %79 : vector<1x1x64x64xbf16> to vector<64x64xbf16>
      %cst_76 = arith.constant dense<0.000000e+00> : vector<4x64xf32>
      %81 = tpu.matmul %78, %80, %cst_76 {dimension_numbers = #tpu.dot_dimension_numbers<[1], [0], [0], [1], [0, 0, 1, 1], [], []>} : vector<4x64xbf16>, vector<64x64xbf16>, vector<4x64xf32> -> vector<4x64xf32>
      %82 = arith.addf %74, %81 : vector<4x64xf32>
      %cst_77 = arith.constant 0.000000e+00 : f32
      %83 = vector.broadcast %cst_77 : f32 to vector<4x64xf32>
      %84 = arith.maximumf %82, %83 : vector<4x64xf32>
      %85 = arith.truncf %84 : vector<4x64xf32> to vector<4x64xbf16>
      %c0_78 = arith.constant 0 : index
      %86 = arith.index_cast %arg9 : i32 to index
      %c0_79 = arith.constant 0 : index
      %c0_80 = arith.constant 0 : index
      %87 = vector.load %arg6[%c0_78, %86, %c0_79, %c0_80] : memref<1x4x4x64xbf16, #tpu.memory_space<vmem>>, vector<1x1x4x64xbf16>
      %88 = vector.shape_cast %87 : vector<1x1x4x64xbf16> to vector<4x64xbf16>
      %89 = vector.shape_cast %85 : vector<4x64xbf16> to vector<1x1x4x64xbf16>
      tpu.vector_store %arg6[%c0_78, %86, %c0_79, %c0_80], %89 {strides = array<i32>} : memref<1x4x4x64xbf16, #tpu.memory_space<vmem>>, vector<1x1x4x64xbf16>,
      %c0_81 = arith.constant 0 : index
      %c0_82 = arith.constant 0 : index
      %90 = vector.load %arg4[%c0_81, %c0_82] : memref<64x1024xbf16, #tpu.memory_space<vmem>>, vector<64x1024xbf16>
      %cst_83 = arith.constant dense<0.000000e+00> : vector<4x1024xf32>
      %91 = tpu.matmul %85, %90, %cst_83 {dimension_numbers = #tpu.dot_dimension_numbers<[1], [0], [0], [1], [0, 0, 1, 1], [], []>} : vector<4x64xbf16>, vector<64x1024xbf16>, vector<4x1024xf32> -> vector<4x1024xf32>
      %92 = vector.broadcast %3 : vector<1x1024xf32> to vector<4x1024xf32>
      %93 = arith.addf %91, %92 : vector<4x1024xf32>
      %cst_84 = arith.constant 0.000000e+00 : f32
      %94 = vector.broadcast %cst_84 : f32 to vector<4x1024xf32>
      %95 = arith.maximumf %93, %94 : vector<4x1024xf32>
      %96 = arith.truncf %95 : vector<4x1024xf32> to vector<4x1024xbf16>
      %c0_85 = arith.constant 0 : index
      %97 = arith.index_cast %arg9 : i32 to index
      %c0_86 = arith.constant 0 : index
      %c0_87 = arith.constant 0 : index
      %98 = vector.load %arg7[%c0_85, %97, %c0_86, %c0_87] : memref<1x4x4x1024xbf16, #tpu.memory_space<vmem>>, vector<1x1x4x1024xbf16>
      %99 = vector.shape_cast %98 : vector<1x1x4x1024xbf16> to vector<4x1024xbf16>
      %100 = vector.shape_cast %96 : vector<4x1024xbf16> to vector<1x1x4x1024xbf16>
      tpu.vector_store %arg7[%c0_85, %97, %c0_86, %c0_87], %100 {strides = array<i32>} : memref<1x4x4x1024xbf16, #tpu.memory_space<vmem>>, vector<1x1x4x1024xbf16>,
    }
    %c4_i32_9 = arith.constant 4 : i32
    return
  }
  func.func @transform_0(%arg0: i32) -> (i32, i32, i32, i32) {
    %c0_i32 = arith.constant 0 : i32
    %c0_i32_0 = arith.constant 0 : i32
    %c0_i32_1 = arith.constant 0 : i32
    %c0_i32_2 = arith.constant 0 : i32
    return %arg0, %c0_i32, %c0_i32_0, %c0_i32_1 : i32, i32, i32, i32
  }
  func.func @transform_1(%arg0: i32) -> (i32, i32, i32, i32) {
    %c0_i32 = arith.constant 0 : i32
    %c0_i32_0 = arith.constant 0 : i32
    %c0_i32_1 = arith.constant 0 : i32
    %c0_i32_2 = arith.constant 0 : i32
    %c0_i32_3 = arith.constant 0 : i32
    return %c0_i32, %c0_i32_0, %c0_i32_1, %c0_i32_2 : i32, i32, i32, i32
  }
  func.func @transform_2(%arg0: i32) -> (i32, i32, i32) {
    %c0_i32 = arith.constant 0 : i32
    %c0_i32_0 = arith.constant 0 : i32
    %c0_i32_1 = arith.constant 0 : i32
    %c0_i32_2 = arith.constant 0 : i32
    return %c0_i32, %c0_i32_0, %c0_i32_1 : i32, i32, i32
  }
  func.func @transform_3(%arg0: i32) -> (i32, i32) {
    %c0_i32 = arith.constant 0 : i32
    %c0_i32_0 = arith.constant 0 : i32
    %c0_i32_1 = arith.constant 0 : i32
    return %c0_i32, %c0_i32_0 : i32, i32
  }
  func.func @transform_4(%arg0: i32) -> (i32, i32) {
    %c0_i32 = arith.constant 0 : i32
    %c0_i32_0 = arith.constant 0 : i32
    %c0_i32_1 = arith.constant 0 : i32
    return %c0_i32, %c0_i32_0 : i32, i32
  }
  func.func @transform_5(%arg0: i32) -> (i32, i32, i32, i32) {
    %c0_i32 = arith.constant 0 : i32
    %c0_i32_0 = arith.constant 0 : i32
    %c0_i32_1 = arith.constant 0 : i32
    %c0_i32_2 = arith.constant 0 : i32
    return %arg0, %c0_i32, %c0_i32_0, %c0_i32_1 : i32, i32, i32, i32
  }
  func.func @transform_6(%arg0: i32) -> (i32, i32, i32, i32) {
    %c0_i32 = arith.constant 0 : i32
    %c0_i32_0 = arith.constant 0 : i32
    %c0_i32_1 = arith.constant 0 : i32
    %c0_i32_2 = arith.constant 0 : i32
    return %arg0, %c0_i32, %c0_i32_0, %c0_i32_1 : i32, i32, i32, i32
  }
}

module attributes {stable_mosaic.version = 11 : i64} {
  func.func @_matmul_bias_kernel(%arg0: i32, %arg1: memref<256x192xbf16, #tpu.memory_space<vmem>>, %arg2: memref<192x16xbf16, #tpu.memory_space<vmem>>, %arg3: memref<1x16xf32, #tpu.memory_space<vmem>>, %arg4: memref<256x16xf32, #tpu.memory_space<vmem>>) attributes {dimension_semantics = [#tpu.dimension_semantics<parallel>], iteration_bounds = array<i64: 2>, scalar_prefetch = 0 : i64, scratch_operands = 0 : i64, tpu.core_type = #tpu.core_type<tc>, window_params = [{transform_indices = @transform_0, window_bounds = array<i64: 256, 192>}, {pipeline_mode = #tpu.pipeline_mode<synchronous>, transform_indices = @transform_1, window_bounds = array<i64: 192, 16>}, {pipeline_mode = #tpu.pipeline_mode<synchronous>, transform_indices = @transform_2, window_bounds = array<i64: 1, 16>}, {transform_indices = @transform_3, window_bounds = array<i64: 256, 16>}]} {
    %c0 = arith.constant 0 : index
    %c0_0 = arith.constant 0 : index
    %0 = vector.load %arg1[%c0, %c0_0] : memref<256x192xbf16, #tpu.memory_space<vmem>>, vector<256x192xbf16>
    %c0_1 = arith.constant 0 : index
    %c0_2 = arith.constant 0 : index
    %1 = vector.load %arg2[%c0_1, %c0_2] : memref<192x16xbf16, #tpu.memory_space<vmem>>, vector<192x16xbf16>
    %cst = arith.constant dense<0.000000e+00> : vector<256x16xf32>
    %2 = tpu.matmul %0, %1, %cst {dimension_numbers = #tpu.dot_dimension_numbers<[1], [0], [0], [1], [0, 0, 1, 1], [], []>} : vector<256x192xbf16>, vector<192x16xbf16>, vector<256x16xf32> -> vector<256x16xf32>
    %c0_3 = arith.constant 0 : index
    %c0_4 = arith.constant 0 : index
    %3 = vector.load %arg3[%c0_3, %c0_4] : memref<1x16xf32, #tpu.memory_space<vmem>>, vector<1x16xf32>
    %4 = vector.broadcast %3 : vector<1x16xf32> to vector<256x16xf32>
    %5 = arith.addf %2, %4 : vector<256x16xf32>
    %c0_5 = arith.constant 0 : index
    %c0_6 = arith.constant 0 : index
    %6 = vector.load %arg4[%c0_5, %c0_6] : memref<256x16xf32, #tpu.memory_space<vmem>>, vector<256x16xf32>
    tpu.vector_store %arg4[%c0_5, %c0_6], %5 {strides = array<i32>} : memref<256x16xf32, #tpu.memory_space<vmem>>, vector<256x16xf32>,
    return
  }
  func.func @transform_0(%arg0: i32) -> (i32, i32) {
    %c0_i32 = arith.constant 0 : i32
    %c0_i32_0 = arith.constant 0 : i32
    return %arg0, %c0_i32 : i32, i32
  }
  func.func @transform_1(%arg0: i32) -> (i32, i32) {
    %c0_i32 = arith.constant 0 : i32
    %c0_i32_0 = arith.constant 0 : i32
    %c0_i32_1 = arith.constant 0 : i32
    return %c0_i32, %c0_i32_0 : i32, i32
  }
  func.func @transform_2(%arg0: i32) -> (i32, i32) {
    %c0_i32 = arith.constant 0 : i32
    %c0_i32_0 = arith.constant 0 : i32
    %c0_i32_1 = arith.constant 0 : i32
    return %c0_i32, %c0_i32_0 : i32, i32
  }
  func.func @transform_3(%arg0: i32) -> (i32, i32) {
    %c0_i32 = arith.constant 0 : i32
    %c0_i32_0 = arith.constant 0 : i32
    return %arg0, %c0_i32 : i32, i32
  }
}

</mosaic_0001>

<llo_original>
// kernel: rpnv2_forward.7
$region0: #{rpnv2_forward.7}
  #allocation0 [shape = 'u32[]', space=smem, size = 0x4, offset = 0x4, fixed_abs, tag = 'smem constant byte address 0x4 - core index']
  #allocation1 [shape = 'u32[144,128]{1,0:T(1,128)}', space=vmem, size = 0x12000, scoped, tag = 'internal scratch']
  %s0 = inlined_call_operand.vmem [shape: bf16[128,288], index: 0, kind: input, shape index: {}]
  %s1 = inlined_call_operand.vmem [shape: bf16[288,64], index: 1, kind: input, shape index: {}]
  %s2 = inlined_call_operand.vmem [shape: f32[1,64], index: 2, kind: input, shape index: {}]
  %s3 = inlined_call_operand.vmem [shape: bf16[128,64], index: 3, kind: output, shape index: {}]
  %s4 = sld [smem:[#allocation0]]
  $region22: #{rpnv2_forward.7} parent=0
    _
  %s6 = ssub.s32 1, %s4
  %s7 = scalar_select 0, %s6, %s4
  // Predicated region
  $region2: #{rpnv2_forward.7} parent=0 // pred_check
    _
  $region3: #{rpnv2_forward.7} parent=0 // pred_check_branch
    %9 = sbr.rel (0) target = $region5
  $region4: #{rpnv2_forward.7} parent=0 // pred_region
    _
  $region5: #{rpnv2_forward.7} parent=0 // pred_fallthru
    _
  // Predicated region
  $region6: #{rpnv2_forward.7} parent=0 // pred_check
    _
  $region7: #{rpnv2_forward.7} parent=0 // pred_check_branch
    %11 = sbr.rel (0) target = $region9
  $region8: #{rpnv2_forward.7} parent=0 // pred_region
    _
  $region9: #{rpnv2_forward.7} parent=0 // pred_fallthru
    _
  // Predicated region
  $region10: #{rpnv2_forward.7} parent=0 // pred_check
    _
  $region11: #{rpnv2_forward.7} parent=0 // pred_check_branch
    %13 = sbr.rel (0) target = $region13
  $region12: #{rpnv2_forward.7} parent=0 // pred_region
    _
  $region13: #{rpnv2_forward.7} parent=0 // pred_fallthru
    _
  %v15 = vld [vmem:[%s0] sm:$0xff]
  %v16 = vld [vmem:[%s0 + $0x8] sm:$0xf]
  %v17 = vld [vmem:[%s0 + $0xc] sm:$0xff]
  %v18 = vld [vmem:[%s0 + $0x14] sm:$0xf]
  %v19 = vld [vmem:[%s0 + $0x18] sm:$0xff]
  %v20 = vld [vmem:[%s0 + $0x20] sm:$0xf]
  %v21 = vld [vmem:[%s0 + $0x24] sm:$0xff]
  %v22 = vld [vmem:[%s0 + $0x2c] sm:$0xf]
  %v23 = vld [vmem:[%s0 + $0x30] sm:$0xff]
  %v24 = vld [vmem:[%s0 + $0x38] sm:$0xf]
  %v25 = vld [vmem:[%s0 + $0x3c] sm:$0xff]
  %v26 = vld [vmem:[%s0 + $0x44] sm:$0xf]
  %v27 = vld [vmem:[%s0 + $0x48] sm:$0xff]
  %v28 = vld [vmem:[%s0 + $0x50] sm:$0xf]
  %v29 = vld [vmem:[%s0 + $0x54] sm:$0xff]
  %v30 = vld [vmem:[%s0 + $0x5c] sm:$0xf]
  %v31 = vld [vmem:[%s0 + $0x60] sm:$0xff]
  %v32 = vld [vmem:[%s0 + $0x68] sm:$0xf]
  %v33 = vld [vmem:[%s0 + $0x6c] sm:$0xff]
  %v34 = vld [vmem:[%s0 + $0x74] sm:$0xf]
  %v35 = vld [vmem:[%s0 + $0x78] sm:$0xff]
  %v36 = vld [vmem:[%s0 + $0x80] sm:$0xf]
  %v37 = vld [vmem:[%s0 + $0x84] sm:$0xff]
  %v38 = vld [vmem:[%s0 + $0x8c] sm:$0xf]
  %v39 = vld [vmem:[%s0 + $0x90] sm:$0xff]
  %v40 = vld [vmem:[%s0 + $0x98] sm:$0xf]
  %v41 = vld [vmem:[%s0 + $0x9c] sm:$0xff]
  %v42 = vld [vmem:[%s0 + $0xa4] sm:$0xf]
  %v43 = vld [vmem:[%s0 + $0xa8] sm:$0xff]
  %v44 = vld [vmem:[%s0 + $0xb0] sm:$0xf]
  %v45 = vld [vmem:[%s0 + $0xb4] sm:$0xff]
  %v46 = vld [vmem:[%s0 + $0xbc] sm:$0xf]
  %v47 = vld [vmem:[%s1] sm:$0xf]
  %v48 = vld [vmem:[%s1 + $0x4] sm:$0xf]
  %v49 = vld [vmem:[%s1 + $0x8] sm:$0xf]
  %v50 = vld [vmem:[%s1 + $0xc] sm:$0xf]
  %v51 = vld [vmem:[%s1 + $0x10] sm:$0xf]
  %v52 = vld [vmem:[%s1 + $0x14] sm:$0xf]
  %v53 = vld [vmem:[%s1 + $0x18] sm:$0xf]
  %v54 = vld [vmem:[%s1 + $0x1c] sm:$0xf]
  %v55 = vld [vmem:[%s1 + $0x20] sm:$0xf]
  %v56 = vld [vmem:[%s1 + $0x24] sm:$0xf]
  %v57 = vld [vmem:[%s1 + $0x28] sm:$0xf]
  %v58 = vld [vmem:[%s1 + $0x2c] sm:$0xf]
  %v59 = vld [vmem:[%s1 + $0x30] sm:$0xf]
  %v60 = vld [vmem:[%s1 + $0x34] sm:$0xf]
  %v61 = vld [vmem:[%s1 + $0x38] sm:$0xf]
  %v62 = vld [vmem:[%s1 + $0x3c] sm:$0xf]
  %v63 = vld [vmem:[%s1 + $0x40] sm:$0xf]
  %v64 = vld [vmem:[%s1 + $0x44] sm:$0xf]
  %v65 = vld [vmem:[%s1 + $0x48] sm:$0xf]
  %v66 = vld [vmem:[%s1 + $0x4c] sm:$0xf]
  %v67 = vld [vmem:[%s1 + $0x50] sm:$0xf]
  %v68 = vld [vmem:[%s1 + $0x54] sm:$0xf]
  %v69 = vld [vmem:[%s1 + $0x58] sm:$0xf]
  %v70 = vld [vmem:[%s1 + $0x5c] sm:$0xf]
  %v71 = vld [vmem:[%s1 + $0x60] sm:$0xf]
  %v72 = vld [vmem:[%s1 + $0x64] sm:$0xf]
  %v73 = vld [vmem:[%s1 + $0x68] sm:$0xf]
  %v74 = vld [vmem:[%s1 + $0x6c] sm:$0xf]
  %v75 = vld [vmem:[%s1 + $0x70] sm:$0xf]
  %v76 = vld [vmem:[%s1 + $0x74] sm:$0xf]
  %v77 = vld [vmem:[%s1 + $0x78] sm:$0xf]
  %v78 = vld [vmem:[%s1 + $0x7c] sm:$0xf]
  %v79 = vld [vmem:[%s1 + $0x80] sm:$0xf]
  %v80 = vld [vmem:[%s1 + $0x84] sm:$0xf]
  %v81 = vld [vmem:[%s1 + $0x88] sm:$0xf]
  %v82 = vld [vmem:[%s1 + $0x8c] sm:$0xf]
  %v83 = vld [vmem:[%s2] sm:$0x1]
  %v85 = vlaneseq
  %v86 = vshrl.u32 %v85, 7
  %v87 = vsub.s32 0, %v86
  %v88 = vrot.slane %v83, %v87
  %v122 = vunpack.c.l.b16 %v15
  %v123 = vunpack.c.h.b16 %v15
  %v124 = vunpack.c.l.b16 %v16
  %v125 = vunpack.c.l.b16 %v17
  %v126 = vunpack.c.h.b16 %v17
  %v127 = vunpack.c.l.b16 %v18
  %v128 = vunpack.c.l.b16 %v19
  %v129 = vunpack.c.h.b16 %v19
  %v130 = vunpack.c.l.b16 %v20
  %v131 = vunpack.c.l.b16 %v21
  %v132 = vunpack.c.h.b16 %v21
  %v133 = vunpack.c.l.b16 %v22
  %v134 = vunpack.c.l.b16 %v23
  %v135 = vunpack.c.h.b16 %v23
  %v136 = vunpack.c.l.b16 %v24
  %v137 = vunpack.c.l.b16 %v25
  %v138 = vunpack.c.h.b16 %v25
  %v139 = vunpack.c.l.b16 %v26
  %v140 = vunpack.c.l.b16 %v27
  %v141 = vunpack.c.h.b16 %v27
  %v142 = vunpack.c.l.b16 %v28
  %v143 = vunpack.c.l.b16 %v29
  %v144 = vunpack.c.h.b16 %v29
  %v145 = vunpack.c.l.b16 %v30
  %v146 = vunpack.c.l.b16 %v31
  %v147 = vunpack.c.h.b16 %v31
  %v148 = vunpack.c.l.b16 %v32
  %v149 = vunpack.c.l.b16 %v33
  %v150 = vunpack.c.h.b16 %v33
  %v151 = vunpack.c.l.b16 %v34
  %v152 = vunpack.c.l.b16 %v35
  %v153 = vunpack.c.h.b16 %v35
  %v154 = vunpack.c.l.b16 %v36
  %v155 = vunpack.c.l.b16 %v37
  %v156 = vunpack.c.h.b16 %v37
  %v157 = vunpack.c.l.b16 %v38
  %v158 = vunpack.c.l.b16 %v39
  %v159 = vunpack.c.h.b16 %v39
  %v160 = vunpack.c.l.b16 %v40
  %v161 = vunpack.c.l.b16 %v41
  %v162 = vunpack.c.h.b16 %v41
  %v163 = vunpack.c.l.b16 %v42
  %v164 = vunpack.c.l.b16 %v43
  %v165 = vunpack.c.h.b16 %v43
  %v166 = vunpack.c.l.b16 %v44
  %v167 = vunpack.c.l.b16 %v45
  %v168 = vunpack.c.h.b16 %v45
  %v169 = vunpack.c.l.b16 %v46
  %v170 = vpack.c.b16 %v125, %v122
  %v171 = vpack.c.b16 %v126, %v123
  %v172 = vpack.c.b16 %v127, %v124
  %v173 = vpack.c.b16 %v131, %v128
  %v174 = vpack.c.b16 %v132, %v129
  %v175 = vpack.c.b16 %v133, %v130
  %v176 = vpack.c.b16 %v137, %v134
  %v177 = vpack.c.b16 %v138, %v135
  %v178 = vpack.c.b16 %v139, %v136
  %v179 = vpack.c.b16 %v143, %v140
  %v180 = vpack.c.b16 %v144, %v141
  %v181 = vpack.c.b16 %v145, %v142
  %v182 = vpack.c.b16 %v149, %v146
  %v183 = vpack.c.b16 %v150, %v147
  %v184 = vpack.c.b16 %v151, %v148
  %v185 = vpack.c.b16 %v155, %v152
  %v186 = vpack.c.b16 %v156, %v153
  %v187 = vpack.c.b16 %v157, %v154
  %v188 = vpack.c.b16 %v161, %v158
  %v189 = vpack.c.b16 %v162, %v159
  %v190 = vpack.c.b16 %v163, %v160
  %v191 = vpack.c.b16 %v167, %v164
  %v192 = vpack.c.b16 %v168, %v165
  %v193 = vpack.c.b16 %v169, %v166
  %v246 = vunpack.c.l.b16 %v47
  %v247 = vunpack.c.l.b16 %v48
  %v248 = vunpack.c.l.b16 %v49
  %v249 = vunpack.c.l.b16 %v50
  %v250 = vunpack.c.l.b16 %v51
  %v251 = vunpack.c.l.b16 %v52
  %v252 = vunpack.c.l.b16 %v53
  %v253 = vunpack.c.l.b16 %v54
  %v254 = vunpack.c.l.b16 %v55
  %v255 = vunpack.c.l.b16 %v56
  %v256 = vunpack.c.l.b16 %v57
  %v257 = vunpack.c.l.b16 %v58
  %v258 = vunpack.c.l.b16 %v59
  %v259 = vunpack.c.l.b16 %v60
  %v260 = vunpack.c.l.b16 %v61
  %v261 = vunpack.c.l.b16 %v62
  %v262 = vunpack.c.l.b16 %v63
  %v263 = vunpack.c.l.b16 %v64
  %v264 = vunpack.c.l.b16 %v65
  %v265 = vunpack.c.l.b16 %v66
  %v266 = vunpack.c.l.b16 %v67
  %v267 = vunpack.c.l.b16 %v68
  %v268 = vunpack.c.l.b16 %v69
  %v269 = vunpack.c.l.b16 %v70
  %v270 = vunpack.c.l.b16 %v71
  %v271 = vunpack.c.l.b16 %v72
  %v272 = vunpack.c.l.b16 %v73
  %v273 = vunpack.c.l.b16 %v74
  %v274 = vunpack.c.l.b16 %v75
  %v275 = vunpack.c.l.b16 %v76
  %v276 = vunpack.c.l.b16 %v77
  %v277 = vunpack.c.l.b16 %v78
  %v278 = vunpack.c.l.b16 %v79
  %v279 = vunpack.c.l.b16 %v80
  %v280 = vunpack.c.l.b16 %v81
  %v281 = vunpack.c.l.b16 %v82
  %v282 = vpack.c.b16 %v247, %v246
  %v283 = vpack.c.b16 %v249, %v248
  %v284 = vpack.c.b16 %v251, %v250
  %v285 = vpack.c.b16 %v253, %v252
  %v286 = vpack.c.b16 %v255, %v254
  %v287 = vpack.c.b16 %v257, %v256
  %v288 = vpack.c.b16 %v259, %v258
  %v289 = vpack.c.b16 %v261, %v260
  %v290 = vpack.c.b16 %v263, %v262
  %v291 = vpack.c.b16 %v265, %v264
  %v292 = vpack.c.b16 %v267, %v266
  %v293 = vpack.c.b16 %v269, %v268
  %v294 = vpack.c.b16 %v271, %v270
  %v295 = vpack.c.b16 %v273, %v272
  %v296 = vpack.c.b16 %v275, %v274
  %v297 = vpack.c.b16 %v277, %v276
  %v298 = vpack.c.b16 %v279, %v278
  %v299 = vpack.c.b16 %v281, %v280
  %vm318 = vcmask 261120
  %v320 = vsel %vm318, %v172, 0
  %v323 = vsel %vm318, %v175, 0
  %v326 = vsel %vm318, %v178, 0
  %v329 = vsel %vm318, %v181, 0
  %v332 = vsel %vm318, %v184, 0
  %v335 = vsel %vm318, %v187, 0
  %v338 = vsel %vm318, %v190, 0
  %v341 = vsel %vm318, %v193, 0
  %343 = vmatprep.subr.bf16.mxu0 0
  %344 = vmatpush1.bf16.msra.mxu0 %v289
  %345 = vmatprep.subr.bf16.mxu0 0
  %346 = vmatpush1.bf16.msra.mxu0 %v288
  %347 = vmatprep.subr.bf16.mxu0 0
  %348 = vmatpush1.bf16.msra.mxu0 %v287
  %349 = vmatprep.subr.bf16.mxu0 0
  %350 = vmatpush1.bf16.msra.mxu0 %v286
  %351 = vmatprep.subr.bf16.mxu0 0
  %352 = vmatpush1.bf16.msra.mxu0 %v285
  %353 = vmatprep.subr.bf16.mxu0 0
  %354 = vmatpush1.bf16.msra.mxu0 %v284
  %355 = vmatprep.subr.bf16.mxu0 0
  %356 = vmatpush1.bf16.msra.mxu0 %v283
  %357 = vmatprep.subr.bf16.mxu0 0
  %358 = vmatpush1.bf16.msra.mxu0 %v282
  %359 = vmatprep.subr.bf16.mxu0 0
  %360 = vmatpush2.bf16.msra.mxu0 %v297
  %361 = vmatprep.subr.bf16.mxu0 0
  %362 = vmatpush2.bf16.msra.mxu0 %v296
  %363 = vmatprep.subr.bf16.mxu0 0
  %364 = vmatpush2.bf16.msra.mxu0 %v295
  %365 = vmatprep.subr.bf16.mxu0 0
  %366 = vmatpush2.bf16.msra.mxu0 %v294
  %367 = vmatprep.subr.bf16.mxu0 0
  %368 = vmatpush2.bf16.msra.mxu0 %v293
  %369 = vmatprep.subr.bf16.mxu0 0
  %370 = vmatpush2.bf16.msra.mxu0 %v292
  %371 = vmatprep.subr.bf16.mxu0 0
  %372 = vmatpush2.bf16.msra.mxu0 %v291
  %373 = vmatprep.subr.bf16.mxu0 0
  %374 = vmatpush2.bf16.msra.mxu0 %v290
  %375 = vmatprep.mubr.bf16.mxu0 %v171
  %376 = vmatmul.mubr.bf16.gmra.mxu0 %v170
  %v377 = vpop.f32.mrf.mxu0
  %v378 = vadd.f32 %v88, %v377
  %v379 = vpop.f32.mrf.mxu0
  %v380 = vpop.f32.mrf.mxu0
  %v381 = vadd.f32 %v88, %v380
  %v382 = vpop.f32.mrf.mxu0
  %383 = vmatprep.mubr.bf16.mxu0 %v174
  %384 = vmatmul.mubr.bf16.gmra.mxu0 %v173
  %v385 = vpop.f32.mrf.mxu0
  %v386 = vadd.f32 %v88, %v385
  %v387 = vpop.f32.mrf.mxu0
  %v388 = vpop.f32.mrf.mxu0
  %v389 = vadd.f32 %v88, %v388
  %v390 = vpop.f32.mrf.mxu0
  %391 = vmatprep.mubr.bf16.mxu0 %v177
  %392 = vmatmul.mubr.bf16.gmra.mxu0 %v176
  %v393 = vpop.f32.mrf.mxu0
  %v394 = vadd.f32 %v88, %v393
  %v395 = vpop.f32.mrf.mxu0
  %v396 = vpop.f32.mrf.mxu0
  %v397 = vadd.f32 %v88, %v396
  %v398 = vpop.f32.mrf.mxu0
  %399 = vmatprep.mubr.bf16.mxu0 %v180
  %400 = vmatmul.mubr.bf16.gmra.mxu0 %v179
  %v401 = vpop.f32.mrf.mxu0
  %v402 = vadd.f32 %v88, %v401
  %v403 = vpop.f32.mrf.mxu0
  %v404 = vpop.f32.mrf.mxu0
  %v405 = vadd.f32 %v88, %v404
  %v406 = vpop.f32.mrf.mxu0
  %407 = vmatprep.mubr.bf16.mxu0 %v183
  %408 = vmatmul.mubr.bf16.gmra.mxu0 %v182
  %v409 = vpop.f32.mrf.mxu0
  %v410 = vadd.f32 %v88, %v409
  %v411 = vpop.f32.mrf.mxu0
  %v412 = vpop.f32.mrf.mxu0
  %v413 = vadd.f32 %v88, %v412
  %v414 = vpop.f32.mrf.mxu0
  %415 = vmatprep.mubr.bf16.mxu0 %v186
  %416 = vmatmul.mubr.bf16.gmra.mxu0 %v185
  %v417 = vpop.f32.mrf.mxu0
  %v418 = vadd.f32 %v88, %v417
  %v419 = vpop.f32.mrf.mxu0
  %v420 = vpop.f32.mrf.mxu0
  %v421 = vadd.f32 %v88, %v420
  %v422 = vpop.f32.mrf.mxu0
  %423 = vmatprep.mubr.bf16.mxu0 %v189
  %424 = vmatmul.mubr.bf16.gmra.mxu0 %v188
  %v425 = vpop.f32.mrf.mxu0
  %v426 = vadd.f32 %v88, %v425
  %v427 = vpop.f32.mrf.mxu0
  %v428 = vpop.f32.mrf.mxu0
  %v429 = vadd.f32 %v88, %v428
  %v430 = vpop.f32.mrf.mxu0
  %431 = vmatprep.mubr.bf16.mxu0 %v192
  %432 = vmatmul.mubr.bf16.gmra.mxu0 %v191
  %v433 = vpop.f32.mrf.mxu0
  %v434 = vadd.f32 %v88, %v433
  %v435 = vpop.f32.mrf.mxu0
  %v436 = vpop.f32.mrf.mxu0
  %v437 = vadd.f32 %v88, %v436
  %v438 = vpop.f32.mrf.mxu0
  %439 = vdwg.mxu0
  %440 = vmatprep.subr.bf16.mxu0 0
  %441 = vmatpush1.bf16.msra.mxu0 0
  %442 = vmatprep.subr.bf16.mxu0 0
  %443 = vmatpush1.bf16.msra.mxu0 0
  %444 = vmatprep.subr.bf16.mxu0 0
  %445 = vmatpush1.bf16.msra.mxu0 0
  %446 = vmatprep.subr.bf16.mxu0 0
  %447 = vmatpush1.bf16.msra.mxu0 0
  %448 = vmatprep.subr.bf16.mxu0 0
  %449 = vmatpush1.bf16.msra.mxu0 0
  %450 = vmatprep.subr.bf16.mxu0 0
  %451 = vmatpush1.bf16.msra.mxu0 0
  %452 = vmatprep.subr.bf16.mxu0 0
  %453 = vmatpush1.bf16.msra.mxu0 %v299
  %454 = vmatprep.subr.bf16.mxu0 0
  %455 = vmatpush1.bf16.msra.mxu0 %v298
  %456 = vmatprep.subr.bf16.mxu0 0
  %457 = vmatpush2.bf16.msra.mxu0 0
  %458 = vmatprep.subr.bf16.mxu0 0
  %459 = vmatpush2.bf16.msra.mxu0 0
  %460 = vmatprep.subr.bf16.mxu0 0
  %461 = vmatpush2.bf16.msra.mxu0 0
  %462 = vmatprep.subr.bf16.mxu0 0
  %463 = vmatpush2.bf16.msra.mxu0 0
  %464 = vmatprep.subr.bf16.mxu0 0
  %465 = vmatpush2.bf16.msra.mxu0 0
  %466 = vmatprep.subr.bf16.mxu0 0
  %467 = vmatpush2.bf16.msra.mxu0 0
  %468 = vmatprep.subr.bf16.mxu0 0
  %469 = vmatpush2.bf16.msra.mxu0 0
  %470 = vmatprep.subr.bf16.mxu0 0
  %471 = vmatpush2.bf16.msra.mxu0 0
  %472 = vmatprep.mubr.bf16.mxu0 0
  %473 = vmatmul.mubr.bf16.gmra.mxu0 %v320
  %v474 = vpop.f32.mrf.mxu0
  %v475 = vadd.f32 %v378, %v474
  %v476 = vpop.f32.mrf.mxu0
  %v477 = vpop.f32.mrf.mxu0
  %v478 = vadd.f32 %v381, %v477
  %v479 = vpop.f32.mrf.mxu0
  %480 = vmatprep.mubr.bf16.mxu0 0
  %481 = vmatmul.mubr.bf16.gmra.mxu0 %v323
  %v482 = vpop.f32.mrf.mxu0
  %v483 = vadd.f32 %v386, %v482
  %v484 = vpop.f32.mrf.mxu0
  %v485 = vpop.f32.mrf.mxu0
  %v486 = vadd.f32 %v389, %v485
  %v487 = vpop.f32.mrf.mxu0
  %488 = vmatprep.mubr.bf16.mxu0 0
  %489 = vmatmul.mubr.bf16.gmra.mxu0 %v326
  %v490 = vpop.f32.mrf.mxu0
  %v491 = vadd.f32 %v394, %v490
  %v492 = vpop.f32.mrf.mxu0
  %v493 = vpop.f32.mrf.mxu0
  %v494 = vadd.f32 %v397, %v493
  %v495 = vpop.f32.mrf.mxu0
  %496 = vmatprep.mubr.bf16.mxu0 0
  %497 = vmatmul.mubr.bf16.gmra.mxu0 %v329
  %v498 = vpop.f32.mrf.mxu0
  %v499 = vadd.f32 %v402, %v498
  %v500 = vpop.f32.mrf.mxu0
  %v501 = vpop.f32.mrf.mxu0
  %v502 = vadd.f32 %v405, %v501
  %v503 = vpop.f32.mrf.mxu0
  %504 = vmatprep.mubr.bf16.mxu0 0
  %505 = vmatmul.mubr.bf16.gmra.mxu0 %v332
  %v506 = vpop.f32.mrf.mxu0
  %v507 = vadd.f32 %v410, %v506
  %v508 = vpop.f32.mrf.mxu0
  %v509 = vpop.f32.mrf.mxu0
  %v510 = vadd.f32 %v413, %v509
  %v511 = vpop.f32.mrf.mxu0
  %512 = vmatprep.mubr.bf16.mxu0 0
  %513 = vmatmul.mubr.bf16.gmra.mxu0 %v335
  %v514 = vpop.f32.mrf.mxu0
  %v515 = vadd.f32 %v418, %v514
  %v516 = vpop.f32.mrf.mxu0
  %v517 = vpop.f32.mrf.mxu0
  %v518 = vadd.f32 %v421, %v517
  %v519 = vpop.f32.mrf.mxu0
  %520 = vmatprep.mubr.bf16.mxu0 0
  %521 = vmatmul.mubr.bf16.gmra.mxu0 %v338
  %v522 = vpop.f32.mrf.mxu0
  %v523 = vadd.f32 %v426, %v522
  %v524 = vpop.f32.mrf.mxu0
  %v525 = vpop.f32.mrf.mxu0
  %v526 = vadd.f32 %v429, %v525
  %v527 = vpop.f32.mrf.mxu0
  %528 = vmatprep.mubr.bf16.mxu0 0
  %529 = vmatmul.mubr.bf16.gmra.mxu0 %v341
  %v530 = vpop.f32.mrf.mxu0
  %v531 = vadd.f32 %v434, %v530
  %v532 = vpop.f32.mrf.mxu0
  %v533 = vpop.f32.mrf.mxu0
  %v534 = vadd.f32 %v437, %v533
  %v535 = vpop.f32.mrf.mxu0
  %536 = vdwg.mxu0
  %v537 = vmax.f32 %v475, 0.0
  %v538 = vmax.f32 %v478, 0.0
  %v539 = vmax.f32 %v483, 0.0
  %v540 = vmax.f32 %v486, 0.0
  %v541 = vmax.f32 %v491, 0.0
  %v542 = vmax.f32 %v494, 0.0
  %v543 = vmax.f32 %v499, 0.0
  %v544 = vmax.f32 %v502, 0.0
  %v545 = vmax.f32 %v507, 0.0
  %v546 = vmax.f32 %v510, 0.0
  %v547 = vmax.f32 %v515, 0.0
  %v548 = vmax.f32 %v518, 0.0
  %v549 = vmax.f32 %v523, 0.0
  %v550 = vmax.f32 %v526, 0.0
  %v551 = vmax.f32 %v531, 0.0
  %v552 = vmax.f32 %v534, 0.0
  %v553 = vpack.c.bf16 %v538, %v537
  %v554 = vpack.c.bf16 %v540, %v539
  %v555 = vpack.c.bf16 %v542, %v541
  %v556 = vpack.c.bf16 %v544, %v543
  %v557 = vpack.c.bf16 %v546, %v545
  %v558 = vpack.c.bf16 %v548, %v547
  %v559 = vpack.c.bf16 %v550, %v549
  %v560 = vpack.c.bf16 %v552, %v551
  %v569 = vunpack.c.l.b16 %v553
  %v570 = vunpack.c.h.b16 %v553
  %v571 = vunpack.c.l.b16 %v554
  %v572 = vunpack.c.h.b16 %v554
  %v573 = vunpack.c.l.b16 %v555
  %v574 = vunpack.c.h.b16 %v555
  %v575 = vunpack.c.l.b16 %v556
  %v576 = vunpack.c.h.b16 %v556
  %v577 = vunpack.c.l.b16 %v557
  %v578 = vunpack.c.h.b16 %v557
  %v579 = vunpack.c.l.b16 %v558
  %v580 = vunpack.c.h.b16 %v558
  %v581 = vunpack.c.l.b16 %v559
  %v582 = vunpack.c.h.b16 %v559
  %v583 = vunpack.c.l.b16 %v560
  %v584 = vunpack.c.h.b16 %v560
  %v585 = vpack.c.b16 %v569, %v569
  %v586 = vpack.c.b16 %v570, %v570
  %v587 = vpack.c.b16 %v571, %v571
  %v588 = vpack.c.b16 %v572, %v572
  %v589 = vpack.c.b16 %v573, %v573
  %v590 = vpack.c.b16 %v574, %v574
  %v591 = vpack.c.b16 %v575, %v575
  %v592 = vpack.c.b16 %v576, %v576
  %v593 = vpack.c.b16 %v577, %v577
  %v594 = vpack.c.b16 %v578, %v578
  %v595 = vpack.c.b16 %v579, %v579
  %v596 = vpack.c.b16 %v580, %v580
  %v597 = vpack.c.b16 %v581, %v581
  %v598 = vpack.c.b16 %v582, %v582
  %v599 = vpack.c.b16 %v583, %v583
  %v600 = vpack.c.b16 %v584, %v584
  %vm617 = vcmask 519168
  %618 = vst.msk [vmem:[%s3] sm:$0xf] %vm617, %v585
  %619 = vst.msk [vmem:[%s3 + $0x4] sm:$0xf] %vm617, %v586
  %620 = vst.msk [vmem:[%s3 + $0x8] sm:$0xf] %vm617, %v587
  %621 = vst.msk [vmem:[%s3 + $0xc] sm:$0xf] %vm617, %v588
  %622 = vst.msk [vmem:[%s3 + $0x10] sm:$0xf] %vm617, %v589
  %623 = vst.msk [vmem:[%s3 + $0x14] sm:$0xf] %vm617, %v590
  %624 = vst.msk [vmem:[%s3 + $0x18] sm:$0xf] %vm617, %v591
  %625 = vst.msk [vmem:[%s3 + $0x1c] sm:$0xf] %vm617, %v592
  %626 = vst.msk [vmem:[%s3 + $0x20] sm:$0xf] %vm617, %v593
  %627 = vst.msk [vmem:[%s3 + $0x24] sm:$0xf] %vm617, %v594
  %628 = vst.msk [vmem:[%s3 + $0x28] sm:$0xf] %vm617, %v595
  %629 = vst.msk [vmem:[%s3 + $0x2c] sm:$0xf] %vm617, %v596
  %630 = vst.msk [vmem:[%s3 + $0x30] sm:$0xf] %vm617, %v597
  %631 = vst.msk [vmem:[%s3 + $0x34] sm:$0xf] %vm617, %v598
  %632 = vst.msk [vmem:[%s3 + $0x38] sm:$0xf] %vm617, %v599
  %633 = vst.msk [vmem:[%s3 + $0x3c] sm:$0xf] %vm617, %v600
  // Predicated region
  $region14: #{rpnv2_forward.7} parent=0 // pred_check
    _
  $region15: #{rpnv2_forward.7} parent=0 // pred_check_branch
    %635 = sbr.rel (0) target = $region17
  $region16: #{rpnv2_forward.7} parent=0 // pred_region
    _
  $region17: #{rpnv2_forward.7} parent=0 // pred_fallthru
    _
  // Predicated region
  $region18: #{rpnv2_forward.7} parent=0 // pred_check
    _
  $region19: #{rpnv2_forward.7} parent=0 // pred_check_branch
    %637 = sbr.rel (0) target = $region21
  $region20: #{rpnv2_forward.7} parent=0 // pred_region
    _
  $region21: #{rpnv2_forward.7} parent=0 // pred_fallthru
    _

// kernel: tile.15
$region0: #{tile.15}
  #allocation0 [shape = 's32[1]{0}', space=sflag, size = 0x4, scoped, tag = 'scoped memory for tile.15']
  %s0 = inlined_call_operand.vmem [shape: f32[64], index: 0, kind: input, shape index: {}]
  %s1 = inlined_call_operand.vmem [shape: f32[4,64], index: 1, kind: output, shape index: {}]
  // Predicated region
  $region2: #{tile.15} parent=0 // pred_check
    _
  $region3: #{tile.15} parent=0 // pred_check_branch
    %3 = sbr.rel (0) target = $region5
  $region4: #{tile.15} parent=0 // pred_region
    _
  $region5: #{tile.15} parent=0 // pred_fallthru
    _
  %v4 = vld [vmem:[%s0] ss:$0 sm:$0xff]
  %5 = vst [vmem:[%s1] sm:$0xf] %v4

// kernel: tile.16
$region0: #{tile.16}
  %s0 = inlined_call_operand.vmem [shape: f32[4,64], index: 0, kind: input, shape index: {}]
  %s1 = inlined_call_operand.vmem [shape: f32[1,256], index: 1, kind: output, shape index: {}]
  $region1: #{tile.16} parent=0
    #allocation0 [shape = 'u8[8192]{0}', space=vmem, size = 0x2000, scoped, tag = 'scoped mem for output reshape']
    #allocation1 [shape = 'u8[4096]{0}', space=vmem, size = 0x1000, scoped, tag = 'scoped mem for input reshape']
    %s3 = sshll.u32 1, 4
    %s4 = ssub.s32 %s3, 1
    %v5 = vld [vmem:[%s0] sm:%s4]
    %6 = vst [vmem:[#allocation1] sm:%s4] %v5
    %s7 = smov 3
    %v8 = vld [vmem:[#allocation1] ss:$2 sm:%s7]
    %vm9 = vcmask 523264
    %10 = vst.msk [vmem:[#allocation0] ss:$8 sm:$0x3] %vm9, %v8
    %s11 = scalar_lea.vmem [#allocation1], 1
    %s12 = smov 3
    %v13 = vld [vmem:[%s11] ss:$2 sm:%s12]
    %14 = vrot.lane.b32.xlu0 %v13, 64
    %v15 = vpop.permute.xlu0 %14
    %vm16 = vcmask 1048064
    %17 = vst.msk [vmem:[#allocation0] ss:$8 sm:$0x3] %vm16, %v15
    %s19 = sshll.u32 1, 1
    %s20 = ssub.s32 %s19, 1
    %v22 = vld [vmem:[#allocation0] sm:%s20]
    %s23 = sshll.u32 1, 1
    %s24 = ssub.s32 %s23, 1
    %25 = vst [vmem:[%s1] sm:%s24] %v22
    %s26 = scalar_lea.vmem [#allocation0], 8
    %v27 = vld [vmem:[%s26] sm:%s20]
    %s28 = sshll.u32 1, 1
    %s29 = ssub.s32 %s28, 1
    %s30 = scalar_lea.vmem %s1, 1
    %31 = vst [vmem:[%s30] sm:%s29] %v27

// kernel: rpnv2_forward.6
$region0: #{rpnv2_forward.6}
  #allocation0 [shape = 'u32[]', space=smem, size = 0x4, offset = 0x4, fixed_abs, tag = 'smem constant byte address 0x4 - core index']
  #allocation1 [shape = 'u32[144,128]{1,0:T(1,128)}', space=vmem, size = 0x12000, scoped, tag = 'internal scratch']
  #allocation2 [shape = 'bf16[18,18,32]{2,1,0:T(8,128)(2,1)}', space=vmem, size = 0x1b000, scoped, tag = 'scratch operand']
  #allocation3 [shape = 'bf16[18,18,32]{2,1,0:T(8,128)(2,1)}', space=vmem, size = 0x1b000, scoped, tag = 'scratch operand']
  %s0 = inlined_call_operand.vmem [shape: bf16[2,18,18,32], index: 0, kind: input, shape index: {}]
  %s1 = inlined_call_operand.vmem [shape: bf16[3,9,32,32], index: 1, kind: input, shape index: {}]
  %s2 = inlined_call_operand.vmem [shape: f32[3,1,32], index: 2, kind: input, shape index: {}]
  %s3 = inlined_call_operand.vmem [shape: bf16[32,64], index: 3, kind: input, shape index: {}]
  %s4 = inlined_call_operand.vmem [shape: f32[1,64], index: 4, kind: input, shape index: {}]
  %s5 = inlined_call_operand.vmem [shape: bf16[2,16,16,32], index: 5, kind: output, shape index: {0}]
  %s6 = inlined_call_operand.vmem [shape: bf16[2,16,16,64], index: 6, kind: output, shape index: {1}]
  %7 = xla_tuple %s5, %s6
  %s8 = sld [smem:[#allocation0]]
  $region82: #{rpnv2_forward.6} parent=0
    _
  %s10 = ssub.s32 1, %s8
  %s11 = scalar_select 0, %s10, %s8
  loop: start=0, step=1, limit=4
  $region2: #{rpnv2_forward.6} parent=0 // loop_pre_header
    _
  $region3: #{rpnv2_forward.6} parent=0 // loop_header
    %s13 = sphi 0, %s17
    %p14 = scmp.ge.s32.totalorder %s13, 4
    %s23 = sphi 0, %s25
    %s26 = sphi 0, %s23
    %s27 = sphi 0, %s26
    %s43 = sphi 0, %s27
    %s47 = sphi 0, %s47
    %s49 = sphi 0, %s47
    %s50 = sphi 0, %s49
    %s64 = sphi 0, %s50
    %s68 = sphi 0, %s68
    %s70 = sphi 0, %s68
    %s71 = sphi 0, %s70
    %s85 = sphi 0, %s71
    %s89 = sphi 0, %s89
    %s91 = sphi 0, %s89
    %s92 = sphi 0, %s91
    %s106 = sphi 0, %s92
    %s110 = sphi 0, %s110
    %s112 = sphi 0, %s110
    %s113 = sphi 0, %s112
    %s127 = sphi 0, %s113
    %s133 = sphi 0, %s135
    %s136 = sphi 0, %s133
    %s137 = sphi 0, %s136
    %s153 = sphi 0, %s137
    %s159 = sphi 0, %s161
    %s162 = sphi 0, %s159
    %s163 = sphi 0, %s162
    %s179 = sphi 0, %s163
  $region4: #{rpnv2_forward.6} parent=0 // loop_header_branch
    %16 = sbr.rel (%p14) target = $region8
  $region5: #{rpnv2_forward.6} parent=0 // loop_body
    %s18 = ssub.s32 %s13, 1
    %s19 = ssub.s32 %s13, 2
    %s20 = sadd.s32 %s13, 1
    %s21 = ssub.s32 %s13, %s20
    %p22 = scmp.eq.s32.totalorder %s21, 0
    %s24 = sadd.s32 %s23, 1
    %s25 = scalar_select %p22, %s23, %s24
    %p28 = pneg %p22
    %p29 = scmp.eq.s32.totalorder %s13, 1
    %p30 = por %p28, %p29
    %p31 = scmp.ne.s32.totalorder %s23, %s26
    %p32 = scmp.eq.s32.totalorder %s13, 0
    %p33 = por %p31, %p32
    %p34 = scmp.ne.s32.totalorder %s23, %s26
    %p35 = scmp.eq.s32.totalorder %s18, 1
    %p36 = por %p34, %p35
    %p37 = scmp.ne.s32.totalorder %s26, %s27
    %p38 = scmp.eq.s32.totalorder %s18, 0
    %p39 = por %p37, %p38
    %p40 = scmp.ne.s32.totalorder %s26, %s27
    %p41 = scmp.eq.s32.totalorder %s19, 1
    %p42 = por %p40, %p41
    %p44 = scmp.ne.s32.totalorder %s27, %s43
    %p45 = scmp.eq.s32.totalorder %s19, 0
    %p46 = por %p44, %p45
    %s48 = sadd.s32 %s47, 1
    %p51 = scmp.eq.s32.totalorder %s13, 1
    %p52 = scmp.ne.s32.totalorder %s47, %s49
    %p53 = scmp.eq.s32.totalorder %s13, 0
    %p54 = por %p52, %p53
    %p55 = scmp.ne.s32.totalorder %s47, %s49
    %p56 = scmp.eq.s32.totalorder %s18, 1
    %p57 = por %p55, %p56
    %p58 = scmp.ne.s32.totalorder %s49, %s50
    %p59 = scmp.eq.s32.totalorder %s18, 0
    %p60 = por %p58, %p59
    %p61 = scmp.ne.s32.totalorder %s49, %s50
    %p62 = scmp.eq.s32.totalorder %s19, 1
    %p63 = por %p61, %p62
    %p65 = scmp.ne.s32.totalorder %s50, %s64
    %p66 = scmp.eq.s32.totalorder %s19, 0
    %p67 = por %p65, %p66
    %s69 = sadd.s32 %s68, 1
    %p72 = scmp.eq.s32.totalorder %s13, 1
    %p73 = scmp.ne.s32.totalorder %s68, %s70
    %p74 = scmp.eq.s32.totalorder %s13, 0
    %p75 = por %p73, %p74
    %p76 = scmp.ne.s32.totalorder %s68, %s70
    %p77 = scmp.eq.s32.totalorder %s18, 1
    %p78 = por %p76, %p77
    %p79 = scmp.ne.s32.totalorder %s70, %s71
    %p80 = scmp.eq.s32.totalorder %s18, 0
    %p81 = por %p79, %p80
    %p82 = scmp.ne.s32.totalorder %s70, %s71
    %p83 = scmp.eq.s32.totalorder %s19, 1
    %p84 = por %p82, %p83
    %p86 = scmp.ne.s32.totalorder %s71, %s85
    %p87 = scmp.eq.s32.totalorder %s19, 0
    %p88 = por %p86, %p87
    %s90 = sadd.s32 %s89, 1
    %p93 = scmp.eq.s32.totalorder %s13, 1
    %p94 = scmp.ne.s32.totalorder %s89, %s91
    %p95 = scmp.eq.s32.totalorder %s13, 0
    %p96 = por %p94, %p95
    %p97 = scmp.ne.s32.totalorder %s89, %s91
    %p98 = scmp.eq.s32.totalorder %s18, 1
    %p99 = por %p97, %p98
    %p100 = scmp.ne.s32.totalorder %s91, %s92
    %p101 = scmp.eq.s32.totalorder %s18, 0
    %p102 = por %p100, %p101
    %p103 = scmp.ne.s32.totalorder %s91, %s92
    %p104 = scmp.eq.s32.totalorder %s19, 1
    %p105 = por %p103, %p104
    %p107 = scmp.ne.s32.totalorder %s92, %s106
    %p108 = scmp.eq.s32.totalorder %s19, 0
    %p109 = por %p107, %p108
    %s111 = sadd.s32 %s110, 1
    %p114 = scmp.eq.s32.totalorder %s13, 1
    %p115 = scmp.ne.s32.totalorder %s110, %s112
    %p116 = scmp.eq.s32.totalorder %s13, 0
    %p117 = por %p115, %p116
    %p118 = scmp.ne.s32.totalorder %s110, %s112
    %p119 = scmp.eq.s32.totalorder %s18, 1
    %p120 = por %p118, %p119
    %p121 = scmp.ne.s32.totalorder %s112, %s113
    %p122 = scmp.eq.s32.totalorder %s18, 0
    %p123 = por %p121, %p122
    %p124 = scmp.ne.s32.totalorder %s112, %s113
    %p125 = scmp.eq.s32.totalorder %s19, 1
    %p126 = por %p124, %p125
    %p128 = scmp.ne.s32.totalorder %s113, %s127
    %p129 = scmp.eq.s32.totalorder %s19, 0
    %p130 = por %p128, %p129
    %s131 = ssub.s32 %s13, %s20
    %p132 = scmp.eq.s32.totalorder %s131, 0
    %s134 = sadd.s32 %s133, 1
    %s135 = scalar_select %p132, %s133, %s134
    %p138 = pneg %p132
    %p139 = scmp.eq.s32.totalorder %s13, 1
    %p140 = por %p138, %p139
    %p141 = scmp.ne.s32.totalorder %s133, %s136
    %p142 = scmp.eq.s32.totalorder %s13, 0
    %p143 = por %p141, %p142
    %p144 = scmp.ne.s32.totalorder %s133, %s136
    %p145 = scmp.eq.s32.totalorder %s18, 1
    %p146 = por %p144, %p145
    %p147 = scmp.ne.s32.totalorder %s136, %s137
    %p148 = scmp.eq.s32.totalorder %s18, 0
    %p149 = por %p147, %p148
    %p150 = scmp.ne.s32.totalorder %s136, %s137
    %p151 = scmp.eq.s32.totalorder %s19, 1
    %p152 = por %p150, %p151
    %p154 = scmp.ne.s32.totalorder %s137, %s153
    %p155 = scmp.eq.s32.totalorder %s19, 0
    %p156 = por %p154, %p155
    %s157 = ssub.s32 %s13, %s20
    %p158 = scmp.eq.s32.totalorder %s157, 0
    %s160 = sadd.s32 %s159, 1
    %s161 = scalar_select %p158, %s159, %s160
    %p164 = pneg %p158
    %p165 = scmp.eq.s32.totalorder %s13, 1
    %p166 = por %p164, %p165
    %p167 = scmp.ne.s32.totalorder %s159, %s162
    %p168 = scmp.eq.s32.totalorder %s13, 0
    %p169 = por %p167, %p168
    %p170 = scmp.ne.s32.totalorder %s159, %s162
    %p171 = scmp.eq.s32.totalorder %s18, 1
    %p172 = por %p170, %p171
    %p173 = scmp.ne.s32.totalorder %s162, %s163
    %p174 = scmp.eq.s32.totalorder %s18, 0
    %p175 = por %p173, %p174
    %p176 = scmp.ne.s32.totalorder %s162, %s163
    %p177 = scmp.eq.s32.totalorder %s19, 1
    %p178 = por %p176, %p177
    %p180 = scmp.ne.s32.totalorder %s163, %s179
    %p181 = scmp.eq.s32.totalorder %s19, 0
    %p182 = por %p180, %p181
    %p183 = scmp.le.s32.totalorder 1, %s13
    %p184 = scmp.lt.s32.totalorder %s13, 3
    %p185 = pnand %p183, %p184
    %p186 = pneg %p185
    // Predicated region
    $region9: #{rpnv2_forward.6} parent=5 // pred_check
      _
    $region10: #{rpnv2_forward.6} parent=5 // pred_check_branch
      %188 = sbr.rel (%p185) target = $region12
    $region11: #{rpnv2_forward.6} parent=5 // pred_region
      %s189 = ssub.s32 %s13, 1
      // Predicated region
      $region13: #{rpnv2_forward.6} parent=11 // pred_check
        %p190 = pneg %p60
      $region14: #{rpnv2_forward.6} parent=11 // pred_check_branch
        %192 = sbr.rel (%p190) target = $region16
      $region15: #{rpnv2_forward.6} parent=11 // pred_region
        _
      $region16: #{rpnv2_forward.6} parent=11 // pred_fallthru
        _
      // Predicated region
      $region17: #{rpnv2_forward.6} parent=11 // pred_check
        %p193 = pneg %p81
      $region18: #{rpnv2_forward.6} parent=11 // pred_check_branch
        %195 = sbr.rel (%p193) target = $region20
      $region19: #{rpnv2_forward.6} parent=11 // pred_region
        _
      $region20: #{rpnv2_forward.6} parent=11 // pred_fallthru
        _
      // Predicated region
      $region21: #{rpnv2_forward.6} parent=11 // pred_check
        %p196 = pneg %p102
      $region22: #{rpnv2_forward.6} parent=11 // pred_check_branch
        %198 = sbr.rel (%p196) target = $region24
      $region23: #{rpnv2_forward.6} parent=11 // pred_region
        _
      $region24: #{rpnv2_forward.6} parent=11 // pred_fallthru
        _
      // Predicated region
      $region25: #{rpnv2_forward.6} parent=11 // pred_check
        %p199 = pneg %p123
      $region26: #{rpnv2_forward.6} parent=11 // pred_check_branch
        %201 = sbr.rel (%p199) target = $region28
      $region27: #{rpnv2_forward.6} parent=11 // pred_region
        _
      $region28: #{rpnv2_forward.6} parent=11 // pred_fallthru
        _
    $region12: #{rpnv2_forward.6} parent=5 // pred_fallthru
      _
    %p202 = scmp.lt.s32.totalorder %s13, 2
    // Predicated region
    $region29: #{rpnv2_forward.6} parent=5 // pred_check
      %p203 = pneg %p202
    $region30: #{rpnv2_forward.6} parent=5 // pred_check_branch
      %205 = sbr.rel (%p203) target = $region32
    $region31: #{rpnv2_forward.6} parent=5 // pred_region
      // Predicated region
      $region33: #{rpnv2_forward.6} parent=31 // pred_check
        %p206 = pneg %p33
      $region34: #{rpnv2_forward.6} parent=31 // pred_check_branch
        %208 = sbr.rel (%p206) target = $region36
      $region35: #{rpnv2_forward.6} parent=31 // pred_region
        %p209 = scmp.lt.s32.totalorder %s13, 1
        %s210 = scalar_select %p209, %s13, 1
        %s211 = smul.addr %s210, 54
        %s212 = smul.addr %s211, 4
        %s213 = scalar_lea.vmem %s0, %s212
      $region36: #{rpnv2_forward.6} parent=31 // pred_fallthru
        _
    $region32: #{rpnv2_forward.6} parent=5 // pred_fallthru
      _
    %p214 = scmp.le.s32.totalorder 1, %s13
    %p215 = scmp.lt.s32.totalorder %s13, 3
    %p216 = pnand %p214, %p215
    %p217 = pneg %p216
    // Predicated region
    $region37: #{rpnv2_forward.6} parent=5 // pred_check
      _
    $region38: #{rpnv2_forward.6} parent=5 // pred_check_branch
      %219 = sbr.rel (%p216) target = $region40
    $region39: #{rpnv2_forward.6} parent=5 // pred_region
      %s220 = ssub.s32 %s13, 1
      %p221 = scmp.lt.s32.totalorder %s18, 1
      %s222 = scalar_select %p221, %s18, 1
      %s223 = smul.addr %s222, 54
      %s224 = smul.addr %s223, 4
      %s225 = scalar_lea.vmem %s0, %s224
      %p226 = pneg %p39
      %p227 = pneg %p36
      %p228 = pneg %p60
      %p229 = pneg %p57
      %p230 = pneg %p81
      %p231 = pneg %p78
      %p232 = pneg %p102
      %p233 = pneg %p99
      %p234 = pneg %p123
      %p235 = pneg %p120
      %p236 = pneg %p149
      %p237 = pneg %p146
      %p238 = scmp.lt.s32.totalorder %s18, 1
      %s239 = scalar_select %p238, %s18, 1
      %s240 = smul.addr %s239, 32
      %s241 = smul.addr %s240, 4
      %s242 = scalar_lea.vmem %s5, %s241
      %p243 = pneg %p175
      %p244 = pneg %p172
      %p245 = scmp.lt.s32.totalorder %s18, 1
      %s246 = scalar_select %p245, %s18, 1
      %s247 = smul.addr %s246, 32
      %s248 = smul.addr %s247, 4
      %s249 = scalar_lea.vmem %s6, %s248
      %p250 = scmp.lt.s32.totalorder %s18, 1
      %s251 = scalar_select %p250, %s18, 1
      %s252 = smul.addr %s251, 54
      %s253 = smul.addr %s252, 4
      %s254 = scalar_lea.vmem %s0, %s253
      %p255 = scmp.lt.s32.totalorder %s18, 1
      %s256 = scalar_select %p255, %s18, 1
      %s257 = smul.addr %s256, 32
      %s258 = smul.addr %s257, 4
      %s259 = scalar_lea.vmem %s5, %s258
      %p260 = scmp.lt.s32.totalorder %s18, 1
      %s261 = scalar_select %p260, %s18, 1
      %s262 = smul.addr %s261, 32
      %s263 = smul.addr %s262, 4
      %s264 = scalar_lea.vmem %s6, %s263
      %vm266 = vcmask 257024
      %267 = vst.msk [vmem:[#allocation2] sm:$0xf] %vm266, 0
      %268 = vst.msk [vmem:[#allocation2 + $0x4] sm:$0xf] %vm266, 0
      %vm269 = vcmask 253952
      %270 = vst.msk [vmem:[#allocation2 + $0x8] sm:$0x1] %vm269, 0
      %271 = vst.msk [vmem:[#allocation2 + $0xc] sm:$0xf] %vm266, 0
      %272 = vst.msk [vmem:[#allocation2 + $0x10] sm:$0xf] %vm266, 0
      %273 = vst.msk [vmem:[#allocation2 + $0x14] sm:$0x1] %vm269, 0
      %274 = vst.msk [vmem:[#allocation2 + $0x18] sm:$0xf] %vm266, 0
      %275 = vst.msk [vmem:[#allocation2 + $0x1c] sm:$0xf] %vm266, 0
      %276 = vst.msk [vmem:[#allocation2 + $0x20] sm:$0x1] %vm269, 0
      %277 = vst.msk [vmem:[#allocation2 + $0x24] sm:$0xf] %vm266, 0
      %278 = vst.msk [vmem:[#allocation2 + $0x28] sm:$0xf] %vm266, 0
      %279 = vst.msk [vmem:[#allocation2 + $0x2c] sm:$0x1] %vm269, 0
      %280 = vst.msk [vmem:[#allocation2 + $0x30] sm:$0xf] %vm266, 0
      %281 = vst.msk [vmem:[#allocation2 + $0x34] sm:$0xf] %vm266, 0
      %282 = vst.msk [vmem:[#allocation2 + $0x38] sm:$0x1] %vm269, 0
      %283 = vst.msk [vmem:[#allocation2 + $0x3c] sm:$0xf] %vm266, 0
      %284 = vst.msk [vmem:[#allocation2 + $0x40] sm:$0xf] %vm266, 0
      %285 = vst.msk [vmem:[#allocation2 + $0x44] sm:$0x1] %vm269, 0
      %286 = vst.msk [vmem:[#allocation2 + $0x48] sm:$0xf] %vm266, 0
      %287 = vst.msk [vmem:[#allocation2 + $0x4c] sm:$0xf] %vm266, 0
      %288 = vst.msk [vmem:[#allocation2 + $0x50] sm:$0x1] %vm269, 0
      %289 = vst.msk [vmem:[#allocation2 + $0x54] sm:$0xf] %vm266, 0
      %290 = vst.msk [vmem:[#allocation2 + $0x58] sm:$0xf] %vm266, 0
      %291 = vst.msk [vmem:[#allocation2 + $0x5c] sm:$0x1] %vm269, 0
      %292 = vst.msk [vmem:[#allocation2 + $0x60] sm:$0xf] %vm266, 0
      %293 = vst.msk [vmem:[#allocation2 + $0x64] sm:$0xf] %vm266, 0
      %294 = vst.msk [vmem:[#allocation2 + $0x68] sm:$0x1] %vm269, 0
      %295 = vst.msk [vmem:[#allocation2 + $0x6c] sm:$0xf] %vm266, 0
      %296 = vst.msk [vmem:[#allocation2 + $0x70] sm:$0xf] %vm266, 0
      %297 = vst.msk [vmem:[#allocation2 + $0x74] sm:$0x1] %vm269, 0
      %298 = vst.msk [vmem:[#allocation2 + $0x78] sm:$0xf] %vm266, 0
      %299 = vst.msk [vmem:[#allocation2 + $0x7c] sm:$0xf] %vm266, 0
      %300 = vst.msk [vmem:[#allocation2 + $0x80] sm:$0x1] %vm269, 0
      %301 = vst.msk [vmem:[#allocation2 + $0x84] sm:$0xf] %vm266, 0
      %302 = vst.msk [vmem:[#allocation2 + $0x88] sm:$0xf] %vm266, 0
      %303 = vst.msk [vmem:[#allocation2 + $0x8c] sm:$0x1] %vm269, 0
      %304 = vst.msk [vmem:[#allocation2 + $0x90] sm:$0xf] %vm266, 0
      %305 = vst.msk [vmem:[#allocation2 + $0x94] sm:$0xf] %vm266, 0
      %306 = vst.msk [vmem:[#allocation2 + $0x98] sm:$0x1] %vm269, 0
      %307 = vst.msk [vmem:[#allocation2 + $0x9c] sm:$0xf] %vm266, 0
      %308 = vst.msk [vmem:[#allocation2 + $0xa0] sm:$0xf] %vm266, 0
      %309 = vst.msk [vmem:[#allocation2 + $0xa4] sm:$0x1] %vm269, 0
      %310 = vst.msk [vmem:[#allocation2 + $0xa8] sm:$0xf] %vm266, 0
      %311 = vst.msk [vmem:[#allocation2 + $0xac] sm:$0xf] %vm266, 0
      %312 = vst.msk [vmem:[#allocation2 + $0xb0] sm:$0x1] %vm269, 0
      %313 = vst.msk [vmem:[#allocation2 + $0xb4] sm:$0xf] %vm266, 0
      %314 = vst.msk [vmem:[#allocation2 + $0xb8] sm:$0xf] %vm266, 0
      %315 = vst.msk [vmem:[#allocation2 + $0xbc] sm:$0x1] %vm269, 0
      %316 = vst.msk [vmem:[#allocation2 + $0xc0] sm:$0xf] %vm266, 0
      %317 = vst.msk [vmem:[#allocation2 + $0xc4] sm:$0xf] %vm266, 0
      %318 = vst.msk [vmem:[#allocation2 + $0xc8] sm:$0x1] %vm269, 0
      %319 = vst.msk [vmem:[#allocation2 + $0xcc] sm:$0xf] %vm266, 0
      %320 = vst.msk [vmem:[#allocation2 + $0xd0] sm:$0xf] %vm266, 0
      %321 = vst.msk [vmem:[#allocation2 + $0xd4] sm:$0x1] %vm269, 0
      %322 = vst.msk [vmem:[#allocation3] sm:$0xf] %vm266, 0
      %323 = vst.msk [vmem:[#allocation3 + $0x4] sm:$0xf] %vm266, 0
      %324 = vst.msk [vmem:[#allocation3 + $0x8] sm:$0x1] %vm269, 0
      %325 = vst.msk [vmem:[#allocation3 + $0xc] sm:$0xf] %vm266, 0
      %326 = vst.msk [vmem:[#allocation3 + $0x10] sm:$0xf] %vm266, 0
      %327 = vst.msk [vmem:[#allocation3 + $0x14] sm:$0x1] %vm269, 0
      %328 = vst.msk [vmem:[#allocation3 + $0x18] sm:$0xf] %vm266, 0
      %329 = vst.msk [vmem:[#allocation3 + $0x1c] sm:$0xf] %vm266, 0
      %330 = vst.msk [vmem:[#allocation3 + $0x20] sm:$0x1] %vm269, 0
      %331 = vst.msk [vmem:[#allocation3 + $0x24] sm:$0xf] %vm266, 0
      %332 = vst.msk [vmem:[#allocation3 + $0x28] sm:$0xf] %vm266, 0
      %333 = vst.msk [vmem:[#allocation3 + $0x2c] sm:$0x1] %vm269, 0
      %334 = vst.msk [vmem:[#allocation3 + $0x30] sm:$0xf] %vm266, 0
      %335 = vst.msk [vmem:[#allocation3 + $0x34] sm:$0xf] %vm266, 0
      %336 = vst.msk [vmem:[#allocation3 + $0x38] sm:$0x1] %vm269, 0
      %337 = vst.msk [vmem:[#allocation3 + $0x3c] sm:$0xf] %vm266, 0
      %338 = vst.msk [vmem:[#allocation3 + $0x40] sm:$0xf] %vm266, 0
      %339 = vst.msk [vmem:[#allocation3 + $0x44] sm:$0x1] %vm269, 0
      %340 = vst.msk [vmem:[#allocation3 + $0x48] sm:$0xf] %vm266, 0
      %341 = vst.msk [vmem:[#allocation3 + $0x4c] sm:$0xf] %vm266, 0
      %342 = vst.msk [vmem:[#allocation3 + $0x50] sm:$0x1] %vm269, 0
      %343 = vst.msk [vmem:[#allocation3 + $0x54] sm:$0xf] %vm266, 0
      %344 = vst.msk [vmem:[#allocation3 + $0x58] sm:$0xf] %vm266, 0
      %345 = vst.msk [vmem:[#allocation3 + $0x5c] sm:$0x1] %vm269, 0
      %346 = vst.msk [vmem:[#allocation3 + $0x60] sm:$0xf] %vm266, 0
      %347 = vst.msk [vmem:[#allocation3 + $0x64] sm:$0xf] %vm266, 0
      %348 = vst.msk [vmem:[#allocation3 + $0x68] sm:$0x1] %vm269, 0
      %349 = vst.msk [vmem:[#allocation3 + $0x6c] sm:$0xf] %vm266, 0
      %350 = vst.msk [vmem:[#allocation3 + $0x70] sm:$0xf] %vm266, 0
      %351 = vst.msk [vmem:[#allocation3 + $0x74] sm:$0x1] %vm269, 0
      %352 = vst.msk [vmem:[#allocation3 + $0x78] sm:$0xf] %vm266, 0
      %353 = vst.msk [vmem:[#allocation3 + $0x7c] sm:$0xf] %vm266, 0
      %354 = vst.msk [vmem:[#allocation3 + $0x80] sm:$0x1] %vm269, 0
      %355 = vst.msk [vmem:[#allocation3 + $0x84] sm:$0xf] %vm266, 0
      %356 = vst.msk [vmem:[#allocation3 + $0x88] sm:$0xf] %vm266, 0
      %357 = vst.msk [vmem:[#allocation3 + $0x8c] sm:$0x1] %vm269, 0
      %358 = vst.msk [vmem:[#allocation3 + $0x90] sm:$0xf] %vm266, 0
      %359 = vst.msk [vmem:[#allocation3 + $0x94] sm:$0xf] %vm266, 0
      %360 = vst.msk [vmem:[#allocation3 + $0x98] sm:$0x1] %vm269, 0
      %361 = vst.msk [vmem:[#allocation3 + $0x9c] sm:$0xf] %vm266, 0
      %362 = vst.msk [vmem:[#allocation3 + $0xa0] sm:$0xf] %vm266, 0
      %363 = vst.msk [vmem:[#allocation3 + $0xa4] sm:$0x1] %vm269, 0
      %364 = vst.msk [vmem:[#allocation3 + $0xa8] sm:$0xf] %vm266, 0
      %365 = vst.msk [vmem:[#allocation3 + $0xac] sm:$0xf] %vm266, 0
      %366 = vst.msk [vmem:[#allocation3 + $0xb0] sm:$0x1] %vm269, 0
      %367 = vst.msk [vmem:[#allocation3 + $0xb4] sm:$0xf] %vm266, 0
      %368 = vst.msk [vmem:[#allocation3 + $0xb8] sm:$0xf] %vm266, 0
      %369 = vst.msk [vmem:[#allocation3 + $0xbc] sm:$0x1] %vm269, 0
      %370 = vst.msk [vmem:[#allocation3 + $0xc0] sm:$0xf] %vm266, 0
      %371 = vst.msk [vmem:[#allocation3 + $0xc4] sm:$0xf] %vm266, 0
      %372 = vst.msk [vmem:[#allocation3 + $0xc8] sm:$0x1] %vm269, 0
      %373 = vst.msk [vmem:[#allocation3 + $0xcc] sm:$0xf] %vm266, 0
      %374 = vst.msk [vmem:[#allocation3 + $0xd0] sm:$0xf] %vm266, 0
      %375 = vst.msk [vmem:[#allocation3 + $0xd4] sm:$0x1] %vm269, 0
      %v376 = vld [vmem:[%s4] sm:$0x1]
      loop: start=0, step=1, limit=16
      $region41: #{rpnv2_forward.6} parent=39 // loop_pre_header
        _
      $region42: #{rpnv2_forward.6} parent=39 // loop_header
        %s378 = sphi 0, %s382
        %p379 = scmp.ge.s32.totalorder %s378, 16
      $region43: #{rpnv2_forward.6} parent=39 // loop_header_branch
        %381 = sbr.rel (%p379) target = $region47
      $region44: #{rpnv2_forward.6} parent=39 // loop_body
        %v383 = vld [vmem:[%s2] sm:$0x1]
        %v385 = vlaneseq
        %v386 = vshrl.u32 %v385, 7
        %v387 = vsub.s32 0, %v386
        %v388 = vrot.slane %v383, %v387
        %v390 = vadd.f32 %v388, 0.0
        %s391 = smul.u32 %s378, 3
        %s392 = smul.addr %s391, 4
        %s393 = scalar_lea.vmem %s254, %s392
        %v394 = vld [vmem:[%s393] sm:$0xf]
        %v395 = vld [vmem:[%s393 + $0x4] sm:$0xf]
        %v396 = vld [vmem:[%s1] sm:$0xf]
        %v397 = vld [vmem:[%s1 + $0x4] sm:$0xf]
        %v398 = vld [vmem:[%s1 + $0x8] sm:$0xf]
        %v399 = vld [vmem:[%s1 + $0xc] sm:$0xf]
        %v402 = vunpack.c.l.b16 %v394
        %v403 = vunpack.c.l.b16 %v395
        %v404 = vpack.c.b16 %v403, %v402
        %v409 = vunpack.c.l.b16 %v396
        %v410 = vunpack.c.l.b16 %v397
        %v411 = vunpack.c.l.b16 %v398
        %v412 = vunpack.c.l.b16 %v399
        %v413 = vpack.c.b16 %v410, %v409
        %v414 = vpack.c.b16 %v412, %v411
        %vm417 = vcmask 261120
        %v419 = vsel %vm417, %v404, 0
        %421 = vmatprep.subr.bf16.mxu0 0
        %422 = vmatpush1.bf16.msra.mxu0 0
        %423 = vmatprep.subr.bf16.mxu0 0
        %424 = vmatpush1.bf16.msra.mxu0 0
        %425 = vmatprep.subr.bf16.mxu0 0
        %426 = vmatpush1.bf16.msra.mxu0 0
        %427 = vmatprep.subr.bf16.mxu0 0
        %428 = vmatpush1.bf16.msra.mxu0 0
        %429 = vmatprep.subr.bf16.mxu0 0
        %430 = vmatpush1.bf16.msra.mxu0 0
        %431 = vmatprep.subr.bf16.mxu0 0
        %432 = vmatpush1.bf16.msra.mxu0 0
        %433 = vmatprep.subr.bf16.mxu0 0
        %434 = vmatpush1.bf16.msra.mxu0 %v414
        %435 = vmatprep.subr.bf16.mxu0 0
        %436 = vmatpush1.bf16.msra.mxu0 %v413
        %437 = vmatprep.subr.bf16.mxu0 0
        %438 = vmatpush2.bf16.msra.mxu0 0
        %439 = vmatprep.subr.bf16.mxu0 0
        %440 = vmatpush2.bf16.msra.mxu0 0
        %441 = vmatprep.subr.bf16.mxu0 0
        %442 = vmatpush2.bf16.msra.mxu0 0
        %443 = vmatprep.subr.bf16.mxu0 0
        %444 = vmatpush2.bf16.msra.mxu0 0
        %445 = vmatprep.subr.bf16.mxu0 0
        %446 = vmatpush2.bf16.msra.mxu0 0
        %447 = vmatprep.subr.bf16.mxu0 0
        %448 = vmatpush2.bf16.msra.mxu0 0
        %449 = vmatprep.subr.bf16.mxu0 0
        %450 = vmatpush2.bf16.msra.mxu0 0
        %451 = vmatprep.subr.bf16.mxu0 0
        %452 = vmatpush2.bf16.msra.mxu0 0
        %453 = vmatprep.mubr.bf16.mxu0 0
        %454 = vmatmul.mubr.bf16.gmra.mxu0 %v419
        %v455 = vpop.f32.mrf.mxu0
        %v456 = vadd.f32 0.0, %v455
        %v457 = vpop.f32.mrf.mxu0
        %v458 = vpop.f32.mrf.mxu0
        %v459 = vadd.f32 0.0, %v458
        %v460 = vpop.f32.mrf.mxu0
        %461 = vdwg.mxu0
        %v462 = vadd.f32 %v390, %v456
        %v463 = vadd.f32 %v390, %v459
        %v464 = vld [vmem:[%s393] sm:$0xf]
        %v465 = vld [vmem:[%s393 + $0x4] sm:$0xf]
        %v466 = vld [vmem:[%s393 + $0x8] sm:$0x1]
        %s467 = scalar_lea.vmem %s1, 16
        %v468 = vld [vmem:[%s467] sm:$0xf]
        %v469 = vld [vmem:[%s467 + $0x4] sm:$0xf]
        %v470 = vld [vmem:[%s467 + $0x8] sm:$0xf]
        %v471 = vld [vmem:[%s467 + $0xc] sm:$0xf]
        %v475 = vunpack.c.l.b16 %v464
        %v476 = vunpack.c.l.b16 %v465
        %v477 = vunpack.c.l.b16 %v466
        %v478 = vpack.c.b16 %v476, %v475
        %v479 = vpack.c.b16 %v477, %v477
        %vm480 = vsmask.f32 7424
        %v482 = vshrl.u32 %v478, 16
        %v484 = vshll.u32 %v478, 16
        %v486 = vrot.slane %v484, 1
        %v487 = vor.u32 %v482, %v486
        %v489 = vshll.u32 %v479, 16
        %v491 = vrot.slane %v489, 1
        %v492 = vsel %vm480, %v487, %v491
        %v497 = vunpack.c.l.b16 %v468
        %v498 = vunpack.c.l.b16 %v469
        %v499 = vunpack.c.l.b16 %v470
        %v500 = vunpack.c.l.b16 %v471
        %v501 = vpack.c.b16 %v498, %v497
        %v502 = vpack.c.b16 %v500, %v499
        %v506 = vsel %vm417, %v492, 0
        %508 = vmatprep.subr.bf16.mxu0 0
        %509 = vmatpush1.bf16.msra.mxu0 0
        %510 = vmatprep.subr.bf16.mxu0 0
        %511 = vmatpush1.bf16.msra.mxu0 0
        %512 = vmatprep.subr.bf16.mxu0 0
        %513 = vmatpush1.bf16.msra.mxu0 0
        %514 = vmatprep.subr.bf16.mxu0 0
        %515 = vmatpush1.bf16.msra.mxu0 0
        %516 = vmatprep.subr.bf16.mxu0 0
        %517 = vmatpush1.bf16.msra.mxu0 0
        %518 = vmatprep.subr.bf16.mxu0 0
        %519 = vmatpush1.bf16.msra.mxu0 0
        %520 = vmatprep.subr.bf16.mxu0 0
        %521 = vmatpush1.bf16.msra.mxu0 %v502
        %522 = vmatprep.subr.bf16.mxu0 0
        %523 = vmatpush1.bf16.msra.mxu0 %v501
        %524 = vmatprep.subr.bf16.mxu0 0
        %525 = vmatpush2.bf16.msra.mxu0 0
        %526 = vmatprep.subr.bf16.mxu0 0
        %527 = vmatpush2.bf16.msra.mxu0 0
        %528 = vmatprep.subr.bf16.mxu0 0
        %529 = vmatpush2.bf16.msra.mxu0 0
        %530 = vmatprep.subr.bf16.mxu0 0
        %531 = vmatpush2.bf16.msra.mxu0 0
        %532 = vmatprep.subr.bf16.mxu0 0
        %533 = vmatpush2.bf16.msra.mxu0 0
        %534 = vmatprep.subr.bf16.mxu0 0
        %535 = vmatpush2.bf16.msra.mxu0 0
        %536 = vmatprep.subr.bf16.mxu0 0
        %537 = vmatpush2.bf16.msra.mxu0 0
        %538 = vmatprep.subr.bf16.mxu0 0
        %539 = vmatpush2.bf16.msra.mxu0 0
        %540 = vmatprep.mubr.bf16.mxu0 0
        %541 = vmatmul.mubr.bf16.gmra.mxu0 %v506
        %v542 = vpop.f32.mrf.mxu0
        %v543 = vadd.f32 0.0, %v542
        %v544 = vpop.f32.mrf.mxu0
        %v545 = vpop.f32.mrf.mxu0
        %v546 = vadd.f32 0.0, %v545
        %v547 = vpop.f32.mrf.mxu0
        %548 = vdwg.mxu0
        %v549 = vadd.f32 %v462, %v543
        %v550 = vadd.f32 %v463, %v546
        %v551 = vld [vmem:[%s393] sm:$0xe]
        %s552 = scalar_lea.vmem %s1, 32
        %v553 = vld [vmem:[%s552] sm:$0xf]
        %v554 = vld [vmem:[%s552 + $0x4] sm:$0xf]
        %v555 = vld [vmem:[%s552 + $0x8] sm:$0xf]
        %v556 = vld [vmem:[%s552 + $0xc] sm:$0xf]
        %v558 = vunpack.c.l.b16 %v551
        %v559 = vpack.c.b16 %v476, %v558
        %vm560 = vcmask 1046528
        %v561 = vrot.slane %v559, 1
        %v562 = vrot.slane %v479, 1
        %v563 = vsel %vm560, %v561, %v562
        %v568 = vunpack.c.l.b16 %v553
        %v569 = vunpack.c.l.b16 %v554
        %v570 = vunpack.c.l.b16 %v555
        %v571 = vunpack.c.l.b16 %v556
        %v572 = vpack.c.b16 %v569, %v568
        %v573 = vpack.c.b16 %v571, %v570
        %v577 = vsel %vm417, %v563, 0
        %579 = vmatprep.subr.bf16.mxu0 0
        %580 = vmatpush1.bf16.msra.mxu0 0
        %581 = vmatprep.subr.bf16.mxu0 0
        %582 = vmatpush1.bf16.msra.mxu0 0
        %583 = vmatprep.subr.bf16.mxu0 0
        %584 = vmatpush1.bf16.msra.mxu0 0
        %585 = vmatprep.subr.bf16.mxu0 0
        %586 = vmatpush1.bf16.msra.mxu0 0
        %587 = vmatprep.subr.bf16.mxu0 0
        %588 = vmatpush1.bf16.msra.mxu0 0
        %589 = vmatprep.subr.bf16.mxu0 0
        %590 = vmatpush1.bf16.msra.mxu0 0
        %591 = vmatprep.subr.bf16.mxu0 0
        %592 = vmatpush1.bf16.msra.mxu0 %v573
        %593 = vmatprep.subr.bf16.mxu0 0
        %594 = vmatpush1.bf16.msra.mxu0 %v572
        %595 = vmatprep.subr.bf16.mxu0 0
        %596 = vmatpush2.bf16.msra.mxu0 0
        %597 = vmatprep.subr.bf16.mxu0 0
        %598 = vmatpush2.bf16.msra.mxu0 0
        %599 = vmatprep.subr.bf16.mxu0 0
        %600 = vmatpush2.bf16.msra.mxu0 0
        %601 = vmatprep.subr.bf16.mxu0 0
        %602 = vmatpush2.bf16.msra.mxu0 0
        %603 = vmatprep.subr.bf16.mxu0 0
        %604 = vmatpush2.bf16.msra.mxu0 0
        %605 = vmatprep.subr.bf16.mxu0 0
        %606 = vmatpush2.bf16.msra.mxu0 0
        %607 = vmatprep.subr.bf16.mxu0 0
        %608 = vmatpush2.bf16.msra.mxu0 0
        %609 = vmatprep.subr.bf16.mxu0 0
        %610 = vmatpush2.bf16.msra.mxu0 0
        %611 = vmatprep.mubr.bf16.mxu0 0
        %612 = vmatmul.mubr.bf16.gmra.mxu0 %v577
        %v613 = vpop.f32.mrf.mxu0
        %v614 = vadd.f32 0.0, %v613
        %v615 = vpop.f32.mrf.mxu0
        %v616 = vpop.f32.mrf.mxu0
        %v617 = vadd.f32 0.0, %v616
        %v618 = vpop.f32.mrf.mxu0
        %619 = vdwg.mxu0
        %v620 = vadd.f32 %v549, %v614
        %v621 = vadd.f32 %v550, %v617
        %s622 = sadd.s32 %s378, 1
        %s623 = smul.u32 %s622, 3
        %s624 = smul.addr %s623, 4
        %s625 = scalar_lea.vmem %s254, %s624
        %v626 = vld [vmem:[%s625] sm:$0xf]
        %v627 = vld [vmem:[%s625 + $0x4] sm:$0xf]
        %s628 = scalar_lea.vmem %s1, 48
        %v629 = vld [vmem:[%s628] sm:$0xf]
        %v630 = vld [vmem:[%s628 + $0x4] sm:$0xf]
        %v631 = vld [vmem:[%s628 + $0x8] sm:$0xf]
        %v632 = vld [vmem:[%s628 + $0xc] sm:$0xf]
        %v635 = vunpack.c.l.b16 %v626
        %v636 = vunpack.c.l.b16 %v627
        %v637 = vpack.c.b16 %v636, %v635
        %v642 = vunpack.c.l.b16 %v629
        %v643 = vunpack.c.l.b16 %v630
        %v644 = vunpack.c.l.b16 %v631
        %v645 = vunpack.c.l.b16 %v632
        %v646 = vpack.c.b16 %v643, %v642
        %v647 = vpack.c.b16 %v645, %v644
        %v651 = vsel %vm417, %v637, 0
        %653 = vmatprep.subr.bf16.mxu0 0
        %654 = vmatpush1.bf16.msra.mxu0 0
        %655 = vmatprep.subr.bf16.mxu0 0
        %656 = vmatpush1.bf16.msra.mxu0 0
        %657 = vmatprep.subr.bf16.mxu0 0
        %658 = vmatpush1.bf16.msra.mxu0 0
        %659 = vmatprep.subr.bf16.mxu0 0
        %660 = vmatpush1.bf16.msra.mxu0 0
        %661 = vmatprep.subr.bf16.mxu0 0
        %662 = vmatpush1.bf16.msra.mxu0 0
        %663 = vmatprep.subr.bf16.mxu0 0
        %664 = vmatpush1.bf16.msra.mxu0 0
        %665 = vmatprep.subr.bf16.mxu0 0
        %666 = vmatpush1.bf16.msra.mxu0 %v647
        %667 = vmatprep.subr.bf16.mxu0 0
        %668 = vmatpush1.bf16.msra.mxu0 %v646
        %669 = vmatprep.subr.bf16.mxu0 0
        %670 = vmatpush2.bf16.msra.mxu0 0
        %671 = vmatprep.subr.bf16.mxu0 0
        %672 = vmatpush2.bf16.msra.mxu0 0
        %673 = vmatprep.subr.bf16.mxu0 0
        %674 = vmatpush2.bf16.msra.mxu0 0
        %675 = vmatprep.subr.bf16.mxu0 0
        %676 = vmatpush2.bf16.msra.mxu0 0
        %677 = vmatprep.subr.bf16.mxu0 0
        %678 = vmatpush2.bf16.msra.mxu0 0
        %679 = vmatprep.subr.bf16.mxu0 0
        %680 = vmatpush2.bf16.msra.mxu0 0
        %681 = vmatprep.subr.bf16.mxu0 0
        %682 = vmatpush2.bf16.msra.mxu0 0
        %683 = vmatprep.subr.bf16.mxu0 0
        %684 = vmatpush2.bf16.msra.mxu0 0
        %685 = vmatprep.mubr.bf16.mxu0 0
        %686 = vmatmul.mubr.bf16.gmra.mxu0 %v651
        %v687 = vpop.f32.mrf.mxu0
        %v688 = vadd.f32 0.0, %v687
        %v689 = vpop.f32.mrf.mxu0
        %v690 = vpop.f32.mrf.mxu0
        %v691 = vadd.f32 0.0, %v690
        %v692 = vpop.f32.mrf.mxu0
        %693 = vdwg.mxu0
        %v694 = vadd.f32 %v620, %v688
        %v695 = vadd.f32 %v621, %v691
        %v696 = vld [vmem:[%s625] sm:$0xf]
        %v697 = vld [vmem:[%s625 + $0x4] sm:$0xf]
        %v698 = vld [vmem:[%s625 + $0x8] sm:$0x1]
        %s699 = scalar_lea.vmem %s1, 64
        %v700 = vld [vmem:[%s699] sm:$0xf]
        %v701 = vld [vmem:[%s699 + $0x4] sm:$0xf]
        %v702 = vld [vmem:[%s699 + $0x8] sm:$0xf]
        %v703 = vld [vmem:[%s699 + $0xc] sm:$0xf]
        %v707 = vunpack.c.l.b16 %v696
        %v708 = vunpack.c.l.b16 %v697
        %v709 = vunpack.c.l.b16 %v698
        %v710 = vpack.c.b16 %v708, %v707
        %v711 = vpack.c.b16 %v709, %v709
        %v713 = vshrl.u32 %v710, 16
        %v715 = vshll.u32 %v710, 16
        %v717 = vrot.slane %v715, 1
        %v718 = vor.u32 %v713, %v717
        %v720 = vshll.u32 %v711, 16
        %v722 = vrot.slane %v720, 1
        %v723 = vsel %vm480, %v718, %v722
        %v728 = vunpack.c.l.b16 %v700
        %v729 = vunpack.c.l.b16 %v701
        %v730 = vunpack.c.l.b16 %v702
        %v731 = vunpack.c.l.b16 %v703
        %v732 = vpack.c.b16 %v729, %v728
        %v733 = vpack.c.b16 %v731, %v730
        %v737 = vsel %vm417, %v723, 0
        %739 = vmatprep.subr.bf16.mxu0 0
        %740 = vmatpush1.bf16.msra.mxu0 0
        %741 = vmatprep.subr.bf16.mxu0 0
        %742 = vmatpush1.bf16.msra.mxu0 0
        %743 = vmatprep.subr.bf16.mxu0 0
        %744 = vmatpush1.bf16.msra.mxu0 0
        %745 = vmatprep.subr.bf16.mxu0 0
        %746 = vmatpush1.bf16.msra.mxu0 0
        %747 = vmatprep.subr.bf16.mxu0 0
        %748 = vmatpush1.bf16.msra.mxu0 0
        %749 = vmatprep.subr.bf16.mxu0 0
        %750 = vmatpush1.bf16.msra.mxu0 0
        %751 = vmatprep.subr.bf16.mxu0 0
        %752 = vmatpush1.bf16.msra.mxu0 %v733
        %753 = vmatprep.subr.bf16.mxu0 0
        %754 = vmatpush1.bf16.msra.mxu0 %v732
        %755 = vmatprep.subr.bf16.mxu0 0
        %756 = vmatpush2.bf16.msra.mxu0 0
        %757 = vmatprep.subr.bf16.mxu0 0
        %758 = vmatpush2.bf16.msra.mxu0 0
        %759 = vmatprep.subr.bf16.mxu0 0
        %760 = vmatpush2.bf16.msra.mxu0 0
        %761 = vmatprep.subr.bf16.mxu0 0
        %762 = vmatpush2.bf16.msra.mxu0 0
        %763 = vmatprep.subr.bf16.mxu0 0
        %764 = vmatpush2.bf16.msra.mxu0 0
        %765 = vmatprep.subr.bf16.mxu0 0
        %766 = vmatpush2.bf16.msra.mxu0 0
        %767 = vmatprep.subr.bf16.mxu0 0
        %768 = vmatpush2.bf16.msra.mxu0 0
        %769 = vmatprep.subr.bf16.mxu0 0
        %770 = vmatpush2.bf16.msra.mxu0 0
        %771 = vmatprep.mubr.bf16.mxu0 0
        %772 = vmatmul.mubr.bf16.gmra.mxu0 %v737
        %v773 = vpop.f32.mrf.mxu0
        %v774 = vadd.f32 0.0, %v773
        %v775 = vpop.f32.mrf.mxu0
        %v776 = vpop.f32.mrf.mxu0
        %v777 = vadd.f32 0.0, %v776
        %v778 = vpop.f32.mrf.mxu0
        %779 = vdwg.mxu0
        %v780 = vadd.f32 %v694, %v774
        %v781 = vadd.f32 %v695, %v777
        %v782 = vld [vmem:[%s625] sm:$0xe]
        %s783 = scalar_lea.vmem %s1, 80
        %v784 = vld [vmem:[%s783] sm:$0xf]
        %v785 = vld [vmem:[%s783 + $0x4] sm:$0xf]
        %v786 = vld [vmem:[%s783 + $0x8] sm:$0xf]
        %v787 = vld [vmem:[%s783 + $0xc] sm:$0xf]
        %v789 = vunpack.c.l.b16 %v782
        %v790 = vpack.c.b16 %v708, %v789
        %v791 = vrot.slane %v790, 1
        %v792 = vrot.slane %v711, 1
        %v793 = vsel %vm560, %v791, %v792
        %v798 = vunpack.c.l.b16 %v784
        %v799 = vunpack.c.l.b16 %v785
        %v800 = vunpack.c.l.b16 %v786
        %v801 = vunpack.c.l.b16 %v787
        %v802 = vpack.c.b16 %v799, %v798
        %v803 = vpack.c.b16 %v801, %v800
        %v807 = vsel %vm417, %v793, 0
        %809 = vmatprep.subr.bf16.mxu0 0
        %810 = vmatpush1.bf16.msra.mxu0 0
        %811 = vmatprep.subr.bf16.mxu0 0
        %812 = vmatpush1.bf16.msra.mxu0 0
        %813 = vmatprep.subr.bf16.mxu0 0
        %814 = vmatpush1.bf16.msra.mxu0 0
        %815 = vmatprep.subr.bf16.mxu0 0
        %816 = vmatpush1.bf16.msra.mxu0 0
        %817 = vmatprep.subr.bf16.mxu0 0
        %818 = vmatpush1.bf16.msra.mxu0 0
        %819 = vmatprep.subr.bf16.mxu0 0
        %820 = vmatpush1.bf16.msra.mxu0 0
        %821 = vmatprep.subr.bf16.mxu0 0
        %822 = vmatpush1.bf16.msra.mxu0 %v803
        %823 = vmatprep.subr.bf16.mxu0 0
        %824 = vmatpush1.bf16.msra.mxu0 %v802
        %825 = vmatprep.subr.bf16.mxu0 0
        %826 = vmatpush2.bf16.msra.mxu0 0
        %827 = vmatprep.subr.bf16.mxu0 0
        %828 = vmatpush2.bf16.msra.mxu0 0
        %829 = vmatprep.subr.bf16.mxu0 0
        %830 = vmatpush2.bf16.msra.mxu0 0
        %831 = vmatprep.subr.bf16.mxu0 0
        %832 = vmatpush2.bf16.msra.mxu0 0
        %833 = vmatprep.subr.bf16.mxu0 0
        %834 = vmatpush2.bf16.msra.mxu0 0
        %835 = vmatprep.subr.bf16.mxu0 0
        %836 = vmatpush2.bf16.msra.mxu0 0
        %837 = vmatprep.subr.bf16.mxu0 0
        %838 = vmatpush2.bf16.msra.mxu0 0
        %839 = vmatprep.subr.bf16.mxu0 0
        %840 = vmatpush2.bf16.msra.mxu0 0
        %841 = vmatprep.mubr.bf16.mxu0 0
        %842 = vmatmul.mubr.bf16.gmra.mxu0 %v807
        %v843 = vpop.f32.mrf.mxu0
        %v844 = vadd.f32 0.0, %v843
        %v845 = vpop.f32.mrf.mxu0
        %v846 = vpop.f32.mrf.mxu0
        %v847 = vadd.f32 0.0, %v846
        %v848 = vpop.f32.mrf.mxu0
        %849 = vdwg.mxu0
        %v850 = vadd.f32 %v780, %v844
        %v851 = vadd.f32 %v781, %v847
        %s852 = sadd.s32 %s378, 2
        %s853 = smul.u32 %s852, 3
        %s854 = smul.addr %s853, 4
        %s855 = scalar_lea.vmem %s254, %s854
        %v856 = vld [vmem:[%s855] sm:$0xf]
        %v857 = vld [vmem:[%s855 + $0x4] sm:$0xf]
        %s858 = scalar_lea.vmem %s1, 96
        %v859 = vld [vmem:[%s858] sm:$0xf]
        %v860 = vld [vmem:[%s858 + $0x4] sm:$0xf]
        %v861 = vld [vmem:[%s858 + $0x8] sm:$0xf]
        %v862 = vld [vmem:[%s858 + $0xc] sm:$0xf]
        %v865 = vunpack.c.l.b16 %v856
        %v866 = vunpack.c.l.b16 %v857
        %v867 = vpack.c.b16 %v866, %v865
        %v872 = vunpack.c.l.b16 %v859
        %v873 = vunpack.c.l.b16 %v860
        %v874 = vunpack.c.l.b16 %v861
        %v875 = vunpack.c.l.b16 %v862
        %v876 = vpack.c.b16 %v873, %v872
        %v877 = vpack.c.b16 %v875, %v874
        %v881 = vsel %vm417, %v867, 0
        %883 = vmatprep.subr.bf16.mxu0 0
        %884 = vmatpush1.bf16.msra.mxu0 0
        %885 = vmatprep.subr.bf16.mxu0 0
        %886 = vmatpush1.bf16.msra.mxu0 0
        %887 = vmatprep.subr.bf16.mxu0 0
        %888 = vmatpush1.bf16.msra.mxu0 0
        %889 = vmatprep.subr.bf16.mxu0 0
        %890 = vmatpush1.bf16.msra.mxu0 0
        %891 = vmatprep.subr.bf16.mxu0 0
        %892 = vmatpush1.bf16.msra.mxu0 0
        %893 = vmatprep.subr.bf16.mxu0 0
        %894 = vmatpush1.bf16.msra.mxu0 0
        %895 = vmatprep.subr.bf16.mxu0 0
        %896 = vmatpush1.bf16.msra.mxu0 %v877
        %897 = vmatprep.subr.bf16.mxu0 0
        %898 = vmatpush1.bf16.msra.mxu0 %v876
        %899 = vmatprep.subr.bf16.mxu0 0
        %900 = vmatpush2.bf16.msra.mxu0 0
        %901 = vmatprep.subr.bf16.mxu0 0
        %902 = vmatpush2.bf16.msra.mxu0 0
        %903 = vmatprep.subr.bf16.mxu0 0
        %904 = vmatpush2.bf16.msra.mxu0 0
        %905 = vmatprep.subr.bf16.mxu0 0
        %906 = vmatpush2.bf16.msra.mxu0 0
        %907 = vmatprep.subr.bf16.mxu0 0
        %908 = vmatpush2.bf16.msra.mxu0 0
        %909 = vmatprep.subr.bf16.mxu0 0
        %910 = vmatpush2.bf16.msra.mxu0 0
        %911 = vmatprep.subr.bf16.mxu0 0
        %912 = vmatpush2.bf16.msra.mxu0 0
        %913 = vmatprep.subr.bf16.mxu0 0
        %914 = vmatpush2.bf16.msra.mxu0 0
        %915 = vmatprep.mubr.bf16.mxu0 0
        %916 = vmatmul.mubr.bf16.gmra.mxu0 %v881
        %v917 = vpop.f32.mrf.mxu0
        %v918 = vadd.f32 0.0, %v917
        %v919 = vpop.f32.mrf.mxu0
        %v920 = vpop.f32.mrf.mxu0
        %v921 = vadd.f32 0.0, %v920
        %v922 = vpop.f32.mrf.mxu0
        %923 = vdwg.mxu0
        %v924 = vadd.f32 %v850, %v918
        %v925 = vadd.f32 %v851, %v921
        %v926 = vld [vmem:[%s855] sm:$0xf]
        %v927 = vld [vmem:[%s855 + $0x4] sm:$0xf]
        %v928 = vld [vmem:[%s855 + $0x8] sm:$0x1]
        %s929 = scalar_lea.vmem %s1, 112
        %v930 = vld [vmem:[%s929] sm:$0xf]
        %v931 = vld [vmem:[%s929 + $0x4] sm:$0xf]
        %v932 = vld [vmem:[%s929 + $0x8] sm:$0xf]
        %v933 = vld [vmem:[%s929 + $0xc] sm:$0xf]
        %v937 = vunpack.c.l.b16 %v926
        %v938 = vunpack.c.l.b16 %v927
        %v939 = vunpack.c.l.b16 %v928
        %v940 = vpack.c.b16 %v938, %v937
        %v941 = vpack.c.b16 %v939, %v939
        %v943 = vshrl.u32 %v940, 16
        %v945 = vshll.u32 %v940, 16
        %v947 = vrot.slane %v945, 1
        %v948 = vor.u32 %v943, %v947
        %v950 = vshll.u32 %v941, 16
        %v952 = vrot.slane %v950, 1
        %v953 = vsel %vm480, %v948, %v952
        %v958 = vunpack.c.l.b16 %v930
        %v959 = vunpack.c.l.b16 %v931
        %v960 = vunpack.c.l.b16 %v932
        %v961 = vunpack.c.l.b16 %v933
        %v962 = vpack.c.b16 %v959, %v958
        %v963 = vpack.c.b16 %v961, %v960
        %v967 = vsel %vm417, %v953, 0
        %969 = vmatprep.subr.bf16.mxu0 0
        %970 = vmatpush1.bf16.msra.mxu0 0
        %971 = vmatprep.subr.bf16.mxu0 0
        %972 = vmatpush1.bf16.msra.mxu0 0
        %973 = vmatprep.subr.bf16.mxu0 0
        %974 = vmatpush1.bf16.msra.mxu0 0
        %975 = vmatprep.subr.bf16.mxu0 0
        %976 = vmatpush1.bf16.msra.mxu0 0
        %977 = vmatprep.subr.bf16.mxu0 0
        %978 = vmatpush1.bf16.msra.mxu0 0
        %979 = vmatprep.subr.bf16.mxu0 0
        %980 = vmatpush1.bf16.msra.mxu0 0
        %981 = vmatprep.subr.bf16.mxu0 0
        %982 = vmatpush1.bf16.msra.mxu0 %v963
        %983 = vmatprep.subr.bf16.mxu0 0
        %984 = vmatpush1.bf16.msra.mxu0 %v962
        %985 = vmatprep.subr.bf16.mxu0 0
        %986 = vmatpush2.bf16.msra.mxu0 0
        %987 = vmatprep.subr.bf16.mxu0 0
        %988 = vmatpush2.bf16.msra.mxu0 0
        %989 = vmatprep.subr.bf16.mxu0 0
        %990 = vmatpush2.bf16.msra.mxu0 0
        %991 = vmatprep.subr.bf16.mxu0 0
        %992 = vmatpush2.bf16.msra.mxu0 0
        %993 = vmatprep.subr.bf16.mxu0 0
        %994 = vmatpush2.bf16.msra.mxu0 0
        %995 = vmatprep.subr.bf16.mxu0 0
        %996 = vmatpush2.bf16.msra.mxu0 0
        %997 = vmatprep.subr.bf16.mxu0 0
        %998 = vmatpush2.bf16.msra.mxu0 0
        %999 = vmatprep.subr.bf16.mxu0 0
        %1000 = vmatpush2.bf16.msra.mxu0 0
        %1001 = vmatprep.mubr.bf16.mxu0 0
        %1002 = vmatmul.mubr.bf16.gmra.mxu0 %v967
        %v1003 = vpop.f32.mrf.mxu0
        %v1004 = vadd.f32 0.0, %v1003
        %v1005 = vpop.f32.mrf.mxu0
        %v1006 = vpop.f32.mrf.mxu0
        %v1007 = vadd.f32 0.0, %v1006
        %v1008 = vpop.f32.mrf.mxu0
        %1009 = vdwg.mxu0
        %v1010 = vadd.f32 %v924, %v1004
        %v1011 = vadd.f32 %v925, %v1007
        %v1012 = vld [vmem:[%s855] sm:$0xe]
        %s1013 = scalar_lea.vmem %s1, 128
        %v1014 = vld [vmem:[%s1013] sm:$0xf]
        %v1015 = vld [vmem:[%s1013 + $0x4] sm:$0xf]
        %v1016 = vld [vmem:[%s1013 + $0x8] sm:$0xf]
        %v1017 = vld [vmem:[%s1013 + $0xc] sm:$0xf]
        %v1019 = vunpack.c.l.b16 %v1012
        %v1020 = vpack.c.b16 %v938, %v1019
        %v1021 = vrot.slane %v1020, 1
        %v1022 = vrot.slane %v941, 1
        %v1023 = vsel %vm560, %v1021, %v1022
        %v1028 = vunpack.c.l.b16 %v1014
        %v1029 = vunpack.c.l.b16 %v1015
        %v1030 = vunpack.c.l.b16 %v1016
        %v1031 = vunpack.c.l.b16 %v1017
        %v1032 = vpack.c.b16 %v1029, %v1028
        %v1033 = vpack.c.b16 %v1031, %v1030
        %v1037 = vsel %vm417, %v1023, 0
        %1039 = vmatprep.subr.bf16.mxu0 0
        %1040 = vmatpush1.bf16.msra.mxu0 0
        %1041 = vmatprep.subr.bf16.mxu0 0
        %1042 = vmatpush1.bf16.msra.mxu0 0
        %1043 = vmatprep.subr.bf16.mxu0 0
        %1044 = vmatpush1.bf16.msra.mxu0 0
        %1045 = vmatprep.subr.bf16.mxu0 0
        %1046 = vmatpush1.bf16.msra.mxu0 0
        %1047 = vmatprep.subr.bf16.mxu0 0
        %1048 = vmatpush1.bf16.msra.mxu0 0
        %1049 = vmatprep.subr.bf16.mxu0 0
        %1050 = vmatpush1.bf16.msra.mxu0 0
        %1051 = vmatprep.subr.bf16.mxu0 0
        %1052 = vmatpush1.bf16.msra.mxu0 %v1033
        %1053 = vmatprep.subr.bf16.mxu0 0
        %1054 = vmatpush1.bf16.msra.mxu0 %v1032
        %1055 = vmatprep.subr.bf16.mxu0 0
        %1056 = vmatpush2.bf16.msra.mxu0 0
        %1057 = vmatprep.subr.bf16.mxu0 0
        %1058 = vmatpush2.bf16.msra.mxu0 0
        %1059 = vmatprep.subr.bf16.mxu0 0
        %1060 = vmatpush2.bf16.msra.mxu0 0
        %1061 = vmatprep.subr.bf16.mxu0 0
        %1062 = vmatpush2.bf16.msra.mxu0 0
        %1063 = vmatprep.subr.bf16.mxu0 0
        %1064 = vmatpush2.bf16.msra.mxu0 0
        %1065 = vmatprep.subr.bf16.mxu0 0
        %1066 = vmatpush2.bf16.msra.mxu0 0
        %1067 = vmatprep.subr.bf16.mxu0 0
        %1068 = vmatpush2.bf16.msra.mxu0 0
        %1069 = vmatprep.subr.bf16.mxu0 0
        %1070 = vmatpush2.bf16.msra.mxu0 0
        %1071 = vmatprep.mubr.bf16.mxu0 0
        %1072 = vmatmul.mubr.bf16.gmra.mxu0 %v1037
        %v1073 = vpop.f32.mrf.mxu0
        %v1074 = vadd.f32 0.0, %v1073
        %v1075 = vpop.f32.mrf.mxu0
        %v1076 = vpop.f32.mrf.mxu0
        %v1077 = vadd.f32 0.0, %v1076
        %v1078 = vpop.f32.mrf.mxu0
        %1079 = vdwg.mxu0
        %v1080 = vadd.f32 %v1010, %v1074
        %v1081 = vadd.f32 %v1011, %v1077
        %v1082 = vmax.f32 %v1080, 0.0
        %v1083 = vmax.f32 %v1081, 0.0
        %v1084 = vpack.c.bf16 %v1083, %v1082
        %v1086 = vshrl.u32 %v1084, 16
        %v1088 = vrot.slane %v1086, 7
        %v1089 = vshll.u32 %v1084, 16
        %v1091 = vor.u32 %v1088, %v1089
        %vm1094 = vcmask 1040384
        %vm1095 = vsmask.f32 256
        %vm1096 = vmand %vm1094, %vm1095
        %v1097 = vsel %vm1096, 0, %v1091
        %v1098 = vsel %vm1096, %v1088, 0
        %v1101 = vunpack.c.l.b16 %v1097
        %v1102 = vunpack.c.h.b16 %v1097
        %v1103 = vunpack.c.l.b16 %v1098
        %v1104 = vpack.c.b16 %v1101, %v1101
        %v1105 = vpack.c.b16 %v1102, %v1102
        %v1106 = vpack.c.b16 %v1103, %v1103
        %s1110 = smul.addr %s623, 4
        %s1111 = scalar_lea.vmem [#allocation2], %s1110
        %1112 = vst.msk [vmem:[%s1111] sm:$0xf] %vm266, %v1104
        %1113 = vst.msk [vmem:[%s1111 + $0x4] sm:$0xf] %vm266, %v1105
        %1114 = vst.msk [vmem:[%s1111 + $0x8] sm:$0x1] %vm269, %v1106
      $region45: #{rpnv2_forward.6} parent=39 // loop_footer
        %s382 = sadd.s32 1, %s378
      $region46: #{rpnv2_forward.6} parent=39 // loop_footer_branch
        %377 = sbr.rel target = $region42
      $region47: #{rpnv2_forward.6} parent=39 // loop_exit
        _
      loop: start=0, step=1, limit=16
      $region48: #{rpnv2_forward.6} parent=39 // loop_pre_header
        _
      $region49: #{rpnv2_forward.6} parent=39 // loop_header
        %s1116 = sphi 0, %s1120
        %p1117 = scmp.ge.s32.totalorder %s1116, 16
      $region50: #{rpnv2_forward.6} parent=39 // loop_header_branch
        %1119 = sbr.rel (%p1117) target = $region54
      $region51: #{rpnv2_forward.6} parent=39 // loop_body
        %s1121 = scalar_lea.vmem %s2, 1
        %v1122 = vld [vmem:[%s1121] sm:$0x1]
        %v1124 = vlaneseq
        %v1125 = vshrl.u32 %v1124, 7
        %v1126 = vsub.s32 0, %v1125
        %v1127 = vrot.slane %v1122, %v1126
        %v1129 = vadd.f32 %v1127, 0.0
        %s1130 = smul.u32 %s1116, 3
        %s1131 = smul.addr %s1130, 4
        %s1132 = scalar_lea.vmem [#allocation2], %s1131
        %v1133 = vld [vmem:[%s1132] sm:$0xf]
        %v1134 = vld [vmem:[%s1132 + $0x4] sm:$0xf]
        %s1135 = scalar_lea.vmem %s1, 144
        %v1136 = vld [vmem:[%s1135] sm:$0xf]
        %v1137 = vld [vmem:[%s1135 + $0x4] sm:$0xf]
        %v1138 = vld [vmem:[%s1135 + $0x8] sm:$0xf]
        %v1139 = vld [vmem:[%s1135 + $0xc] sm:$0xf]
        %v1142 = vunpack.c.l.b16 %v1133
        %v1143 = vunpack.c.l.b16 %v1134
        %v1144 = vpack.c.b16 %v1143, %v1142
        %v1149 = vunpack.c.l.b16 %v1136
        %v1150 = vunpack.c.l.b16 %v1137
        %v1151 = vunpack.c.l.b16 %v1138
        %v1152 = vunpack.c.l.b16 %v1139
        %v1153 = vpack.c.b16 %v1150, %v1149
        %v1154 = vpack.c.b16 %v1152, %v1151
        %vm1157 = vcmask 261120
        %v1159 = vsel %vm1157, %v1144, 0
        %1161 = vmatprep.subr.bf16.mxu0 0
        %1162 = vmatpush1.bf16.msra.mxu0 0
        %1163 = vmatprep.subr.bf16.mxu0 0
        %1164 = vmatpush1.bf16.msra.mxu0 0
        %1165 = vmatprep.subr.bf16.mxu0 0
        %1166 = vmatpush1.bf16.msra.mxu0 0
        %1167 = vmatprep.subr.bf16.mxu0 0
        %1168 = vmatpush1.bf16.msra.mxu0 0
        %1169 = vmatprep.subr.bf16.mxu0 0
        %1170 = vmatpush1.bf16.msra.mxu0 0
        %1171 = vmatprep.subr.bf16.mxu0 0
        %1172 = vmatpush1.bf16.msra.mxu0 0
        %1173 = vmatprep.subr.bf16.mxu0 0
        %1174 = vmatpush1.bf16.msra.mxu0 %v1154
        %1175 = vmatprep.subr.bf16.mxu0 0
        %1176 = vmatpush1.bf16.msra.mxu0 %v1153
        %1177 = vmatprep.subr.bf16.mxu0 0
        %1178 = vmatpush2.bf16.msra.mxu0 0
        %1179 = vmatprep.subr.bf16.mxu0 0
        %1180 = vmatpush2.bf16.msra.mxu0 0
        %1181 = vmatprep.subr.bf16.mxu0 0
        %1182 = vmatpush2.bf16.msra.mxu0 0
        %1183 = vmatprep.subr.bf16.mxu0 0
        %1184 = vmatpush2.bf16.msra.mxu0 0
        %1185 = vmatprep.subr.bf16.mxu0 0
        %1186 = vmatpush2.bf16.msra.mxu0 0
        %1187 = vmatprep.subr.bf16.mxu0 0
        %1188 = vmatpush2.bf16.msra.mxu0 0
        %1189 = vmatprep.subr.bf16.mxu0 0
        %1190 = vmatpush2.bf16.msra.mxu0 0
        %1191 = vmatprep.subr.bf16.mxu0 0
        %1192 = vmatpush2.bf16.msra.mxu0 0
        %1193 = vmatprep.mubr.bf16.mxu0 0
        %1194 = vmatmul.mubr.bf16.gmra.mxu0 %v1159
        %v1195 = vpop.f32.mrf.mxu0
        %v1196 = vadd.f32 0.0, %v1195
        %v1197 = vpop.f32.mrf.mxu0
        %v1198 = vpop.f32.mrf.mxu0
        %v1199 = vadd.f32 0.0, %v1198
        %v1200 = vpop.f32.mrf.mxu0
        %1201 = vdwg.mxu0
        %v1202 = vadd.f32 %v1129, %v1196
        %v1203 = vadd.f32 %v1129, %v1199
        %v1204 = vld [vmem:[%s1132] sm:$0xf]
        %v1205 = vld [vmem:[%s1132 + $0x4] sm:$0xf]
        %v1206 = vld [vmem:[%s1132 + $0x8] sm:$0x1]
        %s1207 = scalar_lea.vmem %s1, 160
        %v1208 = vld [vmem:[%s1207] sm:$0xf]
        %v1209 = vld [vmem:[%s1207 + $0x4] sm:$0xf]
        %v1210 = vld [vmem:[%s1207 + $0x8] sm:$0xf]
        %v1211 = vld [vmem:[%s1207 + $0xc] sm:$0xf]
        %v1215 = vunpack.c.l.b16 %v1204
        %v1216 = vunpack.c.l.b16 %v1205
        %v1217 = vunpack.c.l.b16 %v1206
        %v1218 = vpack.c.b16 %v1216, %v1215
        %v1219 = vpack.c.b16 %v1217, %v1217
        %vm1220 = vsmask.f32 7424
        %v1222 = vshrl.u32 %v1218, 16
        %v1224 = vshll.u32 %v1218, 16
        %v1226 = vrot.slane %v1224, 1
        %v1227 = vor.u32 %v1222, %v1226
        %v1229 = vshll.u32 %v1219, 16
        %v1231 = vrot.slane %v1229, 1
        %v1232 = vsel %vm1220, %v1227, %v1231
        %v1237 = vunpack.c.l.b16 %v1208
        %v1238 = vunpack.c.l.b16 %v1209
        %v1239 = vunpack.c.l.b16 %v1210
        %v1240 = vunpack.c.l.b16 %v1211
        %v1241 = vpack.c.b16 %v1238, %v1237
        %v1242 = vpack.c.b16 %v1240, %v1239
        %v1246 = vsel %vm1157, %v1232, 0
        %1248 = vmatprep.subr.bf16.mxu0 0
        %1249 = vmatpush1.bf16.msra.mxu0 0
        %1250 = vmatprep.subr.bf16.mxu0 0
        %1251 = vmatpush1.bf16.msra.mxu0 0
        %1252 = vmatprep.subr.bf16.mxu0 0
        %1253 = vmatpush1.bf16.msra.mxu0 0
        %1254 = vmatprep.subr.bf16.mxu0 0
        %1255 = vmatpush1.bf16.msra.mxu0 0
        %1256 = vmatprep.subr.bf16.mxu0 0
        %1257 = vmatpush1.bf16.msra.mxu0 0
        %1258 = vmatprep.subr.bf16.mxu0 0
        %1259 = vmatpush1.bf16.msra.mxu0 0
        %1260 = vmatprep.subr.bf16.mxu0 0
        %1261 = vmatpush1.bf16.msra.mxu0 %v1242
        %1262 = vmatprep.subr.bf16.mxu0 0
        %1263 = vmatpush1.bf16.msra.mxu0 %v1241
        %1264 = vmatprep.subr.bf16.mxu0 0
        %1265 = vmatpush2.bf16.msra.mxu0 0
        %1266 = vmatprep.subr.bf16.mxu0 0
        %1267 = vmatpush2.bf16.msra.mxu0 0
        %1268 = vmatprep.subr.bf16.mxu0 0
        %1269 = vmatpush2.bf16.msra.mxu0 0
        %1270 = vmatprep.subr.bf16.mxu0 0
        %1271 = vmatpush2.bf16.msra.mxu0 0
        %1272 = vmatprep.subr.bf16.mxu0 0
        %1273 = vmatpush2.bf16.msra.mxu0 0
        %1274 = vmatprep.subr.bf16.mxu0 0
        %1275 = vmatpush2.bf16.msra.mxu0 0
        %1276 = vmatprep.subr.bf16.mxu0 0
        %1277 = vmatpush2.bf16.msra.mxu0 0
        %1278 = vmatprep.subr.bf16.mxu0 0
        %1279 = vmatpush2.bf16.msra.mxu0 0
        %1280 = vmatprep.mubr.bf16.mxu0 0
        %1281 = vmatmul.mubr.bf16.gmra.mxu0 %v1246
        %v1282 = vpop.f32.mrf.mxu0
        %v1283 = vadd.f32 0.0, %v1282
        %v1284 = vpop.f32.mrf.mxu0
        %v1285 = vpop.f32.mrf.mxu0
        %v1286 = vadd.f32 0.0, %v1285
        %v1287 = vpop.f32.mrf.mxu0
        %1288 = vdwg.mxu0
        %v1289 = vadd.f32 %v1202, %v1283
        %v1290 = vadd.f32 %v1203, %v1286
        %v1291 = vld [vmem:[%s1132] sm:$0xe]
        %s1292 = scalar_lea.vmem %s1, 176
        %v1293 = vld [vmem:[%s1292] sm:$0xf]
        %v1294 = vld [vmem:[%s1292 + $0x4] sm:$0xf]
        %v1295 = vld [vmem:[%s1292 + $0x8] sm:$0xf]
        %v1296 = vld [vmem:[%s1292 + $0xc] sm:$0xf]
        %v1298 = vunpack.c.l.b16 %v1291
        %v1299 = vpack.c.b16 %v1216, %v1298
        %vm1300 = vcmask 1046528
        %v1301 = vrot.slane %v1299, 1
        %v1302 = vrot.slane %v1219, 1
        %v1303 = vsel %vm1300, %v1301, %v1302
        %v1308 = vunpack.c.l.b16 %v1293
        %v1309 = vunpack.c.l.b16 %v1294
        %v1310 = vunpack.c.l.b16 %v1295
        %v1311 = vunpack.c.l.b16 %v1296
        %v1312 = vpack.c.b16 %v1309, %v1308
        %v1313 = vpack.c.b16 %v1311, %v1310
        %v1317 = vsel %vm1157, %v1303, 0
        %1319 = vmatprep.subr.bf16.mxu0 0
        %1320 = vmatpush1.bf16.msra.mxu0 0
        %1321 = vmatprep.subr.bf16.mxu0 0
        %1322 = vmatpush1.bf16.msra.mxu0 0
        %1323 = vmatprep.subr.bf16.mxu0 0
        %1324 = vmatpush1.bf16.msra.mxu0 0
        %1325 = vmatprep.subr.bf16.mxu0 0
        %1326 = vmatpush1.bf16.msra.mxu0 0
        %1327 = vmatprep.subr.bf16.mxu0 0
        %1328 = vmatpush1.bf16.msra.mxu0 0
        %1329 = vmatprep.subr.bf16.mxu0 0
        %1330 = vmatpush1.bf16.msra.mxu0 0
        %1331 = vmatprep.subr.bf16.mxu0 0
        %1332 = vmatpush1.bf16.msra.mxu0 %v1313
        %1333 = vmatprep.subr.bf16.mxu0 0
        %1334 = vmatpush1.bf16.msra.mxu0 %v1312
        %1335 = vmatprep.subr.bf16.mxu0 0
        %1336 = vmatpush2.bf16.msra.mxu0 0
        %1337 = vmatprep.subr.bf16.mxu0 0
        %1338 = vmatpush2.bf16.msra.mxu0 0
        %1339 = vmatprep.subr.bf16.mxu0 0
        %1340 = vmatpush2.bf16.msra.mxu0 0
        %1341 = vmatprep.subr.bf16.mxu0 0
        %1342 = vmatpush2.bf16.msra.mxu0 0
        %1343 = vmatprep.subr.bf16.mxu0 0
        %1344 = vmatpush2.bf16.msra.mxu0 0
        %1345 = vmatprep.subr.bf16.mxu0 0
        %1346 = vmatpush2.bf16.msra.mxu0 0
        %1347 = vmatprep.subr.bf16.mxu0 0
        %1348 = vmatpush2.bf16.msra.mxu0 0
        %1349 = vmatprep.subr.bf16.mxu0 0
        %1350 = vmatpush2.bf16.msra.mxu0 0
        %1351 = vmatprep.mubr.bf16.mxu0 0
        %1352 = vmatmul.mubr.bf16.gmra.mxu0 %v1317
        %v1353 = vpop.f32.mrf.mxu0
        %v1354 = vadd.f32 0.0, %v1353
        %v1355 = vpop.f32.mrf.mxu0
        %v1356 = vpop.f32.mrf.mxu0
        %v1357 = vadd.f32 0.0, %v1356
        %v1358 = vpop.f32.mrf.mxu0
        %1359 = vdwg.mxu0
        %v1360 = vadd.f32 %v1289, %v1354
        %v1361 = vadd.f32 %v1290, %v1357
        %s1362 = sadd.s32 %s1116, 1
        %s1363 = smul.u32 %s1362, 3
        %s1364 = smul.addr %s1363, 4
        %s1365 = scalar_lea.vmem [#allocation2], %s1364
        %v1366 = vld [vmem:[%s1365] sm:$0xf]
        %v1367 = vld [vmem:[%s1365 + $0x4] sm:$0xf]
        %s1368 = scalar_lea.vmem %s1, 192
        %v1369 = vld [vmem:[%s1368] sm:$0xf]
        %v1370 = vld [vmem:[%s1368 + $0x4] sm:$0xf]
        %v1371 = vld [vmem:[%s1368 + $0x8] sm:$0xf]
        %v1372 = vld [vmem:[%s1368 + $0xc] sm:$0xf]
        %v1375 = vunpack.c.l.b16 %v1366
        %v1376 = vunpack.c.l.b16 %v1367
        %v1377 = vpack.c.b16 %v1376, %v1375
        %v1382 = vunpack.c.l.b16 %v1369
        %v1383 = vunpack.c.l.b16 %v1370
        %v1384 = vunpack.c.l.b16 %v1371
        %v1385 = vunpack.c.l.b16 %v1372
        %v1386 = vpack.c.b16 %v1383, %v1382
        %v1387 = vpack.c.b16 %v1385, %v1384
        %v1391 = vsel %vm1157, %v1377, 0
        %1393 = vmatprep.subr.bf16.mxu0 0
        %1394 = vmatpush1.bf16.msra.mxu0 0
        %1395 = vmatprep.subr.bf16.mxu0 0
        %1396 = vmatpush1.bf16.msra.mxu0 0
        %1397 = vmatprep.subr.bf16.mxu0 0
        %1398 = vmatpush1.bf16.msra.mxu0 0
        %1399 = vmatprep.subr.bf16.mxu0 0
        %1400 = vmatpush1.bf16.msra.mxu0 0
        %1401 = vmatprep.subr.bf16.mxu0 0
        %1402 = vmatpush1.bf16.msra.mxu0 0
        %1403 = vmatprep.subr.bf16.mxu0 0
        %1404 = vmatpush1.bf16.msra.mxu0 0
        %1405 = vmatprep.subr.bf16.mxu0 0
        %1406 = vmatpush1.bf16.msra.mxu0 %v1387
        %1407 = vmatprep.subr.bf16.mxu0 0
        %1408 = vmatpush1.bf16.msra.mxu0 %v1386
        %1409 = vmatprep.subr.bf16.mxu0 0
        %1410 = vmatpush2.bf16.msra.mxu0 0
        %1411 = vmatprep.subr.bf16.mxu0 0
        %1412 = vmatpush2.bf16.msra.mxu0 0
        %1413 = vmatprep.subr.bf16.mxu0 0
        %1414 = vmatpush2.bf16.msra.mxu0 0
        %1415 = vmatprep.subr.bf16.mxu0 0
        %1416 = vmatpush2.bf16.msra.mxu0 0
        %1417 = vmatprep.subr.bf16.mxu0 0
        %1418 = vmatpush2.bf16.msra.mxu0 0
        %1419 = vmatprep.subr.bf16.mxu0 0
        %1420 = vmatpush2.bf16.msra.mxu0 0
        %1421 = vmatprep.subr.bf16.mxu0 0
        %1422 = vmatpush2.bf16.msra.mxu0 0
        %1423 = vmatprep.subr.bf16.mxu0 0
        %1424 = vmatpush2.bf16.msra.mxu0 0
        %1425 = vmatprep.mubr.bf16.mxu0 0
        %1426 = vmatmul.mubr.bf16.gmra.mxu0 %v1391
        %v1427 = vpop.f32.mrf.mxu0
        %v1428 = vadd.f32 0.0, %v1427
        %v1429 = vpop.f32.mrf.mxu0
        %v1430 = vpop.f32.mrf.mxu0
        %v1431 = vadd.f32 0.0, %v1430
        %v1432 = vpop.f32.mrf.mxu0
        %1433 = vdwg.mxu0
        %v1434 = vadd.f32 %v1360, %v1428
        %v1435 = vadd.f32 %v1361, %v1431
        %v1436 = vld [vmem:[%s1365] sm:$0xf]
        %v1437 = vld [vmem:[%s1365 + $0x4] sm:$0xf]
        %v1438 = vld [vmem:[%s1365 + $0x8] sm:$0x1]
        %s1439 = scalar_lea.vmem %s1, 208
        %v1440 = vld [vmem:[%s1439] sm:$0xf]
        %v1441 = vld [vmem:[%s1439 + $0x4] sm:$0xf]
        %v1442 = vld [vmem:[%s1439 + $0x8] sm:$0xf]
        %v1443 = vld [vmem:[%s1439 + $0xc] sm:$0xf]
        %v1447 = vunpack.c.l.b16 %v1436
        %v1448 = vunpack.c.l.b16 %v1437
        %v1449 = vunpack.c.l.b16 %v1438
        %v1450 = vpack.c.b16 %v1448, %v1447
        %v1451 = vpack.c.b16 %v1449, %v1449
        %v1453 = vshrl.u32 %v1450, 16
        %v1455 = vshll.u32 %v1450, 16
        %v1457 = vrot.slane %v1455, 1
        %v1458 = vor.u32 %v1453, %v1457
        %v1460 = vshll.u32 %v1451, 16
        %v1462 = vrot.slane %v1460, 1
        %v1463 = vsel %vm1220, %v1458, %v1462
        %v1468 = vunpack.c.l.b16 %v1440
        %v1469 = vunpack.c.l.b16 %v1441
        %v1470 = vunpack.c.l.b16 %v1442
        %v1471 = vunpack.c.l.b16 %v1443
        %v1472 = vpack.c.b16 %v1469, %v1468
        %v1473 = vpack.c.b16 %v1471, %v1470
        %v1477 = vsel %vm1157, %v1463, 0
        %1479 = vmatprep.subr.bf16.mxu0 0
        %1480 = vmatpush1.bf16.msra.mxu0 0
        %1481 = vmatprep.subr.bf16.mxu0 0
        %1482 = vmatpush1.bf16.msra.mxu0 0
        %1483 = vmatprep.subr.bf16.mxu0 0
        %1484 = vmatpush1.bf16.msra.mxu0 0
        %1485 = vmatprep.subr.bf16.mxu0 0
        %1486 = vmatpush1.bf16.msra.mxu0 0
        %1487 = vmatprep.subr.bf16.mxu0 0
        %1488 = vmatpush1.bf16.msra.mxu0 0
        %1489 = vmatprep.subr.bf16.mxu0 0
        %1490 = vmatpush1.bf16.msra.mxu0 0
        %1491 = vmatprep.subr.bf16.mxu0 0
        %1492 = vmatpush1.bf16.msra.mxu0 %v1473
        %1493 = vmatprep.subr.bf16.mxu0 0
        %1494 = vmatpush1.bf16.msra.mxu0 %v1472
        %1495 = vmatprep.subr.bf16.mxu0 0
        %1496 = vmatpush2.bf16.msra.mxu0 0
        %1497 = vmatprep.subr.bf16.mxu0 0
        %1498 = vmatpush2.bf16.msra.mxu0 0
        %1499 = vmatprep.subr.bf16.mxu0 0
        %1500 = vmatpush2.bf16.msra.mxu0 0
        %1501 = vmatprep.subr.bf16.mxu0 0
        %1502 = vmatpush2.bf16.msra.mxu0 0
        %1503 = vmatprep.subr.bf16.mxu0 0
        %1504 = vmatpush2.bf16.msra.mxu0 0
        %1505 = vmatprep.subr.bf16.mxu0 0
        %1506 = vmatpush2.bf16.msra.mxu0 0
        %1507 = vmatprep.subr.bf16.mxu0 0
        %1508 = vmatpush2.bf16.msra.mxu0 0
        %1509 = vmatprep.subr.bf16.mxu0 0
        %1510 = vmatpush2.bf16.msra.mxu0 0
        %1511 = vmatprep.mubr.bf16.mxu0 0
        %1512 = vmatmul.mubr.bf16.gmra.mxu0 %v1477
        %v1513 = vpop.f32.mrf.mxu0
        %v1514 = vadd.f32 0.0, %v1513
        %v1515 = vpop.f32.mrf.mxu0
        %v1516 = vpop.f32.mrf.mxu0
        %v1517 = vadd.f32 0.0, %v1516
        %v1518 = vpop.f32.mrf.mxu0
        %1519 = vdwg.mxu0
        %v1520 = vadd.f32 %v1434, %v1514
        %v1521 = vadd.f32 %v1435, %v1517
        %v1522 = vld [vmem:[%s1365] sm:$0xe]
        %s1523 = scalar_lea.vmem %s1, 224
        %v1524 = vld [vmem:[%s1523] sm:$0xf]
        %v1525 = vld [vmem:[%s1523 + $0x4] sm:$0xf]
        %v1526 = vld [vmem:[%s1523 + $0x8] sm:$0xf]
        %v1527 = vld [vmem:[%s1523 + $0xc] sm:$0xf]
        %v1529 = vunpack.c.l.b16 %v1522
        %v1530 = vpack.c.b16 %v1448, %v1529
        %v1531 = vrot.slane %v1530, 1
        %v1532 = vrot.slane %v1451, 1
        %v1533 = vsel %vm1300, %v1531, %v1532
        %v1538 = vunpack.c.l.b16 %v1524
        %v1539 = vunpack.c.l.b16 %v1525
        %v1540 = vunpack.c.l.b16 %v1526
        %v1541 = vunpack.c.l.b16 %v1527
        %v1542 = vpack.c.b16 %v1539, %v1538
        %v1543 = vpack.c.b16 %v1541, %v1540
        %v1547 = vsel %vm1157, %v1533, 0
        %1549 = vmatprep.subr.bf16.mxu0 0
        %1550 = vmatpush1.bf16.msra.mxu0 0
        %1551 = vmatprep.subr.bf16.mxu0 0
        %1552 = vmatpush1.bf16.msra.mxu0 0
        %1553 = vmatprep.subr.bf16.mxu0 0
        %1554 = vmatpush1.bf16.msra.mxu0 0
        %1555 = vmatprep.subr.bf16.mxu0 0
        %1556 = vmatpush1.bf16.msra.mxu0 0
        %1557 = vmatprep.subr.bf16.mxu0 0
        %1558 = vmatpush1.bf16.msra.mxu0 0
        %1559 = vmatprep.subr.bf16.mxu0 0
        %1560 = vmatpush1.bf16.msra.mxu0 0
        %1561 = vmatprep.subr.bf16.mxu0 0
        %1562 = vmatpush1.bf16.msra.mxu0 %v1543
        %1563 = vmatprep.subr.bf16.mxu0 0
        %1564 = vmatpush1.bf16.msra.mxu0 %v1542
        %1565 = vmatprep.subr.bf16.mxu0 0
        %1566 = vmatpush2.bf16.msra.mxu0 0
        %1567 = vmatprep.subr.bf16.mxu0 0
        %1568 = vmatpush2.bf16.msra.mxu0 0
        %1569 = vmatprep.subr.bf16.mxu0 0
        %1570 = vmatpush2.bf16.msra.mxu0 0
        %1571 = vmatprep.subr.bf16.mxu0 0
        %1572 = vmatpush2.bf16.msra.mxu0 0
        %1573 = vmatprep.subr.bf16.mxu0 0
        %1574 = vmatpush2.bf16.msra.mxu0 0
        %1575 = vmatprep.subr.bf16.mxu0 0
        %1576 = vmatpush2.bf16.msra.mxu0 0
        %1577 = vmatprep.subr.bf16.mxu0 0
        %1578 = vmatpush2.bf16.msra.mxu0 0
        %1579 = vmatprep.subr.bf16.mxu0 0
        %1580 = vmatpush2.bf16.msra.mxu0 0
        %1581 = vmatprep.mubr.bf16.mxu0 0
        %1582 = vmatmul.mubr.bf16.gmra.mxu0 %v1547
        %v1583 = vpop.f32.mrf.mxu0
        %v1584 = vadd.f32 0.0, %v1583
        %v1585 = vpop.f32.mrf.mxu0
        %v1586 = vpop.f32.mrf.mxu0
        %v1587 = vadd.f32 0.0, %v1586
        %v1588 = vpop.f32.mrf.mxu0
        %1589 = vdwg.mxu0
        %v1590 = vadd.f32 %v1520, %v1584
        %v1591 = vadd.f32 %v1521, %v1587
        %s1592 = sadd.s32 %s1116, 2
        %s1593 = smul.u32 %s1592, 3
        %s1594 = smul.addr %s1593, 4
        %s1595 = scalar_lea.vmem [#allocation2], %s1594
        %v1596 = vld [vmem:[%s1595] sm:$0xf]
        %v1597 = vld [vmem:[%s1595 + $0x4] sm:$0xf]
        %s1598 = scalar_lea.vmem %s1, 240
        %v1599 = vld [vmem:[%s1598] sm:$0xf]
        %v1600 = vld [vmem:[%s1598 + $0x4] sm:$0xf]
        %v1601 = vld [vmem:[%s1598 + $0x8] sm:$0xf]
        %v1602 = vld [vmem:[%s1598 + $0xc] sm:$0xf]
        %v1605 = vunpack.c.l.b16 %v1596
        %v1606 = vunpack.c.l.b16 %v1597
        %v1607 = vpack.c.b16 %v1606, %v1605
        %v1612 = vunpack.c.l.b16 %v1599
        %v1613 = vunpack.c.l.b16 %v1600
        %v1614 = vunpack.c.l.b16 %v1601
        %v1615 = vunpack.c.l.b16 %v1602
        %v1616 = vpack.c.b16 %v1613, %v1612
        %v1617 = vpack.c.b16 %v1615, %v1614
        %v1621 = vsel %vm1157, %v1607, 0
        %1623 = vmatprep.subr.bf16.mxu0 0
        %1624 = vmatpush1.bf16.msra.mxu0 0
        %1625 = vmatprep.subr.bf16.mxu0 0
        %1626 = vmatpush1.bf16.msra.mxu0 0
        %1627 = vmatprep.subr.bf16.mxu0 0
        %1628 = vmatpush1.bf16.msra.mxu0 0
        %1629 = vmatprep.subr.bf16.mxu0 0
        %1630 = vmatpush1.bf16.msra.mxu0 0
        %1631 = vmatprep.subr.bf16.mxu0 0
        %1632 = vmatpush1.bf16.msra.mxu0 0
        %1633 = vmatprep.subr.bf16.mxu0 0
        %1634 = vmatpush1.bf16.msra.mxu0 0
        %1635 = vmatprep.subr.bf16.mxu0 0
        %1636 = vmatpush1.bf16.msra.mxu0 %v1617
        %1637 = vmatprep.subr.bf16.mxu0 0
        %1638 = vmatpush1.bf16.msra.mxu0 %v1616
        %1639 = vmatprep.subr.bf16.mxu0 0
        %1640 = vmatpush2.bf16.msra.mxu0 0
        %1641 = vmatprep.subr.bf16.mxu0 0
        %1642 = vmatpush2.bf16.msra.mxu0 0
        %1643 = vmatprep.subr.bf16.mxu0 0
        %1644 = vmatpush2.bf16.msra.mxu0 0
        %1645 = vmatprep.subr.bf16.mxu0 0
        %1646 = vmatpush2.bf16.msra.mxu0 0
        %1647 = vmatprep.subr.bf16.mxu0 0
        %1648 = vmatpush2.bf16.msra.mxu0 0
        %1649 = vmatprep.subr.bf16.mxu0 0
        %1650 = vmatpush2.bf16.msra.mxu0 0
        %1651 = vmatprep.subr.bf16.mxu0 0
        %1652 = vmatpush2.bf16.msra.mxu0 0
        %1653 = vmatprep.subr.bf16.mxu0 0
        %1654 = vmatpush2.bf16.msra.mxu0 0
        %1655 = vmatprep.mubr.bf16.mxu0 0
        %1656 = vmatmul.mubr.bf16.gmra.mxu0 %v1621
        %v1657 = vpop.f32.mrf.mxu0
        %v1658 = vadd.f32 0.0, %v1657
        %v1659 = vpop.f32.mrf.mxu0
        %v1660 = vpop.f32.mrf.mxu0
        %v1661 = vadd.f32 0.0, %v1660
        %v1662 = vpop.f32.mrf.mxu0
        %1663 = vdwg.mxu0
        %v1664 = vadd.f32 %v1590, %v1658
        %v1665 = vadd.f32 %v1591, %v1661
        %v1666 = vld [vmem:[%s1595] sm:$0xf]
        %v1667 = vld [vmem:[%s1595 + $0x4] sm:$0xf]
        %v1668 = vld [vmem:[%s1595 + $0x8] sm:$0x1]
        %s1669 = scalar_lea.vmem %s1, 256
        %v1670 = vld [vmem:[%s1669] sm:$0xf]
        %v1671 = vld [vmem:[%s1669 + $0x4] sm:$0xf]
        %v1672 = vld [vmem:[%s1669 + $0x8] sm:$0xf]
        %v1673 = vld [vmem:[%s1669 + $0xc] sm:$0xf]
        %v1677 = vunpack.c.l.b16 %v1666
        %v1678 = vunpack.c.l.b16 %v1667
        %v1679 = vunpack.c.l.b16 %v1668
        %v1680 = vpack.c.b16 %v1678, %v1677
        %v1681 = vpack.c.b16 %v1679, %v1679
        %v1683 = vshrl.u32 %v1680, 16
        %v1685 = vshll.u32 %v1680, 16
        %v1687 = vrot.slane %v1685, 1
        %v1688 = vor.u32 %v1683, %v1687
        %v1690 = vshll.u32 %v1681, 16
        %v1692 = vrot.slane %v1690, 1
        %v1693 = vsel %vm1220, %v1688, %v1692
        %v1698 = vunpack.c.l.b16 %v1670
        %v1699 = vunpack.c.l.b16 %v1671
        %v1700 = vunpack.c.l.b16 %v1672
        %v1701 = vunpack.c.l.b16 %v1673
        %v1702 = vpack.c.b16 %v1699, %v1698
        %v1703 = vpack.c.b16 %v1701, %v1700
        %v1707 = vsel %vm1157, %v1693, 0
        %1709 = vmatprep.subr.bf16.mxu0 0
        %1710 = vmatpush1.bf16.msra.mxu0 0
        %1711 = vmatprep.subr.bf16.mxu0 0
        %1712 = vmatpush1.bf16.msra.mxu0 0
        %1713 = vmatprep.subr.bf16.mxu0 0
        %1714 = vmatpush1.bf16.msra.mxu0 0
        %1715 = vmatprep.subr.bf16.mxu0 0
        %1716 = vmatpush1.bf16.msra.mxu0 0
        %1717 = vmatprep.subr.bf16.mxu0 0
        %1718 = vmatpush1.bf16.msra.mxu0 0
        %1719 = vmatprep.subr.bf16.mxu0 0
        %1720 = vmatpush1.bf16.msra.mxu0 0
        %1721 = vmatprep.subr.bf16.mxu0 0
        %1722 = vmatpush1.bf16.msra.mxu0 %v1703
        %1723 = vmatprep.subr.bf16.mxu0 0
        %1724 = vmatpush1.bf16.msra.mxu0 %v1702
        %1725 = vmatprep.subr.bf16.mxu0 0
        %1726 = vmatpush2.bf16.msra.mxu0 0
        %1727 = vmatprep.subr.bf16.mxu0 0
        %1728 = vmatpush2.bf16.msra.mxu0 0
        %1729 = vmatprep.subr.bf16.mxu0 0
        %1730 = vmatpush2.bf16.msra.mxu0 0
        %1731 = vmatprep.subr.bf16.mxu0 0
        %1732 = vmatpush2.bf16.msra.mxu0 0
        %1733 = vmatprep.subr.bf16.mxu0 0
        %1734 = vmatpush2.bf16.msra.mxu0 0
        %1735 = vmatprep.subr.bf16.mxu0 0
        %1736 = vmatpush2.bf16.msra.mxu0 0
        %1737 = vmatprep.subr.bf16.mxu0 0
        %1738 = vmatpush2.bf16.msra.mxu0 0
        %1739 = vmatprep.subr.bf16.mxu0 0
        %1740 = vmatpush2.bf16.msra.mxu0 0
        %1741 = vmatprep.mubr.bf16.mxu0 0
        %1742 = vmatmul.mubr.bf16.gmra.mxu0 %v1707
        %v1743 = vpop.f32.mrf.mxu0
        %v1744 = vadd.f32 0.0, %v1743
        %v1745 = vpop.f32.mrf.mxu0
        %v1746 = vpop.f32.mrf.mxu0
        %v1747 = vadd.f32 0.0, %v1746
        %v1748 = vpop.f32.mrf.mxu0
        %1749 = vdwg.mxu0
        %v1750 = vadd.f32 %v1664, %v1744
        %v1751 = vadd.f32 %v1665, %v1747
        %v1752 = vld [vmem:[%s1595] sm:$0xe]
        %s1753 = scalar_lea.vmem %s1, 272
        %v1754 = vld [vmem:[%s1753] sm:$0xf]
        %v1755 = vld [vmem:[%s1753 + $0x4] sm:$0xf]
        %v1756 = vld [vmem:[%s1753 + $0x8] sm:$0xf]
        %v1757 = vld [vmem:[%s1753 + $0xc] sm:$0xf]
        %v1759 = vunpack.c.l.b16 %v1752
        %v1760 = vpack.c.b16 %v1678, %v1759
        %v1761 = vrot.slane %v1760, 1
        %v1762 = vrot.slane %v1681, 1
        %v1763 = vsel %vm1300, %v1761, %v1762
        %v1768 = vunpack.c.l.b16 %v1754
        %v1769 = vunpack.c.l.b16 %v1755
        %v1770 = vunpack.c.l.b16 %v1756
        %v1771 = vunpack.c.l.b16 %v1757
        %v1772 = vpack.c.b16 %v1769, %v1768
        %v1773 = vpack.c.b16 %v1771, %v1770
        %v1777 = vsel %vm1157, %v1763, 0
        %1779 = vmatprep.subr.bf16.mxu0 0
        %1780 = vmatpush1.bf16.msra.mxu0 0
        %1781 = vmatprep.subr.bf16.mxu0 0
        %1782 = vmatpush1.bf16.msra.mxu0 0
        %1783 = vmatprep.subr.bf16.mxu0 0
        %1784 = vmatpush1.bf16.msra.mxu0 0
        %1785 = vmatprep.subr.bf16.mxu0 0
        %1786 = vmatpush1.bf16.msra.mxu0 0
        %1787 = vmatprep.subr.bf16.mxu0 0
        %1788 = vmatpush1.bf16.msra.mxu0 0
        %1789 = vmatprep.subr.bf16.mxu0 0
        %1790 = vmatpush1.bf16.msra.mxu0 0
        %1791 = vmatprep.subr.bf16.mxu0 0
        %1792 = vmatpush1.bf16.msra.mxu0 %v1773
        %1793 = vmatprep.subr.bf16.mxu0 0
        %1794 = vmatpush1.bf16.msra.mxu0 %v1772
        %1795 = vmatprep.subr.bf16.mxu0 0
        %1796 = vmatpush2.bf16.msra.mxu0 0
        %1797 = vmatprep.subr.bf16.mxu0 0
        %1798 = vmatpush2.bf16.msra.mxu0 0
        %1799 = vmatprep.subr.bf16.mxu0 0
        %1800 = vmatpush2.bf16.msra.mxu0 0
        %1801 = vmatprep.subr.bf16.mxu0 0
        %1802 = vmatpush2.bf16.msra.mxu0 0
        %1803 = vmatprep.subr.bf16.mxu0 0
        %1804 = vmatpush2.bf16.msra.mxu0 0
        %1805 = vmatprep.subr.bf16.mxu0 0
        %1806 = vmatpush2.bf16.msra.mxu0 0
        %1807 = vmatprep.subr.bf16.mxu0 0
        %1808 = vmatpush2.bf16.msra.mxu0 0
        %1809 = vmatprep.subr.bf16.mxu0 0
        %1810 = vmatpush2.bf16.msra.mxu0 0
        %1811 = vmatprep.mubr.bf16.mxu0 0
        %1812 = vmatmul.mubr.bf16.gmra.mxu0 %v1777
        %v1813 = vpop.f32.mrf.mxu0
        %v1814 = vadd.f32 0.0, %v1813
        %v1815 = vpop.f32.mrf.mxu0
        %v1816 = vpop.f32.mrf.mxu0
        %v1817 = vadd.f32 0.0, %v1816
        %v1818 = vpop.f32.mrf.mxu0
        %1819 = vdwg.mxu0
        %v1820 = vadd.f32 %v1750, %v1814
        %v1821 = vadd.f32 %v1751, %v1817
        %v1822 = vmax.f32 %v1820, 0.0
        %v1823 = vmax.f32 %v1821, 0.0
        %v1824 = vpack.c.bf16 %v1823, %v1822
        %v1826 = vshrl.u32 %v1824, 16
        %v1828 = vrot.slane %v1826, 7
        %v1829 = vshll.u32 %v1824, 16
        %v1831 = vor.u32 %v1828, %v1829
        %vm1834 = vcmask 1040384
        %vm1835 = vsmask.f32 256
        %vm1836 = vmand %vm1834, %vm1835
        %v1837 = vsel %vm1836, 0, %v1831
        %v1838 = vsel %vm1836, %v1828, 0
        %v1841 = vunpack.c.l.b16 %v1837
        %v1842 = vunpack.c.h.b16 %v1837
        %v1843 = vunpack.c.l.b16 %v1838
        %v1844 = vpack.c.b16 %v1841, %v1841
        %v1845 = vpack.c.b16 %v1842, %v1842
        %v1846 = vpack.c.b16 %v1843, %v1843
        %s1850 = smul.addr %s1363, 4
        %s1851 = scalar_lea.vmem [#allocation3], %s1850
        %1852 = vst.msk [vmem:[%s1851] sm:$0xf] %vm266, %v1844
        %1853 = vst.msk [vmem:[%s1851 + $0x4] sm:$0xf] %vm266, %v1845
        %1854 = vst.msk [vmem:[%s1851 + $0x8] sm:$0x1] %vm269, %v1846
      $region52: #{rpnv2_forward.6} parent=39 // loop_footer
        %s1120 = sadd.s32 1, %s1116
      $region53: #{rpnv2_forward.6} parent=39 // loop_footer_branch
        %1115 = sbr.rel target = $region49
      $region54: #{rpnv2_forward.6} parent=39 // loop_exit
        _
      loop: start=0, step=1, limit=16
      $region55: #{rpnv2_forward.6} parent=39 // loop_pre_header
        _
      $region56: #{rpnv2_forward.6} parent=39 // loop_header
        %s1856 = sphi 0, %s1860
        %p1857 = scmp.ge.s32.totalorder %s1856, 16
      $region57: #{rpnv2_forward.6} parent=39 // loop_header_branch
        %1859 = sbr.rel (%p1857) target = $region61
      $region58: #{rpnv2_forward.6} parent=39 // loop_body
        %s1861 = scalar_lea.vmem %s2, 2
        %v1862 = vld [vmem:[%s1861] sm:$0x1]
        %v1864 = vlaneseq
        %v1865 = vshrl.u32 %v1864, 7
        %v1866 = vsub.s32 0, %v1865
        %v1867 = vrot.slane %v1862, %v1866
        %v1869 = vadd.f32 %v1867, 0.0
        %s1870 = smul.u32 %s1856, 3
        %s1871 = smul.addr %s1870, 4
        %s1872 = scalar_lea.vmem [#allocation3], %s1871
        %v1873 = vld [vmem:[%s1872] sm:$0xf]
        %v1874 = vld [vmem:[%s1872 + $0x4] sm:$0xf]
        %s1875 = scalar_lea.vmem %s1, 288
        %v1876 = vld [vmem:[%s1875] sm:$0xf]
        %v1877 = vld [vmem:[%s1875 + $0x4] sm:$0xf]
        %v1878 = vld [vmem:[%s1875 + $0x8] sm:$0xf]
        %v1879 = vld [vmem:[%s1875 + $0xc] sm:$0xf]
        %v1882 = vunpack.c.l.b16 %v1873
        %v1883 = vunpack.c.l.b16 %v1874
        %v1884 = vpack.c.b16 %v1883, %v1882
        %v1889 = vunpack.c.l.b16 %v1876
        %v1890 = vunpack.c.l.b16 %v1877
        %v1891 = vunpack.c.l.b16 %v1878
        %v1892 = vunpack.c.l.b16 %v1879
        %v1893 = vpack.c.b16 %v1890, %v1889
        %v1894 = vpack.c.b16 %v1892, %v1891
        %vm1897 = vcmask 261120
        %v1899 = vsel %vm1897, %v1884, 0
        %1901 = vmatprep.subr.bf16.mxu0 0
        %1902 = vmatpush1.bf16.msra.mxu0 0
        %1903 = vmatprep.subr.bf16.mxu0 0
        %1904 = vmatpush1.bf16.msra.mxu0 0
        %1905 = vmatprep.subr.bf16.mxu0 0
        %1906 = vmatpush1.bf16.msra.mxu0 0
        %1907 = vmatprep.subr.bf16.mxu0 0
        %1908 = vmatpush1.bf16.msra.mxu0 0
        %1909 = vmatprep.subr.bf16.mxu0 0
        %1910 = vmatpush1.bf16.msra.mxu0 0
        %1911 = vmatprep.subr.bf16.mxu0 0
        %1912 = vmatpush1.bf16.msra.mxu0 0
        %1913 = vmatprep.subr.bf16.mxu0 0
        %1914 = vmatpush1.bf16.msra.mxu0 %v1894
        %1915 = vmatprep.subr.bf16.mxu0 0
        %1916 = vmatpush1.bf16.msra.mxu0 %v1893
        %1917 = vmatprep.subr.bf16.mxu0 0
        %1918 = vmatpush2.bf16.msra.mxu0 0
        %1919 = vmatprep.subr.bf16.mxu0 0
        %1920 = vmatpush2.bf16.msra.mxu0 0
        %1921 = vmatprep.subr.bf16.mxu0 0
        %1922 = vmatpush2.bf16.msra.mxu0 0
        %1923 = vmatprep.subr.bf16.mxu0 0
        %1924 = vmatpush2.bf16.msra.mxu0 0
        %1925 = vmatprep.subr.bf16.mxu0 0
        %1926 = vmatpush2.bf16.msra.mxu0 0
        %1927 = vmatprep.subr.bf16.mxu0 0
        %1928 = vmatpush2.bf16.msra.mxu0 0
        %1929 = vmatprep.subr.bf16.mxu0 0
        %1930 = vmatpush2.bf16.msra.mxu0 0
        %1931 = vmatprep.subr.bf16.mxu0 0
        %1932 = vmatpush2.bf16.msra.mxu0 0
        %1933 = vmatprep.mubr.bf16.mxu0 0
        %1934 = vmatmul.mubr.bf16.gmra.mxu0 %v1899
        %v1935 = vpop.f32.mrf.mxu0
        %v1936 = vadd.f32 0.0, %v1935
        %v1937 = vpop.f32.mrf.mxu0
        %v1938 = vpop.f32.mrf.mxu0
        %v1939 = vadd.f32 0.0, %v1938
        %v1940 = vpop.f32.mrf.mxu0
        %1941 = vdwg.mxu0
        %v1942 = vadd.f32 %v1869, %v1936
        %v1943 = vadd.f32 %v1869, %v1939
        %v1944 = vld [vmem:[%s1872] sm:$0xf]
        %v1945 = vld [vmem:[%s1872 + $0x4] sm:$0xf]
        %v1946 = vld [vmem:[%s1872 + $0x8] sm:$0x1]
        %s1947 = scalar_lea.vmem %s1, 304
        %v1948 = vld [vmem:[%s1947] sm:$0xf]
        %v1949 = vld [vmem:[%s1947 + $0x4] sm:$0xf]
        %v1950 = vld [vmem:[%s1947 + $0x8] sm:$0xf]
        %v1951 = vld [vmem:[%s1947 + $0xc] sm:$0xf]
        %v1955 = vunpack.c.l.b16 %v1944
        %v1956 = vunpack.c.l.b16 %v1945
        %v1957 = vunpack.c.l.b16 %v1946
        %v1958 = vpack.c.b16 %v1956, %v1955
        %v1959 = vpack.c.b16 %v1957, %v1957
        %vm1960 = vsmask.f32 7424
        %v1962 = vshrl.u32 %v1958, 16
        %v1964 = vshll.u32 %v1958, 16
        %v1966 = vrot.slane %v1964, 1
        %v1967 = vor.u32 %v1962, %v1966
        %v1969 = vshll.u32 %v1959, 16
        %v1971 = vrot.slane %v1969, 1
        %v1972 = vsel %vm1960, %v1967, %v1971
        %v1977 = vunpack.c.l.b16 %v1948
        %v1978 = vunpack.c.l.b16 %v1949
        %v1979 = vunpack.c.l.b16 %v1950
        %v1980 = vunpack.c.l.b16 %v1951
        %v1981 = vpack.c.b16 %v1978, %v1977
        %v1982 = vpack.c.b16 %v1980, %v1979
        %v1986 = vsel %vm1897, %v1972, 0
        %1988 = vmatprep.subr.bf16.mxu0 0
        %1989 = vmatpush1.bf16.msra.mxu0 0
        %1990 = vmatprep.subr.bf16.mxu0 0
        %1991 = vmatpush1.bf16.msra.mxu0 0
        %1992 = vmatprep.subr.bf16.mxu0 0
        %1993 = vmatpush1.bf16.msra.mxu0 0
        %1994 = vmatprep.subr.bf16.mxu0 0
        %1995 = vmatpush1.bf16.msra.mxu0 0
        %1996 = vmatprep.subr.bf16.mxu0 0
        %1997 = vmatpush1.bf16.msra.mxu0 0
        %1998 = vmatprep.subr.bf16.mxu0 0
        %1999 = vmatpush1.bf16.msra.mxu0 0
        %2000 = vmatprep.subr.bf16.mxu0 0
        %2001 = vmatpush1.bf16.msra.mxu0 %v1982
        %2002 = vmatprep.subr.bf16.mxu0 0
        %2003 = vmatpush1.bf16.msra.mxu0 %v1981
        %2004 = vmatprep.subr.bf16.mxu0 0
        %2005 = vmatpush2.bf16.msra.mxu0 0
        %2006 = vmatprep.subr.bf16.mxu0 0
        %2007 = vmatpush2.bf16.msra.mxu0 0
        %2008 = vmatprep.subr.bf16.mxu0 0
        %2009 = vmatpush2.bf16.msra.mxu0 0
        %2010 = vmatprep.subr.bf16.mxu0 0
        %2011 = vmatpush2.bf16.msra.mxu0 0
        %2012 = vmatprep.subr.bf16.mxu0 0
        %2013 = vmatpush2.bf16.msra.mxu0 0
        %2014 = vmatprep.subr.bf16.mxu0 0
        %2015 = vmatpush2.bf16.msra.mxu0 0
        %2016 = vmatprep.subr.bf16.mxu0 0
        %2017 = vmatpush2.bf16.msra.mxu0 0
        %2018 = vmatprep.subr.bf16.mxu0 0
        %2019 = vmatpush2.bf16.msra.mxu0 0
        %2020 = vmatprep.mubr.bf16.mxu0 0
        %2021 = vmatmul.mubr.bf16.gmra.mxu0 %v1986
        %v2022 = vpop.f32.mrf.mxu0
        %v2023 = vadd.f32 0.0, %v2022
        %v2024 = vpop.f32.mrf.mxu0
        %v2025 = vpop.f32.mrf.mxu0
        %v2026 = vadd.f32 0.0, %v2025
        %v2027 = vpop.f32.mrf.mxu0
        %2028 = vdwg.mxu0
        %v2029 = vadd.f32 %v1942, %v2023
        %v2030 = vadd.f32 %v1943, %v2026
        %v2031 = vld [vmem:[%s1872] sm:$0xe]
        %s2032 = scalar_lea.vmem %s1, 320
        %v2033 = vld [vmem:[%s2032] sm:$0xf]
        %v2034 = vld [vmem:[%s2032 + $0x4] sm:$0xf]
        %v2035 = vld [vmem:[%s2032 + $0x8] sm:$0xf]
        %v2036 = vld [vmem:[%s2032 + $0xc] sm:$0xf]
        %v2038 = vunpack.c.l.b16 %v2031
        %v2039 = vpack.c.b16 %v1956, %v2038
        %vm2040 = vcmask 1046528
        %v2041 = vrot.slane %v2039, 1
        %v2042 = vrot.slane %v1959, 1
        %v2043 = vsel %vm2040, %v2041, %v2042
        %v2048 = vunpack.c.l.b16 %v2033
        %v2049 = vunpack.c.l.b16 %v2034
        %v2050 = vunpack.c.l.b16 %v2035
        %v2051 = vunpack.c.l.b16 %v2036
        %v2052 = vpack.c.b16 %v2049, %v2048
        %v2053 = vpack.c.b16 %v2051, %v2050
        %v2057 = vsel %vm1897, %v2043, 0
        %2059 = vmatprep.subr.bf16.mxu0 0
        %2060 = vmatpush1.bf16.msra.mxu0 0
        %2061 = vmatprep.subr.bf16.mxu0 0
        %2062 = vmatpush1.bf16.msra.mxu0 0
        %2063 = vmatprep.subr.bf16.mxu0 0
        %2064 = vmatpush1.bf16.msra.mxu0 0
        %2065 = vmatprep.subr.bf16.mxu0 0
        %2066 = vmatpush1.bf16.msra.mxu0 0
        %2067 = vmatprep.subr.bf16.mxu0 0
        %2068 = vmatpush1.bf16.msra.mxu0 0
        %2069 = vmatprep.subr.bf16.mxu0 0
        %2070 = vmatpush1.bf16.msra.mxu0 0
        %2071 = vmatprep.subr.bf16.mxu0 0
        %2072 = vmatpush1.bf16.msra.mxu0 %v2053
        %2073 = vmatprep.subr.bf16.mxu0 0
        %2074 = vmatpush1.bf16.msra.mxu0 %v2052
        %2075 = vmatprep.subr.bf16.mxu0 0
        %2076 = vmatpush2.bf16.msra.mxu0 0
        %2077 = vmatprep.subr.bf16.mxu0 0
        %2078 = vmatpush2.bf16.msra.mxu0 0
        %2079 = vmatprep.subr.bf16.mxu0 0
        %2080 = vmatpush2.bf16.msra.mxu0 0
        %2081 = vmatprep.subr.bf16.mxu0 0
        %2082 = vmatpush2.bf16.msra.mxu0 0
        %2083 = vmatprep.subr.bf16.mxu0 0
        %2084 = vmatpush2.bf16.msra.mxu0 0
        %2085 = vmatprep.subr.bf16.mxu0 0
        %2086 = vmatpush2.bf16.msra.mxu0 0
        %2087 = vmatprep.subr.bf16.mxu0 0
        %2088 = vmatpush2.bf16.msra.mxu0 0
        %2089 = vmatprep.subr.bf16.mxu0 0
        %2090 = vmatpush2.bf16.msra.mxu0 0
        %2091 = vmatprep.mubr.bf16.mxu0 0
        %2092 = vmatmul.mubr.bf16.gmra.mxu0 %v2057
        %v2093 = vpop.f32.mrf.mxu0
        %v2094 = vadd.f32 0.0, %v2093
        %v2095 = vpop.f32.mrf.mxu0
        %v2096 = vpop.f32.mrf.mxu0
        %v2097 = vadd.f32 0.0, %v2096
        %v2098 = vpop.f32.mrf.mxu0
        %2099 = vdwg.mxu0
        %v2100 = vadd.f32 %v2029, %v2094
        %v2101 = vadd.f32 %v2030, %v2097
        %s2102 = sadd.s32 %s1856, 1
        %s2103 = smul.u32 %s2102, 3
        %s2104 = smul.addr %s2103, 4
        %s2105 = scalar_lea.vmem [#allocation3], %s2104
        %v2106 = vld [vmem:[%s2105] sm:$0xf]
        %v2107 = vld [vmem:[%s2105 + $0x4] sm:$0xf]
        %s2108 = scalar_lea.vmem %s1, 336
        %v2109 = vld [vmem:[%s2108] sm:$0xf]
        %v2110 = vld [vmem:[%s2108 + $0x4] sm:$0xf]
        %v2111 = vld [vmem:[%s2108 + $0x8] sm:$0xf]
        %v2112 = vld [vmem:[%s2108 + $0xc] sm:$0xf]
        %v2115 = vunpack.c.l.b16 %v2106
        %v2116 = vunpack.c.l.b16 %v2107
        %v2117 = vpack.c.b16 %v2116, %v2115
        %v2122 = vunpack.c.l.b16 %v2109
        %v2123 = vunpack.c.l.b16 %v2110
        %v2124 = vunpack.c.l.b16 %v2111
        %v2125 = vunpack.c.l.b16 %v2112
        %v2126 = vpack.c.b16 %v2123, %v2122
        %v2127 = vpack.c.b16 %v2125, %v2124
        %v2131 = vsel %vm1897, %v2117, 0
        %2133 = vmatprep.subr.bf16.mxu0 0
        %2134 = vmatpush1.bf16.msra.mxu0 0
        %2135 = vmatprep.subr.bf16.mxu0 0
        %2136 = vmatpush1.bf16.msra.mxu0 0
        %2137 = vmatprep.subr.bf16.mxu0 0
        %2138 = vmatpush1.bf16.msra.mxu0 0
        %2139 = vmatprep.subr.bf16.mxu0 0
        %2140 = vmatpush1.bf16.msra.mxu0 0
        %2141 = vmatprep.subr.bf16.mxu0 0
        %2142 = vmatpush1.bf16.msra.mxu0 0
        %2143 = vmatprep.subr.bf16.mxu0 0
        %2144 = vmatpush1.bf16.msra.mxu0 0
        %2145 = vmatprep.subr.bf16.mxu0 0
        %2146 = vmatpush1.bf16.msra.mxu0 %v2127
        %2147 = vmatprep.subr.bf16.mxu0 0
        %2148 = vmatpush1.bf16.msra.mxu0 %v2126
        %2149 = vmatprep.subr.bf16.mxu0 0
        %2150 = vmatpush2.bf16.msra.mxu0 0
        %2151 = vmatprep.subr.bf16.mxu0 0
        %2152 = vmatpush2.bf16.msra.mxu0 0
        %2153 = vmatprep.subr.bf16.mxu0 0
        %2154 = vmatpush2.bf16.msra.mxu0 0
        %2155 = vmatprep.subr.bf16.mxu0 0
        %2156 = vmatpush2.bf16.msra.mxu0 0
        %2157 = vmatprep.subr.bf16.mxu0 0
        %2158 = vmatpush2.bf16.msra.mxu0 0
        %2159 = vmatprep.subr.bf16.mxu0 0
        %2160 = vmatpush2.bf16.msra.mxu0 0
        %2161 = vmatprep.subr.bf16.mxu0 0
        %2162 = vmatpush2.bf16.msra.mxu0 0
        %2163 = vmatprep.subr.bf16.mxu0 0
        %2164 = vmatpush2.bf16.msra.mxu0 0
        %2165 = vmatprep.mubr.bf16.mxu0 0
        %2166 = vmatmul.mubr.bf16.gmra.mxu0 %v2131
        %v2167 = vpop.f32.mrf.mxu0
        %v2168 = vadd.f32 0.0, %v2167
        %v2169 = vpop.f32.mrf.mxu0
        %v2170 = vpop.f32.mrf.mxu0
        %v2171 = vadd.f32 0.0, %v2170
        %v2172 = vpop.f32.mrf.mxu0
        %2173 = vdwg.mxu0
        %v2174 = vadd.f32 %v2100, %v2168
        %v2175 = vadd.f32 %v2101, %v2171
        %v2176 = vld [vmem:[%s2105] sm:$0xf]
        %v2177 = vld [vmem:[%s2105 + $0x4] sm:$0xf]
        %v2178 = vld [vmem:[%s2105 + $0x8] sm:$0x1]
        %s2179 = scalar_lea.vmem %s1, 352
        %v2180 = vld [vmem:[%s2179] sm:$0xf]
        %v2181 = vld [vmem:[%s2179 + $0x4] sm:$0xf]
        %v2182 = vld [vmem:[%s2179 + $0x8] sm:$0xf]
        %v2183 = vld [vmem:[%s2179 + $0xc] sm:$0xf]
        %v2187 = vunpack.c.l.b16 %v2176
        %v2188 = vunpack.c.l.b16 %v2177
        %v2189 = vunpack.c.l.b16 %v2178
        %v2190 = vpack.c.b16 %v2188, %v2187
        %v2191 = vpack.c.b16 %v2189, %v2189
        %v2193 = vshrl.u32 %v2190, 16
        %v2195 = vshll.u32 %v2190, 16
        %v2197 = vrot.slane %v2195, 1
        %v2198 = vor.u32 %v2193, %v2197
        %v2200 = vshll.u32 %v2191, 16
        %v2202 = vrot.slane %v2200, 1
        %v2203 = vsel %vm1960, %v2198, %v2202
        %v2208 = vunpack.c.l.b16 %v2180
        %v2209 = vunpack.c.l.b16 %v2181
        %v2210 = vunpack.c.l.b16 %v2182
        %v2211 = vunpack.c.l.b16 %v2183
        %v2212 = vpack.c.b16 %v2209, %v2208
        %v2213 = vpack.c.b16 %v2211, %v2210
        %v2217 = vsel %vm1897, %v2203, 0
        %2219 = vmatprep.subr.bf16.mxu0 0
        %2220 = vmatpush1.bf16.msra.mxu0 0
        %2221 = vmatprep.subr.bf16.mxu0 0
        %2222 = vmatpush1.bf16.msra.mxu0 0
        %2223 = vmatprep.subr.bf16.mxu0 0
        %2224 = vmatpush1.bf16.msra.mxu0 0
        %2225 = vmatprep.subr.bf16.mxu0 0
        %2226 = vmatpush1.bf16.msra.mxu0 0
        %2227 = vmatprep.subr.bf16.mxu0 0
        %2228 = vmatpush1.bf16.msra.mxu0 0
        %2229 = vmatprep.subr.bf16.mxu0 0
        %2230 = vmatpush1.bf16.msra.mxu0 0
        %2231 = vmatprep.subr.bf16.mxu0 0
        %2232 = vmatpush1.bf16.msra.mxu0 %v2213
        %2233 = vmatprep.subr.bf16.mxu0 0
        %2234 = vmatpush1.bf16.msra.mxu0 %v2212
        %2235 = vmatprep.subr.bf16.mxu0 0
        %2236 = vmatpush2.bf16.msra.mxu0 0
        %2237 = vmatprep.subr.bf16.mxu0 0
        %2238 = vmatpush2.bf16.msra.mxu0 0
        %2239 = vmatprep.subr.bf16.mxu0 0
        %2240 = vmatpush2.bf16.msra.mxu0 0
        %2241 = vmatprep.subr.bf16.mxu0 0
        %2242 = vmatpush2.bf16.msra.mxu0 0
        %2243 = vmatprep.subr.bf16.mxu0 0
        %2244 = vmatpush2.bf16.msra.mxu0 0
        %2245 = vmatprep.subr.bf16.mxu0 0
        %2246 = vmatpush2.bf16.msra.mxu0 0
        %2247 = vmatprep.subr.bf16.mxu0 0
        %2248 = vmatpush2.bf16.msra.mxu0 0
        %2249 = vmatprep.subr.bf16.mxu0 0
        %2250 = vmatpush2.bf16.msra.mxu0 0
        %2251 = vmatprep.mubr.bf16.mxu0 0
        %2252 = vmatmul.mubr.bf16.gmra.mxu0 %v2217
        %v2253 = vpop.f32.mrf.mxu0
        %v2254 = vadd.f32 0.0, %v2253
        %v2255 = vpop.f32.mrf.mxu0
        %v2256 = vpop.f32.mrf.mxu0
        %v2257 = vadd.f32 0.0, %v2256
        %v2258 = vpop.f32.mrf.mxu0
        %2259 = vdwg.mxu0
        %v2260 = vadd.f32 %v2174, %v2254
        %v2261 = vadd.f32 %v2175, %v2257
        %v2262 = vld [vmem:[%s2105] sm:$0xe]
        %s2263 = scalar_lea.vmem %s1, 368
        %v2264 = vld [vmem:[%s2263] sm:$0xf]
        %v2265 = vld [vmem:[%s2263 + $0x4] sm:$0xf]
        %v2266 = vld [vmem:[%s2263 + $0x8] sm:$0xf]
        %v2267 = vld [vmem:[%s2263 + $0xc] sm:$0xf]
        %v2269 = vunpack.c.l.b16 %v2262
        %v2270 = vpack.c.b16 %v2188, %v2269
        %v2271 = vrot.slane %v2270, 1
        %v2272 = vrot.slane %v2191, 1
        %v2273 = vsel %vm2040, %v2271, %v2272
        %v2278 = vunpack.c.l.b16 %v2264
        %v2279 = vunpack.c.l.b16 %v2265
        %v2280 = vunpack.c.l.b16 %v2266
        %v2281 = vunpack.c.l.b16 %v2267
        %v2282 = vpack.c.b16 %v2279, %v2278
        %v2283 = vpack.c.b16 %v2281, %v2280
        %v2287 = vsel %vm1897, %v2273, 0
        %2289 = vmatprep.subr.bf16.mxu0 0
        %2290 = vmatpush1.bf16.msra.mxu0 0
        %2291 = vmatprep.subr.bf16.mxu0 0
        %2292 = vmatpush1.bf16.msra.mxu0 0
        %2293 = vmatprep.subr.bf16.mxu0 0
        %2294 = vmatpush1.bf16.msra.mxu0 0
        %2295 = vmatprep.subr.bf16.mxu0 0
        %2296 = vmatpush1.bf16.msra.mxu0 0
        %2297 = vmatprep.subr.bf16.mxu0 0
        %2298 = vmatpush1.bf16.msra.mxu0 0
        %2299 = vmatprep.subr.bf16.mxu0 0
        %2300 = vmatpush1.bf16.msra.mxu0 0
        %2301 = vmatprep.subr.bf16.mxu0 0
        %2302 = vmatpush1.bf16.msra.mxu0 %v2283
        %2303 = vmatprep.subr.bf16.mxu0 0
        %2304 = vmatpush1.bf16.msra.mxu0 %v2282
        %2305 = vmatprep.subr.bf16.mxu0 0
        %2306 = vmatpush2.bf16.msra.mxu0 0
        %2307 = vmatprep.subr.bf16.mxu0 0
        %2308 = vmatpush2.bf16.msra.mxu0 0
        %2309 = vmatprep.subr.bf16.mxu0 0
        %2310 = vmatpush2.bf16.msra.mxu0 0
        %2311 = vmatprep.subr.bf16.mxu0 0
        %2312 = vmatpush2.bf16.msra.mxu0 0
        %2313 = vmatprep.subr.bf16.mxu0 0
        %2314 = vmatpush2.bf16.msra.mxu0 0
        %2315 = vmatprep.subr.bf16.mxu0 0
        %2316 = vmatpush2.bf16.msra.mxu0 0
        %2317 = vmatprep.subr.bf16.mxu0 0
        %2318 = vmatpush2.bf16.msra.mxu0 0
        %2319 = vmatprep.subr.bf16.mxu0 0
        %2320 = vmatpush2.bf16.msra.mxu0 0
        %2321 = vmatprep.mubr.bf16.mxu0 0
        %2322 = vmatmul.mubr.bf16.gmra.mxu0 %v2287
        %v2323 = vpop.f32.mrf.mxu0
        %v2324 = vadd.f32 0.0, %v2323
        %v2325 = vpop.f32.mrf.mxu0
        %v2326 = vpop.f32.mrf.mxu0
        %v2327 = vadd.f32 0.0, %v2326
        %v2328 = vpop.f32.mrf.mxu0
        %2329 = vdwg.mxu0
        %v2330 = vadd.f32 %v2260, %v2324
        %v2331 = vadd.f32 %v2261, %v2327
        %s2332 = sadd.s32 %s1856, 2
        %s2333 = smul.u32 %s2332, 3
        %s2334 = smul.addr %s2333, 4
        %s2335 = scalar_lea.vmem [#allocation3], %s2334
        %v2336 = vld [vmem:[%s2335] sm:$0xf]
        %v2337 = vld [vmem:[%s2335 + $0x4] sm:$0xf]
        %s2338 = scalar_lea.vmem %s1, 384
        %v2339 = vld [vmem:[%s2338] sm:$0xf]
        %v2340 = vld [vmem:[%s2338 + $0x4] sm:$0xf]
        %v2341 = vld [vmem:[%s2338 + $0x8] sm:$0xf]
        %v2342 = vld [vmem:[%s2338 + $0xc] sm:$0xf]
        %v2345 = vunpack.c.l.b16 %v2336
        %v2346 = vunpack.c.l.b16 %v2337
        %v2347 = vpack.c.b16 %v2346, %v2345
        %v2352 = vunpack.c.l.b16 %v2339
        %v2353 = vunpack.c.l.b16 %v2340
        %v2354 = vunpack.c.l.b16 %v2341
        %v2355 = vunpack.c.l.b16 %v2342
        %v2356 = vpack.c.b16 %v2353, %v2352
        %v2357 = vpack.c.b16 %v2355, %v2354
        %v2361 = vsel %vm1897, %v2347, 0
        %2363 = vmatprep.subr.bf16.mxu0 0
        %2364 = vmatpush1.bf16.msra.mxu0 0
        %2365 = vmatprep.subr.bf16.mxu0 0
        %2366 = vmatpush1.bf16.msra.mxu0 0
        %2367 = vmatprep.subr.bf16.mxu0 0
        %2368 = vmatpush1.bf16.msra.mxu0 0
        %2369 = vmatprep.subr.bf16.mxu0 0
        %2370 = vmatpush1.bf16.msra.mxu0 0
        %2371 = vmatprep.subr.bf16.mxu0 0
        %2372 = vmatpush1.bf16.msra.mxu0 0
        %2373 = vmatprep.subr.bf16.mxu0 0
        %2374 = vmatpush1.bf16.msra.mxu0 0
        %2375 = vmatprep.subr.bf16.mxu0 0
        %2376 = vmatpush1.bf16.msra.mxu0 %v2357
        %2377 = vmatprep.subr.bf16.mxu0 0
        %2378 = vmatpush1.bf16.msra.mxu0 %v2356
        %2379 = vmatprep.subr.bf16.mxu0 0
        %2380 = vmatpush2.bf16.msra.mxu0 0
        %2381 = vmatprep.subr.bf16.mxu0 0
        %2382 = vmatpush2.bf16.msra.mxu0 0
        %2383 = vmatprep.subr.bf16.mxu0 0
        %2384 = vmatpush2.bf16.msra.mxu0 0
        %2385 = vmatprep.subr.bf16.mxu0 0
        %2386 = vmatpush2.bf16.msra.mxu0 0
        %2387 = vmatprep.subr.bf16.mxu0 0
        %2388 = vmatpush2.bf16.msra.mxu0 0
        %2389 = vmatprep.subr.bf16.mxu0 0
        %2390 = vmatpush2.bf16.msra.mxu0 0
        %2391 = vmatprep.subr.bf16.mxu0 0
        %2392 = vmatpush2.bf16.msra.mxu0 0
        %2393 = vmatprep.subr.bf16.mxu0 0
        %2394 = vmatpush2.bf16.msra.mxu0 0
        %2395 = vmatprep.mubr.bf16.mxu0 0
        %2396 = vmatmul.mubr.bf16.gmra.mxu0 %v2361
        %v2397 = vpop.f32.mrf.mxu0
        %v2398 = vadd.f32 0.0, %v2397
        %v2399 = vpop.f32.mrf.mxu0
        %v2400 = vpop.f32.mrf.mxu0
        %v2401 = vadd.f32 0.0, %v2400
        %v2402 = vpop.f32.mrf.mxu0
        %2403 = vdwg.mxu0
        %v2404 = vadd.f32 %v2330, %v2398
        %v2405 = vadd.f32 %v2331, %v2401
        %v2406 = vld [vmem:[%s2335] sm:$0xf]
        %v2407 = vld [vmem:[%s2335 + $0x4] sm:$0xf]
        %v2408 = vld [vmem:[%s2335 + $0x8] sm:$0x1]
        %s2409 = scalar_lea.vmem %s1, 400
        %v2410 = vld [vmem:[%s2409] sm:$0xf]
        %v2411 = vld [vmem:[%s2409 + $0x4] sm:$0xf]
        %v2412 = vld [vmem:[%s2409 + $0x8] sm:$0xf]
        %v2413 = vld [vmem:[%s2409 + $0xc] sm:$0xf]
        %v2417 = vunpack.c.l.b16 %v2406
        %v2418 = vunpack.c.l.b16 %v2407
        %v2419 = vunpack.c.l.b16 %v2408
        %v2420 = vpack.c.b16 %v2418, %v2417
        %v2421 = vpack.c.b16 %v2419, %v2419
        %v2423 = vshrl.u32 %v2420, 16
        %v2425 = vshll.u32 %v2420, 16
        %v2427 = vrot.slane %v2425, 1
        %v2428 = vor.u32 %v2423, %v2427
        %v2430 = vshll.u32 %v2421, 16
        %v2432 = vrot.slane %v2430, 1
        %v2433 = vsel %vm1960, %v2428, %v2432
        %v2438 = vunpack.c.l.b16 %v2410
        %v2439 = vunpack.c.l.b16 %v2411
        %v2440 = vunpack.c.l.b16 %v2412
        %v2441 = vunpack.c.l.b16 %v2413
        %v2442 = vpack.c.b16 %v2439, %v2438
        %v2443 = vpack.c.b16 %v2441, %v2440
        %v2447 = vsel %vm1897, %v2433, 0
        %2449 = vmatprep.subr.bf16.mxu0 0
        %2450 = vmatpush1.bf16.msra.mxu0 0
        %2451 = vmatprep.subr.bf16.mxu0 0
        %2452 = vmatpush1.bf16.msra.mxu0 0
        %2453 = vmatprep.subr.bf16.mxu0 0
        %2454 = vmatpush1.bf16.msra.mxu0 0
        %2455 = vmatprep.subr.bf16.mxu0 0
        %2456 = vmatpush1.bf16.msra.mxu0 0
        %2457 = vmatprep.subr.bf16.mxu0 0
        %2458 = vmatpush1.bf16.msra.mxu0 0
        %2459 = vmatprep.subr.bf16.mxu0 0
        %2460 = vmatpush1.bf16.msra.mxu0 0
        %2461 = vmatprep.subr.bf16.mxu0 0
        %2462 = vmatpush1.bf16.msra.mxu0 %v2443
        %2463 = vmatprep.subr.bf16.mxu0 0
        %2464 = vmatpush1.bf16.msra.mxu0 %v2442
        %2465 = vmatprep.subr.bf16.mxu0 0
        %2466 = vmatpush2.bf16.msra.mxu0 0
        %2467 = vmatprep.subr.bf16.mxu0 0
        %2468 = vmatpush2.bf16.msra.mxu0 0
        %2469 = vmatprep.subr.bf16.mxu0 0
        %2470 = vmatpush2.bf16.msra.mxu0 0
        %2471 = vmatprep.subr.bf16.mxu0 0
        %2472 = vmatpush2.bf16.msra.mxu0 0
        %2473 = vmatprep.subr.bf16.mxu0 0
        %2474 = vmatpush2.bf16.msra.mxu0 0
        %2475 = vmatprep.subr.bf16.mxu0 0
        %2476 = vmatpush2.bf16.msra.mxu0 0
        %2477 = vmatprep.subr.bf16.mxu0 0
        %2478 = vmatpush2.bf16.msra.mxu0 0
        %2479 = vmatprep.subr.bf16.mxu0 0
        %2480 = vmatpush2.bf16.msra.mxu0 0
        %2481 = vmatprep.mubr.bf16.mxu0 0
        %2482 = vmatmul.mubr.bf16.gmra.mxu0 %v2447
        %v2483 = vpop.f32.mrf.mxu0
        %v2484 = vadd.f32 0.0, %v2483
        %v2485 = vpop.f32.mrf.mxu0
        %v2486 = vpop.f32.mrf.mxu0
        %v2487 = vadd.f32 0.0, %v2486
        %v2488 = vpop.f32.mrf.mxu0
        %2489 = vdwg.mxu0
        %v2490 = vadd.f32 %v2404, %v2484
        %v2491 = vadd.f32 %v2405, %v2487
        %v2492 = vld [vmem:[%s2335] sm:$0xe]
        %s2493 = scalar_lea.vmem %s1, 416
        %v2494 = vld [vmem:[%s2493] sm:$0xf]
        %v2495 = vld [vmem:[%s2493 + $0x4] sm:$0xf]
        %v2496 = vld [vmem:[%s2493 + $0x8] sm:$0xf]
        %v2497 = vld [vmem:[%s2493 + $0xc] sm:$0xf]
        %v2499 = vunpack.c.l.b16 %v2492
        %v2500 = vpack.c.b16 %v2418, %v2499
        %v2501 = vrot.slane %v2500, 1
        %v2502 = vrot.slane %v2421, 1
        %v2503 = vsel %vm2040, %v2501, %v2502
        %v2508 = vunpack.c.l.b16 %v2494
        %v2509 = vunpack.c.l.b16 %v2495
        %v2510 = vunpack.c.l.b16 %v2496
        %v2511 = vunpack.c.l.b16 %v2497
        %v2512 = vpack.c.b16 %v2509, %v2508
        %v2513 = vpack.c.b16 %v2511, %v2510
        %v2517 = vsel %vm1897, %v2503, 0
        %2519 = vmatprep.subr.bf16.mxu0 0
        %2520 = vmatpush1.bf16.msra.mxu0 0
        %2521 = vmatprep.subr.bf16.mxu0 0
        %2522 = vmatpush1.bf16.msra.mxu0 0
        %2523 = vmatprep.subr.bf16.mxu0 0
        %2524 = vmatpush1.bf16.msra.mxu0 0
        %2525 = vmatprep.subr.bf16.mxu0 0
        %2526 = vmatpush1.bf16.msra.mxu0 0
        %2527 = vmatprep.subr.bf16.mxu0 0
        %2528 = vmatpush1.bf16.msra.mxu0 0
        %2529 = vmatprep.subr.bf16.mxu0 0
        %2530 = vmatpush1.bf16.msra.mxu0 0
        %2531 = vmatprep.subr.bf16.mxu0 0
        %2532 = vmatpush1.bf16.msra.mxu0 %v2513
        %2533 = vmatprep.subr.bf16.mxu0 0
        %2534 = vmatpush1.bf16.msra.mxu0 %v2512
        %2535 = vmatprep.subr.bf16.mxu0 0
        %2536 = vmatpush2.bf16.msra.mxu0 0
        %2537 = vmatprep.subr.bf16.mxu0 0
        %2538 = vmatpush2.bf16.msra.mxu0 0
        %2539 = vmatprep.subr.bf16.mxu0 0
        %2540 = vmatpush2.bf16.msra.mxu0 0
        %2541 = vmatprep.subr.bf16.mxu0 0
        %2542 = vmatpush2.bf16.msra.mxu0 0
        %2543 = vmatprep.subr.bf16.mxu0 0
        %2544 = vmatpush2.bf16.msra.mxu0 0
        %2545 = vmatprep.subr.bf16.mxu0 0
        %2546 = vmatpush2.bf16.msra.mxu0 0
        %2547 = vmatprep.subr.bf16.mxu0 0
        %2548 = vmatpush2.bf16.msra.mxu0 0
        %2549 = vmatprep.subr.bf16.mxu0 0
        %2550 = vmatpush2.bf16.msra.mxu0 0
        %2551 = vmatprep.mubr.bf16.mxu0 0
        %2552 = vmatmul.mubr.bf16.gmra.mxu0 %v2517
        %v2553 = vpop.f32.mrf.mxu0
        %v2554 = vadd.f32 0.0, %v2553
        %v2555 = vpop.f32.mrf.mxu0
        %v2556 = vpop.f32.mrf.mxu0
        %v2557 = vadd.f32 0.0, %v2556
        %v2558 = vpop.f32.mrf.mxu0
        %2559 = vdwg.mxu0
        %v2560 = vadd.f32 %v2490, %v2554
        %v2561 = vadd.f32 %v2491, %v2557
        %v2562 = vmax.f32 %v2560, 0.0
        %v2563 = vmax.f32 %v2561, 0.0
        %v2564 = vpack.c.bf16 %v2563, %v2562
        %v2566 = vunpack.c.l.b16 %v2564
        %v2567 = vunpack.c.h.b16 %v2564
        %v2568 = vpack.c.b16 %v2566, %v2566
        %v2569 = vpack.c.b16 %v2567, %v2567
        %s2572 = smul.u32 %s1856, 2
        %s2573 = smul.addr %s2572, 4
        %s2574 = scalar_lea.vmem %s259, %s2573
        %2575 = vst.msk [vmem:[%s2574] sm:$0xf] %vm266, %v2568
        %2576 = vst.msk [vmem:[%s2574 + $0x4] sm:$0xf] %vm266, %v2569
        %v2577 = vld [vmem:[%s3] sm:$0xf]
        %v2578 = vld [vmem:[%s3 + $0x4] sm:$0xf]
        %v2579 = vld [vmem:[%s3 + $0x8] sm:$0xf]
        %v2580 = vld [vmem:[%s3 + $0xc] sm:$0xf]
        %v2582 = vlaneseq
        %v2583 = vshrl.u32 %v2582, 7
        %v2584 = vsub.s32 0, %v2583
        %v2585 = vrot.slane %v376, %v2584
        %v2591 = vunpack.c.l.b16 %v2577
        %v2592 = vunpack.c.l.b16 %v2578
        %v2593 = vunpack.c.l.b16 %v2579
        %v2594 = vunpack.c.l.b16 %v2580
        %v2595 = vpack.c.b16 %v2592, %v2591
        %v2596 = vpack.c.b16 %v2594, %v2593
        %v2600 = vsel %vm1897, %v2564, 0
        %2602 = vmatprep.subr.bf16.mxu0 0
        %2603 = vmatpush1.bf16.msra.mxu0 0
        %2604 = vmatprep.subr.bf16.mxu0 0
        %2605 = vmatpush1.bf16.msra.mxu0 0
        %2606 = vmatprep.subr.bf16.mxu0 0
        %2607 = vmatpush1.bf16.msra.mxu0 0
        %2608 = vmatprep.subr.bf16.mxu0 0
        %2609 = vmatpush1.bf16.msra.mxu0 0
        %2610 = vmatprep.subr.bf16.mxu0 0
        %2611 = vmatpush1.bf16.msra.mxu0 0
        %2612 = vmatprep.subr.bf16.mxu0 0
        %2613 = vmatpush1.bf16.msra.mxu0 0
        %2614 = vmatprep.subr.bf16.mxu0 0
        %2615 = vmatpush1.bf16.msra.mxu0 %v2596
        %2616 = vmatprep.subr.bf16.mxu0 0
        %2617 = vmatpush1.bf16.msra.mxu0 %v2595
        %2618 = vmatprep.subr.bf16.mxu0 0
        %2619 = vmatpush2.bf16.msra.mxu0 0
        %2620 = vmatprep.subr.bf16.mxu0 0
        %2621 = vmatpush2.bf16.msra.mxu0 0
        %2622 = vmatprep.subr.bf16.mxu0 0
        %2623 = vmatpush2.bf16.msra.mxu0 0
        %2624 = vmatprep.subr.bf16.mxu0 0
        %2625 = vmatpush2.bf16.msra.mxu0 0
        %2626 = vmatprep.subr.bf16.mxu0 0
        %2627 = vmatpush2.bf16.msra.mxu0 0
        %2628 = vmatprep.subr.bf16.mxu0 0
        %2629 = vmatpush2.bf16.msra.mxu0 0
        %2630 = vmatprep.subr.bf16.mxu0 0
        %2631 = vmatpush2.bf16.msra.mxu0 0
        %2632 = vmatprep.subr.bf16.mxu0 0
        %2633 = vmatpush2.bf16.msra.mxu0 0
        %2634 = vmatprep.mubr.bf16.mxu0 0
        %2635 = vmatmul.mubr.bf16.gmra.mxu0 %v2600
        %v2636 = vpop.f32.mrf.mxu0
        %v2637 = vadd.f32 %v2585, %v2636
        %v2638 = vpop.f32.mrf.mxu0
        %v2639 = vpop.f32.mrf.mxu0
        %v2640 = vadd.f32 %v2585, %v2639
        %v2641 = vpop.f32.mrf.mxu0
        %2642 = vdwg.mxu0
        %v2643 = vmax.f32 %v2637, 0.0
        %v2644 = vmax.f32 %v2640, 0.0
        %v2645 = vpack.c.bf16 %v2644, %v2643
        %v2647 = vunpack.c.l.b16 %v2645
        %v2648 = vunpack.c.h.b16 %v2645
        %v2649 = vpack.c.b16 %v2647, %v2647
        %v2650 = vpack.c.b16 %v2648, %v2648
        %s2653 = smul.addr %s2572, 4
        %s2654 = scalar_lea.vmem %s264, %s2653
        %vm2655 = vcmask 519168
        %2656 = vst.msk [vmem:[%s2654] sm:$0xf] %vm2655, %v2649
        %2657 = vst.msk [vmem:[%s2654 + $0x4] sm:$0xf] %vm2655, %v2650
      $region59: #{rpnv2_forward.6} parent=39 // loop_footer
        %s1860 = sadd.s32 1, %s1856
      $region60: #{rpnv2_forward.6} parent=39 // loop_footer_branch
        %1855 = sbr.rel target = $region56
      $region61: #{rpnv2_forward.6} parent=39 // loop_exit
        _
      %p2658 = scmp.lt.s32.totalorder %s18, 1
      %s2659 = scalar_select %p2658, %s18, 1
      %s2660 = smul.addr %s2659, 32
      %s2661 = smul.addr %s2660, 4
      %s2662 = scalar_lea.vmem %s5, %s2661
      %p2663 = scmp.lt.s32.totalorder %s18, 1
      %s2664 = scalar_select %p2663, %s18, 1
      %s2665 = smul.addr %s2664, 32
      %s2666 = smul.addr %s2665, 4
      %s2667 = scalar_lea.vmem %s6, %s2666
      // Predicated region
      $region62: #{rpnv2_forward.6} parent=39 // pred_check
        %p2668 = pneg %p146
      $region63: #{rpnv2_forward.6} parent=39 // pred_check_branch
        %2670 = sbr.rel (%p2668) target = $region65
      $region64: #{rpnv2_forward.6} parent=39 // pred_region
        _
      $region65: #{rpnv2_forward.6} parent=39 // pred_fallthru
        _
      // Predicated region
      $region66: #{rpnv2_forward.6} parent=39 // pred_check
        %p2671 = pneg %p172
      $region67: #{rpnv2_forward.6} parent=39 // pred_check_branch
        %2673 = sbr.rel (%p2671) target = $region69
      $region68: #{rpnv2_forward.6} parent=39 // pred_region
        _
      $region69: #{rpnv2_forward.6} parent=39 // pred_fallthru
        _
    $region40: #{rpnv2_forward.6} parent=5 // pred_fallthru
      _
    %p2674 = scmp.le.s32.totalorder 2, %s13
    // Predicated region
    $region70: #{rpnv2_forward.6} parent=5 // pred_check
      %p2675 = pneg %p2674
    $region71: #{rpnv2_forward.6} parent=5 // pred_check_branch
      %2677 = sbr.rel (%p2675) target = $region73
    $region72: #{rpnv2_forward.6} parent=5 // pred_region
      %s2678 = ssub.s32 %s13, 2
      // Predicated region
      $region74: #{rpnv2_forward.6} parent=72 // pred_check
        %p2679 = pneg %p152
      $region75: #{rpnv2_forward.6} parent=72 // pred_check_branch
        %2681 = sbr.rel (%p2679) target = $region77
      $region76: #{rpnv2_forward.6} parent=72 // pred_region
        %p2682 = scmp.lt.s32.totalorder %s19, 1
        %s2683 = scalar_select %p2682, %s19, 1
        %s2684 = smul.addr %s2683, 32
        %s2685 = smul.addr %s2684, 4
        %s2686 = scalar_lea.vmem %s5, %s2685
      $region77: #{rpnv2_forward.6} parent=72 // pred_fallthru
        _
      // Predicated region
      $region78: #{rpnv2_forward.6} parent=72 // pred_check
        %p2687 = pneg %p178
      $region79: #{rpnv2_forward.6} parent=72 // pred_check_branch
        %2689 = sbr.rel (%p2687) target = $region81
      $region80: #{rpnv2_forward.6} parent=72 // pred_region
        %p2690 = scmp.lt.s32.totalorder %s19, 1
        %s2691 = scalar_select %p2690, %s19, 1
        %s2692 = smul.addr %s2691, 32
        %s2693 = smul.addr %s2692, 4
        %s2694 = scalar_lea.vmem %s6, %s2693
      $region81: #{rpnv2_forward.6} parent=72 // pred_fallthru
        _
    $region73: #{rpnv2_forward.6} parent=5 // pred_fallthru
      _
  $region6: #{rpnv2_forward.6} parent=0 // loop_footer
    %s17 = sadd.s32 1, %s13
  $region7: #{rpnv2_forward.6} parent=0 // loop_footer_branch
    %12 = sbr.rel target = $region3
  $region8: #{rpnv2_forward.6} parent=0 // loop_exit
    _

// kernel: rpnv2_forward.8
$region0: #{rpnv2_forward.8}
  #allocation0 [shape = 'u32[]', space=smem, size = 0x4, offset = 0x4, fixed_abs, tag = 'smem constant byte address 0x4 - core index']
  #allocation1 [shape = 'u32[144,128]{1,0:T(1,128)}', space=vmem, size = 0x12000, scoped, tag = 'internal scratch']
  #allocation2 [shape = 'bf16[10,10,64]{2,1,0:T(8,128)(2,1)}', space=vmem, size = 0xa000, scoped, tag = 'scratch operand']
  %s0 = inlined_call_operand.vmem [shape: bf16[2,10,10,64], index: 0, kind: input, shape index: {}]
  %s1 = inlined_call_operand.vmem [shape: bf16[2,9,64,64], index: 1, kind: input, shape index: {}]
  %s2 = inlined_call_operand.vmem [shape: f32[2,1,64], index: 2, kind: input, shape index: {}]
  %s3 = inlined_call_operand.vmem [shape: bf16[64,256], index: 3, kind: input, shape index: {}]
  %s4 = inlined_call_operand.vmem [shape: f32[1,256], index: 4, kind: input, shape index: {}]
  %s5 = inlined_call_operand.vmem [shape: bf16[2,8,8,64], index: 5, kind: output, shape index: {0}]
  %s6 = inlined_call_operand.vmem [shape: bf16[2,8,8,256], index: 6, kind: output, shape index: {1}]
  %7 = xla_tuple %s5, %s6
  %s8 = sld [smem:[#allocation0]]
  $region75: #{rpnv2_forward.8} parent=0
    _
  %s10 = ssub.s32 1, %s8
  %s11 = scalar_select 0, %s10, %s8
  loop: start=0, step=1, limit=4
  $region2: #{rpnv2_forward.8} parent=0 // loop_pre_header
    _
  $region3: #{rpnv2_forward.8} parent=0 // loop_header
    %s13 = sphi 0, %s17
    %p14 = scmp.ge.s32.totalorder %s13, 4
    %s23 = sphi 0, %s25
    %s26 = sphi 0, %s23
    %s27 = sphi 0, %s26
    %s43 = sphi 0, %s27
    %s47 = sphi 0, %s47
    %s49 = sphi 0, %s47
    %s50 = sphi 0, %s49
    %s64 = sphi 0, %s50
    %s68 = sphi 0, %s68
    %s70 = sphi 0, %s68
    %s71 = sphi 0, %s70
    %s85 = sphi 0, %s71
    %s89 = sphi 0, %s89
    %s91 = sphi 0, %s89
    %s92 = sphi 0, %s91
    %s106 = sphi 0, %s92
    %s110 = sphi 0, %s110
    %s112 = sphi 0, %s110
    %s113 = sphi 0, %s112
    %s127 = sphi 0, %s113
    %s133 = sphi 0, %s135
    %s136 = sphi 0, %s133
    %s137 = sphi 0, %s136
    %s153 = sphi 0, %s137
    %s159 = sphi 0, %s161
    %s162 = sphi 0, %s159
    %s163 = sphi 0, %s162
    %s179 = sphi 0, %s163
  $region4: #{rpnv2_forward.8} parent=0 // loop_header_branch
    %16 = sbr.rel (%p14) target = $region8
  $region5: #{rpnv2_forward.8} parent=0 // loop_body
    %s18 = ssub.s32 %s13, 1
    %s19 = ssub.s32 %s13, 2
    %s20 = sadd.s32 %s13, 1
    %s21 = ssub.s32 %s13, %s20
    %p22 = scmp.eq.s32.totalorder %s21, 0
    %s24 = sadd.s32 %s23, 1
    %s25 = scalar_select %p22, %s23, %s24
    %p28 = pneg %p22
    %p29 = scmp.eq.s32.totalorder %s13, 1
    %p30 = por %p28, %p29
    %p31 = scmp.ne.s32.totalorder %s23, %s26
    %p32 = scmp.eq.s32.totalorder %s13, 0
    %p33 = por %p31, %p32
    %p34 = scmp.ne.s32.totalorder %s23, %s26
    %p35 = scmp.eq.s32.totalorder %s18, 1
    %p36 = por %p34, %p35
    %p37 = scmp.ne.s32.totalorder %s26, %s27
    %p38 = scmp.eq.s32.totalorder %s18, 0
    %p39 = por %p37, %p38
    %p40 = scmp.ne.s32.totalorder %s26, %s27
    %p41 = scmp.eq.s32.totalorder %s19, 1
    %p42 = por %p40, %p41
    %p44 = scmp.ne.s32.totalorder %s27, %s43
    %p45 = scmp.eq.s32.totalorder %s19, 0
    %p46 = por %p44, %p45
    %s48 = sadd.s32 %s47, 1
    %p51 = scmp.eq.s32.totalorder %s13, 1
    %p52 = scmp.ne.s32.totalorder %s47, %s49
    %p53 = scmp.eq.s32.totalorder %s13, 0
    %p54 = por %p52, %p53
    %p55 = scmp.ne.s32.totalorder %s47, %s49
    %p56 = scmp.eq.s32.totalorder %s18, 1
    %p57 = por %p55, %p56
    %p58 = scmp.ne.s32.totalorder %s49, %s50
    %p59 = scmp.eq.s32.totalorder %s18, 0
    %p60 = por %p58, %p59
    %p61 = scmp.ne.s32.totalorder %s49, %s50
    %p62 = scmp.eq.s32.totalorder %s19, 1
    %p63 = por %p61, %p62
    %p65 = scmp.ne.s32.totalorder %s50, %s64
    %p66 = scmp.eq.s32.totalorder %s19, 0
    %p67 = por %p65, %p66
    %s69 = sadd.s32 %s68, 1
    %p72 = scmp.eq.s32.totalorder %s13, 1
    %p73 = scmp.ne.s32.totalorder %s68, %s70
    %p74 = scmp.eq.s32.totalorder %s13, 0
    %p75 = por %p73, %p74
    %p76 = scmp.ne.s32.totalorder %s68, %s70
    %p77 = scmp.eq.s32.totalorder %s18, 1
    %p78 = por %p76, %p77
    %p79 = scmp.ne.s32.totalorder %s70, %s71
    %p80 = scmp.eq.s32.totalorder %s18, 0
    %p81 = por %p79, %p80
    %p82 = scmp.ne.s32.totalorder %s70, %s71
    %p83 = scmp.eq.s32.totalorder %s19, 1
    %p84 = por %p82, %p83
    %p86 = scmp.ne.s32.totalorder %s71, %s85
    %p87 = scmp.eq.s32.totalorder %s19, 0
    %p88 = por %p86, %p87
    %s90 = sadd.s32 %s89, 1
    %p93 = scmp.eq.s32.totalorder %s13, 1
    %p94 = scmp.ne.s32.totalorder %s89, %s91
    %p95 = scmp.eq.s32.totalorder %s13, 0
    %p96 = por %p94, %p95
    %p97 = scmp.ne.s32.totalorder %s89, %s91
    %p98 = scmp.eq.s32.totalorder %s18, 1
    %p99 = por %p97, %p98
    %p100 = scmp.ne.s32.totalorder %s91, %s92
    %p101 = scmp.eq.s32.totalorder %s18, 0
    %p102 = por %p100, %p101
    %p103 = scmp.ne.s32.totalorder %s91, %s92
    %p104 = scmp.eq.s32.totalorder %s19, 1
    %p105 = por %p103, %p104
    %p107 = scmp.ne.s32.totalorder %s92, %s106
    %p108 = scmp.eq.s32.totalorder %s19, 0
    %p109 = por %p107, %p108
    %s111 = sadd.s32 %s110, 1
    %p114 = scmp.eq.s32.totalorder %s13, 1
    %p115 = scmp.ne.s32.totalorder %s110, %s112
    %p116 = scmp.eq.s32.totalorder %s13, 0
    %p117 = por %p115, %p116
    %p118 = scmp.ne.s32.totalorder %s110, %s112
    %p119 = scmp.eq.s32.totalorder %s18, 1
    %p120 = por %p118, %p119
    %p121 = scmp.ne.s32.totalorder %s112, %s113
    %p122 = scmp.eq.s32.totalorder %s18, 0
    %p123 = por %p121, %p122
    %p124 = scmp.ne.s32.totalorder %s112, %s113
    %p125 = scmp.eq.s32.totalorder %s19, 1
    %p126 = por %p124, %p125
    %p128 = scmp.ne.s32.totalorder %s113, %s127
    %p129 = scmp.eq.s32.totalorder %s19, 0
    %p130 = por %p128, %p129
    %s131 = ssub.s32 %s13, %s20
    %p132 = scmp.eq.s32.totalorder %s131, 0
    %s134 = sadd.s32 %s133, 1
    %s135 = scalar_select %p132, %s133, %s134
    %p138 = pneg %p132
    %p139 = scmp.eq.s32.totalorder %s13, 1
    %p140 = por %p138, %p139
    %p141 = scmp.ne.s32.totalorder %s133, %s136
    %p142 = scmp.eq.s32.totalorder %s13, 0
    %p143 = por %p141, %p142
    %p144 = scmp.ne.s32.totalorder %s133, %s136
    %p145 = scmp.eq.s32.totalorder %s18, 1
    %p146 = por %p144, %p145
    %p147 = scmp.ne.s32.totalorder %s136, %s137
    %p148 = scmp.eq.s32.totalorder %s18, 0
    %p149 = por %p147, %p148
    %p150 = scmp.ne.s32.totalorder %s136, %s137
    %p151 = scmp.eq.s32.totalorder %s19, 1
    %p152 = por %p150, %p151
    %p154 = scmp.ne.s32.totalorder %s137, %s153
    %p155 = scmp.eq.s32.totalorder %s19, 0
    %p156 = por %p154, %p155
    %s157 = ssub.s32 %s13, %s20
    %p158 = scmp.eq.s32.totalorder %s157, 0
    %s160 = sadd.s32 %s159, 1
    %s161 = scalar_select %p158, %s159, %s160
    %p164 = pneg %p158
    %p165 = scmp.eq.s32.totalorder %s13, 1
    %p166 = por %p164, %p165
    %p167 = scmp.ne.s32.totalorder %s159, %s162
    %p168 = scmp.eq.s32.totalorder %s13, 0
    %p169 = por %p167, %p168
    %p170 = scmp.ne.s32.totalorder %s159, %s162
    %p171 = scmp.eq.s32.totalorder %s18, 1
    %p172 = por %p170, %p171
    %p173 = scmp.ne.s32.totalorder %s162, %s163
    %p174 = scmp.eq.s32.totalorder %s18, 0
    %p175 = por %p173, %p174
    %p176 = scmp.ne.s32.totalorder %s162, %s163
    %p177 = scmp.eq.s32.totalorder %s19, 1
    %p178 = por %p176, %p177
    %p180 = scmp.ne.s32.totalorder %s163, %s179
    %p181 = scmp.eq.s32.totalorder %s19, 0
    %p182 = por %p180, %p181
    %p183 = scmp.le.s32.totalorder 1, %s13
    %p184 = scmp.lt.s32.totalorder %s13, 3
    %p185 = pnand %p183, %p184
    %p186 = pneg %p185
    // Predicated region
    $region9: #{rpnv2_forward.8} parent=5 // pred_check
      _
    $region10: #{rpnv2_forward.8} parent=5 // pred_check_branch
      %188 = sbr.rel (%p185) target = $region12
    $region11: #{rpnv2_forward.8} parent=5 // pred_region
      %s189 = ssub.s32 %s13, 1
      // Predicated region
      $region13: #{rpnv2_forward.8} parent=11 // pred_check
        %p190 = pneg %p60
      $region14: #{rpnv2_forward.8} parent=11 // pred_check_branch
        %192 = sbr.rel (%p190) target = $region16
      $region15: #{rpnv2_forward.8} parent=11 // pred_region
        _
      $region16: #{rpnv2_forward.8} parent=11 // pred_fallthru
        _
      // Predicated region
      $region17: #{rpnv2_forward.8} parent=11 // pred_check
        %p193 = pneg %p81
      $region18: #{rpnv2_forward.8} parent=11 // pred_check_branch
        %195 = sbr.rel (%p193) target = $region20
      $region19: #{rpnv2_forward.8} parent=11 // pred_region
        _
      $region20: #{rpnv2_forward.8} parent=11 // pred_fallthru
        _
      // Predicated region
      $region21: #{rpnv2_forward.8} parent=11 // pred_check
        %p196 = pneg %p102
      $region22: #{rpnv2_forward.8} parent=11 // pred_check_branch
        %198 = sbr.rel (%p196) target = $region24
      $region23: #{rpnv2_forward.8} parent=11 // pred_region
        _
      $region24: #{rpnv2_forward.8} parent=11 // pred_fallthru
        _
      // Predicated region
      $region25: #{rpnv2_forward.8} parent=11 // pred_check
        %p199 = pneg %p123
      $region26: #{rpnv2_forward.8} parent=11 // pred_check_branch
        %201 = sbr.rel (%p199) target = $region28
      $region27: #{rpnv2_forward.8} parent=11 // pred_region
        _
      $region28: #{rpnv2_forward.8} parent=11 // pred_fallthru
        _
    $region12: #{rpnv2_forward.8} parent=5 // pred_fallthru
      _
    %p202 = scmp.lt.s32.totalorder %s13, 2
    // Predicated region
    $region29: #{rpnv2_forward.8} parent=5 // pred_check
      %p203 = pneg %p202
    $region30: #{rpnv2_forward.8} parent=5 // pred_check_branch
      %205 = sbr.rel (%p203) target = $region32
    $region31: #{rpnv2_forward.8} parent=5 // pred_region
      // Predicated region
      $region33: #{rpnv2_forward.8} parent=31 // pred_check
        %p206 = pneg %p33
      $region34: #{rpnv2_forward.8} parent=31 // pred_check_branch
        %208 = sbr.rel (%p206) target = $region36
      $region35: #{rpnv2_forward.8} parent=31 // pred_region
        %p209 = scmp.lt.s32.totalorder %s13, 1
        %s210 = scalar_select %p209, %s13, 1
        %s211 = smul.addr %s210, 20
        %s212 = smul.addr %s211, 4
        %s213 = scalar_lea.vmem %s0, %s212
      $region36: #{rpnv2_forward.8} parent=31 // pred_fallthru
        _
    $region32: #{rpnv2_forward.8} parent=5 // pred_fallthru
      _
    %p214 = scmp.le.s32.totalorder 1, %s13
    %p215 = scmp.lt.s32.totalorder %s13, 3
    %p216 = pnand %p214, %p215
    %p217 = pneg %p216
    // Predicated region
    $region37: #{rpnv2_forward.8} parent=5 // pred_check
      _
    $region38: #{rpnv2_forward.8} parent=5 // pred_check_branch
      %219 = sbr.rel (%p216) target = $region40
    $region39: #{rpnv2_forward.8} parent=5 // pred_region
      %s220 = ssub.s32 %s13, 1
      %p221 = scmp.lt.s32.totalorder %s18, 1
      %s222 = scalar_select %p221, %s18, 1
      %s223 = smul.addr %s222, 20
      %s224 = smul.addr %s223, 4
      %s225 = scalar_lea.vmem %s0, %s224
      %p226 = pneg %p39
      %p227 = pneg %p36
      %p228 = pneg %p60
      %p229 = pneg %p57
      %p230 = pneg %p81
      %p231 = pneg %p78
      %p232 = pneg %p102
      %p233 = pneg %p99
      %p234 = pneg %p123
      %p235 = pneg %p120
      %p236 = pneg %p149
      %p237 = pneg %p146
      %p238 = scmp.lt.s32.totalorder %s18, 1
      %s239 = scalar_select %p238, %s18, 1
      %s240 = smul.addr %s239, 8
      %s241 = smul.addr %s240, 4
      %s242 = scalar_lea.vmem %s5, %s241
      %p243 = pneg %p175
      %p244 = pneg %p172
      %p245 = scmp.lt.s32.totalorder %s18, 1
      %s246 = scalar_select %p245, %s18, 1
      %s247 = smul.addr %s246, 16
      %s248 = smul.addr %s247, 4
      %s249 = scalar_lea.vmem %s6, %s248
      %p250 = scmp.lt.s32.totalorder %s18, 1
      %s251 = scalar_select %p250, %s18, 1
      %s252 = smul.addr %s251, 20
      %s253 = smul.addr %s252, 4
      %s254 = scalar_lea.vmem %s0, %s253
      %p255 = scmp.lt.s32.totalorder %s18, 1
      %s256 = scalar_select %p255, %s18, 1
      %s257 = smul.addr %s256, 8
      %s258 = smul.addr %s257, 4
      %s259 = scalar_lea.vmem %s5, %s258
      %p260 = scmp.lt.s32.totalorder %s18, 1
      %s261 = scalar_select %p260, %s18, 1
      %s262 = smul.addr %s261, 16
      %s263 = smul.addr %s262, 4
      %s264 = scalar_lea.vmem %s6, %s263
      %vm266 = vcmask 519168
      %267 = vst.msk [vmem:[#allocation2] sm:$0xf] %vm266, 0
      %vm268 = vcmask 516096
      %269 = vst.msk [vmem:[#allocation2 + $0x4] sm:$0x1] %vm268, 0
      %270 = vst.msk [vmem:[#allocation2 + $0x8] sm:$0xf] %vm266, 0
      %271 = vst.msk [vmem:[#allocation2 + $0xc] sm:$0x1] %vm268, 0
      %272 = vst.msk [vmem:[#allocation2 + $0x10] sm:$0xf] %vm266, 0
      %273 = vst.msk [vmem:[#allocation2 + $0x14] sm:$0x1] %vm268, 0
      %274 = vst.msk [vmem:[#allocation2 + $0x18] sm:$0xf] %vm266, 0
      %275 = vst.msk [vmem:[#allocation2 + $0x1c] sm:$0x1] %vm268, 0
      %276 = vst.msk [vmem:[#allocation2 + $0x20] sm:$0xf] %vm266, 0
      %277 = vst.msk [vmem:[#allocation2 + $0x24] sm:$0x1] %vm268, 0
      %278 = vst.msk [vmem:[#allocation2 + $0x28] sm:$0xf] %vm266, 0
      %279 = vst.msk [vmem:[#allocation2 + $0x2c] sm:$0x1] %vm268, 0
      %280 = vst.msk [vmem:[#allocation2 + $0x30] sm:$0xf] %vm266, 0
      %281 = vst.msk [vmem:[#allocation2 + $0x34] sm:$0x1] %vm268, 0
      %282 = vst.msk [vmem:[#allocation2 + $0x38] sm:$0xf] %vm266, 0
      %283 = vst.msk [vmem:[#allocation2 + $0x3c] sm:$0x1] %vm268, 0
      %284 = vst.msk [vmem:[#allocation2 + $0x40] sm:$0xf] %vm266, 0
      %285 = vst.msk [vmem:[#allocation2 + $0x44] sm:$0x1] %vm268, 0
      %286 = vst.msk [vmem:[#allocation2 + $0x48] sm:$0xf] %vm266, 0
      %287 = vst.msk [vmem:[#allocation2 + $0x4c] sm:$0x1] %vm268, 0
      %v288 = vld [vmem:[%s4] sm:$0x3]
      loop: start=0, step=1, limit=8
      $region41: #{rpnv2_forward.8} parent=39 // loop_pre_header
        _
      $region42: #{rpnv2_forward.8} parent=39 // loop_header
        %s290 = sphi 0, %s294
        %p291 = scmp.ge.s32.totalorder %s290, 8
      $region43: #{rpnv2_forward.8} parent=39 // loop_header_branch
        %293 = sbr.rel (%p291) target = $region47
      $region44: #{rpnv2_forward.8} parent=39 // loop_body
        %v295 = vld [vmem:[%s2] sm:$0x1]
        %v297 = vlaneseq
        %v298 = vshrl.u32 %v297, 7
        %v299 = vsub.s32 0, %v298
        %v300 = vrot.slane %v295, %v299
        %v302 = vadd.f32 %v300, 0.0
        %s303 = smul.u32 %s290, 2
        %s304 = smul.addr %s303, 4
        %s305 = scalar_lea.vmem %s254, %s304
        %v306 = vld [vmem:[%s305] sm:$0xf]
        %v307 = vld [vmem:[%s1] sm:$0xf]
        %v308 = vld [vmem:[%s1 + $0x4] sm:$0xf]
        %v309 = vld [vmem:[%s1 + $0x8] sm:$0xf]
        %v310 = vld [vmem:[%s1 + $0xc] sm:$0xf]
        %v311 = vld [vmem:[%s1 + $0x10] sm:$0xf]
        %v312 = vld [vmem:[%s1 + $0x14] sm:$0xf]
        %v313 = vld [vmem:[%s1 + $0x18] sm:$0xf]
        %v314 = vld [vmem:[%s1 + $0x1c] sm:$0xf]
        %v323 = vunpack.c.l.b16 %v307
        %v324 = vunpack.c.l.b16 %v308
        %v325 = vunpack.c.l.b16 %v309
        %v326 = vunpack.c.l.b16 %v310
        %v327 = vunpack.c.l.b16 %v311
        %v328 = vunpack.c.l.b16 %v312
        %v329 = vunpack.c.l.b16 %v313
        %v330 = vunpack.c.l.b16 %v314
        %v331 = vpack.c.b16 %v324, %v323
        %v332 = vpack.c.b16 %v326, %v325
        %v333 = vpack.c.b16 %v328, %v327
        %v334 = vpack.c.b16 %v330, %v329
        %vm339 = vcmask 523264
        %v341 = vsel %vm339, %v306, 0
        %343 = vmatprep.subr.bf16.mxu0 0
        %344 = vmatpush1.bf16.msra.mxu0 0
        %345 = vmatprep.subr.bf16.mxu0 0
        %346 = vmatpush1.bf16.msra.mxu0 0
        %347 = vmatprep.subr.bf16.mxu0 0
        %348 = vmatpush1.bf16.msra.mxu0 0
        %349 = vmatprep.subr.bf16.mxu0 0
        %350 = vmatpush1.bf16.msra.mxu0 0
        %351 = vmatprep.subr.bf16.mxu0 0
        %352 = vmatpush1.bf16.msra.mxu0 %v334
        %353 = vmatprep.subr.bf16.mxu0 0
        %354 = vmatpush1.bf16.msra.mxu0 %v333
        %355 = vmatprep.subr.bf16.mxu0 0
        %356 = vmatpush1.bf16.msra.mxu0 %v332
        %357 = vmatprep.subr.bf16.mxu0 0
        %358 = vmatpush1.bf16.msra.mxu0 %v331
        %359 = vmatprep.subr.bf16.mxu0 0
        %360 = vmatpush2.bf16.msra.mxu0 0
        %361 = vmatprep.subr.bf16.mxu0 0
        %362 = vmatpush2.bf16.msra.mxu0 0
        %363 = vmatprep.subr.bf16.mxu0 0
        %364 = vmatpush2.bf16.msra.mxu0 0
        %365 = vmatprep.subr.bf16.mxu0 0
        %366 = vmatpush2.bf16.msra.mxu0 0
        %367 = vmatprep.subr.bf16.mxu0 0
        %368 = vmatpush2.bf16.msra.mxu0 0
        %369 = vmatprep.subr.bf16.mxu0 0
        %370 = vmatpush2.bf16.msra.mxu0 0
        %371 = vmatprep.subr.bf16.mxu0 0
        %372 = vmatpush2.bf16.msra.mxu0 0
        %373 = vmatprep.subr.bf16.mxu0 0
        %374 = vmatpush2.bf16.msra.mxu0 0
        %375 = vmatprep.mubr.bf16.mxu0 0
        %376 = vmatmul.mubr.bf16.gmra.mxu0 %v341
        %v377 = vpop.f32.mrf.mxu0
        %v378 = vadd.f32 0.0, %v377
        %v379 = vpop.f32.mrf.mxu0
        %v380 = vpop.f32.mrf.mxu0
        %v381 = vpop.f32.mrf.mxu0
        %382 = vdwg.mxu0
        %v383 = vadd.f32 %v302, %v378
        %v384 = vld [vmem:[%s305] sm:$0xf]
        %v385 = vld [vmem:[%s305 + $0x4] sm:$0x1]
        %s386 = scalar_lea.vmem %s1, 32
        %v387 = vld [vmem:[%s386] sm:$0xf]
        %v388 = vld [vmem:[%s386 + $0x4] sm:$0xf]
        %v389 = vld [vmem:[%s386 + $0x8] sm:$0xf]
        %v390 = vld [vmem:[%s386 + $0xc] sm:$0xf]
        %v391 = vld [vmem:[%s386 + $0x10] sm:$0xf]
        %v392 = vld [vmem:[%s386 + $0x14] sm:$0xf]
        %v393 = vld [vmem:[%s386 + $0x18] sm:$0xf]
        %v394 = vld [vmem:[%s386 + $0x1c] sm:$0xf]
        %v397 = vunpack.c.l.b16 %v384
        %v398 = vunpack.c.l.b16 %v385
        %v399 = vpack.c.b16 %v398, %v397
        %v401 = vshrl.u32 %v399, 16
        %v403 = vshll.u32 %v399, 16
        %v405 = vrot.slane %v403, 1
        %v406 = vor.u32 %v401, %v405
        %v415 = vunpack.c.l.b16 %v387
        %v416 = vunpack.c.l.b16 %v388
        %v417 = vunpack.c.l.b16 %v389
        %v418 = vunpack.c.l.b16 %v390
        %v419 = vunpack.c.l.b16 %v391
        %v420 = vunpack.c.l.b16 %v392
        %v421 = vunpack.c.l.b16 %v393
        %v422 = vunpack.c.l.b16 %v394
        %v423 = vpack.c.b16 %v416, %v415
        %v424 = vpack.c.b16 %v418, %v417
        %v425 = vpack.c.b16 %v420, %v419
        %v426 = vpack.c.b16 %v422, %v421
        %v432 = vsel %vm339, %v406, 0
        %434 = vmatprep.subr.bf16.mxu0 0
        %435 = vmatpush1.bf16.msra.mxu0 0
        %436 = vmatprep.subr.bf16.mxu0 0
        %437 = vmatpush1.bf16.msra.mxu0 0
        %438 = vmatprep.subr.bf16.mxu0 0
        %439 = vmatpush1.bf16.msra.mxu0 0
        %440 = vmatprep.subr.bf16.mxu0 0
        %441 = vmatpush1.bf16.msra.mxu0 0
        %442 = vmatprep.subr.bf16.mxu0 0
        %443 = vmatpush1.bf16.msra.mxu0 %v426
        %444 = vmatprep.subr.bf16.mxu0 0
        %445 = vmatpush1.bf16.msra.mxu0 %v425
        %446 = vmatprep.subr.bf16.mxu0 0
        %447 = vmatpush1.bf16.msra.mxu0 %v424
        %448 = vmatprep.subr.bf16.mxu0 0
        %449 = vmatpush1.bf16.msra.mxu0 %v423
        %450 = vmatprep.subr.bf16.mxu0 0
        %451 = vmatpush2.bf16.msra.mxu0 0
        %452 = vmatprep.subr.bf16.mxu0 0
        %453 = vmatpush2.bf16.msra.mxu0 0
        %454 = vmatprep.subr.bf16.mxu0 0
        %455 = vmatpush2.bf16.msra.mxu0 0
        %456 = vmatprep.subr.bf16.mxu0 0
        %457 = vmatpush2.bf16.msra.mxu0 0
        %458 = vmatprep.subr.bf16.mxu0 0
        %459 = vmatpush2.bf16.msra.mxu0 0
        %460 = vmatprep.subr.bf16.mxu0 0
        %461 = vmatpush2.bf16.msra.mxu0 0
        %462 = vmatprep.subr.bf16.mxu0 0
        %463 = vmatpush2.bf16.msra.mxu0 0
        %464 = vmatprep.subr.bf16.mxu0 0
        %465 = vmatpush2.bf16.msra.mxu0 0
        %466 = vmatprep.mubr.bf16.mxu0 0
        %467 = vmatmul.mubr.bf16.gmra.mxu0 %v432
        %v468 = vpop.f32.mrf.mxu0
        %v469 = vadd.f32 0.0, %v468
        %v470 = vpop.f32.mrf.mxu0
        %v471 = vpop.f32.mrf.mxu0
        %v472 = vpop.f32.mrf.mxu0
        %473 = vdwg.mxu0
        %v474 = vadd.f32 %v383, %v469
        %v475 = vld [vmem:[%s305] sm:$0xe]
        %s476 = scalar_lea.vmem %s1, 64
        %v477 = vld [vmem:[%s476] sm:$0xf]
        %v478 = vld [vmem:[%s476 + $0x4] sm:$0xf]
        %v479 = vld [vmem:[%s476 + $0x8] sm:$0xf]
        %v480 = vld [vmem:[%s476 + $0xc] sm:$0xf]
        %v481 = vld [vmem:[%s476 + $0x10] sm:$0xf]
        %v482 = vld [vmem:[%s476 + $0x14] sm:$0xf]
        %v483 = vld [vmem:[%s476 + $0x18] sm:$0xf]
        %v484 = vld [vmem:[%s476 + $0x1c] sm:$0xf]
        %v486 = vunpack.c.l.b16 %v475
        %v487 = vpack.c.b16 %v398, %v486
        %v488 = vrot.slane %v487, 1
        %v497 = vunpack.c.l.b16 %v477
        %v498 = vunpack.c.l.b16 %v478
        %v499 = vunpack.c.l.b16 %v479
        %v500 = vunpack.c.l.b16 %v480
        %v501 = vunpack.c.l.b16 %v481
        %v502 = vunpack.c.l.b16 %v482
        %v503 = vunpack.c.l.b16 %v483
        %v504 = vunpack.c.l.b16 %v484
        %v505 = vpack.c.b16 %v498, %v497
        %v506 = vpack.c.b16 %v500, %v499
        %v507 = vpack.c.b16 %v502, %v501
        %v508 = vpack.c.b16 %v504, %v503
        %v514 = vsel %vm339, %v488, 0
        %516 = vmatprep.subr.bf16.mxu0 0
        %517 = vmatpush1.bf16.msra.mxu0 0
        %518 = vmatprep.subr.bf16.mxu0 0
        %519 = vmatpush1.bf16.msra.mxu0 0
        %520 = vmatprep.subr.bf16.mxu0 0
        %521 = vmatpush1.bf16.msra.mxu0 0
        %522 = vmatprep.subr.bf16.mxu0 0
        %523 = vmatpush1.bf16.msra.mxu0 0
        %524 = vmatprep.subr.bf16.mxu0 0
        %525 = vmatpush1.bf16.msra.mxu0 %v508
        %526 = vmatprep.subr.bf16.mxu0 0
        %527 = vmatpush1.bf16.msra.mxu0 %v507
        %528 = vmatprep.subr.bf16.mxu0 0
        %529 = vmatpush1.bf16.msra.mxu0 %v506
        %530 = vmatprep.subr.bf16.mxu0 0
        %531 = vmatpush1.bf16.msra.mxu0 %v505
        %532 = vmatprep.subr.bf16.mxu0 0
        %533 = vmatpush2.bf16.msra.mxu0 0
        %534 = vmatprep.subr.bf16.mxu0 0
        %535 = vmatpush2.bf16.msra.mxu0 0
        %536 = vmatprep.subr.bf16.mxu0 0
        %537 = vmatpush2.bf16.msra.mxu0 0
        %538 = vmatprep.subr.bf16.mxu0 0
        %539 = vmatpush2.bf16.msra.mxu0 0
        %540 = vmatprep.subr.bf16.mxu0 0
        %541 = vmatpush2.bf16.msra.mxu0 0
        %542 = vmatprep.subr.bf16.mxu0 0
        %543 = vmatpush2.bf16.msra.mxu0 0
        %544 = vmatprep.subr.bf16.mxu0 0
        %545 = vmatpush2.bf16.msra.mxu0 0
        %546 = vmatprep.subr.bf16.mxu0 0
        %547 = vmatpush2.bf16.msra.mxu0 0
        %548 = vmatprep.mubr.bf16.mxu0 0
        %549 = vmatmul.mubr.bf16.gmra.mxu0 %v514
        %v550 = vpop.f32.mrf.mxu0
        %v551 = vadd.f32 0.0, %v550
        %v552 = vpop.f32.mrf.mxu0
        %v553 = vpop.f32.mrf.mxu0
        %v554 = vpop.f32.mrf.mxu0
        %555 = vdwg.mxu0
        %v556 = vadd.f32 %v474, %v551
        %s557 = sadd.s32 %s290, 1
        %s558 = smul.u32 %s557, 2
        %s559 = smul.addr %s558, 4
        %s560 = scalar_lea.vmem %s254, %s559
        %v561 = vld [vmem:[%s560] sm:$0xf]
        %s562 = scalar_lea.vmem %s1, 96
        %v563 = vld [vmem:[%s562] sm:$0xf]
        %v564 = vld [vmem:[%s562 + $0x4] sm:$0xf]
        %v565 = vld [vmem:[%s562 + $0x8] sm:$0xf]
        %v566 = vld [vmem:[%s562 + $0xc] sm:$0xf]
        %v567 = vld [vmem:[%s562 + $0x10] sm:$0xf]
        %v568 = vld [vmem:[%s562 + $0x14] sm:$0xf]
        %v569 = vld [vmem:[%s562 + $0x18] sm:$0xf]
        %v570 = vld [vmem:[%s562 + $0x1c] sm:$0xf]
        %v579 = vunpack.c.l.b16 %v563
        %v580 = vunpack.c.l.b16 %v564
        %v581 = vunpack.c.l.b16 %v565
        %v582 = vunpack.c.l.b16 %v566
        %v583 = vunpack.c.l.b16 %v567
        %v584 = vunpack.c.l.b16 %v568
        %v585 = vunpack.c.l.b16 %v569
        %v586 = vunpack.c.l.b16 %v570
        %v587 = vpack.c.b16 %v580, %v579
        %v588 = vpack.c.b16 %v582, %v581
        %v589 = vpack.c.b16 %v584, %v583
        %v590 = vpack.c.b16 %v586, %v585
        %v596 = vsel %vm339, %v561, 0
        %598 = vmatprep.subr.bf16.mxu0 0
        %599 = vmatpush1.bf16.msra.mxu0 0
        %600 = vmatprep.subr.bf16.mxu0 0
        %601 = vmatpush1.bf16.msra.mxu0 0
        %602 = vmatprep.subr.bf16.mxu0 0
        %603 = vmatpush1.bf16.msra.mxu0 0
        %604 = vmatprep.subr.bf16.mxu0 0
        %605 = vmatpush1.bf16.msra.mxu0 0
        %606 = vmatprep.subr.bf16.mxu0 0
        %607 = vmatpush1.bf16.msra.mxu0 %v590
        %608 = vmatprep.subr.bf16.mxu0 0
        %609 = vmatpush1.bf16.msra.mxu0 %v589
        %610 = vmatprep.subr.bf16.mxu0 0
        %611 = vmatpush1.bf16.msra.mxu0 %v588
        %612 = vmatprep.subr.bf16.mxu0 0
        %613 = vmatpush1.bf16.msra.mxu0 %v587
        %614 = vmatprep.subr.bf16.mxu0 0
        %615 = vmatpush2.bf16.msra.mxu0 0
        %616 = vmatprep.subr.bf16.mxu0 0
        %617 = vmatpush2.bf16.msra.mxu0 0
        %618 = vmatprep.subr.bf16.mxu0 0
        %619 = vmatpush2.bf16.msra.mxu0 0
        %620 = vmatprep.subr.bf16.mxu0 0
        %621 = vmatpush2.bf16.msra.mxu0 0
        %622 = vmatprep.subr.bf16.mxu0 0
        %623 = vmatpush2.bf16.msra.mxu0 0
        %624 = vmatprep.subr.bf16.mxu0 0
        %625 = vmatpush2.bf16.msra.mxu0 0
        %626 = vmatprep.subr.bf16.mxu0 0
        %627 = vmatpush2.bf16.msra.mxu0 0
        %628 = vmatprep.subr.bf16.mxu0 0
        %629 = vmatpush2.bf16.msra.mxu0 0
        %630 = vmatprep.mubr.bf16.mxu0 0
        %631 = vmatmul.mubr.bf16.gmra.mxu0 %v596
        %v632 = vpop.f32.mrf.mxu0
        %v633 = vadd.f32 0.0, %v632
        %v634 = vpop.f32.mrf.mxu0
        %v635 = vpop.f32.mrf.mxu0
        %v636 = vpop.f32.mrf.mxu0
        %637 = vdwg.mxu0
        %v638 = vadd.f32 %v556, %v633
        %v639 = vld [vmem:[%s560] sm:$0xf]
        %v640 = vld [vmem:[%s560 + $0x4] sm:$0x1]
        %s641 = scalar_lea.vmem %s1, 128
        %v642 = vld [vmem:[%s641] sm:$0xf]
        %v643 = vld [vmem:[%s641 + $0x4] sm:$0xf]
        %v644 = vld [vmem:[%s641 + $0x8] sm:$0xf]
        %v645 = vld [vmem:[%s641 + $0xc] sm:$0xf]
        %v646 = vld [vmem:[%s641 + $0x10] sm:$0xf]
        %v647 = vld [vmem:[%s641 + $0x14] sm:$0xf]
        %v648 = vld [vmem:[%s641 + $0x18] sm:$0xf]
        %v649 = vld [vmem:[%s641 + $0x1c] sm:$0xf]
        %v652 = vunpack.c.l.b16 %v639
        %v653 = vunpack.c.l.b16 %v640
        %v654 = vpack.c.b16 %v653, %v652
        %v656 = vshrl.u32 %v654, 16
        %v658 = vshll.u32 %v654, 16
        %v660 = vrot.slane %v658, 1
        %v661 = vor.u32 %v656, %v660
        %v670 = vunpack.c.l.b16 %v642
        %v671 = vunpack.c.l.b16 %v643
        %v672 = vunpack.c.l.b16 %v644
        %v673 = vunpack.c.l.b16 %v645
        %v674 = vunpack.c.l.b16 %v646
        %v675 = vunpack.c.l.b16 %v647
        %v676 = vunpack.c.l.b16 %v648
        %v677 = vunpack.c.l.b16 %v649
        %v678 = vpack.c.b16 %v671, %v670
        %v679 = vpack.c.b16 %v673, %v672
        %v680 = vpack.c.b16 %v675, %v674
        %v681 = vpack.c.b16 %v677, %v676
        %v687 = vsel %vm339, %v661, 0
        %689 = vmatprep.subr.bf16.mxu0 0
        %690 = vmatpush1.bf16.msra.mxu0 0
        %691 = vmatprep.subr.bf16.mxu0 0
        %692 = vmatpush1.bf16.msra.mxu0 0
        %693 = vmatprep.subr.bf16.mxu0 0
        %694 = vmatpush1.bf16.msra.mxu0 0
        %695 = vmatprep.subr.bf16.mxu0 0
        %696 = vmatpush1.bf16.msra.mxu0 0
        %697 = vmatprep.subr.bf16.mxu0 0
        %698 = vmatpush1.bf16.msra.mxu0 %v681
        %699 = vmatprep.subr.bf16.mxu0 0
        %700 = vmatpush1.bf16.msra.mxu0 %v680
        %701 = vmatprep.subr.bf16.mxu0 0
        %702 = vmatpush1.bf16.msra.mxu0 %v679
        %703 = vmatprep.subr.bf16.mxu0 0
        %704 = vmatpush1.bf16.msra.mxu0 %v678
        %705 = vmatprep.subr.bf16.mxu0 0
        %706 = vmatpush2.bf16.msra.mxu0 0
        %707 = vmatprep.subr.bf16.mxu0 0
        %708 = vmatpush2.bf16.msra.mxu0 0
        %709 = vmatprep.subr.bf16.mxu0 0
        %710 = vmatpush2.bf16.msra.mxu0 0
        %711 = vmatprep.subr.bf16.mxu0 0
        %712 = vmatpush2.bf16.msra.mxu0 0
        %713 = vmatprep.subr.bf16.mxu0 0
        %714 = vmatpush2.bf16.msra.mxu0 0
        %715 = vmatprep.subr.bf16.mxu0 0
        %716 = vmatpush2.bf16.msra.mxu0 0
        %717 = vmatprep.subr.bf16.mxu0 0
        %718 = vmatpush2.bf16.msra.mxu0 0
        %719 = vmatprep.subr.bf16.mxu0 0
        %720 = vmatpush2.bf16.msra.mxu0 0
        %721 = vmatprep.mubr.bf16.mxu0 0
        %722 = vmatmul.mubr.bf16.gmra.mxu0 %v687
        %v723 = vpop.f32.mrf.mxu0
        %v724 = vadd.f32 0.0, %v723
        %v725 = vpop.f32.mrf.mxu0
        %v726 = vpop.f32.mrf.mxu0
        %v727 = vpop.f32.mrf.mxu0
        %728 = vdwg.mxu0
        %v729 = vadd.f32 %v638, %v724
        %v730 = vld [vmem:[%s560] sm:$0xe]
        %s731 = scalar_lea.vmem %s1, 160
        %v732 = vld [vmem:[%s731] sm:$0xf]
        %v733 = vld [vmem:[%s731 + $0x4] sm:$0xf]
        %v734 = vld [vmem:[%s731 + $0x8] sm:$0xf]
        %v735 = vld [vmem:[%s731 + $0xc] sm:$0xf]
        %v736 = vld [vmem:[%s731 + $0x10] sm:$0xf]
        %v737 = vld [vmem:[%s731 + $0x14] sm:$0xf]
        %v738 = vld [vmem:[%s731 + $0x18] sm:$0xf]
        %v739 = vld [vmem:[%s731 + $0x1c] sm:$0xf]
        %v741 = vunpack.c.l.b16 %v730
        %v742 = vpack.c.b16 %v653, %v741
        %v743 = vrot.slane %v742, 1
        %v752 = vunpack.c.l.b16 %v732
        %v753 = vunpack.c.l.b16 %v733
        %v754 = vunpack.c.l.b16 %v734
        %v755 = vunpack.c.l.b16 %v735
        %v756 = vunpack.c.l.b16 %v736
        %v757 = vunpack.c.l.b16 %v737
        %v758 = vunpack.c.l.b16 %v738
        %v759 = vunpack.c.l.b16 %v739
        %v760 = vpack.c.b16 %v753, %v752
        %v761 = vpack.c.b16 %v755, %v754
        %v762 = vpack.c.b16 %v757, %v756
        %v763 = vpack.c.b16 %v759, %v758
        %v769 = vsel %vm339, %v743, 0
        %771 = vmatprep.subr.bf16.mxu0 0
        %772 = vmatpush1.bf16.msra.mxu0 0
        %773 = vmatprep.subr.bf16.mxu0 0
        %774 = vmatpush1.bf16.msra.mxu0 0
        %775 = vmatprep.subr.bf16.mxu0 0
        %776 = vmatpush1.bf16.msra.mxu0 0
        %777 = vmatprep.subr.bf16.mxu0 0
        %778 = vmatpush1.bf16.msra.mxu0 0
        %779 = vmatprep.subr.bf16.mxu0 0
        %780 = vmatpush1.bf16.msra.mxu0 %v763
        %781 = vmatprep.subr.bf16.mxu0 0
        %782 = vmatpush1.bf16.msra.mxu0 %v762
        %783 = vmatprep.subr.bf16.mxu0 0
        %784 = vmatpush1.bf16.msra.mxu0 %v761
        %785 = vmatprep.subr.bf16.mxu0 0
        %786 = vmatpush1.bf16.msra.mxu0 %v760
        %787 = vmatprep.subr.bf16.mxu0 0
        %788 = vmatpush2.bf16.msra.mxu0 0
        %789 = vmatprep.subr.bf16.mxu0 0
        %790 = vmatpush2.bf16.msra.mxu0 0
        %791 = vmatprep.subr.bf16.mxu0 0
        %792 = vmatpush2.bf16.msra.mxu0 0
        %793 = vmatprep.subr.bf16.mxu0 0
        %794 = vmatpush2.bf16.msra.mxu0 0
        %795 = vmatprep.subr.bf16.mxu0 0
        %796 = vmatpush2.bf16.msra.mxu0 0
        %797 = vmatprep.subr.bf16.mxu0 0
        %798 = vmatpush2.bf16.msra.mxu0 0
        %799 = vmatprep.subr.bf16.mxu0 0
        %800 = vmatpush2.bf16.msra.mxu0 0
        %801 = vmatprep.subr.bf16.mxu0 0
        %802 = vmatpush2.bf16.msra.mxu0 0
        %803 = vmatprep.mubr.bf16.mxu0 0
        %804 = vmatmul.mubr.bf16.gmra.mxu0 %v769
        %v805 = vpop.f32.mrf.mxu0
        %v806 = vadd.f32 0.0, %v805
        %v807 = vpop.f32.mrf.mxu0
        %v808 = vpop.f32.mrf.mxu0
        %v809 = vpop.f32.mrf.mxu0
        %810 = vdwg.mxu0
        %v811 = vadd.f32 %v729, %v806
        %s812 = sadd.s32 %s290, 2
        %s813 = smul.u32 %s812, 2
        %s814 = smul.addr %s813, 4
        %s815 = scalar_lea.vmem %s254, %s814
        %v816 = vld [vmem:[%s815] sm:$0xf]
        %s817 = scalar_lea.vmem %s1, 192
        %v818 = vld [vmem:[%s817] sm:$0xf]
        %v819 = vld [vmem:[%s817 + $0x4] sm:$0xf]
        %v820 = vld [vmem:[%s817 + $0x8] sm:$0xf]
        %v821 = vld [vmem:[%s817 + $0xc] sm:$0xf]
        %v822 = vld [vmem:[%s817 + $0x10] sm:$0xf]
        %v823 = vld [vmem:[%s817 + $0x14] sm:$0xf]
        %v824 = vld [vmem:[%s817 + $0x18] sm:$0xf]
        %v825 = vld [vmem:[%s817 + $0x1c] sm:$0xf]
        %v834 = vunpack.c.l.b16 %v818
        %v835 = vunpack.c.l.b16 %v819
        %v836 = vunpack.c.l.b16 %v820
        %v837 = vunpack.c.l.b16 %v821
        %v838 = vunpack.c.l.b16 %v822
        %v839 = vunpack.c.l.b16 %v823
        %v840 = vunpack.c.l.b16 %v824
        %v841 = vunpack.c.l.b16 %v825
        %v842 = vpack.c.b16 %v835, %v834
        %v843 = vpack.c.b16 %v837, %v836
        %v844 = vpack.c.b16 %v839, %v838
        %v845 = vpack.c.b16 %v841, %v840
        %v851 = vsel %vm339, %v816, 0
        %853 = vmatprep.subr.bf16.mxu0 0
        %854 = vmatpush1.bf16.msra.mxu0 0
        %855 = vmatprep.subr.bf16.mxu0 0
        %856 = vmatpush1.bf16.msra.mxu0 0
        %857 = vmatprep.subr.bf16.mxu0 0
        %858 = vmatpush1.bf16.msra.mxu0 0
        %859 = vmatprep.subr.bf16.mxu0 0
        %860 = vmatpush1.bf16.msra.mxu0 0
        %861 = vmatprep.subr.bf16.mxu0 0
        %862 = vmatpush1.bf16.msra.mxu0 %v845
        %863 = vmatprep.subr.bf16.mxu0 0
        %864 = vmatpush1.bf16.msra.mxu0 %v844
        %865 = vmatprep.subr.bf16.mxu0 0
        %866 = vmatpush1.bf16.msra.mxu0 %v843
        %867 = vmatprep.subr.bf16.mxu0 0
        %868 = vmatpush1.bf16.msra.mxu0 %v842
        %869 = vmatprep.subr.bf16.mxu0 0
        %870 = vmatpush2.bf16.msra.mxu0 0
        %871 = vmatprep.subr.bf16.mxu0 0
        %872 = vmatpush2.bf16.msra.mxu0 0
        %873 = vmatprep.subr.bf16.mxu0 0
        %874 = vmatpush2.bf16.msra.mxu0 0
        %875 = vmatprep.subr.bf16.mxu0 0
        %876 = vmatpush2.bf16.msra.mxu0 0
        %877 = vmatprep.subr.bf16.mxu0 0
        %878 = vmatpush2.bf16.msra.mxu0 0
        %879 = vmatprep.subr.bf16.mxu0 0
        %880 = vmatpush2.bf16.msra.mxu0 0
        %881 = vmatprep.subr.bf16.mxu0 0
        %882 = vmatpush2.bf16.msra.mxu0 0
        %883 = vmatprep.subr.bf16.mxu0 0
        %884 = vmatpush2.bf16.msra.mxu0 0
        %885 = vmatprep.mubr.bf16.mxu0 0
        %886 = vmatmul.mubr.bf16.gmra.mxu0 %v851
        %v887 = vpop.f32.mrf.mxu0
        %v888 = vadd.f32 0.0, %v887
        %v889 = vpop.f32.mrf.mxu0
        %v890 = vpop.f32.mrf.mxu0
        %v891 = vpop.f32.mrf.mxu0
        %892 = vdwg.mxu0
        %v893 = vadd.f32 %v811, %v888
        %v894 = vld [vmem:[%s815] sm:$0xf]
        %v895 = vld [vmem:[%s815 + $0x4] sm:$0x1]
        %s896 = scalar_lea.vmem %s1, 224
        %v897 = vld [vmem:[%s896] sm:$0xf]
        %v898 = vld [vmem:[%s896 + $0x4] sm:$0xf]
        %v899 = vld [vmem:[%s896 + $0x8] sm:$0xf]
        %v900 = vld [vmem:[%s896 + $0xc] sm:$0xf]
        %v901 = vld [vmem:[%s896 + $0x10] sm:$0xf]
        %v902 = vld [vmem:[%s896 + $0x14] sm:$0xf]
        %v903 = vld [vmem:[%s896 + $0x18] sm:$0xf]
        %v904 = vld [vmem:[%s896 + $0x1c] sm:$0xf]
        %v907 = vunpack.c.l.b16 %v894
        %v908 = vunpack.c.l.b16 %v895
        %v909 = vpack.c.b16 %v908, %v907
        %v911 = vshrl.u32 %v909, 16
        %v913 = vshll.u32 %v909, 16
        %v915 = vrot.slane %v913, 1
        %v916 = vor.u32 %v911, %v915
        %v925 = vunpack.c.l.b16 %v897
        %v926 = vunpack.c.l.b16 %v898
        %v927 = vunpack.c.l.b16 %v899
        %v928 = vunpack.c.l.b16 %v900
        %v929 = vunpack.c.l.b16 %v901
        %v930 = vunpack.c.l.b16 %v902
        %v931 = vunpack.c.l.b16 %v903
        %v932 = vunpack.c.l.b16 %v904
        %v933 = vpack.c.b16 %v926, %v925
        %v934 = vpack.c.b16 %v928, %v927
        %v935 = vpack.c.b16 %v930, %v929
        %v936 = vpack.c.b16 %v932, %v931
        %v942 = vsel %vm339, %v916, 0
        %944 = vmatprep.subr.bf16.mxu0 0
        %945 = vmatpush1.bf16.msra.mxu0 0
        %946 = vmatprep.subr.bf16.mxu0 0
        %947 = vmatpush1.bf16.msra.mxu0 0
        %948 = vmatprep.subr.bf16.mxu0 0
        %949 = vmatpush1.bf16.msra.mxu0 0
        %950 = vmatprep.subr.bf16.mxu0 0
        %951 = vmatpush1.bf16.msra.mxu0 0
        %952 = vmatprep.subr.bf16.mxu0 0
        %953 = vmatpush1.bf16.msra.mxu0 %v936
        %954 = vmatprep.subr.bf16.mxu0 0
        %955 = vmatpush1.bf16.msra.mxu0 %v935
        %956 = vmatprep.subr.bf16.mxu0 0
        %957 = vmatpush1.bf16.msra.mxu0 %v934
        %958 = vmatprep.subr.bf16.mxu0 0
        %959 = vmatpush1.bf16.msra.mxu0 %v933
        %960 = vmatprep.subr.bf16.mxu0 0
        %961 = vmatpush2.bf16.msra.mxu0 0
        %962 = vmatprep.subr.bf16.mxu0 0
        %963 = vmatpush2.bf16.msra.mxu0 0
        %964 = vmatprep.subr.bf16.mxu0 0
        %965 = vmatpush2.bf16.msra.mxu0 0
        %966 = vmatprep.subr.bf16.mxu0 0
        %967 = vmatpush2.bf16.msra.mxu0 0
        %968 = vmatprep.subr.bf16.mxu0 0
        %969 = vmatpush2.bf16.msra.mxu0 0
        %970 = vmatprep.subr.bf16.mxu0 0
        %971 = vmatpush2.bf16.msra.mxu0 0
        %972 = vmatprep.subr.bf16.mxu0 0
        %973 = vmatpush2.bf16.msra.mxu0 0
        %974 = vmatprep.subr.bf16.mxu0 0
        %975 = vmatpush2.bf16.msra.mxu0 0
        %976 = vmatprep.mubr.bf16.mxu0 0
        %977 = vmatmul.mubr.bf16.gmra.mxu0 %v942
        %v978 = vpop.f32.mrf.mxu0
        %v979 = vadd.f32 0.0, %v978
        %v980 = vpop.f32.mrf.mxu0
        %v981 = vpop.f32.mrf.mxu0
        %v982 = vpop.f32.mrf.mxu0
        %983 = vdwg.mxu0
        %v984 = vadd.f32 %v893, %v979
        %v985 = vld [vmem:[%s815] sm:$0xe]
        %s986 = scalar_lea.vmem %s1, 256
        %v987 = vld [vmem:[%s986] sm:$0xf]
        %v988 = vld [vmem:[%s986 + $0x4] sm:$0xf]
        %v989 = vld [vmem:[%s986 + $0x8] sm:$0xf]
        %v990 = vld [vmem:[%s986 + $0xc] sm:$0xf]
        %v991 = vld [vmem:[%s986 + $0x10] sm:$0xf]
        %v992 = vld [vmem:[%s986 + $0x14] sm:$0xf]
        %v993 = vld [vmem:[%s986 + $0x18] sm:$0xf]
        %v994 = vld [vmem:[%s986 + $0x1c] sm:$0xf]
        %v996 = vunpack.c.l.b16 %v985
        %v997 = vpack.c.b16 %v908, %v996
        %v998 = vrot.slane %v997, 1
        %v1007 = vunpack.c.l.b16 %v987
        %v1008 = vunpack.c.l.b16 %v988
        %v1009 = vunpack.c.l.b16 %v989
        %v1010 = vunpack.c.l.b16 %v990
        %v1011 = vunpack.c.l.b16 %v991
        %v1012 = vunpack.c.l.b16 %v992
        %v1013 = vunpack.c.l.b16 %v993
        %v1014 = vunpack.c.l.b16 %v994
        %v1015 = vpack.c.b16 %v1008, %v1007
        %v1016 = vpack.c.b16 %v1010, %v1009
        %v1017 = vpack.c.b16 %v1012, %v1011
        %v1018 = vpack.c.b16 %v1014, %v1013
        %v1024 = vsel %vm339, %v998, 0
        %1026 = vmatprep.subr.bf16.mxu0 0
        %1027 = vmatpush1.bf16.msra.mxu0 0
        %1028 = vmatprep.subr.bf16.mxu0 0
        %1029 = vmatpush1.bf16.msra.mxu0 0
        %1030 = vmatprep.subr.bf16.mxu0 0
        %1031 = vmatpush1.bf16.msra.mxu0 0
        %1032 = vmatprep.subr.bf16.mxu0 0
        %1033 = vmatpush1.bf16.msra.mxu0 0
        %1034 = vmatprep.subr.bf16.mxu0 0
        %1035 = vmatpush1.bf16.msra.mxu0 %v1018
        %1036 = vmatprep.subr.bf16.mxu0 0
        %1037 = vmatpush1.bf16.msra.mxu0 %v1017
        %1038 = vmatprep.subr.bf16.mxu0 0
        %1039 = vmatpush1.bf16.msra.mxu0 %v1016
        %1040 = vmatprep.subr.bf16.mxu0 0
        %1041 = vmatpush1.bf16.msra.mxu0 %v1015
        %1042 = vmatprep.subr.bf16.mxu0 0
        %1043 = vmatpush2.bf16.msra.mxu0 0
        %1044 = vmatprep.subr.bf16.mxu0 0
        %1045 = vmatpush2.bf16.msra.mxu0 0
        %1046 = vmatprep.subr.bf16.mxu0 0
        %1047 = vmatpush2.bf16.msra.mxu0 0
        %1048 = vmatprep.subr.bf16.mxu0 0
        %1049 = vmatpush2.bf16.msra.mxu0 0
        %1050 = vmatprep.subr.bf16.mxu0 0
        %1051 = vmatpush2.bf16.msra.mxu0 0
        %1052 = vmatprep.subr.bf16.mxu0 0
        %1053 = vmatpush2.bf16.msra.mxu0 0
        %1054 = vmatprep.subr.bf16.mxu0 0
        %1055 = vmatpush2.bf16.msra.mxu0 0
        %1056 = vmatprep.subr.bf16.mxu0 0
        %1057 = vmatpush2.bf16.msra.mxu0 0
        %1058 = vmatprep.mubr.bf16.mxu0 0
        %1059 = vmatmul.mubr.bf16.gmra.mxu0 %v1024
        %v1060 = vpop.f32.mrf.mxu0
        %v1061 = vadd.f32 0.0, %v1060
        %v1062 = vpop.f32.mrf.mxu0
        %v1063 = vpop.f32.mrf.mxu0
        %v1064 = vpop.f32.mrf.mxu0
        %1065 = vdwg.mxu0
        %v1066 = vadd.f32 %v984, %v1061
        %v1067 = vmax.f32 %v1066, 0.0
        %v1068 = vpack.c.bf16 %v1067, %v1067
        %v1070 = vshrl.u32 %v1068, 16
        %v1072 = vrot.slane %v1070, 7
        %v1073 = vshll.u32 %v1068, 16
        %v1075 = vor.u32 %v1072, %v1073
        %vm1077 = vcmask 1040384
        %vm1078 = vsmask.f32 256
        %vm1079 = vmand %vm1077, %vm1078
        %v1080 = vsel %vm1079, 0, %v1075
        %vm1081 = vcmask 1044480
        %vm1082 = vsmask.f32 4352
        %vm1083 = vmand %vm1081, %vm1082
        %v1084 = vsel %vm1083, %v1080, 0
        %v1086 = vunpack.c.l.b16 %v1084
        %v1087 = vunpack.c.h.b16 %v1084
        %v1088 = vpack.c.b16 %v1086, %v1086
        %v1089 = vpack.c.b16 %v1087, %v1087
        %s1092 = smul.addr %s558, 4
        %s1093 = scalar_lea.vmem [#allocation2], %s1092
        %1094 = vst.msk [vmem:[%s1093] sm:$0xf] %vm266, %v1088
        %1095 = vst.msk [vmem:[%s1093 + $0x4] sm:$0x1] %vm268, %v1089
      $region45: #{rpnv2_forward.8} parent=39 // loop_footer
        %s294 = sadd.s32 1, %s290
      $region46: #{rpnv2_forward.8} parent=39 // loop_footer_branch
        %289 = sbr.rel target = $region42
      $region47: #{rpnv2_forward.8} parent=39 // loop_exit
        _
      loop: start=0, step=1, limit=8
      $region48: #{rpnv2_forward.8} parent=39 // loop_pre_header
        _
      $region49: #{rpnv2_forward.8} parent=39 // loop_header
        %s1097 = sphi 0, %s1101
        %p1098 = scmp.ge.s32.totalorder %s1097, 8
      $region50: #{rpnv2_forward.8} parent=39 // loop_header_branch
        %1100 = sbr.rel (%p1098) target = $region54
      $region51: #{rpnv2_forward.8} parent=39 // loop_body
        %s1102 = scalar_lea.vmem %s2, 1
        %v1103 = vld [vmem:[%s1102] sm:$0x1]
        %v1105 = vlaneseq
        %v1106 = vshrl.u32 %v1105, 7
        %v1107 = vsub.s32 0, %v1106
        %v1108 = vrot.slane %v1103, %v1107
        %v1110 = vadd.f32 %v1108, 0.0
        %s1111 = smul.u32 %s1097, 2
        %s1112 = smul.addr %s1111, 4
        %s1113 = scalar_lea.vmem [#allocation2], %s1112
        %v1114 = vld [vmem:[%s1113] sm:$0xf]
        %s1115 = scalar_lea.vmem %s1, 288
        %v1116 = vld [vmem:[%s1115] sm:$0xf]
        %v1117 = vld [vmem:[%s1115 + $0x4] sm:$0xf]
        %v1118 = vld [vmem:[%s1115 + $0x8] sm:$0xf]
        %v1119 = vld [vmem:[%s1115 + $0xc] sm:$0xf]
        %v1120 = vld [vmem:[%s1115 + $0x10] sm:$0xf]
        %v1121 = vld [vmem:[%s1115 + $0x14] sm:$0xf]
        %v1122 = vld [vmem:[%s1115 + $0x18] sm:$0xf]
        %v1123 = vld [vmem:[%s1115 + $0x1c] sm:$0xf]
        %v1132 = vunpack.c.l.b16 %v1116
        %v1133 = vunpack.c.l.b16 %v1117
        %v1134 = vunpack.c.l.b16 %v1118
        %v1135 = vunpack.c.l.b16 %v1119
        %v1136 = vunpack.c.l.b16 %v1120
        %v1137 = vunpack.c.l.b16 %v1121
        %v1138 = vunpack.c.l.b16 %v1122
        %v1139 = vunpack.c.l.b16 %v1123
        %v1140 = vpack.c.b16 %v1133, %v1132
        %v1141 = vpack.c.b16 %v1135, %v1134
        %v1142 = vpack.c.b16 %v1137, %v1136
        %v1143 = vpack.c.b16 %v1139, %v1138
        %vm1148 = vcmask 523264
        %v1150 = vsel %vm1148, %v1114, 0
        %1152 = vmatprep.subr.bf16.mxu0 0
        %1153 = vmatpush1.bf16.msra.mxu0 0
        %1154 = vmatprep.subr.bf16.mxu0 0
        %1155 = vmatpush1.bf16.msra.mxu0 0
        %1156 = vmatprep.subr.bf16.mxu0 0
        %1157 = vmatpush1.bf16.msra.mxu0 0
        %1158 = vmatprep.subr.bf16.mxu0 0
        %1159 = vmatpush1.bf16.msra.mxu0 0
        %1160 = vmatprep.subr.bf16.mxu0 0
        %1161 = vmatpush1.bf16.msra.mxu0 %v1143
        %1162 = vmatprep.subr.bf16.mxu0 0
        %1163 = vmatpush1.bf16.msra.mxu0 %v1142
        %1164 = vmatprep.subr.bf16.mxu0 0
        %1165 = vmatpush1.bf16.msra.mxu0 %v1141
        %1166 = vmatprep.subr.bf16.mxu0 0
        %1167 = vmatpush1.bf16.msra.mxu0 %v1140
        %1168 = vmatprep.subr.bf16.mxu0 0
        %1169 = vmatpush2.bf16.msra.mxu0 0
        %1170 = vmatprep.subr.bf16.mxu0 0
        %1171 = vmatpush2.bf16.msra.mxu0 0
        %1172 = vmatprep.subr.bf16.mxu0 0
        %1173 = vmatpush2.bf16.msra.mxu0 0
        %1174 = vmatprep.subr.bf16.mxu0 0
        %1175 = vmatpush2.bf16.msra.mxu0 0
        %1176 = vmatprep.subr.bf16.mxu0 0
        %1177 = vmatpush2.bf16.msra.mxu0 0
        %1178 = vmatprep.subr.bf16.mxu0 0
        %1179 = vmatpush2.bf16.msra.mxu0 0
        %1180 = vmatprep.subr.bf16.mxu0 0
        %1181 = vmatpush2.bf16.msra.mxu0 0
        %1182 = vmatprep.subr.bf16.mxu0 0
        %1183 = vmatpush2.bf16.msra.mxu0 0
        %1184 = vmatprep.mubr.bf16.mxu0 0
        %1185 = vmatmul.mubr.bf16.gmra.mxu0 %v1150
        %v1186 = vpop.f32.mrf.mxu0
        %v1187 = vadd.f32 0.0, %v1186
        %v1188 = vpop.f32.mrf.mxu0
        %v1189 = vpop.f32.mrf.mxu0
        %v1190 = vpop.f32.mrf.mxu0
        %1191 = vdwg.mxu0
        %v1192 = vadd.f32 %v1110, %v1187
        %v1193 = vld [vmem:[%s1113] sm:$0xf]
        %v1194 = vld [vmem:[%s1113 + $0x4] sm:$0x1]
        %s1195 = scalar_lea.vmem %s1, 320
        %v1196 = vld [vmem:[%s1195] sm:$0xf]
        %v1197 = vld [vmem:[%s1195 + $0x4] sm:$0xf]
        %v1198 = vld [vmem:[%s1195 + $0x8] sm:$0xf]
        %v1199 = vld [vmem:[%s1195 + $0xc] sm:$0xf]
        %v1200 = vld [vmem:[%s1195 + $0x10] sm:$0xf]
        %v1201 = vld [vmem:[%s1195 + $0x14] sm:$0xf]
        %v1202 = vld [vmem:[%s1195 + $0x18] sm:$0xf]
        %v1203 = vld [vmem:[%s1195 + $0x1c] sm:$0xf]
        %v1206 = vunpack.c.l.b16 %v1193
        %v1207 = vunpack.c.l.b16 %v1194
        %v1208 = vpack.c.b16 %v1207, %v1206
        %v1210 = vshrl.u32 %v1208, 16
        %v1212 = vshll.u32 %v1208, 16
        %v1214 = vrot.slane %v1212, 1
        %v1215 = vor.u32 %v1210, %v1214
        %v1224 = vunpack.c.l.b16 %v1196
        %v1225 = vunpack.c.l.b16 %v1197
        %v1226 = vunpack.c.l.b16 %v1198
        %v1227 = vunpack.c.l.b16 %v1199
        %v1228 = vunpack.c.l.b16 %v1200
        %v1229 = vunpack.c.l.b16 %v1201
        %v1230 = vunpack.c.l.b16 %v1202
        %v1231 = vunpack.c.l.b16 %v1203
        %v1232 = vpack.c.b16 %v1225, %v1224
        %v1233 = vpack.c.b16 %v1227, %v1226
        %v1234 = vpack.c.b16 %v1229, %v1228
        %v1235 = vpack.c.b16 %v1231, %v1230
        %v1241 = vsel %vm1148, %v1215, 0
        %1243 = vmatprep.subr.bf16.mxu0 0
        %1244 = vmatpush1.bf16.msra.mxu0 0
        %1245 = vmatprep.subr.bf16.mxu0 0
        %1246 = vmatpush1.bf16.msra.mxu0 0
        %1247 = vmatprep.subr.bf16.mxu0 0
        %1248 = vmatpush1.bf16.msra.mxu0 0
        %1249 = vmatprep.subr.bf16.mxu0 0
        %1250 = vmatpush1.bf16.msra.mxu0 0
        %1251 = vmatprep.subr.bf16.mxu0 0
        %1252 = vmatpush1.bf16.msra.mxu0 %v1235
        %1253 = vmatprep.subr.bf16.mxu0 0
        %1254 = vmatpush1.bf16.msra.mxu0 %v1234
        %1255 = vmatprep.subr.bf16.mxu0 0
        %1256 = vmatpush1.bf16.msra.mxu0 %v1233
        %1257 = vmatprep.subr.bf16.mxu0 0
        %1258 = vmatpush1.bf16.msra.mxu0 %v1232
        %1259 = vmatprep.subr.bf16.mxu0 0
        %1260 = vmatpush2.bf16.msra.mxu0 0
        %1261 = vmatprep.subr.bf16.mxu0 0
        %1262 = vmatpush2.bf16.msra.mxu0 0
        %1263 = vmatprep.subr.bf16.mxu0 0
        %1264 = vmatpush2.bf16.msra.mxu0 0
        %1265 = vmatprep.subr.bf16.mxu0 0
        %1266 = vmatpush2.bf16.msra.mxu0 0
        %1267 = vmatprep.subr.bf16.mxu0 0
        %1268 = vmatpush2.bf16.msra.mxu0 0
        %1269 = vmatprep.subr.bf16.mxu0 0
        %1270 = vmatpush2.bf16.msra.mxu0 0
        %1271 = vmatprep.subr.bf16.mxu0 0
        %1272 = vmatpush2.bf16.msra.mxu0 0
        %1273 = vmatprep.subr.bf16.mxu0 0
        %1274 = vmatpush2.bf16.msra.mxu0 0
        %1275 = vmatprep.mubr.bf16.mxu0 0
        %1276 = vmatmul.mubr.bf16.gmra.mxu0 %v1241
        %v1277 = vpop.f32.mrf.mxu0
        %v1278 = vadd.f32 0.0, %v1277
        %v1279 = vpop.f32.mrf.mxu0
        %v1280 = vpop.f32.mrf.mxu0
        %v1281 = vpop.f32.mrf.mxu0
        %1282 = vdwg.mxu0
        %v1283 = vadd.f32 %v1192, %v1278
        %v1284 = vld [vmem:[%s1113] sm:$0xe]
        %s1285 = scalar_lea.vmem %s1, 352
        %v1286 = vld [vmem:[%s1285] sm:$0xf]
        %v1287 = vld [vmem:[%s1285 + $0x4] sm:$0xf]
        %v1288 = vld [vmem:[%s1285 + $0x8] sm:$0xf]
        %v1289 = vld [vmem:[%s1285 + $0xc] sm:$0xf]
        %v1290 = vld [vmem:[%s1285 + $0x10] sm:$0xf]
        %v1291 = vld [vmem:[%s1285 + $0x14] sm:$0xf]
        %v1292 = vld [vmem:[%s1285 + $0x18] sm:$0xf]
        %v1293 = vld [vmem:[%s1285 + $0x1c] sm:$0xf]
        %v1295 = vunpack.c.l.b16 %v1284
        %v1296 = vpack.c.b16 %v1207, %v1295
        %v1297 = vrot.slane %v1296, 1
        %v1306 = vunpack.c.l.b16 %v1286
        %v1307 = vunpack.c.l.b16 %v1287
        %v1308 = vunpack.c.l.b16 %v1288
        %v1309 = vunpack.c.l.b16 %v1289
        %v1310 = vunpack.c.l.b16 %v1290
        %v1311 = vunpack.c.l.b16 %v1291
        %v1312 = vunpack.c.l.b16 %v1292
        %v1313 = vunpack.c.l.b16 %v1293
        %v1314 = vpack.c.b16 %v1307, %v1306
        %v1315 = vpack.c.b16 %v1309, %v1308
        %v1316 = vpack.c.b16 %v1311, %v1310
        %v1317 = vpack.c.b16 %v1313, %v1312
        %v1323 = vsel %vm1148, %v1297, 0
        %1325 = vmatprep.subr.bf16.mxu0 0
        %1326 = vmatpush1.bf16.msra.mxu0 0
        %1327 = vmatprep.subr.bf16.mxu0 0
        %1328 = vmatpush1.bf16.msra.mxu0 0
        %1329 = vmatprep.subr.bf16.mxu0 0
        %1330 = vmatpush1.bf16.msra.mxu0 0
        %1331 = vmatprep.subr.bf16.mxu0 0
        %1332 = vmatpush1.bf16.msra.mxu0 0
        %1333 = vmatprep.subr.bf16.mxu0 0
        %1334 = vmatpush1.bf16.msra.mxu0 %v1317
        %1335 = vmatprep.subr.bf16.mxu0 0
        %1336 = vmatpush1.bf16.msra.mxu0 %v1316
        %1337 = vmatprep.subr.bf16.mxu0 0
        %1338 = vmatpush1.bf16.msra.mxu0 %v1315
        %1339 = vmatprep.subr.bf16.mxu0 0
        %1340 = vmatpush1.bf16.msra.mxu0 %v1314
        %1341 = vmatprep.subr.bf16.mxu0 0
        %1342 = vmatpush2.bf16.msra.mxu0 0
        %1343 = vmatprep.subr.bf16.mxu0 0
        %1344 = vmatpush2.bf16.msra.mxu0 0
        %1345 = vmatprep.subr.bf16.mxu0 0
        %1346 = vmatpush2.bf16.msra.mxu0 0
        %1347 = vmatprep.subr.bf16.mxu0 0
        %1348 = vmatpush2.bf16.msra.mxu0 0
        %1349 = vmatprep.subr.bf16.mxu0 0
        %1350 = vmatpush2.bf16.msra.mxu0 0
        %1351 = vmatprep.subr.bf16.mxu0 0
        %1352 = vmatpush2.bf16.msra.mxu0 0
        %1353 = vmatprep.subr.bf16.mxu0 0
        %1354 = vmatpush2.bf16.msra.mxu0 0
        %1355 = vmatprep.subr.bf16.mxu0 0
        %1356 = vmatpush2.bf16.msra.mxu0 0
        %1357 = vmatprep.mubr.bf16.mxu0 0
        %1358 = vmatmul.mubr.bf16.gmra.mxu0 %v1323
        %v1359 = vpop.f32.mrf.mxu0
        %v1360 = vadd.f32 0.0, %v1359
        %v1361 = vpop.f32.mrf.mxu0
        %v1362 = vpop.f32.mrf.mxu0
        %v1363 = vpop.f32.mrf.mxu0
        %1364 = vdwg.mxu0
        %v1365 = vadd.f32 %v1283, %v1360
        %s1366 = sadd.s32 %s1097, 1
        %s1367 = smul.u32 %s1366, 2
        %s1368 = smul.addr %s1367, 4
        %s1369 = scalar_lea.vmem [#allocation2], %s1368
        %v1370 = vld [vmem:[%s1369] sm:$0xf]
        %s1371 = scalar_lea.vmem %s1, 384
        %v1372 = vld [vmem:[%s1371] sm:$0xf]
        %v1373 = vld [vmem:[%s1371 + $0x4] sm:$0xf]
        %v1374 = vld [vmem:[%s1371 + $0x8] sm:$0xf]
        %v1375 = vld [vmem:[%s1371 + $0xc] sm:$0xf]
        %v1376 = vld [vmem:[%s1371 + $0x10] sm:$0xf]
        %v1377 = vld [vmem:[%s1371 + $0x14] sm:$0xf]
        %v1378 = vld [vmem:[%s1371 + $0x18] sm:$0xf]
        %v1379 = vld [vmem:[%s1371 + $0x1c] sm:$0xf]
        %v1388 = vunpack.c.l.b16 %v1372
        %v1389 = vunpack.c.l.b16 %v1373
        %v1390 = vunpack.c.l.b16 %v1374
        %v1391 = vunpack.c.l.b16 %v1375
        %v1392 = vunpack.c.l.b16 %v1376
        %v1393 = vunpack.c.l.b16 %v1377
        %v1394 = vunpack.c.l.b16 %v1378
        %v1395 = vunpack.c.l.b16 %v1379
        %v1396 = vpack.c.b16 %v1389, %v1388
        %v1397 = vpack.c.b16 %v1391, %v1390
        %v1398 = vpack.c.b16 %v1393, %v1392
        %v1399 = vpack.c.b16 %v1395, %v1394
        %v1405 = vsel %vm1148, %v1370, 0
        %1407 = vmatprep.subr.bf16.mxu0 0
        %1408 = vmatpush1.bf16.msra.mxu0 0
        %1409 = vmatprep.subr.bf16.mxu0 0
        %1410 = vmatpush1.bf16.msra.mxu0 0
        %1411 = vmatprep.subr.bf16.mxu0 0
        %1412 = vmatpush1.bf16.msra.mxu0 0
        %1413 = vmatprep.subr.bf16.mxu0 0
        %1414 = vmatpush1.bf16.msra.mxu0 0
        %1415 = vmatprep.subr.bf16.mxu0 0
        %1416 = vmatpush1.bf16.msra.mxu0 %v1399
        %1417 = vmatprep.subr.bf16.mxu0 0
        %1418 = vmatpush1.bf16.msra.mxu0 %v1398
        %1419 = vmatprep.subr.bf16.mxu0 0
        %1420 = vmatpush1.bf16.msra.mxu0 %v1397
        %1421 = vmatprep.subr.bf16.mxu0 0
        %1422 = vmatpush1.bf16.msra.mxu0 %v1396
        %1423 = vmatprep.subr.bf16.mxu0 0
        %1424 = vmatpush2.bf16.msra.mxu0 0
        %1425 = vmatprep.subr.bf16.mxu0 0
        %1426 = vmatpush2.bf16.msra.mxu0 0
        %1427 = vmatprep.subr.bf16.mxu0 0
        %1428 = vmatpush2.bf16.msra.mxu0 0
        %1429 = vmatprep.subr.bf16.mxu0 0
        %1430 = vmatpush2.bf16.msra.mxu0 0
        %1431 = vmatprep.subr.bf16.mxu0 0
        %1432 = vmatpush2.bf16.msra.mxu0 0
        %1433 = vmatprep.subr.bf16.mxu0 0
        %1434 = vmatpush2.bf16.msra.mxu0 0
        %1435 = vmatprep.subr.bf16.mxu0 0
        %1436 = vmatpush2.bf16.msra.mxu0 0
        %1437 = vmatprep.subr.bf16.mxu0 0
        %1438 = vmatpush2.bf16.msra.mxu0 0
        %1439 = vmatprep.mubr.bf16.mxu0 0
        %1440 = vmatmul.mubr.bf16.gmra.mxu0 %v1405
        %v1441 = vpop.f32.mrf.mxu0
        %v1442 = vadd.f32 0.0, %v1441
        %v1443 = vpop.f32.mrf.mxu0
        %v1444 = vpop.f32.mrf.mxu0
        %v1445 = vpop.f32.mrf.mxu0
        %1446 = vdwg.mxu0
        %v1447 = vadd.f32 %v1365, %v1442
        %v1448 = vld [vmem:[%s1369] sm:$0xf]
        %v1449 = vld [vmem:[%s1369 + $0x4] sm:$0x1]
        %s1450 = scalar_lea.vmem %s1, 416
        %v1451 = vld [vmem:[%s1450] sm:$0xf]
        %v1452 = vld [vmem:[%s1450 + $0x4] sm:$0xf]
        %v1453 = vld [vmem:[%s1450 + $0x8] sm:$0xf]
        %v1454 = vld [vmem:[%s1450 + $0xc] sm:$0xf]
        %v1455 = vld [vmem:[%s1450 + $0x10] sm:$0xf]
        %v1456 = vld [vmem:[%s1450 + $0x14] sm:$0xf]
        %v1457 = vld [vmem:[%s1450 + $0x18] sm:$0xf]
        %v1458 = vld [vmem:[%s1450 + $0x1c] sm:$0xf]
        %v1461 = vunpack.c.l.b16 %v1448
        %v1462 = vunpack.c.l.b16 %v1449
        %v1463 = vpack.c.b16 %v1462, %v1461
        %v1465 = vshrl.u32 %v1463, 16
        %v1467 = vshll.u32 %v1463, 16
        %v1469 = vrot.slane %v1467, 1
        %v1470 = vor.u32 %v1465, %v1469
        %v1479 = vunpack.c.l.b16 %v1451
        %v1480 = vunpack.c.l.b16 %v1452
        %v1481 = vunpack.c.l.b16 %v1453
        %v1482 = vunpack.c.l.b16 %v1454
        %v1483 = vunpack.c.l.b16 %v1455
        %v1484 = vunpack.c.l.b16 %v1456
        %v1485 = vunpack.c.l.b16 %v1457
        %v1486 = vunpack.c.l.b16 %v1458
        %v1487 = vpack.c.b16 %v1480, %v1479
        %v1488 = vpack.c.b16 %v1482, %v1481
        %v1489 = vpack.c.b16 %v1484, %v1483
        %v1490 = vpack.c.b16 %v1486, %v1485
        %v1496 = vsel %vm1148, %v1470, 0
        %1498 = vmatprep.subr.bf16.mxu0 0
        %1499 = vmatpush1.bf16.msra.mxu0 0
        %1500 = vmatprep.subr.bf16.mxu0 0
        %1501 = vmatpush1.bf16.msra.mxu0 0
        %1502 = vmatprep.subr.bf16.mxu0 0
        %1503 = vmatpush1.bf16.msra.mxu0 0
        %1504 = vmatprep.subr.bf16.mxu0 0
        %1505 = vmatpush1.bf16.msra.mxu0 0
        %1506 = vmatprep.subr.bf16.mxu0 0
        %1507 = vmatpush1.bf16.msra.mxu0 %v1490
        %1508 = vmatprep.subr.bf16.mxu0 0
        %1509 = vmatpush1.bf16.msra.mxu0 %v1489
        %1510 = vmatprep.subr.bf16.mxu0 0
        %1511 = vmatpush1.bf16.msra.mxu0 %v1488
        %1512 = vmatprep.subr.bf16.mxu0 0
        %1513 = vmatpush1.bf16.msra.mxu0 %v1487
        %1514 = vmatprep.subr.bf16.mxu0 0
        %1515 = vmatpush2.bf16.msra.mxu0 0
        %1516 = vmatprep.subr.bf16.mxu0 0
        %1517 = vmatpush2.bf16.msra.mxu0 0
        %1518 = vmatprep.subr.bf16.mxu0 0
        %1519 = vmatpush2.bf16.msra.mxu0 0
        %1520 = vmatprep.subr.bf16.mxu0 0
        %1521 = vmatpush2.bf16.msra.mxu0 0
        %1522 = vmatprep.subr.bf16.mxu0 0
        %1523 = vmatpush2.bf16.msra.mxu0 0
        %1524 = vmatprep.subr.bf16.mxu0 0
        %1525 = vmatpush2.bf16.msra.mxu0 0
        %1526 = vmatprep.subr.bf16.mxu0 0
        %1527 = vmatpush2.bf16.msra.mxu0 0
        %1528 = vmatprep.subr.bf16.mxu0 0
        %1529 = vmatpush2.bf16.msra.mxu0 0
        %1530 = vmatprep.mubr.bf16.mxu0 0
        %1531 = vmatmul.mubr.bf16.gmra.mxu0 %v1496
        %v1532 = vpop.f32.mrf.mxu0
        %v1533 = vadd.f32 0.0, %v1532
        %v1534 = vpop.f32.mrf.mxu0
        %v1535 = vpop.f32.mrf.mxu0
        %v1536 = vpop.f32.mrf.mxu0
        %1537 = vdwg.mxu0
        %v1538 = vadd.f32 %v1447, %v1533
        %v1539 = vld [vmem:[%s1369] sm:$0xe]
        %s1540 = scalar_lea.vmem %s1, 448
        %v1541 = vld [vmem:[%s1540] sm:$0xf]
        %v1542 = vld [vmem:[%s1540 + $0x4] sm:$0xf]
        %v1543 = vld [vmem:[%s1540 + $0x8] sm:$0xf]
        %v1544 = vld [vmem:[%s1540 + $0xc] sm:$0xf]
        %v1545 = vld [vmem:[%s1540 + $0x10] sm:$0xf]
        %v1546 = vld [vmem:[%s1540 + $0x14] sm:$0xf]
        %v1547 = vld [vmem:[%s1540 + $0x18] sm:$0xf]
        %v1548 = vld [vmem:[%s1540 + $0x1c] sm:$0xf]
        %v1550 = vunpack.c.l.b16 %v1539
        %v1551 = vpack.c.b16 %v1462, %v1550
        %v1552 = vrot.slane %v1551, 1
        %v1561 = vunpack.c.l.b16 %v1541
        %v1562 = vunpack.c.l.b16 %v1542
        %v1563 = vunpack.c.l.b16 %v1543
        %v1564 = vunpack.c.l.b16 %v1544
        %v1565 = vunpack.c.l.b16 %v1545
        %v1566 = vunpack.c.l.b16 %v1546
        %v1567 = vunpack.c.l.b16 %v1547
        %v1568 = vunpack.c.l.b16 %v1548
        %v1569 = vpack.c.b16 %v1562, %v1561
        %v1570 = vpack.c.b16 %v1564, %v1563
        %v1571 = vpack.c.b16 %v1566, %v1565
        %v1572 = vpack.c.b16 %v1568, %v1567
        %v1578 = vsel %vm1148, %v1552, 0
        %1580 = vmatprep.subr.bf16.mxu0 0
        %1581 = vmatpush1.bf16.msra.mxu0 0
        %1582 = vmatprep.subr.bf16.mxu0 0
        %1583 = vmatpush1.bf16.msra.mxu0 0
        %1584 = vmatprep.subr.bf16.mxu0 0
        %1585 = vmatpush1.bf16.msra.mxu0 0
        %1586 = vmatprep.subr.bf16.mxu0 0
        %1587 = vmatpush1.bf16.msra.mxu0 0
        %1588 = vmatprep.subr.bf16.mxu0 0
        %1589 = vmatpush1.bf16.msra.mxu0 %v1572
        %1590 = vmatprep.subr.bf16.mxu0 0
        %1591 = vmatpush1.bf16.msra.mxu0 %v1571
        %1592 = vmatprep.subr.bf16.mxu0 0
        %1593 = vmatpush1.bf16.msra.mxu0 %v1570
        %1594 = vmatprep.subr.bf16.mxu0 0
        %1595 = vmatpush1.bf16.msra.mxu0 %v1569
        %1596 = vmatprep.subr.bf16.mxu0 0
        %1597 = vmatpush2.bf16.msra.mxu0 0
        %1598 = vmatprep.subr.bf16.mxu0 0
        %1599 = vmatpush2.bf16.msra.mxu0 0
        %1600 = vmatprep.subr.bf16.mxu0 0
        %1601 = vmatpush2.bf16.msra.mxu0 0
        %1602 = vmatprep.subr.bf16.mxu0 0
        %1603 = vmatpush2.bf16.msra.mxu0 0
        %1604 = vmatprep.subr.bf16.mxu0 0
        %1605 = vmatpush2.bf16.msra.mxu0 0
        %1606 = vmatprep.subr.bf16.mxu0 0
        %1607 = vmatpush2.bf16.msra.mxu0 0
        %1608 = vmatprep.subr.bf16.mxu0 0
        %1609 = vmatpush2.bf16.msra.mxu0 0
        %1610 = vmatprep.subr.bf16.mxu0 0
        %1611 = vmatpush2.bf16.msra.mxu0 0
        %1612 = vmatprep.mubr.bf16.mxu0 0
        %1613 = vmatmul.mubr.bf16.gmra.mxu0 %v1578
        %v1614 = vpop.f32.mrf.mxu0
        %v1615 = vadd.f32 0.0, %v1614
        %v1616 = vpop.f32.mrf.mxu0
        %v1617 = vpop.f32.mrf.mxu0
        %v1618 = vpop.f32.mrf.mxu0
        %1619 = vdwg.mxu0
        %v1620 = vadd.f32 %v1538, %v1615
        %s1621 = sadd.s32 %s1097, 2
        %s1622 = smul.u32 %s1621, 2
        %s1623 = smul.addr %s1622, 4
        %s1624 = scalar_lea.vmem [#allocation2], %s1623
        %v1625 = vld [vmem:[%s1624] sm:$0xf]
        %s1626 = scalar_lea.vmem %s1, 480
        %v1627 = vld [vmem:[%s1626] sm:$0xf]
        %v1628 = vld [vmem:[%s1626 + $0x4] sm:$0xf]
        %v1629 = vld [vmem:[%s1626 + $0x8] sm:$0xf]
        %v1630 = vld [vmem:[%s1626 + $0xc] sm:$0xf]
        %v1631 = vld [vmem:[%s1626 + $0x10] sm:$0xf]
        %v1632 = vld [vmem:[%s1626 + $0x14] sm:$0xf]
        %v1633 = vld [vmem:[%s1626 + $0x18] sm:$0xf]
        %v1634 = vld [vmem:[%s1626 + $0x1c] sm:$0xf]
        %v1643 = vunpack.c.l.b16 %v1627
        %v1644 = vunpack.c.l.b16 %v1628
        %v1645 = vunpack.c.l.b16 %v1629
        %v1646 = vunpack.c.l.b16 %v1630
        %v1647 = vunpack.c.l.b16 %v1631
        %v1648 = vunpack.c.l.b16 %v1632
        %v1649 = vunpack.c.l.b16 %v1633
        %v1650 = vunpack.c.l.b16 %v1634
        %v1651 = vpack.c.b16 %v1644, %v1643
        %v1652 = vpack.c.b16 %v1646, %v1645
        %v1653 = vpack.c.b16 %v1648, %v1647
        %v1654 = vpack.c.b16 %v1650, %v1649
        %v1660 = vsel %vm1148, %v1625, 0
        %1662 = vmatprep.subr.bf16.mxu0 0
        %1663 = vmatpush1.bf16.msra.mxu0 0
        %1664 = vmatprep.subr.bf16.mxu0 0
        %1665 = vmatpush1.bf16.msra.mxu0 0
        %1666 = vmatprep.subr.bf16.mxu0 0
        %1667 = vmatpush1.bf16.msra.mxu0 0
        %1668 = vmatprep.subr.bf16.mxu0 0
        %1669 = vmatpush1.bf16.msra.mxu0 0
        %1670 = vmatprep.subr.bf16.mxu0 0
        %1671 = vmatpush1.bf16.msra.mxu0 %v1654
        %1672 = vmatprep.subr.bf16.mxu0 0
        %1673 = vmatpush1.bf16.msra.mxu0 %v1653
        %1674 = vmatprep.subr.bf16.mxu0 0
        %1675 = vmatpush1.bf16.msra.mxu0 %v1652
        %1676 = vmatprep.subr.bf16.mxu0 0
        %1677 = vmatpush1.bf16.msra.mxu0 %v1651
        %1678 = vmatprep.subr.bf16.mxu0 0
        %1679 = vmatpush2.bf16.msra.mxu0 0
        %1680 = vmatprep.subr.bf16.mxu0 0
        %1681 = vmatpush2.bf16.msra.mxu0 0
        %1682 = vmatprep.subr.bf16.mxu0 0
        %1683 = vmatpush2.bf16.msra.mxu0 0
        %1684 = vmatprep.subr.bf16.mxu0 0
        %1685 = vmatpush2.bf16.msra.mxu0 0
        %1686 = vmatprep.subr.bf16.mxu0 0
        %1687 = vmatpush2.bf16.msra.mxu0 0
        %1688 = vmatprep.subr.bf16.mxu0 0
        %1689 = vmatpush2.bf16.msra.mxu0 0
        %1690 = vmatprep.subr.bf16.mxu0 0
        %1691 = vmatpush2.bf16.msra.mxu0 0
        %1692 = vmatprep.subr.bf16.mxu0 0
        %1693 = vmatpush2.bf16.msra.mxu0 0
        %1694 = vmatprep.mubr.bf16.mxu0 0
        %1695 = vmatmul.mubr.bf16.gmra.mxu0 %v1660
        %v1696 = vpop.f32.mrf.mxu0
        %v1697 = vadd.f32 0.0, %v1696
        %v1698 = vpop.f32.mrf.mxu0
        %v1699 = vpop.f32.mrf.mxu0
        %v1700 = vpop.f32.mrf.mxu0
        %1701 = vdwg.mxu0
        %v1702 = vadd.f32 %v1620, %v1697
        %v1703 = vld [vmem:[%s1624] sm:$0xf]
        %v1704 = vld [vmem:[%s1624 + $0x4] sm:$0x1]
        %s1705 = scalar_lea.vmem %s1, 512
        %v1706 = vld [vmem:[%s1705] sm:$0xf]
        %v1707 = vld [vmem:[%s1705 + $0x4] sm:$0xf]
        %v1708 = vld [vmem:[%s1705 + $0x8] sm:$0xf]
        %v1709 = vld [vmem:[%s1705 + $0xc] sm:$0xf]
        %v1710 = vld [vmem:[%s1705 + $0x10] sm:$0xf]
        %v1711 = vld [vmem:[%s1705 + $0x14] sm:$0xf]
        %v1712 = vld [vmem:[%s1705 + $0x18] sm:$0xf]
        %v1713 = vld [vmem:[%s1705 + $0x1c] sm:$0xf]
        %v1716 = vunpack.c.l.b16 %v1703
        %v1717 = vunpack.c.l.b16 %v1704
        %v1718 = vpack.c.b16 %v1717, %v1716
        %v1720 = vshrl.u32 %v1718, 16
        %v1722 = vshll.u32 %v1718, 16
        %v1724 = vrot.slane %v1722, 1
        %v1725 = vor.u32 %v1720, %v1724
        %v1734 = vunpack.c.l.b16 %v1706
        %v1735 = vunpack.c.l.b16 %v1707
        %v1736 = vunpack.c.l.b16 %v1708
        %v1737 = vunpack.c.l.b16 %v1709
        %v1738 = vunpack.c.l.b16 %v1710
        %v1739 = vunpack.c.l.b16 %v1711
        %v1740 = vunpack.c.l.b16 %v1712
        %v1741 = vunpack.c.l.b16 %v1713
        %v1742 = vpack.c.b16 %v1735, %v1734
        %v1743 = vpack.c.b16 %v1737, %v1736
        %v1744 = vpack.c.b16 %v1739, %v1738
        %v1745 = vpack.c.b16 %v1741, %v1740
        %v1751 = vsel %vm1148, %v1725, 0
        %1753 = vmatprep.subr.bf16.mxu0 0
        %1754 = vmatpush1.bf16.msra.mxu0 0
        %1755 = vmatprep.subr.bf16.mxu0 0
        %1756 = vmatpush1.bf16.msra.mxu0 0
        %1757 = vmatprep.subr.bf16.mxu0 0
        %1758 = vmatpush1.bf16.msra.mxu0 0
        %1759 = vmatprep.subr.bf16.mxu0 0
        %1760 = vmatpush1.bf16.msra.mxu0 0
        %1761 = vmatprep.subr.bf16.mxu0 0
        %1762 = vmatpush1.bf16.msra.mxu0 %v1745
        %1763 = vmatprep.subr.bf16.mxu0 0
        %1764 = vmatpush1.bf16.msra.mxu0 %v1744
        %1765 = vmatprep.subr.bf16.mxu0 0
        %1766 = vmatpush1.bf16.msra.mxu0 %v1743
        %1767 = vmatprep.subr.bf16.mxu0 0
        %1768 = vmatpush1.bf16.msra.mxu0 %v1742
        %1769 = vmatprep.subr.bf16.mxu0 0
        %1770 = vmatpush2.bf16.msra.mxu0 0
        %1771 = vmatprep.subr.bf16.mxu0 0
        %1772 = vmatpush2.bf16.msra.mxu0 0
        %1773 = vmatprep.subr.bf16.mxu0 0
        %1774 = vmatpush2.bf16.msra.mxu0 0
        %1775 = vmatprep.subr.bf16.mxu0 0
        %1776 = vmatpush2.bf16.msra.mxu0 0
        %1777 = vmatprep.subr.bf16.mxu0 0
        %1778 = vmatpush2.bf16.msra.mxu0 0
        %1779 = vmatprep.subr.bf16.mxu0 0
        %1780 = vmatpush2.bf16.msra.mxu0 0
        %1781 = vmatprep.subr.bf16.mxu0 0
        %1782 = vmatpush2.bf16.msra.mxu0 0
        %1783 = vmatprep.subr.bf16.mxu0 0
        %1784 = vmatpush2.bf16.msra.mxu0 0
        %1785 = vmatprep.mubr.bf16.mxu0 0
        %1786 = vmatmul.mubr.bf16.gmra.mxu0 %v1751
        %v1787 = vpop.f32.mrf.mxu0
        %v1788 = vadd.f32 0.0, %v1787
        %v1789 = vpop.f32.mrf.mxu0
        %v1790 = vpop.f32.mrf.mxu0
        %v1791 = vpop.f32.mrf.mxu0
        %1792 = vdwg.mxu0
        %v1793 = vadd.f32 %v1702, %v1788
        %v1794 = vld [vmem:[%s1624] sm:$0xe]
        %s1795 = scalar_lea.vmem %s1, 544
        %v1796 = vld [vmem:[%s1795] sm:$0xf]
        %v1797 = vld [vmem:[%s1795 + $0x4] sm:$0xf]
        %v1798 = vld [vmem:[%s1795 + $0x8] sm:$0xf]
        %v1799 = vld [vmem:[%s1795 + $0xc] sm:$0xf]
        %v1800 = vld [vmem:[%s1795 + $0x10] sm:$0xf]
        %v1801 = vld [vmem:[%s1795 + $0x14] sm:$0xf]
        %v1802 = vld [vmem:[%s1795 + $0x18] sm:$0xf]
        %v1803 = vld [vmem:[%s1795 + $0x1c] sm:$0xf]
        %v1805 = vunpack.c.l.b16 %v1794
        %v1806 = vpack.c.b16 %v1717, %v1805
        %v1807 = vrot.slane %v1806, 1
        %v1816 = vunpack.c.l.b16 %v1796
        %v1817 = vunpack.c.l.b16 %v1797
        %v1818 = vunpack.c.l.b16 %v1798
        %v1819 = vunpack.c.l.b16 %v1799
        %v1820 = vunpack.c.l.b16 %v1800
        %v1821 = vunpack.c.l.b16 %v1801
        %v1822 = vunpack.c.l.b16 %v1802
        %v1823 = vunpack.c.l.b16 %v1803
        %v1824 = vpack.c.b16 %v1817, %v1816
        %v1825 = vpack.c.b16 %v1819, %v1818
        %v1826 = vpack.c.b16 %v1821, %v1820
        %v1827 = vpack.c.b16 %v1823, %v1822
        %v1833 = vsel %vm1148, %v1807, 0
        %1835 = vmatprep.subr.bf16.mxu0 0
        %1836 = vmatpush1.bf16.msra.mxu0 0
        %1837 = vmatprep.subr.bf16.mxu0 0
        %1838 = vmatpush1.bf16.msra.mxu0 0
        %1839 = vmatprep.subr.bf16.mxu0 0
        %1840 = vmatpush1.bf16.msra.mxu0 0
        %1841 = vmatprep.subr.bf16.mxu0 0
        %1842 = vmatpush1.bf16.msra.mxu0 0
        %1843 = vmatprep.subr.bf16.mxu0 0
        %1844 = vmatpush1.bf16.msra.mxu0 %v1827
        %1845 = vmatprep.subr.bf16.mxu0 0
        %1846 = vmatpush1.bf16.msra.mxu0 %v1826
        %1847 = vmatprep.subr.bf16.mxu0 0
        %1848 = vmatpush1.bf16.msra.mxu0 %v1825
        %1849 = vmatprep.subr.bf16.mxu0 0
        %1850 = vmatpush1.bf16.msra.mxu0 %v1824
        %1851 = vmatprep.subr.bf16.mxu0 0
        %1852 = vmatpush2.bf16.msra.mxu0 0
        %1853 = vmatprep.subr.bf16.mxu0 0
        %1854 = vmatpush2.bf16.msra.mxu0 0
        %1855 = vmatprep.subr.bf16.mxu0 0
        %1856 = vmatpush2.bf16.msra.mxu0 0
        %1857 = vmatprep.subr.bf16.mxu0 0
        %1858 = vmatpush2.bf16.msra.mxu0 0
        %1859 = vmatprep.subr.bf16.mxu0 0
        %1860 = vmatpush2.bf16.msra.mxu0 0
        %1861 = vmatprep.subr.bf16.mxu0 0
        %1862 = vmatpush2.bf16.msra.mxu0 0
        %1863 = vmatprep.subr.bf16.mxu0 0
        %1864 = vmatpush2.bf16.msra.mxu0 0
        %1865 = vmatprep.subr.bf16.mxu0 0
        %1866 = vmatpush2.bf16.msra.mxu0 0
        %1867 = vmatprep.mubr.bf16.mxu0 0
        %1868 = vmatmul.mubr.bf16.gmra.mxu0 %v1833
        %v1869 = vpop.f32.mrf.mxu0
        %v1870 = vadd.f32 0.0, %v1869
        %v1871 = vpop.f32.mrf.mxu0
        %v1872 = vpop.f32.mrf.mxu0
        %v1873 = vpop.f32.mrf.mxu0
        %1874 = vdwg.mxu0
        %v1875 = vadd.f32 %v1793, %v1870
        %v1876 = vmax.f32 %v1875, 0.0
        %v1877 = vpack.c.bf16 %v1876, %v1876
        %s1878 = smul.addr %s1097, 4
        %s1879 = scalar_lea.vmem %s259, %s1878
        %1880 = vst.msk [vmem:[%s1879] sm:$0xf] %vm266, %v1877
        %v1881 = vld [vmem:[%s3] sm:$0xff]
        %v1882 = vld [vmem:[%s3 + $0x8] sm:$0xff]
        %v1883 = vld [vmem:[%s3 + $0x10] sm:$0xff]
        %v1884 = vld [vmem:[%s3 + $0x18] sm:$0xff]
        %v1885 = vld [vmem:[%s3 + $0x20] sm:$0xff]
        %v1886 = vld [vmem:[%s3 + $0x28] sm:$0xff]
        %v1887 = vld [vmem:[%s3 + $0x30] sm:$0xff]
        %v1888 = vld [vmem:[%s3 + $0x38] sm:$0xff]
        %v1890 = vlaneseq
        %v1891 = vshrl.u32 %v1890, 7
        %v1892 = vsub.s32 0, %v1891
        %v1893 = vrot.slane %v288, %v1892
        %v1894 = vlaneseq
        %v1895 = vshrl.u32 %v1894, 7
        %v1896 = vsub.s32 1, %v1895
        %v1897 = vrot.slane %v288, %v1896
        %v1908 = vunpack.c.l.b16 %v1881
        %v1909 = vunpack.c.h.b16 %v1881
        %v1910 = vunpack.c.l.b16 %v1882
        %v1911 = vunpack.c.h.b16 %v1882
        %v1912 = vunpack.c.l.b16 %v1883
        %v1913 = vunpack.c.h.b16 %v1883
        %v1914 = vunpack.c.l.b16 %v1884
        %v1915 = vunpack.c.h.b16 %v1884
        %v1916 = vunpack.c.l.b16 %v1885
        %v1917 = vunpack.c.h.b16 %v1885
        %v1918 = vunpack.c.l.b16 %v1886
        %v1919 = vunpack.c.h.b16 %v1886
        %v1920 = vunpack.c.l.b16 %v1887
        %v1921 = vunpack.c.h.b16 %v1887
        %v1922 = vunpack.c.l.b16 %v1888
        %v1923 = vunpack.c.h.b16 %v1888
        %v1924 = vpack.c.b16 %v1910, %v1908
        %v1925 = vpack.c.b16 %v1911, %v1909
        %v1926 = vpack.c.b16 %v1914, %v1912
        %v1927 = vpack.c.b16 %v1915, %v1913
        %v1928 = vpack.c.b16 %v1918, %v1916
        %v1929 = vpack.c.b16 %v1919, %v1917
        %v1930 = vpack.c.b16 %v1922, %v1920
        %v1931 = vpack.c.b16 %v1923, %v1921
        %v1941 = vsel %vm1148, %v1877, 0
        %1943 = vmatprep.subr.bf16.mxu0 0
        %1944 = vmatpush1.bf16.msra.mxu0 0
        %1945 = vmatprep.subr.bf16.mxu0 0
        %1946 = vmatpush1.bf16.msra.mxu0 0
        %1947 = vmatprep.subr.bf16.mxu0 0
        %1948 = vmatpush1.bf16.msra.mxu0 0
        %1949 = vmatprep.subr.bf16.mxu0 0
        %1950 = vmatpush1.bf16.msra.mxu0 0
        %1951 = vmatprep.subr.bf16.mxu0 %v1931
        %1952 = vmatpush1.bf16.msra.mxu0 %v1930
        %1953 = vmatprep.subr.bf16.mxu0 %v1929
        %1954 = vmatpush1.bf16.msra.mxu0 %v1928
        %1955 = vmatprep.subr.bf16.mxu0 %v1927
        %1956 = vmatpush1.bf16.msra.mxu0 %v1926
        %1957 = vmatprep.subr.bf16.mxu0 %v1925
        %1958 = vmatpush1.bf16.msra.mxu0 %v1924
        %1959 = vmatprep.subr.bf16.mxu0 0
        %1960 = vmatpush2.bf16.msra.mxu0 0
        %1961 = vmatprep.subr.bf16.mxu0 0
        %1962 = vmatpush2.bf16.msra.mxu0 0
        %1963 = vmatprep.subr.bf16.mxu0 0
        %1964 = vmatpush2.bf16.msra.mxu0 0
        %1965 = vmatprep.subr.bf16.mxu0 0
        %1966 = vmatpush2.bf16.msra.mxu0 0
        %1967 = vmatprep.subr.bf16.mxu0 0
        %1968 = vmatpush2.bf16.msra.mxu0 0
        %1969 = vmatprep.subr.bf16.mxu0 0
        %1970 = vmatpush2.bf16.msra.mxu0 0
        %1971 = vmatprep.subr.bf16.mxu0 0
        %1972 = vmatpush2.bf16.msra.mxu0 0
        %1973 = vmatprep.subr.bf16.mxu0 0
        %1974 = vmatpush2.bf16.msra.mxu0 0
        %1975 = vmatprep.mubr.bf16.mxu0 0
        %1976 = vmatmul.mubr.bf16.gmra.mxu0 %v1941
        %v1977 = vpop.f32.mrf.mxu0
        %v1978 = vadd.f32 %v1893, %v1977
        %v1979 = vpop.f32.mrf.mxu0
        %v1980 = vadd.f32 %v1897, %v1979
        %v1981 = vpop.f32.mrf.mxu0
        %v1982 = vpop.f32.mrf.mxu0
        %1983 = vdwg.mxu0
        %v1984 = vmax.f32 %v1978, 0.0
        %v1985 = vmax.f32 %v1980, 0.0
        %v1986 = vpack.c.bf16 %v1984, %v1984
        %v1987 = vpack.c.bf16 %v1985, %v1985
        %v1990 = vunpack.c.l.b16 %v1986
        %v1991 = vunpack.c.l.b16 %v1987
        %v1992 = vpack.c.b16 %v1991, %v1990
        %s1994 = smul.addr %s1111, 4
        %s1995 = scalar_lea.vmem %s264, %s1994
        %1996 = vst [vmem:[%s1995] sm:$0xff] %v1992
      $region52: #{rpnv2_forward.8} parent=39 // loop_footer
        %s1101 = sadd.s32 1, %s1097
      $region53: #{rpnv2_forward.8} parent=39 // loop_footer_branch
        %1096 = sbr.rel target = $region49
      $region54: #{rpnv2_forward.8} parent=39 // loop_exit
        _
      %p1997 = scmp.lt.s32.totalorder %s18, 1
      %s1998 = scalar_select %p1997, %s18, 1
      %s1999 = smul.addr %s1998, 8
      %s2000 = smul.addr %s1999, 4
      %s2001 = scalar_lea.vmem %s5, %s2000
      %p2002 = scmp.lt.s32.totalorder %s18, 1
      %s2003 = scalar_select %p2002, %s18, 1
      %s2004 = smul.addr %s2003, 16
      %s2005 = smul.addr %s2004, 4
      %s2006 = scalar_lea.vmem %s6, %s2005
      // Predicated region
      $region55: #{rpnv2_forward.8} parent=39 // pred_check
        %p2007 = pneg %p146
      $region56: #{rpnv2_forward.8} parent=39 // pred_check_branch
        %2009 = sbr.rel (%p2007) target = $region58
      $region57: #{rpnv2_forward.8} parent=39 // pred_region
        _
      $region58: #{rpnv2_forward.8} parent=39 // pred_fallthru
        _
      // Predicated region
      $region59: #{rpnv2_forward.8} parent=39 // pred_check
        %p2010 = pneg %p172
      $region60: #{rpnv2_forward.8} parent=39 // pred_check_branch
        %2012 = sbr.rel (%p2010) target = $region62
      $region61: #{rpnv2_forward.8} parent=39 // pred_region
        _
      $region62: #{rpnv2_forward.8} parent=39 // pred_fallthru
        _
    $region40: #{rpnv2_forward.8} parent=5 // pred_fallthru
      _
    %p2013 = scmp.le.s32.totalorder 2, %s13
    // Predicated region
    $region63: #{rpnv2_forward.8} parent=5 // pred_check
      %p2014 = pneg %p2013
    $region64: #{rpnv2_forward.8} parent=5 // pred_check_branch
      %2016 = sbr.rel (%p2014) target = $region66
    $region65: #{rpnv2_forward.8} parent=5 // pred_region
      %s2017 = ssub.s32 %s13, 2
      // Predicated region
      $region67: #{rpnv2_forward.8} parent=65 // pred_check
        %p2018 = pneg %p152
      $region68: #{rpnv2_forward.8} parent=65 // pred_check_branch
        %2020 = sbr.rel (%p2018) target = $region70
      $region69: #{rpnv2_forward.8} parent=65 // pred_region
        %p2021 = scmp.lt.s32.totalorder %s19, 1
        %s2022 = scalar_select %p2021, %s19, 1
        %s2023 = smul.addr %s2022, 8
        %s2024 = smul.addr %s2023, 4
        %s2025 = scalar_lea.vmem %s5, %s2024
      $region70: #{rpnv2_forward.8} parent=65 // pred_fallthru
        _
      // Predicated region
      $region71: #{rpnv2_forward.8} parent=65 // pred_check
        %p2026 = pneg %p178
      $region72: #{rpnv2_forward.8} parent=65 // pred_check_branch
        %2028 = sbr.rel (%p2026) target = $region74
      $region73: #{rpnv2_forward.8} parent=65 // pred_region
        %p2029 = scmp.lt.s32.totalorder %s19, 1
        %s2030 = scalar_select %p2029, %s19, 1
        %s2031 = smul.addr %s2030, 16
        %s2032 = smul.addr %s2031, 4
        %s2033 = scalar_lea.vmem %s6, %s2032
      $region74: #{rpnv2_forward.8} parent=65 // pred_fallthru
        _
    $region66: #{rpnv2_forward.8} parent=5 // pred_fallthru
      _
  $region6: #{rpnv2_forward.8} parent=0 // loop_footer
    %s17 = sadd.s32 1, %s13
  $region7: #{rpnv2_forward.8} parent=0 // loop_footer_branch
    %12 = sbr.rel target = $region3
  $region8: #{rpnv2_forward.8} parent=0 // loop_exit
    _

// kernel: tile.20
$region0: #{tile.20}
  #allocation0 [shape = 's32[1]{0}', space=sflag, size = 0x4, scoped, tag = 'scoped memory for tile.20']
  %s0 = inlined_call_operand.vmem [shape: f32[64], index: 0, kind: input, shape index: {}]
  %s1 = inlined_call_operand.vmem [shape: f32[16,64], index: 1, kind: output, shape index: {}]
  // Predicated region
  $region2: #{tile.20} parent=0 // pred_check
    _
  $region3: #{tile.20} parent=0 // pred_check_branch
    %3 = sbr.rel (0) target = $region5
  $region4: #{tile.20} parent=0 // pred_region
    _
  $region5: #{tile.20} parent=0 // pred_fallthru
    _
  %v4 = vld [vmem:[%s0] ss:$0 sm:$0xff]
  %5 = vst [vmem:[%s1] sm:$0xff] %v4
  %s6 = scalar_lea.vmem %s1, 8
  %7 = vst [vmem:[%s6] sm:$0xff] %v4

// kernel: rpnv2_forward.9
$region0: #{rpnv2_forward.9}
  #allocation0 [shape = 'u32[]', space=smem, size = 0x4, offset = 0x4, fixed_abs, tag = 'smem constant byte address 0x4 - core index']
  #allocation1 [shape = 'u32[144,128]{1,0:T(1,128)}', space=vmem, size = 0x12000, scoped, tag = 'internal scratch']
  %s0 = inlined_call_operand.vmem [shape: bf16[32,576], index: 0, kind: input, shape index: {}]
  %s1 = inlined_call_operand.vmem [shape: bf16[576,64], index: 1, kind: input, shape index: {}]
  %s2 = inlined_call_operand.vmem [shape: f32[1,64], index: 2, kind: input, shape index: {}]
  %s3 = inlined_call_operand.vmem [shape: bf16[32,64], index: 3, kind: output, shape index: {}]
  %s4 = sld [smem:[#allocation0]]
  $region22: #{rpnv2_forward.9} parent=0
    _
  %s6 = ssub.s32 1, %s4
  %s7 = scalar_select 0, %s6, %s4
  // Predicated region
  $region2: #{rpnv2_forward.9} parent=0 // pred_check
    _
  $region3: #{rpnv2_forward.9} parent=0 // pred_check_branch
    %9 = sbr.rel (0) target = $region5
  $region4: #{rpnv2_forward.9} parent=0 // pred_region
    _
  $region5: #{rpnv2_forward.9} parent=0 // pred_fallthru
    _
  // Predicated region
  $region6: #{rpnv2_forward.9} parent=0 // pred_check
    _
  $region7: #{rpnv2_forward.9} parent=0 // pred_check_branch
    %11 = sbr.rel (0) target = $region9
  $region8: #{rpnv2_forward.9} parent=0 // pred_region
    _
  $region9: #{rpnv2_forward.9} parent=0 // pred_fallthru
    _
  // Predicated region
  $region10: #{rpnv2_forward.9} parent=0 // pred_check
    _
  $region11: #{rpnv2_forward.9} parent=0 // pred_check_branch
    %13 = sbr.rel (0) target = $region13
  $region12: #{rpnv2_forward.9} parent=0 // pred_region
    _
  $region13: #{rpnv2_forward.9} parent=0 // pred_fallthru
    _
  %v15 = vld [vmem:[%s0] sm:$0xff]
  %v16 = vld [vmem:[%s0 + $0x8] sm:$0xff]
  %v17 = vld [vmem:[%s0 + $0x10] sm:$0xf]
  %v18 = vld [vmem:[%s0 + $0x14] sm:$0xff]
  %v19 = vld [vmem:[%s0 + $0x1c] sm:$0xff]
  %v20 = vld [vmem:[%s0 + $0x24] sm:$0xf]
  %v21 = vld [vmem:[%s0 + $0x28] sm:$0xff]
  %v22 = vld [vmem:[%s0 + $0x30] sm:$0xff]
  %v23 = vld [vmem:[%s0 + $0x38] sm:$0xf]
  %v24 = vld [vmem:[%s0 + $0x3c] sm:$0xff]
  %v25 = vld [vmem:[%s0 + $0x44] sm:$0xff]
  %v26 = vld [vmem:[%s0 + $0x4c] sm:$0xf]
  %v27 = vld [vmem:[%s1] sm:$0xf]
  %v28 = vld [vmem:[%s1 + $0x4] sm:$0xf]
  %v29 = vld [vmem:[%s1 + $0x8] sm:$0xf]
  %v30 = vld [vmem:[%s1 + $0xc] sm:$0xf]
  %v31 = vld [vmem:[%s1 + $0x10] sm:$0xf]
  %v32 = vld [vmem:[%s1 + $0x14] sm:$0xf]
  %v33 = vld [vmem:[%s1 + $0x18] sm:$0xf]
  %v34 = vld [vmem:[%s1 + $0x1c] sm:$0xf]
  %v35 = vld [vmem:[%s1 + $0x20] sm:$0xf]
  %v36 = vld [vmem:[%s1 + $0x24] sm:$0xf]
  %v37 = vld [vmem:[%s1 + $0x28] sm:$0xf]
  %v38 = vld [vmem:[%s1 + $0x2c] sm:$0xf]
  %v39 = vld [vmem:[%s1 + $0x30] sm:$0xf]
  %v40 = vld [vmem:[%s1 + $0x34] sm:$0xf]
  %v41 = vld [vmem:[%s1 + $0x38] sm:$0xf]
  %v42 = vld [vmem:[%s1 + $0x3c] sm:$0xf]
  %v43 = vld [vmem:[%s1 + $0x40] sm:$0xf]
  %v44 = vld [vmem:[%s1 + $0x44] sm:$0xf]
  %v45 = vld [vmem:[%s1 + $0x48] sm:$0xf]
  %v46 = vld [vmem:[%s1 + $0x4c] sm:$0xf]
  %v47 = vld [vmem:[%s1 + $0x50] sm:$0xf]
  %v48 = vld [vmem:[%s1 + $0x54] sm:$0xf]
  %v49 = vld [vmem:[%s1 + $0x58] sm:$0xf]
  %v50 = vld [vmem:[%s1 + $0x5c] sm:$0xf]
  %v51 = vld [vmem:[%s1 + $0x60] sm:$0xf]
  %v52 = vld [vmem:[%s1 + $0x64] sm:$0xf]
  %v53 = vld [vmem:[%s1 + $0x68] sm:$0xf]
  %v54 = vld [vmem:[%s1 + $0x6c] sm:$0xf]
  %v55 = vld [vmem:[%s1 + $0x70] sm:$0xf]
  %v56 = vld [vmem:[%s1 + $0x74] sm:$0xf]
  %v57 = vld [vmem:[%s1 + $0x78] sm:$0xf]
  %v58 = vld [vmem:[%s1 + $0x7c] sm:$0xf]
  %v59 = vld [vmem:[%s1 + $0x80] sm:$0xf]
  %v60 = vld [vmem:[%s1 + $0x84] sm:$0xf]
  %v61 = vld [vmem:[%s1 + $0x88] sm:$0xf]
  %v62 = vld [vmem:[%s1 + $0x8c] sm:$0xf]
  %v63 = vld [vmem:[%s1 + $0x90] sm:$0xf]
  %v64 = vld [vmem:[%s1 + $0x94] sm:$0xf]
  %v65 = vld [vmem:[%s1 + $0x98] sm:$0xf]
  %v66 = vld [vmem:[%s1 + $0x9c] sm:$0xf]
  %v67 = vld [vmem:[%s1 + $0xa0] sm:$0xf]
  %v68 = vld [vmem:[%s1 + $0xa4] sm:$0xf]
  %v69 = vld [vmem:[%s1 + $0xa8] sm:$0xf]
  %v70 = vld [vmem:[%s1 + $0xac] sm:$0xf]
  %v71 = vld [vmem:[%s1 + $0xb0] sm:$0xf]
  %v72 = vld [vmem:[%s1 + $0xb4] sm:$0xf]
  %v73 = vld [vmem:[%s1 + $0xb8] sm:$0xf]
  %v74 = vld [vmem:[%s1 + $0xbc] sm:$0xf]
  %v75 = vld [vmem:[%s1 + $0xc0] sm:$0xf]
  %v76 = vld [vmem:[%s1 + $0xc4] sm:$0xf]
  %v77 = vld [vmem:[%s1 + $0xc8] sm:$0xf]
  %v78 = vld [vmem:[%s1 + $0xcc] sm:$0xf]
  %v79 = vld [vmem:[%s1 + $0xd0] sm:$0xf]
  %v80 = vld [vmem:[%s1 + $0xd4] sm:$0xf]
  %v81 = vld [vmem:[%s1 + $0xd8] sm:$0xf]
  %v82 = vld [vmem:[%s1 + $0xdc] sm:$0xf]
  %v83 = vld [vmem:[%s1 + $0xe0] sm:$0xf]
  %v84 = vld [vmem:[%s1 + $0xe4] sm:$0xf]
  %v85 = vld [vmem:[%s1 + $0xe8] sm:$0xf]
  %v86 = vld [vmem:[%s1 + $0xec] sm:$0xf]
  %v87 = vld [vmem:[%s1 + $0xf0] sm:$0xf]
  %v88 = vld [vmem:[%s1 + $0xf4] sm:$0xf]
  %v89 = vld [vmem:[%s1 + $0xf8] sm:$0xf]
  %v90 = vld [vmem:[%s1 + $0xfc] sm:$0xf]
  %v91 = vld [vmem:[%s1 + $0x100] sm:$0xf]
  %v92 = vld [vmem:[%s1 + $0x104] sm:$0xf]
  %v93 = vld [vmem:[%s1 + $0x108] sm:$0xf]
  %v94 = vld [vmem:[%s1 + $0x10c] sm:$0xf]
  %v95 = vld [vmem:[%s1 + $0x110] sm:$0xf]
  %v96 = vld [vmem:[%s1 + $0x114] sm:$0xf]
  %v97 = vld [vmem:[%s1 + $0x118] sm:$0xf]
  %v98 = vld [vmem:[%s1 + $0x11c] sm:$0xf]
  %v99 = vld [vmem:[%s2] sm:$0x1]
  %v101 = vlaneseq
  %v102 = vshrl.u32 %v101, 7
  %v103 = vsub.s32 0, %v102
  %v104 = vrot.slane %v99, %v103
  %v118 = vunpack.c.l.b16 %v15
  %v119 = vunpack.c.h.b16 %v15
  %v120 = vunpack.c.l.b16 %v16
  %v121 = vunpack.c.h.b16 %v16
  %v122 = vunpack.c.l.b16 %v17
  %v123 = vunpack.c.l.b16 %v18
  %v124 = vunpack.c.h.b16 %v18
  %v125 = vunpack.c.l.b16 %v19
  %v126 = vunpack.c.h.b16 %v19
  %v127 = vunpack.c.l.b16 %v20
  %v128 = vunpack.c.l.b16 %v21
  %v129 = vunpack.c.h.b16 %v21
  %v130 = vunpack.c.l.b16 %v22
  %v131 = vunpack.c.h.b16 %v22
  %v132 = vunpack.c.l.b16 %v23
  %v133 = vunpack.c.l.b16 %v24
  %v134 = vunpack.c.h.b16 %v24
  %v135 = vunpack.c.l.b16 %v25
  %v136 = vunpack.c.h.b16 %v25
  %v137 = vunpack.c.l.b16 %v26
  %v138 = vpack.c.b16 %v123, %v118
  %v139 = vpack.c.b16 %v124, %v119
  %v140 = vpack.c.b16 %v125, %v120
  %v141 = vpack.c.b16 %v126, %v121
  %v142 = vpack.c.b16 %v127, %v122
  %v143 = vpack.c.b16 %v133, %v128
  %v144 = vpack.c.b16 %v134, %v129
  %v145 = vpack.c.b16 %v135, %v130
  %v146 = vpack.c.b16 %v136, %v131
  %v147 = vpack.c.b16 %v137, %v132
  %v228 = vunpack.c.l.b16 %v27
  %v229 = vunpack.c.l.b16 %v28
  %v230 = vunpack.c.l.b16 %v29
  %v231 = vunpack.c.l.b16 %v30
  %v232 = vunpack.c.l.b16 %v31
  %v233 = vunpack.c.l.b16 %v32
  %v234 = vunpack.c.l.b16 %v33
  %v235 = vunpack.c.l.b16 %v34
  %v236 = vunpack.c.l.b16 %v35
  %v237 = vunpack.c.l.b16 %v36
  %v238 = vunpack.c.l.b16 %v37
  %v239 = vunpack.c.l.b16 %v38
  %v240 = vunpack.c.l.b16 %v39
  %v241 = vunpack.c.l.b16 %v40
  %v242 = vunpack.c.l.b16 %v41
  %v243 = vunpack.c.l.b16 %v42
  %v244 = vunpack.c.l.b16 %v43
  %v245 = vunpack.c.l.b16 %v44
  %v246 = vunpack.c.l.b16 %v45
  %v247 = vunpack.c.l.b16 %v46
  %v248 = vunpack.c.l.b16 %v47
  %v249 = vunpack.c.l.b16 %v48
  %v250 = vunpack.c.l.b16 %v49
  %v251 = vunpack.c.l.b16 %v50
  %v252 = vunpack.c.l.b16 %v51
  %v253 = vunpack.c.l.b16 %v52
  %v254 = vunpack.c.l.b16 %v53
  %v255 = vunpack.c.l.b16 %v54
  %v256 = vunpack.c.l.b16 %v55
  %v257 = vunpack.c.l.b16 %v56
  %v258 = vunpack.c.l.b16 %v57
  %v259 = vunpack.c.l.b16 %v58
  %v260 = vunpack.c.l.b16 %v59
  %v261 = vunpack.c.l.b16 %v60
  %v262 = vunpack.c.l.b16 %v61
  %v263 = vunpack.c.l.b16 %v62
  %v264 = vunpack.c.l.b16 %v63
  %v265 = vunpack.c.l.b16 %v64
  %v266 = vunpack.c.l.b16 %v65
  %v267 = vunpack.c.l.b16 %v66
  %v268 = vunpack.c.l.b16 %v67
  %v269 = vunpack.c.l.b16 %v68
  %v270 = vunpack.c.l.b16 %v69
  %v271 = vunpack.c.l.b16 %v70
  %v272 = vunpack.c.l.b16 %v71
  %v273 = vunpack.c.l.b16 %v72
  %v274 = vunpack.c.l.b16 %v73
  %v275 = vunpack.c.l.b16 %v74
  %v276 = vunpack.c.l.b16 %v75
  %v277 = vunpack.c.l.b16 %v76
  %v278 = vunpack.c.l.b16 %v77
  %v279 = vunpack.c.l.b16 %v78
  %v280 = vunpack.c.l.b16 %v79
  %v281 = vunpack.c.l.b16 %v80
  %v282 = vunpack.c.l.b16 %v81
  %v283 = vunpack.c.l.b16 %v82
  %v284 = vunpack.c.l.b16 %v83
  %v285 = vunpack.c.l.b16 %v84
  %v286 = vunpack.c.l.b16 %v85
  %v287 = vunpack.c.l.b16 %v86
  %v288 = vunpack.c.l.b16 %v87
  %v289 = vunpack.c.l.b16 %v88
  %v290 = vunpack.c.l.b16 %v89
  %v291 = vunpack.c.l.b16 %v90
  %v292 = vunpack.c.l.b16 %v91
  %v293 = vunpack.c.l.b16 %v92
  %v294 = vunpack.c.l.b16 %v93
  %v295 = vunpack.c.l.b16 %v94
  %v296 = vunpack.c.l.b16 %v95
  %v297 = vunpack.c.l.b16 %v96
  %v298 = vunpack.c.l.b16 %v97
  %v299 = vunpack.c.l.b16 %v98
  %v300 = vpack.c.b16 %v229, %v228
  %v301 = vpack.c.b16 %v231, %v230
  %v302 = vpack.c.b16 %v233, %v232
  %v303 = vpack.c.b16 %v235, %v234
  %v304 = vpack.c.b16 %v237, %v236
  %v305 = vpack.c.b16 %v239, %v238
  %v306 = vpack.c.b16 %v241, %v240
  %v307 = vpack.c.b16 %v243, %v242
  %v308 = vpack.c.b16 %v245, %v244
  %v309 = vpack.c.b16 %v247, %v246
  %v310 = vpack.c.b16 %v249, %v248
  %v311 = vpack.c.b16 %v251, %v250
  %v312 = vpack.c.b16 %v253, %v252
  %v313 = vpack.c.b16 %v255, %v254
  %v314 = vpack.c.b16 %v257, %v256
  %v315 = vpack.c.b16 %v259, %v258
  %v316 = vpack.c.b16 %v261, %v260
  %v317 = vpack.c.b16 %v263, %v262
  %v318 = vpack.c.b16 %v265, %v264
  %v319 = vpack.c.b16 %v267, %v266
  %v320 = vpack.c.b16 %v269, %v268
  %v321 = vpack.c.b16 %v271, %v270
  %v322 = vpack.c.b16 %v273, %v272
  %v323 = vpack.c.b16 %v275, %v274
  %v324 = vpack.c.b16 %v277, %v276
  %v325 = vpack.c.b16 %v279, %v278
  %v326 = vpack.c.b16 %v281, %v280
  %v327 = vpack.c.b16 %v283, %v282
  %v328 = vpack.c.b16 %v285, %v284
  %v329 = vpack.c.b16 %v287, %v286
  %v330 = vpack.c.b16 %v289, %v288
  %v331 = vpack.c.b16 %v291, %v290
  %v332 = vpack.c.b16 %v293, %v292
  %v333 = vpack.c.b16 %v295, %v294
  %v334 = vpack.c.b16 %v297, %v296
  %v335 = vpack.c.b16 %v299, %v298
  %vm372 = vcmask 523264
  %v374 = vsel %vm372, %v142, 0
  %v377 = vsel %vm372, %v147, 0
  %379 = vmatprep.subr.bf16.mxu0 0
  %380 = vmatpush1.bf16.msra.mxu0 %v307
  %381 = vmatprep.subr.bf16.mxu0 0
  %382 = vmatpush1.bf16.msra.mxu0 %v306
  %383 = vmatprep.subr.bf16.mxu0 0
  %384 = vmatpush1.bf16.msra.mxu0 %v305
  %385 = vmatprep.subr.bf16.mxu0 0
  %386 = vmatpush1.bf16.msra.mxu0 %v304
  %387 = vmatprep.subr.bf16.mxu0 0
  %388 = vmatpush1.bf16.msra.mxu0 %v303
  %389 = vmatprep.subr.bf16.mxu0 0
  %390 = vmatpush1.bf16.msra.mxu0 %v302
  %391 = vmatprep.subr.bf16.mxu0 0
  %392 = vmatpush1.bf16.msra.mxu0 %v301
  %393 = vmatprep.subr.bf16.mxu0 0
  %394 = vmatpush1.bf16.msra.mxu0 %v300
  %395 = vmatprep.subr.bf16.mxu0 0
  %396 = vmatpush2.bf16.msra.mxu0 %v315
  %397 = vmatprep.subr.bf16.mxu0 0
  %398 = vmatpush2.bf16.msra.mxu0 %v314
  %399 = vmatprep.subr.bf16.mxu0 0
  %400 = vmatpush2.bf16.msra.mxu0 %v313
  %401 = vmatprep.subr.bf16.mxu0 0
  %402 = vmatpush2.bf16.msra.mxu0 %v312
  %403 = vmatprep.subr.bf16.mxu0 0
  %404 = vmatpush2.bf16.msra.mxu0 %v311
  %405 = vmatprep.subr.bf16.mxu0 0
  %406 = vmatpush2.bf16.msra.mxu0 %v310
  %407 = vmatprep.subr.bf16.mxu0 0
  %408 = vmatpush2.bf16.msra.mxu0 %v309
  %409 = vmatprep.subr.bf16.mxu0 0
  %410 = vmatpush2.bf16.msra.mxu0 %v308
  %411 = vmatprep.mubr.bf16.mxu0 %v139
  %412 = vmatmul.mubr.bf16.gmra.mxu0 %v138
  %v413 = vpop.f32.mrf.mxu0
  %v414 = vadd.f32 %v104, %v413
  %v415 = vpop.f32.mrf.mxu0
  %v416 = vpop.f32.mrf.mxu0
  %v417 = vadd.f32 %v104, %v416
  %v418 = vpop.f32.mrf.mxu0
  %419 = vmatprep.mubr.bf16.mxu0 %v144
  %420 = vmatmul.mubr.bf16.gmra.mxu0 %v143
  %v421 = vpop.f32.mrf.mxu0
  %v422 = vadd.f32 %v104, %v421
  %v423 = vpop.f32.mrf.mxu0
  %v424 = vpop.f32.mrf.mxu0
  %v425 = vadd.f32 %v104, %v424
  %v426 = vpop.f32.mrf.mxu0
  %427 = vdwg.mxu0
  %428 = vmatprep.subr.bf16.mxu0 0
  %429 = vmatpush1.bf16.msra.mxu0 %v323
  %430 = vmatprep.subr.bf16.mxu0 0
  %431 = vmatpush1.bf16.msra.mxu0 %v322
  %432 = vmatprep.subr.bf16.mxu0 0
  %433 = vmatpush1.bf16.msra.mxu0 %v321
  %434 = vmatprep.subr.bf16.mxu0 0
  %435 = vmatpush1.bf16.msra.mxu0 %v320
  %436 = vmatprep.subr.bf16.mxu0 0
  %437 = vmatpush1.bf16.msra.mxu0 %v319
  %438 = vmatprep.subr.bf16.mxu0 0
  %439 = vmatpush1.bf16.msra.mxu0 %v318
  %440 = vmatprep.subr.bf16.mxu0 0
  %441 = vmatpush1.bf16.msra.mxu0 %v317
  %442 = vmatprep.subr.bf16.mxu0 0
  %443 = vmatpush1.bf16.msra.mxu0 %v316
  %444 = vmatprep.subr.bf16.mxu0 0
  %445 = vmatpush2.bf16.msra.mxu0 %v331
  %446 = vmatprep.subr.bf16.mxu0 0
  %447 = vmatpush2.bf16.msra.mxu0 %v330
  %448 = vmatprep.subr.bf16.mxu0 0
  %449 = vmatpush2.bf16.msra.mxu0 %v329
  %450 = vmatprep.subr.bf16.mxu0 0
  %451 = vmatpush2.bf16.msra.mxu0 %v328
  %452 = vmatprep.subr.bf16.mxu0 0
  %453 = vmatpush2.bf16.msra.mxu0 %v327
  %454 = vmatprep.subr.bf16.mxu0 0
  %455 = vmatpush2.bf16.msra.mxu0 %v326
  %456 = vmatprep.subr.bf16.mxu0 0
  %457 = vmatpush2.bf16.msra.mxu0 %v325
  %458 = vmatprep.subr.bf16.mxu0 0
  %459 = vmatpush2.bf16.msra.mxu0 %v324
  %460 = vmatprep.mubr.bf16.mxu0 %v141
  %461 = vmatmul.mubr.bf16.gmra.mxu0 %v140
  %v462 = vpop.f32.mrf.mxu0
  %v463 = vadd.f32 %v414, %v462
  %v464 = vpop.f32.mrf.mxu0
  %v465 = vpop.f32.mrf.mxu0
  %v466 = vadd.f32 %v417, %v465
  %v467 = vpop.f32.mrf.mxu0
  %468 = vmatprep.mubr.bf16.mxu0 %v146
  %469 = vmatmul.mubr.bf16.gmra.mxu0 %v145
  %v470 = vpop.f32.mrf.mxu0
  %v471 = vadd.f32 %v422, %v470
  %v472 = vpop.f32.mrf.mxu0
  %v473 = vpop.f32.mrf.mxu0
  %v474 = vadd.f32 %v425, %v473
  %v475 = vpop.f32.mrf.mxu0
  %476 = vdwg.mxu0
  %477 = vmatprep.subr.bf16.mxu0 0
  %478 = vmatpush1.bf16.msra.mxu0 0
  %479 = vmatprep.subr.bf16.mxu0 0
  %480 = vmatpush1.bf16.msra.mxu0 0
  %481 = vmatprep.subr.bf16.mxu0 0
  %482 = vmatpush1.bf16.msra.mxu0 0
  %483 = vmatprep.subr.bf16.mxu0 0
  %484 = vmatpush1.bf16.msra.mxu0 0
  %485 = vmatprep.subr.bf16.mxu0 0
  %486 = vmatpush1.bf16.msra.mxu0 %v335
  %487 = vmatprep.subr.bf16.mxu0 0
  %488 = vmatpush1.bf16.msra.mxu0 %v334
  %489 = vmatprep.subr.bf16.mxu0 0
  %490 = vmatpush1.bf16.msra.mxu0 %v333
  %491 = vmatprep.subr.bf16.mxu0 0
  %492 = vmatpush1.bf16.msra.mxu0 %v332
  %493 = vmatprep.subr.bf16.mxu0 0
  %494 = vmatpush2.bf16.msra.mxu0 0
  %495 = vmatprep.subr.bf16.mxu0 0
  %496 = vmatpush2.bf16.msra.mxu0 0
  %497 = vmatprep.subr.bf16.mxu0 0
  %498 = vmatpush2.bf16.msra.mxu0 0
  %499 = vmatprep.subr.bf16.mxu0 0
  %500 = vmatpush2.bf16.msra.mxu0 0
  %501 = vmatprep.subr.bf16.mxu0 0
  %502 = vmatpush2.bf16.msra.mxu0 0
  %503 = vmatprep.subr.bf16.mxu0 0
  %504 = vmatpush2.bf16.msra.mxu0 0
  %505 = vmatprep.subr.bf16.mxu0 0
  %506 = vmatpush2.bf16.msra.mxu0 0
  %507 = vmatprep.subr.bf16.mxu0 0
  %508 = vmatpush2.bf16.msra.mxu0 0
  %509 = vmatprep.mubr.bf16.mxu0 0
  %510 = vmatmul.mubr.bf16.gmra.mxu0 %v374
  %v511 = vpop.f32.mrf.mxu0
  %v512 = vadd.f32 %v463, %v511
  %v513 = vpop.f32.mrf.mxu0
  %v514 = vpop.f32.mrf.mxu0
  %v515 = vadd.f32 %v466, %v514
  %v516 = vpop.f32.mrf.mxu0
  %517 = vmatprep.mubr.bf16.mxu0 0
  %518 = vmatmul.mubr.bf16.gmra.mxu0 %v377
  %v519 = vpop.f32.mrf.mxu0
  %v520 = vadd.f32 %v471, %v519
  %v521 = vpop.f32.mrf.mxu0
  %v522 = vpop.f32.mrf.mxu0
  %v523 = vadd.f32 %v474, %v522
  %v524 = vpop.f32.mrf.mxu0
  %525 = vdwg.mxu0
  %v526 = vmax.f32 %v512, 0.0
  %v527 = vmax.f32 %v515, 0.0
  %v528 = vmax.f32 %v520, 0.0
  %v529 = vmax.f32 %v523, 0.0
  %v530 = vpack.c.bf16 %v527, %v526
  %v531 = vpack.c.bf16 %v529, %v528
  %v534 = vunpack.c.l.b16 %v530
  %v535 = vunpack.c.h.b16 %v530
  %v536 = vunpack.c.l.b16 %v531
  %v537 = vunpack.c.h.b16 %v531
  %v538 = vpack.c.b16 %v534, %v534
  %v539 = vpack.c.b16 %v535, %v535
  %v540 = vpack.c.b16 %v536, %v536
  %v541 = vpack.c.b16 %v537, %v537
  %vm546 = vcmask 519168
  %547 = vst.msk [vmem:[%s3] sm:$0xf] %vm546, %v538
  %548 = vst.msk [vmem:[%s3 + $0x4] sm:$0xf] %vm546, %v539
  %549 = vst.msk [vmem:[%s3 + $0x8] sm:$0xf] %vm546, %v540
  %550 = vst.msk [vmem:[%s3 + $0xc] sm:$0xf] %vm546, %v541
  // Predicated region
  $region14: #{rpnv2_forward.9} parent=0 // pred_check
    _
  $region15: #{rpnv2_forward.9} parent=0 // pred_check_branch
    %552 = sbr.rel (0) target = $region17
  $region16: #{rpnv2_forward.9} parent=0 // pred_region
    _
  $region17: #{rpnv2_forward.9} parent=0 // pred_fallthru
    _
  // Predicated region
  $region18: #{rpnv2_forward.9} parent=0 // pred_check
    _
  $region19: #{rpnv2_forward.9} parent=0 // pred_check_branch
    %554 = sbr.rel (0) target = $region21
  $region20: #{rpnv2_forward.9} parent=0 // pred_region
    _
  $region21: #{rpnv2_forward.9} parent=0 // pred_fallthru
    _

// kernel: tile.21
$region0: #{tile.21}
  %s0 = inlined_call_operand.vmem [shape: f32[16,64], index: 0, kind: input, shape index: {}]
  %s1 = inlined_call_operand.vmem [shape: f32[1,1024], index: 1, kind: output, shape index: {}]
  $region1: #{tile.21} parent=0
    #allocation0 [shape = 'u8[32768]{0}', space=vmem, size = 0x8000, scoped, tag = 'scoped mem for output reshape']
    %v2 = vld [vmem:[%s0] ss:$2 sm:$0xff]
    %vm3 = vcmask 523264
    %4 = vst.msk [vmem:[#allocation0] ss:$8 sm:$0xf] %vm3, %v2
    %5 = vst.msk [vmem:[#allocation0] ss:$8 sm:$0xf0] %vm3, %v2
    %s6 = scalar_lea.vmem %s0, 1
    %v7 = vld [vmem:[%s6] ss:$2 sm:$0xff]
    %8 = vrot.lane.b32.xlu0 %v7, 64
    %v9 = vpop.permute.xlu0 %8
    %vm10 = vcmask 1048064
    %11 = vst.msk [vmem:[#allocation0] ss:$8 sm:$0xf] %vm10, %v9
    %12 = vst.msk [vmem:[#allocation0] ss:$8 sm:$0xf0] %vm10, %v9
    %s14 = sshll.u32 1, 1
    %s15 = ssub.s32 %s14, 1
    %v17 = vld [vmem:[#allocation0] sm:%s15]
    %s18 = sshll.u32 1, 1
    %s19 = ssub.s32 %s18, 1
    %20 = vst [vmem:[%s1] sm:%s19] %v17
    %s21 = scalar_lea.vmem [#allocation0], 8
    %v22 = vld [vmem:[%s21] sm:%s15]
    %s23 = sshll.u32 1, 1
    %s24 = ssub.s32 %s23, 1
    %s25 = scalar_lea.vmem %s1, 1
    %26 = vst [vmem:[%s25] sm:%s24] %v22
    %s27 = scalar_lea.vmem [#allocation0], 16
    %v28 = vld [vmem:[%s27] sm:%s15]
    %s29 = sshll.u32 1, 1
    %s30 = ssub.s32 %s29, 1
    %s31 = smul.addr 1, 2
    %s32 = scalar_lea.vmem %s1, %s31
    %33 = vst [vmem:[%s32] sm:%s30] %v28
    %s34 = scalar_lea.vmem [#allocation0], 24
    %v35 = vld [vmem:[%s34] sm:%s15]
    %s36 = sshll.u32 1, 1
    %s37 = ssub.s32 %s36, 1
    %s38 = smul.addr 1, 3
    %s39 = scalar_lea.vmem %s1, %s38
    %40 = vst [vmem:[%s39] sm:%s37] %v35
    %s41 = scalar_lea.vmem [#allocation0], 32
    %v42 = vld [vmem:[%s41] sm:%s15]
    %s43 = sshll.u32 1, 1
    %s44 = ssub.s32 %s43, 1
    %s45 = smul.addr 1, 4
    %s46 = scalar_lea.vmem %s1, %s45
    %47 = vst [vmem:[%s46] sm:%s44] %v42
    %s48 = scalar_lea.vmem [#allocation0], 40
    %v49 = vld [vmem:[%s48] sm:%s15]
    %s50 = sshll.u32 1, 1
    %s51 = ssub.s32 %s50, 1
    %s52 = smul.addr 1, 5
    %s53 = scalar_lea.vmem %s1, %s52
    %54 = vst [vmem:[%s53] sm:%s51] %v49
    %s55 = scalar_lea.vmem [#allocation0], 48
    %v56 = vld [vmem:[%s55] sm:%s15]
    %s57 = sshll.u32 1, 1
    %s58 = ssub.s32 %s57, 1
    %s59 = smul.addr 1, 6
    %s60 = scalar_lea.vmem %s1, %s59
    %61 = vst [vmem:[%s60] sm:%s58] %v56
    %s62 = scalar_lea.vmem [#allocation0], 56
    %v63 = vld [vmem:[%s62] sm:%s15]
    %s64 = sshll.u32 1, 1
    %s65 = ssub.s32 %s64, 1
    %s66 = smul.addr 1, 7
    %s67 = scalar_lea.vmem %s1, %s66
    %68 = vst [vmem:[%s67] sm:%s65] %v63

// kernel: rpnv2_forward.10
$region0: #{rpnv2_forward.10}
  #allocation0 [shape = 'u32[]', space=smem, size = 0x4, offset = 0x4, fixed_abs, tag = 'smem constant byte address 0x4 - core index']
  #allocation1 [shape = 'u32[144,128]{1,0:T(1,128)}', space=vmem, size = 0x12000, scoped, tag = 'internal scratch']
  #allocation2 [shape = 'bf16[6,6,64]{2,1,0:T(8,128)(2,1)}', space=vmem, size = 0x3000, scoped, tag = 'scratch operand']
  %s0 = inlined_call_operand.vmem [shape: bf16[2,6,6,64], index: 0, kind: input, shape index: {}]
  %s1 = inlined_call_operand.vmem [shape: bf16[2,9,64,64], index: 1, kind: input, shape index: {}]
  %s2 = inlined_call_operand.vmem [shape: f32[2,1,64], index: 2, kind: input, shape index: {}]
  %s3 = inlined_call_operand.vmem [shape: bf16[64,1024], index: 3, kind: input, shape index: {}]
  %s4 = inlined_call_operand.vmem [shape: f32[1,1024], index: 4, kind: input, shape index: {}]
  %s5 = inlined_call_operand.hbm [shape: bf16[2,4,4,64], index: 5, kind: output, shape index: {0}]
  %s6 = inlined_call_operand.vmem [shape: bf16[2,4,4,1024], index: 6, kind: output, shape index: {1}]
  %7 = xla_tuple %s5, %s6
  %s8 = sld [smem:[#allocation0]]
  $region75: #{rpnv2_forward.10} parent=0
    _
  %s10 = ssub.s32 1, %s8
  %s11 = scalar_select 0, %s10, %s8
  $region1: #{rpnv2_forward.10} parent=0
    #allocation3 [shape = 'u8[8192]{0}', space=vmem, size = 0x2000, scoped, tag = 'output window, operand 0']
    #allocation4 [shape = 's32[2]{0}', space=sflag, size = 0x8, scoped, tag = 'scoped memory for rpnv2_forward.10']
    %12 = vsyncpa [#allocation4], 0
    %s13 = scalar_lea.sflag [#allocation4], 1
    %14 = vsyncpa %s13, 0
    loop: start=0, step=1, limit=4
    $region2: #{rpnv2_forward.10} parent=1 // loop_pre_header
      _
    $region3: #{rpnv2_forward.10} parent=1 // loop_header
      %s16 = sphi 0, %s20
      %p17 = scmp.ge.s32.totalorder %s16, 4
      %s26 = sphi 0, %s28
      %s29 = sphi 0, %s26
      %s30 = sphi 0, %s29
      %s46 = sphi 0, %s30
      %s50 = sphi 0, %s50
      %s52 = sphi 0, %s50
      %s53 = sphi 0, %s52
      %s67 = sphi 0, %s53
      %s71 = sphi 0, %s71
      %s73 = sphi 0, %s71
      %s74 = sphi 0, %s73
      %s88 = sphi 0, %s74
      %s92 = sphi 0, %s92
      %s94 = sphi 0, %s92
      %s95 = sphi 0, %s94
      %s109 = sphi 0, %s95
      %s113 = sphi 0, %s113
      %s115 = sphi 0, %s113
      %s116 = sphi 0, %s115
      %s130 = sphi 0, %s116
      %s136 = sphi 0, %s138
      %s139 = sphi 0, %s136
      %s140 = sphi 0, %s139
      %s156 = sphi 0, %s140
      %s162 = sphi 0, %s164
      %s165 = sphi 0, %s162
      %s166 = sphi 0, %s165
      %s182 = sphi 0, %s166
    $region4: #{rpnv2_forward.10} parent=1 // loop_header_branch
      %19 = sbr.rel (%p17) target = $region8
    $region5: #{rpnv2_forward.10} parent=1 // loop_body
      %s21 = ssub.s32 %s16, 1
      %s22 = ssub.s32 %s16, 2
      %s23 = sadd.s32 %s16, 1
      %s24 = ssub.s32 %s16, %s23
      %p25 = scmp.eq.s32.totalorder %s24, 0
      %s27 = sadd.s32 %s26, 1
      %s28 = scalar_select %p25, %s26, %s27
      %p31 = pneg %p25
      %p32 = scmp.eq.s32.totalorder %s16, 1
      %p33 = por %p31, %p32
      %p34 = scmp.ne.s32.totalorder %s26, %s29
      %p35 = scmp.eq.s32.totalorder %s16, 0
      %p36 = por %p34, %p35
      %p37 = scmp.ne.s32.totalorder %s26, %s29
      %p38 = scmp.eq.s32.totalorder %s21, 1
      %p39 = por %p37, %p38
      %p40 = scmp.ne.s32.totalorder %s29, %s30
      %p41 = scmp.eq.s32.totalorder %s21, 0
      %p42 = por %p40, %p41
      %p43 = scmp.ne.s32.totalorder %s29, %s30
      %p44 = scmp.eq.s32.totalorder %s22, 1
      %p45 = por %p43, %p44
      %p47 = scmp.ne.s32.totalorder %s30, %s46
      %p48 = scmp.eq.s32.totalorder %s22, 0
      %p49 = por %p47, %p48
      %s51 = sadd.s32 %s50, 1
      %p54 = scmp.eq.s32.totalorder %s16, 1
      %p55 = scmp.ne.s32.totalorder %s50, %s52
      %p56 = scmp.eq.s32.totalorder %s16, 0
      %p57 = por %p55, %p56
      %p58 = scmp.ne.s32.totalorder %s50, %s52
      %p59 = scmp.eq.s32.totalorder %s21, 1
      %p60 = por %p58, %p59
      %p61 = scmp.ne.s32.totalorder %s52, %s53
      %p62 = scmp.eq.s32.totalorder %s21, 0
      %p63 = por %p61, %p62
      %p64 = scmp.ne.s32.totalorder %s52, %s53
      %p65 = scmp.eq.s32.totalorder %s22, 1
      %p66 = por %p64, %p65
      %p68 = scmp.ne.s32.totalorder %s53, %s67
      %p69 = scmp.eq.s32.totalorder %s22, 0
      %p70 = por %p68, %p69
      %s72 = sadd.s32 %s71, 1
      %p75 = scmp.eq.s32.totalorder %s16, 1
      %p76 = scmp.ne.s32.totalorder %s71, %s73
      %p77 = scmp.eq.s32.totalorder %s16, 0
      %p78 = por %p76, %p77
      %p79 = scmp.ne.s32.totalorder %s71, %s73
      %p80 = scmp.eq.s32.totalorder %s21, 1
      %p81 = por %p79, %p80
      %p82 = scmp.ne.s32.totalorder %s73, %s74
      %p83 = scmp.eq.s32.totalorder %s21, 0
      %p84 = por %p82, %p83
      %p85 = scmp.ne.s32.totalorder %s73, %s74
      %p86 = scmp.eq.s32.totalorder %s22, 1
      %p87 = por %p85, %p86
      %p89 = scmp.ne.s32.totalorder %s74, %s88
      %p90 = scmp.eq.s32.totalorder %s22, 0
      %p91 = por %p89, %p90
      %s93 = sadd.s32 %s92, 1
      %p96 = scmp.eq.s32.totalorder %s16, 1
      %p97 = scmp.ne.s32.totalorder %s92, %s94
      %p98 = scmp.eq.s32.totalorder %s16, 0
      %p99 = por %p97, %p98
      %p100 = scmp.ne.s32.totalorder %s92, %s94
      %p101 = scmp.eq.s32.totalorder %s21, 1
      %p102 = por %p100, %p101
      %p103 = scmp.ne.s32.totalorder %s94, %s95
      %p104 = scmp.eq.s32.totalorder %s21, 0
      %p105 = por %p103, %p104
      %p106 = scmp.ne.s32.totalorder %s94, %s95
      %p107 = scmp.eq.s32.totalorder %s22, 1
      %p108 = por %p106, %p107
      %p110 = scmp.ne.s32.totalorder %s95, %s109
      %p111 = scmp.eq.s32.totalorder %s22, 0
      %p112 = por %p110, %p111
      %s114 = sadd.s32 %s113, 1
      %p117 = scmp.eq.s32.totalorder %s16, 1
      %p118 = scmp.ne.s32.totalorder %s113, %s115
      %p119 = scmp.eq.s32.totalorder %s16, 0
      %p120 = por %p118, %p119
      %p121 = scmp.ne.s32.totalorder %s113, %s115
      %p122 = scmp.eq.s32.totalorder %s21, 1
      %p123 = por %p121, %p122
      %p124 = scmp.ne.s32.totalorder %s115, %s116
      %p125 = scmp.eq.s32.totalorder %s21, 0
      %p126 = por %p124, %p125
      %p127 = scmp.ne.s32.totalorder %s115, %s116
      %p128 = scmp.eq.s32.totalorder %s22, 1
      %p129 = por %p127, %p128
      %p131 = scmp.ne.s32.totalorder %s116, %s130
      %p132 = scmp.eq.s32.totalorder %s22, 0
      %p133 = por %p131, %p132
      %s134 = ssub.s32 %s16, %s23
      %p135 = scmp.eq.s32.totalorder %s134, 0
      %s137 = sadd.s32 %s136, 1
      %s138 = scalar_select %p135, %s136, %s137
      %p141 = pneg %p135
      %p142 = scmp.eq.s32.totalorder %s16, 1
      %p143 = por %p141, %p142
      %p144 = scmp.ne.s32.totalorder %s136, %s139
      %p145 = scmp.eq.s32.totalorder %s16, 0
      %p146 = por %p144, %p145
      %p147 = scmp.ne.s32.totalorder %s136, %s139
      %p148 = scmp.eq.s32.totalorder %s21, 1
      %p149 = por %p147, %p148
      %p150 = scmp.ne.s32.totalorder %s139, %s140
      %p151 = scmp.eq.s32.totalorder %s21, 0
      %p152 = por %p150, %p151
      %p153 = scmp.ne.s32.totalorder %s139, %s140
      %p154 = scmp.eq.s32.totalorder %s22, 1
      %p155 = por %p153, %p154
      %p157 = scmp.ne.s32.totalorder %s140, %s156
      %p158 = scmp.eq.s32.totalorder %s22, 0
      %p159 = por %p157, %p158
      %s160 = ssub.s32 %s16, %s23
      %p161 = scmp.eq.s32.totalorder %s160, 0
      %s163 = sadd.s32 %s162, 1
      %s164 = scalar_select %p161, %s162, %s163
      %p167 = pneg %p161
      %p168 = scmp.eq.s32.totalorder %s16, 1
      %p169 = por %p167, %p168
      %p170 = scmp.ne.s32.totalorder %s162, %s165
      %p171 = scmp.eq.s32.totalorder %s16, 0
      %p172 = por %p170, %p171
      %p173 = scmp.ne.s32.totalorder %s162, %s165
      %p174 = scmp.eq.s32.totalorder %s21, 1
      %p175 = por %p173, %p174
      %p176 = scmp.ne.s32.totalorder %s165, %s166
      %p177 = scmp.eq.s32.totalorder %s21, 0
      %p178 = por %p176, %p177
      %p179 = scmp.ne.s32.totalorder %s165, %s166
      %p180 = scmp.eq.s32.totalorder %s22, 1
      %p181 = por %p179, %p180
      %p183 = scmp.ne.s32.totalorder %s166, %s182
      %p184 = scmp.eq.s32.totalorder %s22, 0
      %p185 = por %p183, %p184
      %p186 = scmp.le.s32.totalorder 1, %s16
      %p187 = scmp.lt.s32.totalorder %s16, 3
      %p188 = pnand %p186, %p187
      %p189 = pneg %p188
      // Predicated region
      $region9: #{rpnv2_forward.10} parent=5 // pred_check
        _
      $region10: #{rpnv2_forward.10} parent=5 // pred_check_branch
        %191 = sbr.rel (%p188) target = $region12
      $region11: #{rpnv2_forward.10} parent=5 // pred_region
        %s192 = ssub.s32 %s16, 1
        // Predicated region
        $region13: #{rpnv2_forward.10} parent=11 // pred_check
          %p193 = pneg %p63
        $region14: #{rpnv2_forward.10} parent=11 // pred_check_branch
          %195 = sbr.rel (%p193) target = $region16
        $region15: #{rpnv2_forward.10} parent=11 // pred_region
          _
        $region16: #{rpnv2_forward.10} parent=11 // pred_fallthru
          _
        // Predicated region
        $region17: #{rpnv2_forward.10} parent=11 // pred_check
          %p196 = pneg %p84
        $region18: #{rpnv2_forward.10} parent=11 // pred_check_branch
          %198 = sbr.rel (%p196) target = $region20
        $region19: #{rpnv2_forward.10} parent=11 // pred_region
          _
        $region20: #{rpnv2_forward.10} parent=11 // pred_fallthru
          _
        // Predicated region
        $region21: #{rpnv2_forward.10} parent=11 // pred_check
          %p199 = pneg %p105
        $region22: #{rpnv2_forward.10} parent=11 // pred_check_branch
          %201 = sbr.rel (%p199) target = $region24
        $region23: #{rpnv2_forward.10} parent=11 // pred_region
          _
        $region24: #{rpnv2_forward.10} parent=11 // pred_fallthru
          _
        // Predicated region
        $region25: #{rpnv2_forward.10} parent=11 // pred_check
          %p202 = pneg %p126
        $region26: #{rpnv2_forward.10} parent=11 // pred_check_branch
          %204 = sbr.rel (%p202) target = $region28
        $region27: #{rpnv2_forward.10} parent=11 // pred_region
          _
        $region28: #{rpnv2_forward.10} parent=11 // pred_fallthru
          _
      $region12: #{rpnv2_forward.10} parent=5 // pred_fallthru
        _
      %p205 = scmp.lt.s32.totalorder %s16, 2
      // Predicated region
      $region29: #{rpnv2_forward.10} parent=5 // pred_check
        %p206 = pneg %p205
      $region30: #{rpnv2_forward.10} parent=5 // pred_check_branch
        %208 = sbr.rel (%p206) target = $region32
      $region31: #{rpnv2_forward.10} parent=5 // pred_region
        // Predicated region
        $region33: #{rpnv2_forward.10} parent=31 // pred_check
          %p209 = pneg %p36
        $region34: #{rpnv2_forward.10} parent=31 // pred_check_branch
          %211 = sbr.rel (%p209) target = $region36
        $region35: #{rpnv2_forward.10} parent=31 // pred_region
          %p212 = scmp.lt.s32.totalorder %s16, 1
          %s213 = scalar_select %p212, %s16, 1
          %s214 = smul.addr %s213, 6
          %s215 = smul.addr %s214, 4
          %s216 = scalar_lea.vmem %s0, %s215
        $region36: #{rpnv2_forward.10} parent=31 // pred_fallthru
          _
      $region32: #{rpnv2_forward.10} parent=5 // pred_fallthru
        _
      %p217 = scmp.le.s32.totalorder 1, %s16
      %p218 = scmp.lt.s32.totalorder %s16, 3
      %p219 = pnand %p217, %p218
      %p220 = pneg %p219
      // Predicated region
      $region37: #{rpnv2_forward.10} parent=5 // pred_check
        _
      $region38: #{rpnv2_forward.10} parent=5 // pred_check_branch
        %222 = sbr.rel (%p219) target = $region40
      $region39: #{rpnv2_forward.10} parent=5 // pred_region
        %s223 = ssub.s32 %s16, 1
        %p224 = scmp.lt.s32.totalorder %s21, 1
        %s225 = scalar_select %p224, %s21, 1
        %s226 = smul.addr %s225, 6
        %s227 = smul.addr %s226, 4
        %s228 = scalar_lea.vmem %s0, %s227
        %p229 = pneg %p42
        %p230 = pneg %p39
        %p231 = pneg %p63
        %p232 = pneg %p60
        %p233 = pneg %p84
        %p234 = pneg %p81
        %p235 = pneg %p105
        %p236 = pneg %p102
        %p237 = pneg %p126
        %p238 = pneg %p123
        %p239 = pneg %p152
        %p240 = pneg %p149
        %s241 = sand.u32 %s139, 1
        %s242 = scalar_lea.sflag [#allocation4], %s241
        %s243 = sand.u32 %s139, 1
        %s244 = smul.addr %s243, 8
        %s245 = scalar_lea.vmem [#allocation3], %s244
        %p246 = pneg %p178
        %p247 = pneg %p175
        %p248 = scmp.lt.s32.totalorder %s21, 1
        %s249 = scalar_select %p248, %s21, 1
        %s250 = smul.addr %s249, 32
        %s251 = smul.addr %s250, 2
        %s252 = scalar_lea.vmem %s6, %s251
        %p253 = scmp.lt.s32.totalorder %s21, 1
        %s254 = scalar_select %p253, %s21, 1
        %s255 = smul.addr %s254, 6
        %s256 = smul.addr %s255, 4
        %s257 = scalar_lea.vmem %s0, %s256
        %p258 = scmp.lt.s32.totalorder %s21, 1
        %s259 = scalar_select %p258, %s21, 1
        %s260 = smul.addr %s259, 32
        %s261 = smul.addr %s260, 2
        %s262 = scalar_lea.vmem %s6, %s261
        %vm264 = vcmask 518144
        %265 = vst.msk [vmem:[#allocation2] sm:$0x7] %vm264, 0
        %266 = vst.msk [vmem:[#allocation2 + $0x4] sm:$0x7] %vm264, 0
        %267 = vst.msk [vmem:[#allocation2 + $0x8] sm:$0x7] %vm264, 0
        %268 = vst.msk [vmem:[#allocation2 + $0xc] sm:$0x7] %vm264, 0
        %269 = vst.msk [vmem:[#allocation2 + $0x10] sm:$0x7] %vm264, 0
        %270 = vst.msk [vmem:[#allocation2 + $0x14] sm:$0x7] %vm264, 0
        %v271 = vld [vmem:[%s4] sm:$0xff]
        loop: start=0, step=1, limit=4
        $region41: #{rpnv2_forward.10} parent=39 // loop_pre_header
          _
        $region42: #{rpnv2_forward.10} parent=39 // loop_header
          %s273 = sphi 0, %s277
          %p274 = scmp.ge.s32.totalorder %s273, 4
        $region43: #{rpnv2_forward.10} parent=39 // loop_header_branch
          %276 = sbr.rel (%p274) target = $region47
        $region44: #{rpnv2_forward.10} parent=39 // loop_body
          %v278 = vld [vmem:[%s2] sm:$0x1]
          %v280 = vlaneseq
          %v281 = vshrl.u32 %v280, 7
          %v282 = vsub.s32 0, %v281
          %v283 = vrot.slane %v278, %v282
          %v285 = vadd.f32 %v283, 0.0
          %s286 = smul.addr %s273, 4
          %s287 = scalar_lea.vmem %s257, %s286
          %v288 = vld [vmem:[%s287] sm:$0x3]
          %v289 = vld [vmem:[%s1] sm:$0xf]
          %v290 = vld [vmem:[%s1 + $0x4] sm:$0xf]
          %v291 = vld [vmem:[%s1 + $0x8] sm:$0xf]
          %v292 = vld [vmem:[%s1 + $0xc] sm:$0xf]
          %v293 = vld [vmem:[%s1 + $0x10] sm:$0xf]
          %v294 = vld [vmem:[%s1 + $0x14] sm:$0xf]
          %v295 = vld [vmem:[%s1 + $0x18] sm:$0xf]
          %v296 = vld [vmem:[%s1 + $0x1c] sm:$0xf]
          %v305 = vunpack.c.l.b16 %v289
          %v306 = vunpack.c.l.b16 %v290
          %v307 = vunpack.c.l.b16 %v291
          %v308 = vunpack.c.l.b16 %v292
          %v309 = vunpack.c.l.b16 %v293
          %v310 = vunpack.c.l.b16 %v294
          %v311 = vunpack.c.l.b16 %v295
          %v312 = vunpack.c.l.b16 %v296
          %v313 = vpack.c.b16 %v306, %v305
          %v314 = vpack.c.b16 %v308, %v307
          %v315 = vpack.c.b16 %v310, %v309
          %v316 = vpack.c.b16 %v312, %v311
          %vm321 = vcmask 523264
          %v323 = vsel %vm321, %v288, 0
          %325 = vmatprep.subr.bf16.mxu0 0
          %326 = vmatpush1.bf16.msra.mxu0 0
          %327 = vmatprep.subr.bf16.mxu0 0
          %328 = vmatpush1.bf16.msra.mxu0 0
          %329 = vmatprep.subr.bf16.mxu0 0
          %330 = vmatpush1.bf16.msra.mxu0 0
          %331 = vmatprep.subr.bf16.mxu0 0
          %332 = vmatpush1.bf16.msra.mxu0 0
          %333 = vmatprep.subr.bf16.mxu0 0
          %334 = vmatpush1.bf16.msra.mxu0 %v316
          %335 = vmatprep.subr.bf16.mxu0 0
          %336 = vmatpush1.bf16.msra.mxu0 %v315
          %337 = vmatprep.subr.bf16.mxu0 0
          %338 = vmatpush1.bf16.msra.mxu0 %v314
          %339 = vmatprep.subr.bf16.mxu0 0
          %340 = vmatpush1.bf16.msra.mxu0 %v313
          %341 = vmatprep.subr.bf16.mxu0 0
          %342 = vmatpush2.bf16.msra.mxu0 0
          %343 = vmatprep.subr.bf16.mxu0 0
          %344 = vmatpush2.bf16.msra.mxu0 0
          %345 = vmatprep.subr.bf16.mxu0 0
          %346 = vmatpush2.bf16.msra.mxu0 0
          %347 = vmatprep.subr.bf16.mxu0 0
          %348 = vmatpush2.bf16.msra.mxu0 0
          %349 = vmatprep.subr.bf16.mxu0 0
          %350 = vmatpush2.bf16.msra.mxu0 0
          %351 = vmatprep.subr.bf16.mxu0 0
          %352 = vmatpush2.bf16.msra.mxu0 0
          %353 = vmatprep.subr.bf16.mxu0 0
          %354 = vmatpush2.bf16.msra.mxu0 0
          %355 = vmatprep.subr.bf16.mxu0 0
          %356 = vmatpush2.bf16.msra.mxu0 0
          %357 = vmatprep.mubr.bf16.mxu0 0
          %358 = vmatmul.mubr.bf16.gmra.mxu0 %v323
          %v359 = vpop.f32.mrf.mxu0
          %v360 = vadd.f32 0.0, %v359
          %v361 = vpop.f32.mrf.mxu0
          %v362 = vpop.f32.mrf.mxu0
          %v363 = vpop.f32.mrf.mxu0
          %364 = vdwg.mxu0
          %v365 = vadd.f32 %v285, %v360
          %v366 = vld [vmem:[%s287] sm:$0x7]
          %s367 = scalar_lea.vmem %s1, 32
          %v368 = vld [vmem:[%s367] sm:$0xf]
          %v369 = vld [vmem:[%s367 + $0x4] sm:$0xf]
          %v370 = vld [vmem:[%s367 + $0x8] sm:$0xf]
          %v371 = vld [vmem:[%s367 + $0xc] sm:$0xf]
          %v372 = vld [vmem:[%s367 + $0x10] sm:$0xf]
          %v373 = vld [vmem:[%s367 + $0x14] sm:$0xf]
          %v374 = vld [vmem:[%s367 + $0x18] sm:$0xf]
          %v375 = vld [vmem:[%s367 + $0x1c] sm:$0xf]
          %v377 = vunpack.c.l.b16 %v366
          %v378 = vpack.c.b16 %v377, %v377
          %v380 = vshrl.u32 %v378, 16
          %v382 = vshll.u32 %v378, 16
          %v384 = vrot.slane %v382, 1
          %v385 = vor.u32 %v380, %v384
          %v394 = vunpack.c.l.b16 %v368
          %v395 = vunpack.c.l.b16 %v369
          %v396 = vunpack.c.l.b16 %v370
          %v397 = vunpack.c.l.b16 %v371
          %v398 = vunpack.c.l.b16 %v372
          %v399 = vunpack.c.l.b16 %v373
          %v400 = vunpack.c.l.b16 %v374
          %v401 = vunpack.c.l.b16 %v375
          %v402 = vpack.c.b16 %v395, %v394
          %v403 = vpack.c.b16 %v397, %v396
          %v404 = vpack.c.b16 %v399, %v398
          %v405 = vpack.c.b16 %v401, %v400
          %v411 = vsel %vm321, %v385, 0
          %413 = vmatprep.subr.bf16.mxu0 0
          %414 = vmatpush1.bf16.msra.mxu0 0
          %415 = vmatprep.subr.bf16.mxu0 0
          %416 = vmatpush1.bf16.msra.mxu0 0
          %417 = vmatprep.subr.bf16.mxu0 0
          %418 = vmatpush1.bf16.msra.mxu0 0
          %419 = vmatprep.subr.bf16.mxu0 0
          %420 = vmatpush1.bf16.msra.mxu0 0
          %421 = vmatprep.subr.bf16.mxu0 0
          %422 = vmatpush1.bf16.msra.mxu0 %v405
          %423 = vmatprep.subr.bf16.mxu0 0
          %424 = vmatpush1.bf16.msra.mxu0 %v404
          %425 = vmatprep.subr.bf16.mxu0 0
          %426 = vmatpush1.bf16.msra.mxu0 %v403
          %427 = vmatprep.subr.bf16.mxu0 0
          %428 = vmatpush1.bf16.msra.mxu0 %v402
          %429 = vmatprep.subr.bf16.mxu0 0
          %430 = vmatpush2.bf16.msra.mxu0 0
          %431 = vmatprep.subr.bf16.mxu0 0
          %432 = vmatpush2.bf16.msra.mxu0 0
          %433 = vmatprep.subr.bf16.mxu0 0
          %434 = vmatpush2.bf16.msra.mxu0 0
          %435 = vmatprep.subr.bf16.mxu0 0
          %436 = vmatpush2.bf16.msra.mxu0 0
          %437 = vmatprep.subr.bf16.mxu0 0
          %438 = vmatpush2.bf16.msra.mxu0 0
          %439 = vmatprep.subr.bf16.mxu0 0
          %440 = vmatpush2.bf16.msra.mxu0 0
          %441 = vmatprep.subr.bf16.mxu0 0
          %442 = vmatpush2.bf16.msra.mxu0 0
          %443 = vmatprep.subr.bf16.mxu0 0
          %444 = vmatpush2.bf16.msra.mxu0 0
          %445 = vmatprep.mubr.bf16.mxu0 0
          %446 = vmatmul.mubr.bf16.gmra.mxu0 %v411
          %v447 = vpop.f32.mrf.mxu0
          %v448 = vadd.f32 0.0, %v447
          %v449 = vpop.f32.mrf.mxu0
          %v450 = vpop.f32.mrf.mxu0
          %v451 = vpop.f32.mrf.mxu0
          %452 = vdwg.mxu0
          %v453 = vadd.f32 %v365, %v448
          %v454 = vld [vmem:[%s287] sm:$0x6]
          %s455 = scalar_lea.vmem %s1, 64
          %v456 = vld [vmem:[%s455] sm:$0xf]
          %v457 = vld [vmem:[%s455 + $0x4] sm:$0xf]
          %v458 = vld [vmem:[%s455 + $0x8] sm:$0xf]
          %v459 = vld [vmem:[%s455 + $0xc] sm:$0xf]
          %v460 = vld [vmem:[%s455 + $0x10] sm:$0xf]
          %v461 = vld [vmem:[%s455 + $0x14] sm:$0xf]
          %v462 = vld [vmem:[%s455 + $0x18] sm:$0xf]
          %v463 = vld [vmem:[%s455 + $0x1c] sm:$0xf]
          %v465 = vunpack.c.l.b16 %v454
          %v466 = vpack.c.b16 %v465, %v465
          %v467 = vrot.slane %v466, 1
          %v476 = vunpack.c.l.b16 %v456
          %v477 = vunpack.c.l.b16 %v457
          %v478 = vunpack.c.l.b16 %v458
          %v479 = vunpack.c.l.b16 %v459
          %v480 = vunpack.c.l.b16 %v460
          %v481 = vunpack.c.l.b16 %v461
          %v482 = vunpack.c.l.b16 %v462
          %v483 = vunpack.c.l.b16 %v463
          %v484 = vpack.c.b16 %v477, %v476
          %v485 = vpack.c.b16 %v479, %v478
          %v486 = vpack.c.b16 %v481, %v480
          %v487 = vpack.c.b16 %v483, %v482
          %v493 = vsel %vm321, %v467, 0
          %495 = vmatprep.subr.bf16.mxu0 0
          %496 = vmatpush1.bf16.msra.mxu0 0
          %497 = vmatprep.subr.bf16.mxu0 0
          %498 = vmatpush1.bf16.msra.mxu0 0
          %499 = vmatprep.subr.bf16.mxu0 0
          %500 = vmatpush1.bf16.msra.mxu0 0
          %501 = vmatprep.subr.bf16.mxu0 0
          %502 = vmatpush1.bf16.msra.mxu0 0
          %503 = vmatprep.subr.bf16.mxu0 0
          %504 = vmatpush1.bf16.msra.mxu0 %v487
          %505 = vmatprep.subr.bf16.mxu0 0
          %506 = vmatpush1.bf16.msra.mxu0 %v486
          %507 = vmatprep.subr.bf16.mxu0 0
          %508 = vmatpush1.bf16.msra.mxu0 %v485
          %509 = vmatprep.subr.bf16.mxu0 0
          %510 = vmatpush1.bf16.msra.mxu0 %v484
          %511 = vmatprep.subr.bf16.mxu0 0
          %512 = vmatpush2.bf16.msra.mxu0 0
          %513 = vmatprep.subr.bf16.mxu0 0
          %514 = vmatpush2.bf16.msra.mxu0 0
          %515 = vmatprep.subr.bf16.mxu0 0
          %516 = vmatpush2.bf16.msra.mxu0 0
          %517 = vmatprep.subr.bf16.mxu0 0
          %518 = vmatpush2.bf16.msra.mxu0 0
          %519 = vmatprep.subr.bf16.mxu0 0
          %520 = vmatpush2.bf16.msra.mxu0 0
          %521 = vmatprep.subr.bf16.mxu0 0
          %522 = vmatpush2.bf16.msra.mxu0 0
          %523 = vmatprep.subr.bf16.mxu0 0
          %524 = vmatpush2.bf16.msra.mxu0 0
          %525 = vmatprep.subr.bf16.mxu0 0
          %526 = vmatpush2.bf16.msra.mxu0 0
          %527 = vmatprep.mubr.bf16.mxu0 0
          %528 = vmatmul.mubr.bf16.gmra.mxu0 %v493
          %v529 = vpop.f32.mrf.mxu0
          %v530 = vadd.f32 0.0, %v529
          %v531 = vpop.f32.mrf.mxu0
          %v532 = vpop.f32.mrf.mxu0
          %v533 = vpop.f32.mrf.mxu0
          %534 = vdwg.mxu0
          %v535 = vadd.f32 %v453, %v530
          %s536 = sadd.s32 %s273, 1
          %s537 = smul.addr %s536, 4
          %s538 = scalar_lea.vmem %s257, %s537
          %v539 = vld [vmem:[%s538] sm:$0x3]
          %s540 = scalar_lea.vmem %s1, 96
          %v541 = vld [vmem:[%s540] sm:$0xf]
          %v542 = vld [vmem:[%s540 + $0x4] sm:$0xf]
          %v543 = vld [vmem:[%s540 + $0x8] sm:$0xf]
          %v544 = vld [vmem:[%s540 + $0xc] sm:$0xf]
          %v545 = vld [vmem:[%s540 + $0x10] sm:$0xf]
          %v546 = vld [vmem:[%s540 + $0x14] sm:$0xf]
          %v547 = vld [vmem:[%s540 + $0x18] sm:$0xf]
          %v548 = vld [vmem:[%s540 + $0x1c] sm:$0xf]
          %v557 = vunpack.c.l.b16 %v541
          %v558 = vunpack.c.l.b16 %v542
          %v559 = vunpack.c.l.b16 %v543
          %v560 = vunpack.c.l.b16 %v544
          %v561 = vunpack.c.l.b16 %v545
          %v562 = vunpack.c.l.b16 %v546
          %v563 = vunpack.c.l.b16 %v547
          %v564 = vunpack.c.l.b16 %v548
          %v565 = vpack.c.b16 %v558, %v557
          %v566 = vpack.c.b16 %v560, %v559
          %v567 = vpack.c.b16 %v562, %v561
          %v568 = vpack.c.b16 %v564, %v563
          %v574 = vsel %vm321, %v539, 0
          %576 = vmatprep.subr.bf16.mxu0 0
          %577 = vmatpush1.bf16.msra.mxu0 0
          %578 = vmatprep.subr.bf16.mxu0 0
          %579 = vmatpush1.bf16.msra.mxu0 0
          %580 = vmatprep.subr.bf16.mxu0 0
          %581 = vmatpush1.bf16.msra.mxu0 0
          %582 = vmatprep.subr.bf16.mxu0 0
          %583 = vmatpush1.bf16.msra.mxu0 0
          %584 = vmatprep.subr.bf16.mxu0 0
          %585 = vmatpush1.bf16.msra.mxu0 %v568
          %586 = vmatprep.subr.bf16.mxu0 0
          %587 = vmatpush1.bf16.msra.mxu0 %v567
          %588 = vmatprep.subr.bf16.mxu0 0
          %589 = vmatpush1.bf16.msra.mxu0 %v566
          %590 = vmatprep.subr.bf16.mxu0 0
          %591 = vmatpush1.bf16.msra.mxu0 %v565
          %592 = vmatprep.subr.bf16.mxu0 0
          %593 = vmatpush2.bf16.msra.mxu0 0
          %594 = vmatprep.subr.bf16.mxu0 0
          %595 = vmatpush2.bf16.msra.mxu0 0
          %596 = vmatprep.subr.bf16.mxu0 0
          %597 = vmatpush2.bf16.msra.mxu0 0
          %598 = vmatprep.subr.bf16.mxu0 0
          %599 = vmatpush2.bf16.msra.mxu0 0
          %600 = vmatprep.subr.bf16.mxu0 0
          %601 = vmatpush2.bf16.msra.mxu0 0
          %602 = vmatprep.subr.bf16.mxu0 0
          %603 = vmatpush2.bf16.msra.mxu0 0
          %604 = vmatprep.subr.bf16.mxu0 0
          %605 = vmatpush2.bf16.msra.mxu0 0
          %606 = vmatprep.subr.bf16.mxu0 0
          %607 = vmatpush2.bf16.msra.mxu0 0
          %608 = vmatprep.mubr.bf16.mxu0 0
          %609 = vmatmul.mubr.bf16.gmra.mxu0 %v574
          %v610 = vpop.f32.mrf.mxu0
          %v611 = vadd.f32 0.0, %v610
          %v612 = vpop.f32.mrf.mxu0
          %v613 = vpop.f32.mrf.mxu0
          %v614 = vpop.f32.mrf.mxu0
          %615 = vdwg.mxu0
          %v616 = vadd.f32 %v535, %v611
          %v617 = vld [vmem:[%s538] sm:$0x7]
          %s618 = scalar_lea.vmem %s1, 128
          %v619 = vld [vmem:[%s618] sm:$0xf]
          %v620 = vld [vmem:[%s618 + $0x4] sm:$0xf]
          %v621 = vld [vmem:[%s618 + $0x8] sm:$0xf]
          %v622 = vld [vmem:[%s618 + $0xc] sm:$0xf]
          %v623 = vld [vmem:[%s618 + $0x10] sm:$0xf]
          %v624 = vld [vmem:[%s618 + $0x14] sm:$0xf]
          %v625 = vld [vmem:[%s618 + $0x18] sm:$0xf]
          %v626 = vld [vmem:[%s618 + $0x1c] sm:$0xf]
          %v628 = vunpack.c.l.b16 %v617
          %v629 = vpack.c.b16 %v628, %v628
          %v631 = vshrl.u32 %v629, 16
          %v633 = vshll.u32 %v629, 16
          %v635 = vrot.slane %v633, 1
          %v636 = vor.u32 %v631, %v635
          %v645 = vunpack.c.l.b16 %v619
          %v646 = vunpack.c.l.b16 %v620
          %v647 = vunpack.c.l.b16 %v621
          %v648 = vunpack.c.l.b16 %v622
          %v649 = vunpack.c.l.b16 %v623
          %v650 = vunpack.c.l.b16 %v624
          %v651 = vunpack.c.l.b16 %v625
          %v652 = vunpack.c.l.b16 %v626
          %v653 = vpack.c.b16 %v646, %v645
          %v654 = vpack.c.b16 %v648, %v647
          %v655 = vpack.c.b16 %v650, %v649
          %v656 = vpack.c.b16 %v652, %v651
          %v662 = vsel %vm321, %v636, 0
          %664 = vmatprep.subr.bf16.mxu0 0
          %665 = vmatpush1.bf16.msra.mxu0 0
          %666 = vmatprep.subr.bf16.mxu0 0
          %667 = vmatpush1.bf16.msra.mxu0 0
          %668 = vmatprep.subr.bf16.mxu0 0
          %669 = vmatpush1.bf16.msra.mxu0 0
          %670 = vmatprep.subr.bf16.mxu0 0
          %671 = vmatpush1.bf16.msra.mxu0 0
          %672 = vmatprep.subr.bf16.mxu0 0
          %673 = vmatpush1.bf16.msra.mxu0 %v656
          %674 = vmatprep.subr.bf16.mxu0 0
          %675 = vmatpush1.bf16.msra.mxu0 %v655
          %676 = vmatprep.subr.bf16.mxu0 0
          %677 = vmatpush1.bf16.msra.mxu0 %v654
          %678 = vmatprep.subr.bf16.mxu0 0
          %679 = vmatpush1.bf16.msra.mxu0 %v653
          %680 = vmatprep.subr.bf16.mxu0 0
          %681 = vmatpush2.bf16.msra.mxu0 0
          %682 = vmatprep.subr.bf16.mxu0 0
          %683 = vmatpush2.bf16.msra.mxu0 0
          %684 = vmatprep.subr.bf16.mxu0 0
          %685 = vmatpush2.bf16.msra.mxu0 0
          %686 = vmatprep.subr.bf16.mxu0 0
          %687 = vmatpush2.bf16.msra.mxu0 0
          %688 = vmatprep.subr.bf16.mxu0 0
          %689 = vmatpush2.bf16.msra.mxu0 0
          %690 = vmatprep.subr.bf16.mxu0 0
          %691 = vmatpush2.bf16.msra.mxu0 0
          %692 = vmatprep.subr.bf16.mxu0 0
          %693 = vmatpush2.bf16.msra.mxu0 0
          %694 = vmatprep.subr.bf16.mxu0 0
          %695 = vmatpush2.bf16.msra.mxu0 0
          %696 = vmatprep.mubr.bf16.mxu0 0
          %697 = vmatmul.mubr.bf16.gmra.mxu0 %v662
          %v698 = vpop.f32.mrf.mxu0
          %v699 = vadd.f32 0.0, %v698
          %v700 = vpop.f32.mrf.mxu0
          %v701 = vpop.f32.mrf.mxu0
          %v702 = vpop.f32.mrf.mxu0
          %703 = vdwg.mxu0
          %v704 = vadd.f32 %v616, %v699
          %v705 = vld [vmem:[%s538] sm:$0x6]
          %s706 = scalar_lea.vmem %s1, 160
          %v707 = vld [vmem:[%s706] sm:$0xf]
          %v708 = vld [vmem:[%s706 + $0x4] sm:$0xf]
          %v709 = vld [vmem:[%s706 + $0x8] sm:$0xf]
          %v710 = vld [vmem:[%s706 + $0xc] sm:$0xf]
          %v711 = vld [vmem:[%s706 + $0x10] sm:$0xf]
          %v712 = vld [vmem:[%s706 + $0x14] sm:$0xf]
          %v713 = vld [vmem:[%s706 + $0x18] sm:$0xf]
          %v714 = vld [vmem:[%s706 + $0x1c] sm:$0xf]
          %v716 = vunpack.c.l.b16 %v705
          %v717 = vpack.c.b16 %v716, %v716
          %v718 = vrot.slane %v717, 1
          %v727 = vunpack.c.l.b16 %v707
          %v728 = vunpack.c.l.b16 %v708
          %v729 = vunpack.c.l.b16 %v709
          %v730 = vunpack.c.l.b16 %v710
          %v731 = vunpack.c.l.b16 %v711
          %v732 = vunpack.c.l.b16 %v712
          %v733 = vunpack.c.l.b16 %v713
          %v734 = vunpack.c.l.b16 %v714
          %v735 = vpack.c.b16 %v728, %v727
          %v736 = vpack.c.b16 %v730, %v729
          %v737 = vpack.c.b16 %v732, %v731
          %v738 = vpack.c.b16 %v734, %v733
          %v744 = vsel %vm321, %v718, 0
          %746 = vmatprep.subr.bf16.mxu0 0
          %747 = vmatpush1.bf16.msra.mxu0 0
          %748 = vmatprep.subr.bf16.mxu0 0
          %749 = vmatpush1.bf16.msra.mxu0 0
          %750 = vmatprep.subr.bf16.mxu0 0
          %751 = vmatpush1.bf16.msra.mxu0 0
          %752 = vmatprep.subr.bf16.mxu0 0
          %753 = vmatpush1.bf16.msra.mxu0 0
          %754 = vmatprep.subr.bf16.mxu0 0
          %755 = vmatpush1.bf16.msra.mxu0 %v738
          %756 = vmatprep.subr.bf16.mxu0 0
          %757 = vmatpush1.bf16.msra.mxu0 %v737
          %758 = vmatprep.subr.bf16.mxu0 0
          %759 = vmatpush1.bf16.msra.mxu0 %v736
          %760 = vmatprep.subr.bf16.mxu0 0
          %761 = vmatpush1.bf16.msra.mxu0 %v735
          %762 = vmatprep.subr.bf16.mxu0 0
          %763 = vmatpush2.bf16.msra.mxu0 0
          %764 = vmatprep.subr.bf16.mxu0 0
          %765 = vmatpush2.bf16.msra.mxu0 0
          %766 = vmatprep.subr.bf16.mxu0 0
          %767 = vmatpush2.bf16.msra.mxu0 0
          %768 = vmatprep.subr.bf16.mxu0 0
          %769 = vmatpush2.bf16.msra.mxu0 0
          %770 = vmatprep.subr.bf16.mxu0 0
          %771 = vmatpush2.bf16.msra.mxu0 0
          %772 = vmatprep.subr.bf16.mxu0 0
          %773 = vmatpush2.bf16.msra.mxu0 0
          %774 = vmatprep.subr.bf16.mxu0 0
          %775 = vmatpush2.bf16.msra.mxu0 0
          %776 = vmatprep.subr.bf16.mxu0 0
          %777 = vmatpush2.bf16.msra.mxu0 0
          %778 = vmatprep.mubr.bf16.mxu0 0
          %779 = vmatmul.mubr.bf16.gmra.mxu0 %v744
          %v780 = vpop.f32.mrf.mxu0
          %v781 = vadd.f32 0.0, %v780
          %v782 = vpop.f32.mrf.mxu0
          %v783 = vpop.f32.mrf.mxu0
          %v784 = vpop.f32.mrf.mxu0
          %785 = vdwg.mxu0
          %v786 = vadd.f32 %v704, %v781
          %s787 = sadd.s32 %s273, 2
          %s788 = smul.addr %s787, 4
          %s789 = scalar_lea.vmem %s257, %s788
          %v790 = vld [vmem:[%s789] sm:$0x3]
          %s791 = scalar_lea.vmem %s1, 192
          %v792 = vld [vmem:[%s791] sm:$0xf]
          %v793 = vld [vmem:[%s791 + $0x4] sm:$0xf]
          %v794 = vld [vmem:[%s791 + $0x8] sm:$0xf]
          %v795 = vld [vmem:[%s791 + $0xc] sm:$0xf]
          %v796 = vld [vmem:[%s791 + $0x10] sm:$0xf]
          %v797 = vld [vmem:[%s791 + $0x14] sm:$0xf]
          %v798 = vld [vmem:[%s791 + $0x18] sm:$0xf]
          %v799 = vld [vmem:[%s791 + $0x1c] sm:$0xf]
          %v808 = vunpack.c.l.b16 %v792
          %v809 = vunpack.c.l.b16 %v793
          %v810 = vunpack.c.l.b16 %v794
          %v811 = vunpack.c.l.b16 %v795
          %v812 = vunpack.c.l.b16 %v796
          %v813 = vunpack.c.l.b16 %v797
          %v814 = vunpack.c.l.b16 %v798
          %v815 = vunpack.c.l.b16 %v799
          %v816 = vpack.c.b16 %v809, %v808
          %v817 = vpack.c.b16 %v811, %v810
          %v818 = vpack.c.b16 %v813, %v812
          %v819 = vpack.c.b16 %v815, %v814
          %v825 = vsel %vm321, %v790, 0
          %827 = vmatprep.subr.bf16.mxu0 0
          %828 = vmatpush1.bf16.msra.mxu0 0
          %829 = vmatprep.subr.bf16.mxu0 0
          %830 = vmatpush1.bf16.msra.mxu0 0
          %831 = vmatprep.subr.bf16.mxu0 0
          %832 = vmatpush1.bf16.msra.mxu0 0
          %833 = vmatprep.subr.bf16.mxu0 0
          %834 = vmatpush1.bf16.msra.mxu0 0
          %835 = vmatprep.subr.bf16.mxu0 0
          %836 = vmatpush1.bf16.msra.mxu0 %v819
          %837 = vmatprep.subr.bf16.mxu0 0
          %838 = vmatpush1.bf16.msra.mxu0 %v818
          %839 = vmatprep.subr.bf16.mxu0 0
          %840 = vmatpush1.bf16.msra.mxu0 %v817
          %841 = vmatprep.subr.bf16.mxu0 0
          %842 = vmatpush1.bf16.msra.mxu0 %v816
          %843 = vmatprep.subr.bf16.mxu0 0
          %844 = vmatpush2.bf16.msra.mxu0 0
          %845 = vmatprep.subr.bf16.mxu0 0
          %846 = vmatpush2.bf16.msra.mxu0 0
          %847 = vmatprep.subr.bf16.mxu0 0
          %848 = vmatpush2.bf16.msra.mxu0 0
          %849 = vmatprep.subr.bf16.mxu0 0
          %850 = vmatpush2.bf16.msra.mxu0 0
          %851 = vmatprep.subr.bf16.mxu0 0
          %852 = vmatpush2.bf16.msra.mxu0 0
          %853 = vmatprep.subr.bf16.mxu0 0
          %854 = vmatpush2.bf16.msra.mxu0 0
          %855 = vmatprep.subr.bf16.mxu0 0
          %856 = vmatpush2.bf16.msra.mxu0 0
          %857 = vmatprep.subr.bf16.mxu0 0
          %858 = vmatpush2.bf16.msra.mxu0 0
          %859 = vmatprep.mubr.bf16.mxu0 0
          %860 = vmatmul.mubr.bf16.gmra.mxu0 %v825
          %v861 = vpop.f32.mrf.mxu0
          %v862 = vadd.f32 0.0, %v861
          %v863 = vpop.f32.mrf.mxu0
          %v864 = vpop.f32.mrf.mxu0
          %v865 = vpop.f32.mrf.mxu0
          %866 = vdwg.mxu0
          %v867 = vadd.f32 %v786, %v862
          %v868 = vld [vmem:[%s789] sm:$0x7]
          %s869 = scalar_lea.vmem %s1, 224
          %v870 = vld [vmem:[%s869] sm:$0xf]
          %v871 = vld [vmem:[%s869 + $0x4] sm:$0xf]
          %v872 = vld [vmem:[%s869 + $0x8] sm:$0xf]
          %v873 = vld [vmem:[%s869 + $0xc] sm:$0xf]
          %v874 = vld [vmem:[%s869 + $0x10] sm:$0xf]
          %v875 = vld [vmem:[%s869 + $0x14] sm:$0xf]
          %v876 = vld [vmem:[%s869 + $0x18] sm:$0xf]
          %v877 = vld [vmem:[%s869 + $0x1c] sm:$0xf]
          %v879 = vunpack.c.l.b16 %v868
          %v880 = vpack.c.b16 %v879, %v879
          %v882 = vshrl.u32 %v880, 16
          %v884 = vshll.u32 %v880, 16
          %v886 = vrot.slane %v884, 1
          %v887 = vor.u32 %v882, %v886
          %v896 = vunpack.c.l.b16 %v870
          %v897 = vunpack.c.l.b16 %v871
          %v898 = vunpack.c.l.b16 %v872
          %v899 = vunpack.c.l.b16 %v873
          %v900 = vunpack.c.l.b16 %v874
          %v901 = vunpack.c.l.b16 %v875
          %v902 = vunpack.c.l.b16 %v876
          %v903 = vunpack.c.l.b16 %v877
          %v904 = vpack.c.b16 %v897, %v896
          %v905 = vpack.c.b16 %v899, %v898
          %v906 = vpack.c.b16 %v901, %v900
          %v907 = vpack.c.b16 %v903, %v902
          %v913 = vsel %vm321, %v887, 0
          %915 = vmatprep.subr.bf16.mxu0 0
          %916 = vmatpush1.bf16.msra.mxu0 0
          %917 = vmatprep.subr.bf16.mxu0 0
          %918 = vmatpush1.bf16.msra.mxu0 0
          %919 = vmatprep.subr.bf16.mxu0 0
          %920 = vmatpush1.bf16.msra.mxu0 0
          %921 = vmatprep.subr.bf16.mxu0 0
          %922 = vmatpush1.bf16.msra.mxu0 0
          %923 = vmatprep.subr.bf16.mxu0 0
          %924 = vmatpush1.bf16.msra.mxu0 %v907
          %925 = vmatprep.subr.bf16.mxu0 0
          %926 = vmatpush1.bf16.msra.mxu0 %v906
          %927 = vmatprep.subr.bf16.mxu0 0
          %928 = vmatpush1.bf16.msra.mxu0 %v905
          %929 = vmatprep.subr.bf16.mxu0 0
          %930 = vmatpush1.bf16.msra.mxu0 %v904
          %931 = vmatprep.subr.bf16.mxu0 0
          %932 = vmatpush2.bf16.msra.mxu0 0
          %933 = vmatprep.subr.bf16.mxu0 0
          %934 = vmatpush2.bf16.msra.mxu0 0
          %935 = vmatprep.subr.bf16.mxu0 0
          %936 = vmatpush2.bf16.msra.mxu0 0
          %937 = vmatprep.subr.bf16.mxu0 0
          %938 = vmatpush2.bf16.msra.mxu0 0
          %939 = vmatprep.subr.bf16.mxu0 0
          %940 = vmatpush2.bf16.msra.mxu0 0
          %941 = vmatprep.subr.bf16.mxu0 0
          %942 = vmatpush2.bf16.msra.mxu0 0
          %943 = vmatprep.subr.bf16.mxu0 0
          %944 = vmatpush2.bf16.msra.mxu0 0
          %945 = vmatprep.subr.bf16.mxu0 0
          %946 = vmatpush2.bf16.msra.mxu0 0
          %947 = vmatprep.mubr.bf16.mxu0 0
          %948 = vmatmul.mubr.bf16.gmra.mxu0 %v913
          %v949 = vpop.f32.mrf.mxu0
          %v950 = vadd.f32 0.0, %v949
          %v951 = vpop.f32.mrf.mxu0
          %v952 = vpop.f32.mrf.mxu0
          %v953 = vpop.f32.mrf.mxu0
          %954 = vdwg.mxu0
          %v955 = vadd.f32 %v867, %v950
          %v956 = vld [vmem:[%s789] sm:$0x6]
          %s957 = scalar_lea.vmem %s1, 256
          %v958 = vld [vmem:[%s957] sm:$0xf]
          %v959 = vld [vmem:[%s957 + $0x4] sm:$0xf]
          %v960 = vld [vmem:[%s957 + $0x8] sm:$0xf]
          %v961 = vld [vmem:[%s957 + $0xc] sm:$0xf]
          %v962 = vld [vmem:[%s957 + $0x10] sm:$0xf]
          %v963 = vld [vmem:[%s957 + $0x14] sm:$0xf]
          %v964 = vld [vmem:[%s957 + $0x18] sm:$0xf]
          %v965 = vld [vmem:[%s957 + $0x1c] sm:$0xf]
          %v967 = vunpack.c.l.b16 %v956
          %v968 = vpack.c.b16 %v967, %v967
          %v969 = vrot.slane %v968, 1
          %v978 = vunpack.c.l.b16 %v958
          %v979 = vunpack.c.l.b16 %v959
          %v980 = vunpack.c.l.b16 %v960
          %v981 = vunpack.c.l.b16 %v961
          %v982 = vunpack.c.l.b16 %v962
          %v983 = vunpack.c.l.b16 %v963
          %v984 = vunpack.c.l.b16 %v964
          %v985 = vunpack.c.l.b16 %v965
          %v986 = vpack.c.b16 %v979, %v978
          %v987 = vpack.c.b16 %v981, %v980
          %v988 = vpack.c.b16 %v983, %v982
          %v989 = vpack.c.b16 %v985, %v984
          %v995 = vsel %vm321, %v969, 0
          %997 = vmatprep.subr.bf16.mxu0 0
          %998 = vmatpush1.bf16.msra.mxu0 0
          %999 = vmatprep.subr.bf16.mxu0 0
          %1000 = vmatpush1.bf16.msra.mxu0 0
          %1001 = vmatprep.subr.bf16.mxu0 0
          %1002 = vmatpush1.bf16.msra.mxu0 0
          %1003 = vmatprep.subr.bf16.mxu0 0
          %1004 = vmatpush1.bf16.msra.mxu0 0
          %1005 = vmatprep.subr.bf16.mxu0 0
          %1006 = vmatpush1.bf16.msra.mxu0 %v989
          %1007 = vmatprep.subr.bf16.mxu0 0
          %1008 = vmatpush1.bf16.msra.mxu0 %v988
          %1009 = vmatprep.subr.bf16.mxu0 0
          %1010 = vmatpush1.bf16.msra.mxu0 %v987
          %1011 = vmatprep.subr.bf16.mxu0 0
          %1012 = vmatpush1.bf16.msra.mxu0 %v986
          %1013 = vmatprep.subr.bf16.mxu0 0
          %1014 = vmatpush2.bf16.msra.mxu0 0
          %1015 = vmatprep.subr.bf16.mxu0 0
          %1016 = vmatpush2.bf16.msra.mxu0 0
          %1017 = vmatprep.subr.bf16.mxu0 0
          %1018 = vmatpush2.bf16.msra.mxu0 0
          %1019 = vmatprep.subr.bf16.mxu0 0
          %1020 = vmatpush2.bf16.msra.mxu0 0
          %1021 = vmatprep.subr.bf16.mxu0 0
          %1022 = vmatpush2.bf16.msra.mxu0 0
          %1023 = vmatprep.subr.bf16.mxu0 0
          %1024 = vmatpush2.bf16.msra.mxu0 0
          %1025 = vmatprep.subr.bf16.mxu0 0
          %1026 = vmatpush2.bf16.msra.mxu0 0
          %1027 = vmatprep.subr.bf16.mxu0 0
          %1028 = vmatpush2.bf16.msra.mxu0 0
          %1029 = vmatprep.mubr.bf16.mxu0 0
          %1030 = vmatmul.mubr.bf16.gmra.mxu0 %v995
          %v1031 = vpop.f32.mrf.mxu0
          %v1032 = vadd.f32 0.0, %v1031
          %v1033 = vpop.f32.mrf.mxu0
          %v1034 = vpop.f32.mrf.mxu0
          %v1035 = vpop.f32.mrf.mxu0
          %1036 = vdwg.mxu0
          %v1037 = vadd.f32 %v955, %v1032
          %v1038 = vmax.f32 %v1037, 0.0
          %v1039 = vpack.c.bf16 %v1038, %v1038
          %v1041 = vshrl.u32 %v1039, 16
          %v1043 = vrot.slane %v1041, 7
          %v1044 = vshll.u32 %v1039, 16
          %v1046 = vor.u32 %v1043, %v1044
          %vm1048 = vcmask 1040384
          %vm1049 = vsmask.f32 256
          %vm1050 = vmand %vm1048, %vm1049
          %v1051 = vsel %vm1050, 0, %v1046
          %vm1052 = vcmask 1042432
          %vm1053 = vsmask.f32 2304
          %vm1054 = vmand %vm1052, %vm1053
          %v1055 = vsel %vm1054, %v1051, 0
          %s1056 = smul.addr %s536, 4
          %s1057 = scalar_lea.vmem [#allocation2], %s1056
          %1058 = vst.msk [vmem:[%s1057] sm:$0x7] %vm264, %v1055
        $region45: #{rpnv2_forward.10} parent=39 // loop_footer
          %s277 = sadd.s32 1, %s273
        $region46: #{rpnv2_forward.10} parent=39 // loop_footer_branch
          %272 = sbr.rel target = $region42
        $region47: #{rpnv2_forward.10} parent=39 // loop_exit
          _
        loop: start=0, step=1, limit=4
        $region48: #{rpnv2_forward.10} parent=39 // loop_pre_header
          _
        $region49: #{rpnv2_forward.10} parent=39 // loop_header
          %s1060 = sphi 0, %s1064
          %p1061 = scmp.ge.s32.totalorder %s1060, 4
        $region50: #{rpnv2_forward.10} parent=39 // loop_header_branch
          %1063 = sbr.rel (%p1061) target = $region54
        $region51: #{rpnv2_forward.10} parent=39 // loop_body
          %s1065 = scalar_lea.vmem %s2, 1
          %v1066 = vld [vmem:[%s1065] sm:$0x1]
          %v1068 = vlaneseq
          %v1069 = vshrl.u32 %v1068, 7
          %v1070 = vsub.s32 0, %v1069
          %v1071 = vrot.slane %v1066, %v1070
          %v1073 = vadd.f32 %v1071, 0.0
          %s1074 = smul.addr %s1060, 4
          %s1075 = scalar_lea.vmem [#allocation2], %s1074
          %v1076 = vld [vmem:[%s1075] sm:$0x3]
          %s1077 = scalar_lea.vmem %s1, 288
          %v1078 = vld [vmem:[%s1077] sm:$0xf]
          %v1079 = vld [vmem:[%s1077 + $0x4] sm:$0xf]
          %v1080 = vld [vmem:[%s1077 + $0x8] sm:$0xf]
          %v1081 = vld [vmem:[%s1077 + $0xc] sm:$0xf]
          %v1082 = vld [vmem:[%s1077 + $0x10] sm:$0xf]
          %v1083 = vld [vmem:[%s1077 + $0x14] sm:$0xf]
          %v1084 = vld [vmem:[%s1077 + $0x18] sm:$0xf]
          %v1085 = vld [vmem:[%s1077 + $0x1c] sm:$0xf]
          %v1094 = vunpack.c.l.b16 %v1078
          %v1095 = vunpack.c.l.b16 %v1079
          %v1096 = vunpack.c.l.b16 %v1080
          %v1097 = vunpack.c.l.b16 %v1081
          %v1098 = vunpack.c.l.b16 %v1082
          %v1099 = vunpack.c.l.b16 %v1083
          %v1100 = vunpack.c.l.b16 %v1084
          %v1101 = vunpack.c.l.b16 %v1085
          %v1102 = vpack.c.b16 %v1095, %v1094
          %v1103 = vpack.c.b16 %v1097, %v1096
          %v1104 = vpack.c.b16 %v1099, %v1098
          %v1105 = vpack.c.b16 %v1101, %v1100
          %vm1110 = vcmask 523264
          %v1112 = vsel %vm1110, %v1076, 0
          %1114 = vmatprep.subr.bf16.mxu0 0
          %1115 = vmatpush1.bf16.msra.mxu0 0
          %1116 = vmatprep.subr.bf16.mxu0 0
          %1117 = vmatpush1.bf16.msra.mxu0 0
          %1118 = vmatprep.subr.bf16.mxu0 0
          %1119 = vmatpush1.bf16.msra.mxu0 0
          %1120 = vmatprep.subr.bf16.mxu0 0
          %1121 = vmatpush1.bf16.msra.mxu0 0
          %1122 = vmatprep.subr.bf16.mxu0 0
          %1123 = vmatpush1.bf16.msra.mxu0 %v1105
          %1124 = vmatprep.subr.bf16.mxu0 0
          %1125 = vmatpush1.bf16.msra.mxu0 %v1104
          %1126 = vmatprep.subr.bf16.mxu0 0
          %1127 = vmatpush1.bf16.msra.mxu0 %v1103
          %1128 = vmatprep.subr.bf16.mxu0 0
          %1129 = vmatpush1.bf16.msra.mxu0 %v1102
          %1130 = vmatprep.subr.bf16.mxu0 0
          %1131 = vmatpush2.bf16.msra.mxu0 0
          %1132 = vmatprep.subr.bf16.mxu0 0
          %1133 = vmatpush2.bf16.msra.mxu0 0
          %1134 = vmatprep.subr.bf16.mxu0 0
          %1135 = vmatpush2.bf16.msra.mxu0 0
          %1136 = vmatprep.subr.bf16.mxu0 0
          %1137 = vmatpush2.bf16.msra.mxu0 0
          %1138 = vmatprep.subr.bf16.mxu0 0
          %1139 = vmatpush2.bf16.msra.mxu0 0
          %1140 = vmatprep.subr.bf16.mxu0 0
          %1141 = vmatpush2.bf16.msra.mxu0 0
          %1142 = vmatprep.subr.bf16.mxu0 0
          %1143 = vmatpush2.bf16.msra.mxu0 0
          %1144 = vmatprep.subr.bf16.mxu0 0
          %1145 = vmatpush2.bf16.msra.mxu0 0
          %1146 = vmatprep.mubr.bf16.mxu0 0
          %1147 = vmatmul.mubr.bf16.gmra.mxu0 %v1112
          %v1148 = vpop.f32.mrf.mxu0
          %v1149 = vadd.f32 0.0, %v1148
          %v1150 = vpop.f32.mrf.mxu0
          %v1151 = vpop.f32.mrf.mxu0
          %v1152 = vpop.f32.mrf.mxu0
          %1153 = vdwg.mxu0
          %v1154 = vadd.f32 %v1073, %v1149
          %v1155 = vld [vmem:[%s1075] sm:$0x7]
          %s1156 = scalar_lea.vmem %s1, 320
          %v1157 = vld [vmem:[%s1156] sm:$0xf]
          %v1158 = vld [vmem:[%s1156 + $0x4] sm:$0xf]
          %v1159 = vld [vmem:[%s1156 + $0x8] sm:$0xf]
          %v1160 = vld [vmem:[%s1156 + $0xc] sm:$0xf]
          %v1161 = vld [vmem:[%s1156 + $0x10] sm:$0xf]
          %v1162 = vld [vmem:[%s1156 + $0x14] sm:$0xf]
          %v1163 = vld [vmem:[%s1156 + $0x18] sm:$0xf]
          %v1164 = vld [vmem:[%s1156 + $0x1c] sm:$0xf]
          %v1166 = vunpack.c.l.b16 %v1155
          %v1167 = vpack.c.b16 %v1166, %v1166
          %v1169 = vshrl.u32 %v1167, 16
          %v1171 = vshll.u32 %v1167, 16
          %v1173 = vrot.slane %v1171, 1
          %v1174 = vor.u32 %v1169, %v1173
          %v1183 = vunpack.c.l.b16 %v1157
          %v1184 = vunpack.c.l.b16 %v1158
          %v1185 = vunpack.c.l.b16 %v1159
          %v1186 = vunpack.c.l.b16 %v1160
          %v1187 = vunpack.c.l.b16 %v1161
          %v1188 = vunpack.c.l.b16 %v1162
          %v1189 = vunpack.c.l.b16 %v1163
          %v1190 = vunpack.c.l.b16 %v1164
          %v1191 = vpack.c.b16 %v1184, %v1183
          %v1192 = vpack.c.b16 %v1186, %v1185
          %v1193 = vpack.c.b16 %v1188, %v1187
          %v1194 = vpack.c.b16 %v1190, %v1189
          %v1200 = vsel %vm1110, %v1174, 0
          %1202 = vmatprep.subr.bf16.mxu0 0
          %1203 = vmatpush1.bf16.msra.mxu0 0
          %1204 = vmatprep.subr.bf16.mxu0 0
          %1205 = vmatpush1.bf16.msra.mxu0 0
          %1206 = vmatprep.subr.bf16.mxu0 0
          %1207 = vmatpush1.bf16.msra.mxu0 0
          %1208 = vmatprep.subr.bf16.mxu0 0
          %1209 = vmatpush1.bf16.msra.mxu0 0
          %1210 = vmatprep.subr.bf16.mxu0 0
          %1211 = vmatpush1.bf16.msra.mxu0 %v1194
          %1212 = vmatprep.subr.bf16.mxu0 0
          %1213 = vmatpush1.bf16.msra.mxu0 %v1193
          %1214 = vmatprep.subr.bf16.mxu0 0
          %1215 = vmatpush1.bf16.msra.mxu0 %v1192
          %1216 = vmatprep.subr.bf16.mxu0 0
          %1217 = vmatpush1.bf16.msra.mxu0 %v1191
          %1218 = vmatprep.subr.bf16.mxu0 0
          %1219 = vmatpush2.bf16.msra.mxu0 0
          %1220 = vmatprep.subr.bf16.mxu0 0
          %1221 = vmatpush2.bf16.msra.mxu0 0
          %1222 = vmatprep.subr.bf16.mxu0 0
          %1223 = vmatpush2.bf16.msra.mxu0 0
          %1224 = vmatprep.subr.bf16.mxu0 0
          %1225 = vmatpush2.bf16.msra.mxu0 0
          %1226 = vmatprep.subr.bf16.mxu0 0
          %1227 = vmatpush2.bf16.msra.mxu0 0
          %1228 = vmatprep.subr.bf16.mxu0 0
          %1229 = vmatpush2.bf16.msra.mxu0 0
          %1230 = vmatprep.subr.bf16.mxu0 0
          %1231 = vmatpush2.bf16.msra.mxu0 0
          %1232 = vmatprep.subr.bf16.mxu0 0
          %1233 = vmatpush2.bf16.msra.mxu0 0
          %1234 = vmatprep.mubr.bf16.mxu0 0
          %1235 = vmatmul.mubr.bf16.gmra.mxu0 %v1200
          %v1236 = vpop.f32.mrf.mxu0
          %v1237 = vadd.f32 0.0, %v1236
          %v1238 = vpop.f32.mrf.mxu0
          %v1239 = vpop.f32.mrf.mxu0
          %v1240 = vpop.f32.mrf.mxu0
          %1241 = vdwg.mxu0
          %v1242 = vadd.f32 %v1154, %v1237
          %v1243 = vld [vmem:[%s1075] sm:$0x6]
          %s1244 = scalar_lea.vmem %s1, 352
          %v1245 = vld [vmem:[%s1244] sm:$0xf]
          %v1246 = vld [vmem:[%s1244 + $0x4] sm:$0xf]
          %v1247 = vld [vmem:[%s1244 + $0x8] sm:$0xf]
          %v1248 = vld [vmem:[%s1244 + $0xc] sm:$0xf]
          %v1249 = vld [vmem:[%s1244 + $0x10] sm:$0xf]
          %v1250 = vld [vmem:[%s1244 + $0x14] sm:$0xf]
          %v1251 = vld [vmem:[%s1244 + $0x18] sm:$0xf]
          %v1252 = vld [vmem:[%s1244 + $0x1c] sm:$0xf]
          %v1254 = vunpack.c.l.b16 %v1243
          %v1255 = vpack.c.b16 %v1254, %v1254
          %v1256 = vrot.slane %v1255, 1
          %v1265 = vunpack.c.l.b16 %v1245
          %v1266 = vunpack.c.l.b16 %v1246
          %v1267 = vunpack.c.l.b16 %v1247
          %v1268 = vunpack.c.l.b16 %v1248
          %v1269 = vunpack.c.l.b16 %v1249
          %v1270 = vunpack.c.l.b16 %v1250
          %v1271 = vunpack.c.l.b16 %v1251
          %v1272 = vunpack.c.l.b16 %v1252
          %v1273 = vpack.c.b16 %v1266, %v1265
          %v1274 = vpack.c.b16 %v1268, %v1267
          %v1275 = vpack.c.b16 %v1270, %v1269
          %v1276 = vpack.c.b16 %v1272, %v1271
          %v1282 = vsel %vm1110, %v1256, 0
          %1284 = vmatprep.subr.bf16.mxu0 0
          %1285 = vmatpush1.bf16.msra.mxu0 0
          %1286 = vmatprep.subr.bf16.mxu0 0
          %1287 = vmatpush1.bf16.msra.mxu0 0
          %1288 = vmatprep.subr.bf16.mxu0 0
          %1289 = vmatpush1.bf16.msra.mxu0 0
          %1290 = vmatprep.subr.bf16.mxu0 0
          %1291 = vmatpush1.bf16.msra.mxu0 0
          %1292 = vmatprep.subr.bf16.mxu0 0
          %1293 = vmatpush1.bf16.msra.mxu0 %v1276
          %1294 = vmatprep.subr.bf16.mxu0 0
          %1295 = vmatpush1.bf16.msra.mxu0 %v1275
          %1296 = vmatprep.subr.bf16.mxu0 0
          %1297 = vmatpush1.bf16.msra.mxu0 %v1274
          %1298 = vmatprep.subr.bf16.mxu0 0
          %1299 = vmatpush1.bf16.msra.mxu0 %v1273
          %1300 = vmatprep.subr.bf16.mxu0 0
          %1301 = vmatpush2.bf16.msra.mxu0 0
          %1302 = vmatprep.subr.bf16.mxu0 0
          %1303 = vmatpush2.bf16.msra.mxu0 0
          %1304 = vmatprep.subr.bf16.mxu0 0
          %1305 = vmatpush2.bf16.msra.mxu0 0
          %1306 = vmatprep.subr.bf16.mxu0 0
          %1307 = vmatpush2.bf16.msra.mxu0 0
          %1308 = vmatprep.subr.bf16.mxu0 0
          %1309 = vmatpush2.bf16.msra.mxu0 0
          %1310 = vmatprep.subr.bf16.mxu0 0
          %1311 = vmatpush2.bf16.msra.mxu0 0
          %1312 = vmatprep.subr.bf16.mxu0 0
          %1313 = vmatpush2.bf16.msra.mxu0 0
          %1314 = vmatprep.subr.bf16.mxu0 0
          %1315 = vmatpush2.bf16.msra.mxu0 0
          %1316 = vmatprep.mubr.bf16.mxu0 0
          %1317 = vmatmul.mubr.bf16.gmra.mxu0 %v1282
          %v1318 = vpop.f32.mrf.mxu0
          %v1319 = vadd.f32 0.0, %v1318
          %v1320 = vpop.f32.mrf.mxu0
          %v1321 = vpop.f32.mrf.mxu0
          %v1322 = vpop.f32.mrf.mxu0
          %1323 = vdwg.mxu0
          %v1324 = vadd.f32 %v1242, %v1319
          %s1325 = sadd.s32 %s1060, 1
          %s1326 = smul.addr %s1325, 4
          %s1327 = scalar_lea.vmem [#allocation2], %s1326
          %v1328 = vld [vmem:[%s1327] sm:$0x3]
          %s1329 = scalar_lea.vmem %s1, 384
          %v1330 = vld [vmem:[%s1329] sm:$0xf]
          %v1331 = vld [vmem:[%s1329 + $0x4] sm:$0xf]
          %v1332 = vld [vmem:[%s1329 + $0x8] sm:$0xf]
          %v1333 = vld [vmem:[%s1329 + $0xc] sm:$0xf]
          %v1334 = vld [vmem:[%s1329 + $0x10] sm:$0xf]
          %v1335 = vld [vmem:[%s1329 + $0x14] sm:$0xf]
          %v1336 = vld [vmem:[%s1329 + $0x18] sm:$0xf]
          %v1337 = vld [vmem:[%s1329 + $0x1c] sm:$0xf]
          %v1346 = vunpack.c.l.b16 %v1330
          %v1347 = vunpack.c.l.b16 %v1331
          %v1348 = vunpack.c.l.b16 %v1332
          %v1349 = vunpack.c.l.b16 %v1333
          %v1350 = vunpack.c.l.b16 %v1334
          %v1351 = vunpack.c.l.b16 %v1335
          %v1352 = vunpack.c.l.b16 %v1336
          %v1353 = vunpack.c.l.b16 %v1337
          %v1354 = vpack.c.b16 %v1347, %v1346
          %v1355 = vpack.c.b16 %v1349, %v1348
          %v1356 = vpack.c.b16 %v1351, %v1350
          %v1357 = vpack.c.b16 %v1353, %v1352
          %v1363 = vsel %vm1110, %v1328, 0
          %1365 = vmatprep.subr.bf16.mxu0 0
          %1366 = vmatpush1.bf16.msra.mxu0 0
          %1367 = vmatprep.subr.bf16.mxu0 0
          %1368 = vmatpush1.bf16.msra.mxu0 0
          %1369 = vmatprep.subr.bf16.mxu0 0
          %1370 = vmatpush1.bf16.msra.mxu0 0
          %1371 = vmatprep.subr.bf16.mxu0 0
          %1372 = vmatpush1.bf16.msra.mxu0 0
          %1373 = vmatprep.subr.bf16.mxu0 0
          %1374 = vmatpush1.bf16.msra.mxu0 %v1357
          %1375 = vmatprep.subr.bf16.mxu0 0
          %1376 = vmatpush1.bf16.msra.mxu0 %v1356
          %1377 = vmatprep.subr.bf16.mxu0 0
          %1378 = vmatpush1.bf16.msra.mxu0 %v1355
          %1379 = vmatprep.subr.bf16.mxu0 0
          %1380 = vmatpush1.bf16.msra.mxu0 %v1354
          %1381 = vmatprep.subr.bf16.mxu0 0
          %1382 = vmatpush2.bf16.msra.mxu0 0
          %1383 = vmatprep.subr.bf16.mxu0 0
          %1384 = vmatpush2.bf16.msra.mxu0 0
          %1385 = vmatprep.subr.bf16.mxu0 0
          %1386 = vmatpush2.bf16.msra.mxu0 0
          %1387 = vmatprep.subr.bf16.mxu0 0
          %1388 = vmatpush2.bf16.msra.mxu0 0
          %1389 = vmatprep.subr.bf16.mxu0 0
          %1390 = vmatpush2.bf16.msra.mxu0 0
          %1391 = vmatprep.subr.bf16.mxu0 0
          %1392 = vmatpush2.bf16.msra.mxu0 0
          %1393 = vmatprep.subr.bf16.mxu0 0
          %1394 = vmatpush2.bf16.msra.mxu0 0
          %1395 = vmatprep.subr.bf16.mxu0 0
          %1396 = vmatpush2.bf16.msra.mxu0 0
          %1397 = vmatprep.mubr.bf16.mxu0 0
          %1398 = vmatmul.mubr.bf16.gmra.mxu0 %v1363
          %v1399 = vpop.f32.mrf.mxu0
          %v1400 = vadd.f32 0.0, %v1399
          %v1401 = vpop.f32.mrf.mxu0
          %v1402 = vpop.f32.mrf.mxu0
          %v1403 = vpop.f32.mrf.mxu0
          %1404 = vdwg.mxu0
          %v1405 = vadd.f32 %v1324, %v1400
          %v1406 = vld [vmem:[%s1327] sm:$0x7]
          %s1407 = scalar_lea.vmem %s1, 416
          %v1408 = vld [vmem:[%s1407] sm:$0xf]
          %v1409 = vld [vmem:[%s1407 + $0x4] sm:$0xf]
          %v1410 = vld [vmem:[%s1407 + $0x8] sm:$0xf]
          %v1411 = vld [vmem:[%s1407 + $0xc] sm:$0xf]
          %v1412 = vld [vmem:[%s1407 + $0x10] sm:$0xf]
          %v1413 = vld [vmem:[%s1407 + $0x14] sm:$0xf]
          %v1414 = vld [vmem:[%s1407 + $0x18] sm:$0xf]
          %v1415 = vld [vmem:[%s1407 + $0x1c] sm:$0xf]
          %v1417 = vunpack.c.l.b16 %v1406
          %v1418 = vpack.c.b16 %v1417, %v1417
          %v1420 = vshrl.u32 %v1418, 16
          %v1422 = vshll.u32 %v1418, 16
          %v1424 = vrot.slane %v1422, 1
          %v1425 = vor.u32 %v1420, %v1424
          %v1434 = vunpack.c.l.b16 %v1408
          %v1435 = vunpack.c.l.b16 %v1409
          %v1436 = vunpack.c.l.b16 %v1410
          %v1437 = vunpack.c.l.b16 %v1411
          %v1438 = vunpack.c.l.b16 %v1412
          %v1439 = vunpack.c.l.b16 %v1413
          %v1440 = vunpack.c.l.b16 %v1414
          %v1441 = vunpack.c.l.b16 %v1415
          %v1442 = vpack.c.b16 %v1435, %v1434
          %v1443 = vpack.c.b16 %v1437, %v1436
          %v1444 = vpack.c.b16 %v1439, %v1438
          %v1445 = vpack.c.b16 %v1441, %v1440
          %v1451 = vsel %vm1110, %v1425, 0
          %1453 = vmatprep.subr.bf16.mxu0 0
          %1454 = vmatpush1.bf16.msra.mxu0 0
          %1455 = vmatprep.subr.bf16.mxu0 0
          %1456 = vmatpush1.bf16.msra.mxu0 0
          %1457 = vmatprep.subr.bf16.mxu0 0
          %1458 = vmatpush1.bf16.msra.mxu0 0
          %1459 = vmatprep.subr.bf16.mxu0 0
          %1460 = vmatpush1.bf16.msra.mxu0 0
          %1461 = vmatprep.subr.bf16.mxu0 0
          %1462 = vmatpush1.bf16.msra.mxu0 %v1445
          %1463 = vmatprep.subr.bf16.mxu0 0
          %1464 = vmatpush1.bf16.msra.mxu0 %v1444
          %1465 = vmatprep.subr.bf16.mxu0 0
          %1466 = vmatpush1.bf16.msra.mxu0 %v1443
          %1467 = vmatprep.subr.bf16.mxu0 0
          %1468 = vmatpush1.bf16.msra.mxu0 %v1442
          %1469 = vmatprep.subr.bf16.mxu0 0
          %1470 = vmatpush2.bf16.msra.mxu0 0
          %1471 = vmatprep.subr.bf16.mxu0 0
          %1472 = vmatpush2.bf16.msra.mxu0 0
          %1473 = vmatprep.subr.bf16.mxu0 0
          %1474 = vmatpush2.bf16.msra.mxu0 0
          %1475 = vmatprep.subr.bf16.mxu0 0
          %1476 = vmatpush2.bf16.msra.mxu0 0
          %1477 = vmatprep.subr.bf16.mxu0 0
          %1478 = vmatpush2.bf16.msra.mxu0 0
          %1479 = vmatprep.subr.bf16.mxu0 0
          %1480 = vmatpush2.bf16.msra.mxu0 0
          %1481 = vmatprep.subr.bf16.mxu0 0
          %1482 = vmatpush2.bf16.msra.mxu0 0
          %1483 = vmatprep.subr.bf16.mxu0 0
          %1484 = vmatpush2.bf16.msra.mxu0 0
          %1485 = vmatprep.mubr.bf16.mxu0 0
          %1486 = vmatmul.mubr.bf16.gmra.mxu0 %v1451
          %v1487 = vpop.f32.mrf.mxu0
          %v1488 = vadd.f32 0.0, %v1487
          %v1489 = vpop.f32.mrf.mxu0
          %v1490 = vpop.f32.mrf.mxu0
          %v1491 = vpop.f32.mrf.mxu0
          %1492 = vdwg.mxu0
          %v1493 = vadd.f32 %v1405, %v1488
          %v1494 = vld [vmem:[%s1327] sm:$0x6]
          %s1495 = scalar_lea.vmem %s1, 448
          %v1496 = vld [vmem:[%s1495] sm:$0xf]
          %v1497 = vld [vmem:[%s1495 + $0x4] sm:$0xf]
          %v1498 = vld [vmem:[%s1495 + $0x8] sm:$0xf]
          %v1499 = vld [vmem:[%s1495 + $0xc] sm:$0xf]
          %v1500 = vld [vmem:[%s1495 + $0x10] sm:$0xf]
          %v1501 = vld [vmem:[%s1495 + $0x14] sm:$0xf]
          %v1502 = vld [vmem:[%s1495 + $0x18] sm:$0xf]
          %v1503 = vld [vmem:[%s1495 + $0x1c] sm:$0xf]
          %v1505 = vunpack.c.l.b16 %v1494
          %v1506 = vpack.c.b16 %v1505, %v1505
          %v1507 = vrot.slane %v1506, 1
          %v1516 = vunpack.c.l.b16 %v1496
          %v1517 = vunpack.c.l.b16 %v1497
          %v1518 = vunpack.c.l.b16 %v1498
          %v1519 = vunpack.c.l.b16 %v1499
          %v1520 = vunpack.c.l.b16 %v1500
          %v1521 = vunpack.c.l.b16 %v1501
          %v1522 = vunpack.c.l.b16 %v1502
          %v1523 = vunpack.c.l.b16 %v1503
          %v1524 = vpack.c.b16 %v1517, %v1516
          %v1525 = vpack.c.b16 %v1519, %v1518
          %v1526 = vpack.c.b16 %v1521, %v1520
          %v1527 = vpack.c.b16 %v1523, %v1522
          %v1533 = vsel %vm1110, %v1507, 0
          %1535 = vmatprep.subr.bf16.mxu0 0
          %1536 = vmatpush1.bf16.msra.mxu0 0
          %1537 = vmatprep.subr.bf16.mxu0 0
          %1538 = vmatpush1.bf16.msra.mxu0 0
          %1539 = vmatprep.subr.bf16.mxu0 0
          %1540 = vmatpush1.bf16.msra.mxu0 0
          %1541 = vmatprep.subr.bf16.mxu0 0
          %1542 = vmatpush1.bf16.msra.mxu0 0
          %1543 = vmatprep.subr.bf16.mxu0 0
          %1544 = vmatpush1.bf16.msra.mxu0 %v1527
          %1545 = vmatprep.subr.bf16.mxu0 0
          %1546 = vmatpush1.bf16.msra.mxu0 %v1526
          %1547 = vmatprep.subr.bf16.mxu0 0
          %1548 = vmatpush1.bf16.msra.mxu0 %v1525
          %1549 = vmatprep.subr.bf16.mxu0 0
          %1550 = vmatpush1.bf16.msra.mxu0 %v1524
          %1551 = vmatprep.subr.bf16.mxu0 0
          %1552 = vmatpush2.bf16.msra.mxu0 0
          %1553 = vmatprep.subr.bf16.mxu0 0
          %1554 = vmatpush2.bf16.msra.mxu0 0
          %1555 = vmatprep.subr.bf16.mxu0 0
          %1556 = vmatpush2.bf16.msra.mxu0 0
          %1557 = vmatprep.subr.bf16.mxu0 0
          %1558 = vmatpush2.bf16.msra.mxu0 0
          %1559 = vmatprep.subr.bf16.mxu0 0
          %1560 = vmatpush2.bf16.msra.mxu0 0
          %1561 = vmatprep.subr.bf16.mxu0 0
          %1562 = vmatpush2.bf16.msra.mxu0 0
          %1563 = vmatprep.subr.bf16.mxu0 0
          %1564 = vmatpush2.bf16.msra.mxu0 0
          %1565 = vmatprep.subr.bf16.mxu0 0
          %1566 = vmatpush2.bf16.msra.mxu0 0
          %1567 = vmatprep.mubr.bf16.mxu0 0
          %1568 = vmatmul.mubr.bf16.gmra.mxu0 %v1533
          %v1569 = vpop.f32.mrf.mxu0
          %v1570 = vadd.f32 0.0, %v1569
          %v1571 = vpop.f32.mrf.mxu0
          %v1572 = vpop.f32.mrf.mxu0
          %v1573 = vpop.f32.mrf.mxu0
          %1574 = vdwg.mxu0
          %v1575 = vadd.f32 %v1493, %v1570
          %s1576 = sadd.s32 %s1060, 2
          %s1577 = smul.addr %s1576, 4
          %s1578 = scalar_lea.vmem [#allocation2], %s1577
          %v1579 = vld [vmem:[%s1578] sm:$0x3]
          %s1580 = scalar_lea.vmem %s1, 480
          %v1581 = vld [vmem:[%s1580] sm:$0xf]
          %v1582 = vld [vmem:[%s1580 + $0x4] sm:$0xf]
          %v1583 = vld [vmem:[%s1580 + $0x8] sm:$0xf]
          %v1584 = vld [vmem:[%s1580 + $0xc] sm:$0xf]
          %v1585 = vld [vmem:[%s1580 + $0x10] sm:$0xf]
          %v1586 = vld [vmem:[%s1580 + $0x14] sm:$0xf]
          %v1587 = vld [vmem:[%s1580 + $0x18] sm:$0xf]
          %v1588 = vld [vmem:[%s1580 + $0x1c] sm:$0xf]
          %v1597 = vunpack.c.l.b16 %v1581
          %v1598 = vunpack.c.l.b16 %v1582
          %v1599 = vunpack.c.l.b16 %v1583
          %v1600 = vunpack.c.l.b16 %v1584
          %v1601 = vunpack.c.l.b16 %v1585
          %v1602 = vunpack.c.l.b16 %v1586
          %v1603 = vunpack.c.l.b16 %v1587
          %v1604 = vunpack.c.l.b16 %v1588
          %v1605 = vpack.c.b16 %v1598, %v1597
          %v1606 = vpack.c.b16 %v1600, %v1599
          %v1607 = vpack.c.b16 %v1602, %v1601
          %v1608 = vpack.c.b16 %v1604, %v1603
          %v1614 = vsel %vm1110, %v1579, 0
          %1616 = vmatprep.subr.bf16.mxu0 0
          %1617 = vmatpush1.bf16.msra.mxu0 0
          %1618 = vmatprep.subr.bf16.mxu0 0
          %1619 = vmatpush1.bf16.msra.mxu0 0
          %1620 = vmatprep.subr.bf16.mxu0 0
          %1621 = vmatpush1.bf16.msra.mxu0 0
          %1622 = vmatprep.subr.bf16.mxu0 0
          %1623 = vmatpush1.bf16.msra.mxu0 0
          %1624 = vmatprep.subr.bf16.mxu0 0
          %1625 = vmatpush1.bf16.msra.mxu0 %v1608
          %1626 = vmatprep.subr.bf16.mxu0 0
          %1627 = vmatpush1.bf16.msra.mxu0 %v1607
          %1628 = vmatprep.subr.bf16.mxu0 0
          %1629 = vmatpush1.bf16.msra.mxu0 %v1606
          %1630 = vmatprep.subr.bf16.mxu0 0
          %1631 = vmatpush1.bf16.msra.mxu0 %v1605
          %1632 = vmatprep.subr.bf16.mxu0 0
          %1633 = vmatpush2.bf16.msra.mxu0 0
          %1634 = vmatprep.subr.bf16.mxu0 0
          %1635 = vmatpush2.bf16.msra.mxu0 0
          %1636 = vmatprep.subr.bf16.mxu0 0
          %1637 = vmatpush2.bf16.msra.mxu0 0
          %1638 = vmatprep.subr.bf16.mxu0 0
          %1639 = vmatpush2.bf16.msra.mxu0 0
          %1640 = vmatprep.subr.bf16.mxu0 0
          %1641 = vmatpush2.bf16.msra.mxu0 0
          %1642 = vmatprep.subr.bf16.mxu0 0
          %1643 = vmatpush2.bf16.msra.mxu0 0
          %1644 = vmatprep.subr.bf16.mxu0 0
          %1645 = vmatpush2.bf16.msra.mxu0 0
          %1646 = vmatprep.subr.bf16.mxu0 0
          %1647 = vmatpush2.bf16.msra.mxu0 0
          %1648 = vmatprep.mubr.bf16.mxu0 0
          %1649 = vmatmul.mubr.bf16.gmra.mxu0 %v1614
          %v1650 = vpop.f32.mrf.mxu0
          %v1651 = vadd.f32 0.0, %v1650
          %v1652 = vpop.f32.mrf.mxu0
          %v1653 = vpop.f32.mrf.mxu0
          %v1654 = vpop.f32.mrf.mxu0
          %1655 = vdwg.mxu0
          %v1656 = vadd.f32 %v1575, %v1651
          %v1657 = vld [vmem:[%s1578] sm:$0x7]
          %s1658 = scalar_lea.vmem %s1, 512
          %v1659 = vld [vmem:[%s1658] sm:$0xf]
          %v1660 = vld [vmem:[%s1658 + $0x4] sm:$0xf]
          %v1661 = vld [vmem:[%s1658 + $0x8] sm:$0xf]
          %v1662 = vld [vmem:[%s1658 + $0xc] sm:$0xf]
          %v1663 = vld [vmem:[%s1658 + $0x10] sm:$0xf]
          %v1664 = vld [vmem:[%s1658 + $0x14] sm:$0xf]
          %v1665 = vld [vmem:[%s1658 + $0x18] sm:$0xf]
          %v1666 = vld [vmem:[%s1658 + $0x1c] sm:$0xf]
          %v1668 = vunpack.c.l.b16 %v1657
          %v1669 = vpack.c.b16 %v1668, %v1668
          %v1671 = vshrl.u32 %v1669, 16
          %v1673 = vshll.u32 %v1669, 16
          %v1675 = vrot.slane %v1673, 1
          %v1676 = vor.u32 %v1671, %v1675
          %v1685 = vunpack.c.l.b16 %v1659
          %v1686 = vunpack.c.l.b16 %v1660
          %v1687 = vunpack.c.l.b16 %v1661
          %v1688 = vunpack.c.l.b16 %v1662
          %v1689 = vunpack.c.l.b16 %v1663
          %v1690 = vunpack.c.l.b16 %v1664
          %v1691 = vunpack.c.l.b16 %v1665
          %v1692 = vunpack.c.l.b16 %v1666
          %v1693 = vpack.c.b16 %v1686, %v1685
          %v1694 = vpack.c.b16 %v1688, %v1687
          %v1695 = vpack.c.b16 %v1690, %v1689
          %v1696 = vpack.c.b16 %v1692, %v1691
          %v1702 = vsel %vm1110, %v1676, 0
          %1704 = vmatprep.subr.bf16.mxu0 0
          %1705 = vmatpush1.bf16.msra.mxu0 0
          %1706 = vmatprep.subr.bf16.mxu0 0
          %1707 = vmatpush1.bf16.msra.mxu0 0
          %1708 = vmatprep.subr.bf16.mxu0 0
          %1709 = vmatpush1.bf16.msra.mxu0 0
          %1710 = vmatprep.subr.bf16.mxu0 0
          %1711 = vmatpush1.bf16.msra.mxu0 0
          %1712 = vmatprep.subr.bf16.mxu0 0
          %1713 = vmatpush1.bf16.msra.mxu0 %v1696
          %1714 = vmatprep.subr.bf16.mxu0 0
          %1715 = vmatpush1.bf16.msra.mxu0 %v1695
          %1716 = vmatprep.subr.bf16.mxu0 0
          %1717 = vmatpush1.bf16.msra.mxu0 %v1694
          %1718 = vmatprep.subr.bf16.mxu0 0
          %1719 = vmatpush1.bf16.msra.mxu0 %v1693
          %1720 = vmatprep.subr.bf16.mxu0 0
          %1721 = vmatpush2.bf16.msra.mxu0 0
          %1722 = vmatprep.subr.bf16.mxu0 0
          %1723 = vmatpush2.bf16.msra.mxu0 0
          %1724 = vmatprep.subr.bf16.mxu0 0
          %1725 = vmatpush2.bf16.msra.mxu0 0
          %1726 = vmatprep.subr.bf16.mxu0 0
          %1727 = vmatpush2.bf16.msra.mxu0 0
          %1728 = vmatprep.subr.bf16.mxu0 0
          %1729 = vmatpush2.bf16.msra.mxu0 0
          %1730 = vmatprep.subr.bf16.mxu0 0
          %1731 = vmatpush2.bf16.msra.mxu0 0
          %1732 = vmatprep.subr.bf16.mxu0 0
          %1733 = vmatpush2.bf16.msra.mxu0 0
          %1734 = vmatprep.subr.bf16.mxu0 0
          %1735 = vmatpush2.bf16.msra.mxu0 0
          %1736 = vmatprep.mubr.bf16.mxu0 0
          %1737 = vmatmul.mubr.bf16.gmra.mxu0 %v1702
          %v1738 = vpop.f32.mrf.mxu0
          %v1739 = vadd.f32 0.0, %v1738
          %v1740 = vpop.f32.mrf.mxu0
          %v1741 = vpop.f32.mrf.mxu0
          %v1742 = vpop.f32.mrf.mxu0
          %1743 = vdwg.mxu0
          %v1744 = vadd.f32 %v1656, %v1739
          %v1745 = vld [vmem:[%s1578] sm:$0x6]
          %s1746 = scalar_lea.vmem %s1, 544
          %v1747 = vld [vmem:[%s1746] sm:$0xf]
          %v1748 = vld [vmem:[%s1746 + $0x4] sm:$0xf]
          %v1749 = vld [vmem:[%s1746 + $0x8] sm:$0xf]
          %v1750 = vld [vmem:[%s1746 + $0xc] sm:$0xf]
          %v1751 = vld [vmem:[%s1746 + $0x10] sm:$0xf]
          %v1752 = vld [vmem:[%s1746 + $0x14] sm:$0xf]
          %v1753 = vld [vmem:[%s1746 + $0x18] sm:$0xf]
          %v1754 = vld [vmem:[%s1746 + $0x1c] sm:$0xf]
          %v1756 = vunpack.c.l.b16 %v1745
          %v1757 = vpack.c.b16 %v1756, %v1756
          %v1758 = vrot.slane %v1757, 1
          %v1767 = vunpack.c.l.b16 %v1747
          %v1768 = vunpack.c.l.b16 %v1748
          %v1769 = vunpack.c.l.b16 %v1749
          %v1770 = vunpack.c.l.b16 %v1750
          %v1771 = vunpack.c.l.b16 %v1751
          %v1772 = vunpack.c.l.b16 %v1752
          %v1773 = vunpack.c.l.b16 %v1753
          %v1774 = vunpack.c.l.b16 %v1754
          %v1775 = vpack.c.b16 %v1768, %v1767
          %v1776 = vpack.c.b16 %v1770, %v1769
          %v1777 = vpack.c.b16 %v1772, %v1771
          %v1778 = vpack.c.b16 %v1774, %v1773
          %v1784 = vsel %vm1110, %v1758, 0
          %1786 = vmatprep.subr.bf16.mxu0 0
          %1787 = vmatpush1.bf16.msra.mxu0 0
          %1788 = vmatprep.subr.bf16.mxu0 0
          %1789 = vmatpush1.bf16.msra.mxu0 0
          %1790 = vmatprep.subr.bf16.mxu0 0
          %1791 = vmatpush1.bf16.msra.mxu0 0
          %1792 = vmatprep.subr.bf16.mxu0 0
          %1793 = vmatpush1.bf16.msra.mxu0 0
          %1794 = vmatprep.subr.bf16.mxu0 0
          %1795 = vmatpush1.bf16.msra.mxu0 %v1778
          %1796 = vmatprep.subr.bf16.mxu0 0
          %1797 = vmatpush1.bf16.msra.mxu0 %v1777
          %1798 = vmatprep.subr.bf16.mxu0 0
          %1799 = vmatpush1.bf16.msra.mxu0 %v1776
          %1800 = vmatprep.subr.bf16.mxu0 0
          %1801 = vmatpush1.bf16.msra.mxu0 %v1775
          %1802 = vmatprep.subr.bf16.mxu0 0
          %1803 = vmatpush2.bf16.msra.mxu0 0
          %1804 = vmatprep.subr.bf16.mxu0 0
          %1805 = vmatpush2.bf16.msra.mxu0 0
          %1806 = vmatprep.subr.bf16.mxu0 0
          %1807 = vmatpush2.bf16.msra.mxu0 0
          %1808 = vmatprep.subr.bf16.mxu0 0
          %1809 = vmatpush2.bf16.msra.mxu0 0
          %1810 = vmatprep.subr.bf16.mxu0 0
          %1811 = vmatpush2.bf16.msra.mxu0 0
          %1812 = vmatprep.subr.bf16.mxu0 0
          %1813 = vmatpush2.bf16.msra.mxu0 0
          %1814 = vmatprep.subr.bf16.mxu0 0
          %1815 = vmatpush2.bf16.msra.mxu0 0
          %1816 = vmatprep.subr.bf16.mxu0 0
          %1817 = vmatpush2.bf16.msra.mxu0 0
          %1818 = vmatprep.mubr.bf16.mxu0 0
          %1819 = vmatmul.mubr.bf16.gmra.mxu0 %v1784
          %v1820 = vpop.f32.mrf.mxu0
          %v1821 = vadd.f32 0.0, %v1820
          %v1822 = vpop.f32.mrf.mxu0
          %v1823 = vpop.f32.mrf.mxu0
          %v1824 = vpop.f32.mrf.mxu0
          %1825 = vdwg.mxu0
          %v1826 = vadd.f32 %v1744, %v1821
          %v1827 = vmax.f32 %v1826, 0.0
          %v1828 = vpack.c.bf16 %v1827, %v1827
          %s1829 = smul.addr %s1060, 2
          %s1830 = scalar_lea.vmem %s245, %s1829 [#allocation3]
          %vm1831 = vcmask 517120
          %1832 = vst.msk [vmem:[%s1830] sm:$0x3] %vm1831, %v1828
          %v1833 = vld [vmem:[%s3] sm:$0xff]
          %v1834 = vld [vmem:[%s3 + $0x8] sm:$0xff]
          %v1835 = vld [vmem:[%s3 + $0x10] sm:$0xff]
          %v1836 = vld [vmem:[%s3 + $0x18] sm:$0xff]
          %v1837 = vld [vmem:[%s3 + $0x20] sm:$0xff]
          %v1838 = vld [vmem:[%s3 + $0x28] sm:$0xff]
          %v1839 = vld [vmem:[%s3 + $0x30] sm:$0xff]
          %v1840 = vld [vmem:[%s3 + $0x38] sm:$0xff]
          %v1841 = vld [vmem:[%s3 + $0x40] sm:$0xff]
          %v1842 = vld [vmem:[%s3 + $0x48] sm:$0xff]
          %v1843 = vld [vmem:[%s3 + $0x50] sm:$0xff]
          %v1844 = vld [vmem:[%s3 + $0x58] sm:$0xff]
          %v1845 = vld [vmem:[%s3 + $0x60] sm:$0xff]
          %v1846 = vld [vmem:[%s3 + $0x68] sm:$0xff]
          %v1847 = vld [vmem:[%s3 + $0x70] sm:$0xff]
          %v1848 = vld [vmem:[%s3 + $0x78] sm:$0xff]
          %v1849 = vld [vmem:[%s3 + $0x80] sm:$0xff]
          %v1850 = vld [vmem:[%s3 + $0x88] sm:$0xff]
          %v1851 = vld [vmem:[%s3 + $0x90] sm:$0xff]
          %v1852 = vld [vmem:[%s3 + $0x98] sm:$0xff]
          %v1853 = vld [vmem:[%s3 + $0xa0] sm:$0xff]
          %v1854 = vld [vmem:[%s3 + $0xa8] sm:$0xff]
          %v1855 = vld [vmem:[%s3 + $0xb0] sm:$0xff]
          %v1856 = vld [vmem:[%s3 + $0xb8] sm:$0xff]
          %v1857 = vld [vmem:[%s3 + $0xc0] sm:$0xff]
          %v1858 = vld [vmem:[%s3 + $0xc8] sm:$0xff]
          %v1859 = vld [vmem:[%s3 + $0xd0] sm:$0xff]
          %v1860 = vld [vmem:[%s3 + $0xd8] sm:$0xff]
          %v1861 = vld [vmem:[%s3 + $0xe0] sm:$0xff]
          %v1862 = vld [vmem:[%s3 + $0xe8] sm:$0xff]
          %v1863 = vld [vmem:[%s3 + $0xf0] sm:$0xff]
          %v1864 = vld [vmem:[%s3 + $0xf8] sm:$0xff]
          %v1866 = vlaneseq
          %v1867 = vshrl.u32 %v1866, 7
          %v1868 = vsub.s32 0, %v1867
          %v1869 = vrot.slane %v271, %v1868
          %v1870 = vlaneseq
          %v1871 = vshrl.u32 %v1870, 7
          %v1872 = vsub.s32 1, %v1871
          %v1873 = vrot.slane %v271, %v1872
          %v1874 = vlaneseq
          %v1875 = vshrl.u32 %v1874, 7
          %v1876 = vsub.s32 2, %v1875
          %v1877 = vrot.slane %v271, %v1876
          %v1878 = vlaneseq
          %v1879 = vshrl.u32 %v1878, 7
          %v1880 = vsub.s32 3, %v1879
          %v1881 = vrot.slane %v271, %v1880
          %v1882 = vlaneseq
          %v1883 = vshrl.u32 %v1882, 7
          %v1884 = vsub.s32 4, %v1883
          %v1885 = vrot.slane %v271, %v1884
          %v1886 = vlaneseq
          %v1887 = vshrl.u32 %v1886, 7
          %v1888 = vsub.s32 5, %v1887
          %v1889 = vrot.slane %v271, %v1888
          %v1890 = vlaneseq
          %v1891 = vshrl.u32 %v1890, 7
          %v1892 = vsub.s32 6, %v1891
          %v1893 = vrot.slane %v271, %v1892
          %v1894 = vlaneseq
          %v1895 = vshrl.u32 %v1894, 7
          %v1896 = vsub.s32 7, %v1895
          %v1897 = vrot.slane %v271, %v1896
          %v1938 = vunpack.c.l.b16 %v1833
          %v1939 = vunpack.c.h.b16 %v1833
          %v1940 = vunpack.c.l.b16 %v1834
          %v1941 = vunpack.c.h.b16 %v1834
          %v1942 = vunpack.c.l.b16 %v1835
          %v1943 = vunpack.c.h.b16 %v1835
          %v1944 = vunpack.c.l.b16 %v1836
          %v1945 = vunpack.c.h.b16 %v1836
          %v1946 = vunpack.c.l.b16 %v1837
          %v1947 = vunpack.c.h.b16 %v1837
          %v1948 = vunpack.c.l.b16 %v1838
          %v1949 = vunpack.c.h.b16 %v1838
          %v1950 = vunpack.c.l.b16 %v1839
          %v1951 = vunpack.c.h.b16 %v1839
          %v1952 = vunpack.c.l.b16 %v1840
          %v1953 = vunpack.c.h.b16 %v1840
          %v1954 = vunpack.c.l.b16 %v1841
          %v1955 = vunpack.c.h.b16 %v1841
          %v1956 = vunpack.c.l.b16 %v1842
          %v1957 = vunpack.c.h.b16 %v1842
          %v1958 = vunpack.c.l.b16 %v1843
          %v1959 = vunpack.c.h.b16 %v1843
          %v1960 = vunpack.c.l.b16 %v1844
          %v1961 = vunpack.c.h.b16 %v1844
          %v1962 = vunpack.c.l.b16 %v1845
          %v1963 = vunpack.c.h.b16 %v1845
          %v1964 = vunpack.c.l.b16 %v1846
          %v1965 = vunpack.c.h.b16 %v1846
          %v1966 = vunpack.c.l.b16 %v1847
          %v1967 = vunpack.c.h.b16 %v1847
          %v1968 = vunpack.c.l.b16 %v1848
          %v1969 = vunpack.c.h.b16 %v1848
          %v1970 = vunpack.c.l.b16 %v1849
          %v1971 = vunpack.c.h.b16 %v1849
          %v1972 = vunpack.c.l.b16 %v1850
          %v1973 = vunpack.c.h.b16 %v1850
          %v1974 = vunpack.c.l.b16 %v1851
          %v1975 = vunpack.c.h.b16 %v1851
          %v1976 = vunpack.c.l.b16 %v1852
          %v1977 = vunpack.c.h.b16 %v1852
          %v1978 = vunpack.c.l.b16 %v1853
          %v1979 = vunpack.c.h.b16 %v1853
          %v1980 = vunpack.c.l.b16 %v1854
          %v1981 = vunpack.c.h.b16 %v1854
          %v1982 = vunpack.c.l.b16 %v1855
          %v1983 = vunpack.c.h.b16 %v1855
          %v1984 = vunpack.c.l.b16 %v1856
          %v1985 = vunpack.c.h.b16 %v1856
          %v1986 = vunpack.c.l.b16 %v1857
          %v1987 = vunpack.c.h.b16 %v1857
          %v1988 = vunpack.c.l.b16 %v1858
          %v1989 = vunpack.c.h.b16 %v1858
          %v1990 = vunpack.c.l.b16 %v1859
          %v1991 = vunpack.c.h.b16 %v1859
          %v1992 = vunpack.c.l.b16 %v1860
          %v1993 = vunpack.c.h.b16 %v1860
          %v1994 = vunpack.c.l.b16 %v1861
          %v1995 = vunpack.c.h.b16 %v1861
          %v1996 = vunpack.c.l.b16 %v1862
          %v1997 = vunpack.c.h.b16 %v1862
          %v1998 = vunpack.c.l.b16 %v1863
          %v1999 = vunpack.c.h.b16 %v1863
          %v2000 = vunpack.c.l.b16 %v1864
          %v2001 = vunpack.c.h.b16 %v1864
          %v2002 = vpack.c.b16 %v1946, %v1938
          %v2003 = vpack.c.b16 %v1947, %v1939
          %v2004 = vpack.c.b16 %v1948, %v1940
          %v2005 = vpack.c.b16 %v1949, %v1941
          %v2006 = vpack.c.b16 %v1950, %v1942
          %v2007 = vpack.c.b16 %v1951, %v1943
          %v2008 = vpack.c.b16 %v1952, %v1944
          %v2009 = vpack.c.b16 %v1953, %v1945
          %v2010 = vpack.c.b16 %v1962, %v1954
          %v2011 = vpack.c.b16 %v1963, %v1955
          %v2012 = vpack.c.b16 %v1964, %v1956
          %v2013 = vpack.c.b16 %v1965, %v1957
          %v2014 = vpack.c.b16 %v1966, %v1958
          %v2015 = vpack.c.b16 %v1967, %v1959
          %v2016 = vpack.c.b16 %v1968, %v1960
          %v2017 = vpack.c.b16 %v1969, %v1961
          %v2018 = vpack.c.b16 %v1978, %v1970
          %v2019 = vpack.c.b16 %v1979, %v1971
          %v2020 = vpack.c.b16 %v1980, %v1972
          %v2021 = vpack.c.b16 %v1981, %v1973
          %v2022 = vpack.c.b16 %v1982, %v1974
          %v2023 = vpack.c.b16 %v1983, %v1975
          %v2024 = vpack.c.b16 %v1984, %v1976
          %v2025 = vpack.c.b16 %v1985, %v1977
          %v2026 = vpack.c.b16 %v1994, %v1986
          %v2027 = vpack.c.b16 %v1995, %v1987
          %v2028 = vpack.c.b16 %v1996, %v1988
          %v2029 = vpack.c.b16 %v1997, %v1989
          %v2030 = vpack.c.b16 %v1998, %v1990
          %v2031 = vpack.c.b16 %v1999, %v1991
          %v2032 = vpack.c.b16 %v2000, %v1992
          %v2033 = vpack.c.b16 %v2001, %v1993
          %v2067 = vsel %vm1110, %v1828, 0
          %2069 = vmatprep.subr.bf16.mxu0 0
          %2070 = vmatpush1.bf16.msra.mxu0 0
          %2071 = vmatprep.subr.bf16.mxu0 0
          %2072 = vmatpush1.bf16.msra.mxu0 0
          %2073 = vmatprep.subr.bf16.mxu0 0
          %2074 = vmatpush1.bf16.msra.mxu0 0
          %2075 = vmatprep.subr.bf16.mxu0 0
          %2076 = vmatpush1.bf16.msra.mxu0 0
          %2077 = vmatprep.subr.bf16.mxu0 %v2027
          %2078 = vmatpush1.bf16.msra.mxu0 %v2026
          %2079 = vmatprep.subr.bf16.mxu0 %v2019
          %2080 = vmatpush1.bf16.msra.mxu0 %v2018
          %2081 = vmatprep.subr.bf16.mxu0 %v2011
          %2082 = vmatpush1.bf16.msra.mxu0 %v2010
          %2083 = vmatprep.subr.bf16.mxu0 %v2003
          %2084 = vmatpush1.bf16.msra.mxu0 %v2002
          %2085 = vmatprep.subr.bf16.mxu0 0
          %2086 = vmatpush2.bf16.msra.mxu0 0
          %2087 = vmatprep.subr.bf16.mxu0 0
          %2088 = vmatpush2.bf16.msra.mxu0 0
          %2089 = vmatprep.subr.bf16.mxu0 0
          %2090 = vmatpush2.bf16.msra.mxu0 0
          %2091 = vmatprep.subr.bf16.mxu0 0
          %2092 = vmatpush2.bf16.msra.mxu0 0
          %2093 = vmatprep.subr.bf16.mxu0 0
          %2094 = vmatpush2.bf16.msra.mxu0 0
          %2095 = vmatprep.subr.bf16.mxu0 0
          %2096 = vmatpush2.bf16.msra.mxu0 0
          %2097 = vmatprep.subr.bf16.mxu0 0
          %2098 = vmatpush2.bf16.msra.mxu0 0
          %2099 = vmatprep.subr.bf16.mxu0 0
          %2100 = vmatpush2.bf16.msra.mxu0 0
          %2101 = vmatprep.mubr.bf16.mxu0 0
          %2102 = vmatmul.mubr.bf16.gmra.mxu0 %v2067
          %v2103 = vpop.f32.mrf.mxu0
          %v2104 = vadd.f32 %v1869, %v2103
          %v2105 = vpop.f32.mrf.mxu0
          %v2106 = vadd.f32 %v1873, %v2105
          %v2107 = vpop.f32.mrf.mxu0
          %v2108 = vpop.f32.mrf.mxu0
          %2109 = vdwg.mxu0
          %2110 = vmatprep.subr.bf16.mxu0 0
          %2111 = vmatpush1.bf16.msra.mxu0 0
          %2112 = vmatprep.subr.bf16.mxu0 0
          %2113 = vmatpush1.bf16.msra.mxu0 0
          %2114 = vmatprep.subr.bf16.mxu0 0
          %2115 = vmatpush1.bf16.msra.mxu0 0
          %2116 = vmatprep.subr.bf16.mxu0 0
          %2117 = vmatpush1.bf16.msra.mxu0 0
          %2118 = vmatprep.subr.bf16.mxu0 %v2029
          %2119 = vmatpush1.bf16.msra.mxu0 %v2028
          %2120 = vmatprep.subr.bf16.mxu0 %v2021
          %2121 = vmatpush1.bf16.msra.mxu0 %v2020
          %2122 = vmatprep.subr.bf16.mxu0 %v2013
          %2123 = vmatpush1.bf16.msra.mxu0 %v2012
          %2124 = vmatprep.subr.bf16.mxu0 %v2005
          %2125 = vmatpush1.bf16.msra.mxu0 %v2004
          %2126 = vmatprep.subr.bf16.mxu0 0
          %2127 = vmatpush2.bf16.msra.mxu0 0
          %2128 = vmatprep.subr.bf16.mxu0 0
          %2129 = vmatpush2.bf16.msra.mxu0 0
          %2130 = vmatprep.subr.bf16.mxu0 0
          %2131 = vmatpush2.bf16.msra.mxu0 0
          %2132 = vmatprep.subr.bf16.mxu0 0
          %2133 = vmatpush2.bf16.msra.mxu0 0
          %2134 = vmatprep.subr.bf16.mxu0 0
          %2135 = vmatpush2.bf16.msra.mxu0 0
          %2136 = vmatprep.subr.bf16.mxu0 0
          %2137 = vmatpush2.bf16.msra.mxu0 0
          %2138 = vmatprep.subr.bf16.mxu0 0
          %2139 = vmatpush2.bf16.msra.mxu0 0
          %2140 = vmatprep.subr.bf16.mxu0 0
          %2141 = vmatpush2.bf16.msra.mxu0 0
          %2142 = vmatprep.mubr.bf16.mxu0 0
          %2143 = vmatmul.mubr.bf16.gmra.mxu0 %v2067
          %v2144 = vpop.f32.mrf.mxu0
          %v2145 = vadd.f32 %v1877, %v2144
          %v2146 = vpop.f32.mrf.mxu0
          %v2147 = vadd.f32 %v1881, %v2146
          %v2148 = vpop.f32.mrf.mxu0
          %v2149 = vpop.f32.mrf.mxu0
          %2150 = vdwg.mxu0
          %2151 = vmatprep.subr.bf16.mxu0 0
          %2152 = vmatpush1.bf16.msra.mxu0 0
          %2153 = vmatprep.subr.bf16.mxu0 0
          %2154 = vmatpush1.bf16.msra.mxu0 0
          %2155 = vmatprep.subr.bf16.mxu0 0
          %2156 = vmatpush1.bf16.msra.mxu0 0
          %2157 = vmatprep.subr.bf16.mxu0 0
          %2158 = vmatpush1.bf16.msra.mxu0 0
          %2159 = vmatprep.subr.bf16.mxu0 %v2031
          %2160 = vmatpush1.bf16.msra.mxu0 %v2030
          %2161 = vmatprep.subr.bf16.mxu0 %v2023
          %2162 = vmatpush1.bf16.msra.mxu0 %v2022
          %2163 = vmatprep.subr.bf16.mxu0 %v2015
          %2164 = vmatpush1.bf16.msra.mxu0 %v2014
          %2165 = vmatprep.subr.bf16.mxu0 %v2007
          %2166 = vmatpush1.bf16.msra.mxu0 %v2006
          %2167 = vmatprep.subr.bf16.mxu0 0
          %2168 = vmatpush2.bf16.msra.mxu0 0
          %2169 = vmatprep.subr.bf16.mxu0 0
          %2170 = vmatpush2.bf16.msra.mxu0 0
          %2171 = vmatprep.subr.bf16.mxu0 0
          %2172 = vmatpush2.bf16.msra.mxu0 0
          %2173 = vmatprep.subr.bf16.mxu0 0
          %2174 = vmatpush2.bf16.msra.mxu0 0
          %2175 = vmatprep.subr.bf16.mxu0 0
          %2176 = vmatpush2.bf16.msra.mxu0 0
          %2177 = vmatprep.subr.bf16.mxu0 0
          %2178 = vmatpush2.bf16.msra.mxu0 0
          %2179 = vmatprep.subr.bf16.mxu0 0
          %2180 = vmatpush2.bf16.msra.mxu0 0
          %2181 = vmatprep.subr.bf16.mxu0 0
          %2182 = vmatpush2.bf16.msra.mxu0 0
          %2183 = vmatprep.mubr.bf16.mxu0 0
          %2184 = vmatmul.mubr.bf16.gmra.mxu0 %v2067
          %v2185 = vpop.f32.mrf.mxu0
          %v2186 = vadd.f32 %v1885, %v2185
          %v2187 = vpop.f32.mrf.mxu0
          %v2188 = vadd.f32 %v1889, %v2187
          %v2189 = vpop.f32.mrf.mxu0
          %v2190 = vpop.f32.mrf.mxu0
          %2191 = vdwg.mxu0
          %2192 = vmatprep.subr.bf16.mxu0 0
          %2193 = vmatpush1.bf16.msra.mxu0 0
          %2194 = vmatprep.subr.bf16.mxu0 0
          %2195 = vmatpush1.bf16.msra.mxu0 0
          %2196 = vmatprep.subr.bf16.mxu0 0
          %2197 = vmatpush1.bf16.msra.mxu0 0
          %2198 = vmatprep.subr.bf16.mxu0 0
          %2199 = vmatpush1.bf16.msra.mxu0 0
          %2200 = vmatprep.subr.bf16.mxu0 %v2033
          %2201 = vmatpush1.bf16.msra.mxu0 %v2032
          %2202 = vmatprep.subr.bf16.mxu0 %v2025
          %2203 = vmatpush1.bf16.msra.mxu0 %v2024
          %2204 = vmatprep.subr.bf16.mxu0 %v2017
          %2205 = vmatpush1.bf16.msra.mxu0 %v2016
          %2206 = vmatprep.subr.bf16.mxu0 %v2009
          %2207 = vmatpush1.bf16.msra.mxu0 %v2008
          %2208 = vmatprep.subr.bf16.mxu0 0
          %2209 = vmatpush2.bf16.msra.mxu0 0
          %2210 = vmatprep.subr.bf16.mxu0 0
          %2211 = vmatpush2.bf16.msra.mxu0 0
          %2212 = vmatprep.subr.bf16.mxu0 0
          %2213 = vmatpush2.bf16.msra.mxu0 0
          %2214 = vmatprep.subr.bf16.mxu0 0
          %2215 = vmatpush2.bf16.msra.mxu0 0
          %2216 = vmatprep.subr.bf16.mxu0 0
          %2217 = vmatpush2.bf16.msra.mxu0 0
          %2218 = vmatprep.subr.bf16.mxu0 0
          %2219 = vmatpush2.bf16.msra.mxu0 0
          %2220 = vmatprep.subr.bf16.mxu0 0
          %2221 = vmatpush2.bf16.msra.mxu0 0
          %2222 = vmatprep.subr.bf16.mxu0 0
          %2223 = vmatpush2.bf16.msra.mxu0 0
          %2224 = vmatprep.mubr.bf16.mxu0 0
          %2225 = vmatmul.mubr.bf16.gmra.mxu0 %v2067
          %v2226 = vpop.f32.mrf.mxu0
          %v2227 = vadd.f32 %v1893, %v2226
          %v2228 = vpop.f32.mrf.mxu0
          %v2229 = vadd.f32 %v1897, %v2228
          %v2230 = vpop.f32.mrf.mxu0
          %v2231 = vpop.f32.mrf.mxu0
          %2232 = vdwg.mxu0
          %v2233 = vmax.f32 %v2104, 0.0
          %v2234 = vmax.f32 %v2106, 0.0
          %v2235 = vmax.f32 %v2145, 0.0
          %v2236 = vmax.f32 %v2147, 0.0
          %v2237 = vmax.f32 %v2186, 0.0
          %v2238 = vmax.f32 %v2188, 0.0
          %v2239 = vmax.f32 %v2227, 0.0
          %v2240 = vmax.f32 %v2229, 0.0
          %v2241 = vpack.c.bf16 %v2233, %v2233
          %v2242 = vpack.c.bf16 %v2234, %v2234
          %v2243 = vpack.c.bf16 %v2235, %v2235
          %v2244 = vpack.c.bf16 %v2236, %v2236
          %v2245 = vpack.c.bf16 %v2237, %v2237
          %v2246 = vpack.c.bf16 %v2238, %v2238
          %v2247 = vpack.c.bf16 %v2239, %v2239
          %v2248 = vpack.c.bf16 %v2240, %v2240
          %v2257 = vcombine.low %v2241, %v2242
          %v2258 = vcombine.low %v2243, %v2244
          %v2260 = vunpack.c.l.s4 1983009808
          %v2261 = vunpack.c.0.s8 %v2260
          %v2262 = vlaneseq
          %v2263 = vshrl.u32 %v2262, 7
          %v2264 = vsub.s32 %v2261, %v2263
          %v2265 = vrot.slane %v2257, %v2264
          %v2267 = vunpack.c.l.s4 1983009808
          %v2268 = vunpack.c.0.s8 %v2267
          %v2269 = vlaneseq
          %v2270 = vshrl.u32 %v2269, 7
          %v2271 = vsub.s32 %v2268, %v2270
          %v2272 = vrot.slane %v2258, %v2271
          %v2273 = vcombine.low %v2265, %v2272
          %v2274 = vcombine.low %v2245, %v2246
          %v2275 = vcombine.low %v2247, %v2248
          %v2277 = vunpack.c.l.s4 1983009808
          %v2278 = vunpack.c.0.s8 %v2277
          %v2279 = vlaneseq
          %v2280 = vshrl.u32 %v2279, 7
          %v2281 = vsub.s32 %v2278, %v2280
          %v2282 = vrot.slane %v2274, %v2281
          %v2284 = vunpack.c.l.s4 1983009808
          %v2285 = vunpack.c.0.s8 %v2284
          %v2286 = vlaneseq
          %v2287 = vshrl.u32 %v2286, 7
          %v2288 = vsub.s32 %v2285, %v2287
          %v2289 = vrot.slane %v2275, %v2288
          %v2290 = vcombine.low %v2282, %v2289
          %s2293 = smul.u32 %s1060, 8
          %s2294 = smul.addr %s2293, 2
          %s2295 = scalar_lea.vmem %s262, %s2294
          %2296 = vst [vmem:[%s2295] sm:$0xff] %v2273
          %2297 = vst [vmem:[%s2295 + $0x8] sm:$0xff] %v2290
        $region52: #{rpnv2_forward.10} parent=39 // loop_footer
          %s1064 = sadd.s32 1, %s1060
        $region53: #{rpnv2_forward.10} parent=39 // loop_footer_branch
          %1059 = sbr.rel target = $region49
        $region54: #{rpnv2_forward.10} parent=39 // loop_exit
          _
        %s2298 = sand.u32 %s139, 1
        %s2299 = scalar_lea.sflag [#allocation4], %s2298
        %s2300 = sand.u32 %s139, 1
        %s2301 = smul.addr %s2300, 8
        %s2302 = scalar_lea.vmem [#allocation3], %s2301
        %p2303 = scmp.lt.s32.totalorder %s21, 1
        %s2304 = scalar_select %p2303, %s21, 1
        %s2305 = smul.addr %s2304, 32
        %s2306 = smul.addr %s2305, 2
        %s2307 = scalar_lea.vmem %s6, %s2306
        // Predicated region
        $region55: #{rpnv2_forward.10} parent=39 // pred_check
          %p2308 = pneg %p149
        $region56: #{rpnv2_forward.10} parent=39 // pred_check_branch
          %2310 = sbr.rel (%p2308) target = $region58
        $region57: #{rpnv2_forward.10} parent=39 // pred_region
          %s2312 = ssub.s32 128, 128
          %2313 = vsyncadd %s2299, %s2312
          %s2314 = smul.addr %s21, 4
          %s2315 = smul.addr %s2314, 32
          %s2316 = scalar_lea.hbm %s5, %s2315
          %s2317 = sshll.u32 %s2302, 4
          %s2318 = int_to_ptr.vmem [resolvable:$true] %s2317
          %2323 = dma.vmem_to_hbm [thread:$0]  %s2318, 128, %s2316, %s2299, 32, 32, 2
        $region58: #{rpnv2_forward.10} parent=39 // pred_fallthru
          _
        // Predicated region
        $region59: #{rpnv2_forward.10} parent=39 // pred_check
          %p2324 = pneg %p175
        $region60: #{rpnv2_forward.10} parent=39 // pred_check_branch
          %2326 = sbr.rel (%p2324) target = $region62
        $region61: #{rpnv2_forward.10} parent=39 // pred_region
          _
        $region62: #{rpnv2_forward.10} parent=39 // pred_fallthru
          _
      $region40: #{rpnv2_forward.10} parent=5 // pred_fallthru
        _
      %p2327 = scmp.le.s32.totalorder 2, %s16
      // Predicated region
      $region63: #{rpnv2_forward.10} parent=5 // pred_check
        %p2328 = pneg %p2327
      $region64: #{rpnv2_forward.10} parent=5 // pred_check_branch
        %2330 = sbr.rel (%p2328) target = $region66
      $region65: #{rpnv2_forward.10} parent=5 // pred_region
        %s2331 = ssub.s32 %s16, 2
        // Predicated region
        $region67: #{rpnv2_forward.10} parent=65 // pred_check
          %p2332 = pneg %p155
        $region68: #{rpnv2_forward.10} parent=65 // pred_check_branch
          %2334 = sbr.rel (%p2332) target = $region70
        $region69: #{rpnv2_forward.10} parent=65 // pred_region
          %s2335 = sand.u32 %s140, 1
          %s2336 = scalar_lea.sflag [#allocation4], %s2335
          %s2337 = sand.u32 %s140, 1
          %s2338 = smul.addr %s2337, 8
          %s2339 = scalar_lea.vmem [#allocation3], %s2338
          %2340 = dma.done %s2336, 128
        $region70: #{rpnv2_forward.10} parent=65 // pred_fallthru
          _
        // Predicated region
        $region71: #{rpnv2_forward.10} parent=65 // pred_check
          %p2341 = pneg %p181
        $region72: #{rpnv2_forward.10} parent=65 // pred_check_branch
          %2343 = sbr.rel (%p2341) target = $region74
        $region73: #{rpnv2_forward.10} parent=65 // pred_region
          %p2344 = scmp.lt.s32.totalorder %s22, 1
          %s2345 = scalar_select %p2344, %s22, 1
          %s2346 = smul.addr %s2345, 32
          %s2347 = smul.addr %s2346, 2
          %s2348 = scalar_lea.vmem %s6, %s2347
        $region74: #{rpnv2_forward.10} parent=65 // pred_fallthru
          _
      $region66: #{rpnv2_forward.10} parent=5 // pred_fallthru
        _
    $region6: #{rpnv2_forward.10} parent=1 // loop_footer
      %s20 = sadd.s32 1, %s16
    $region7: #{rpnv2_forward.10} parent=1 // loop_footer_branch
      %15 = sbr.rel target = $region3
    $region8: #{rpnv2_forward.10} parent=1 // loop_exit
      _
    %2349 = vsyncpa [#allocation4], 1
    %s2350 = scalar_lea.sflag [#allocation4], 1
    %2351 = vsyncpa %s2350, 1

// kernel: rpnv2_forward.11
$region0: #{rpnv2_forward.11}
  #allocation0 [shape = 'u32[]', space=smem, size = 0x4, offset = 0x4, fixed_abs, tag = 'smem constant byte address 0x4 - core index']
  #allocation1 [shape = 'u32[144,128]{1,0:T(1,128)}', space=vmem, size = 0x12000, scoped, tag = 'internal scratch']
  %s0 = inlined_call_operand.vmem [shape: bf16[512,192], index: 0, kind: input, shape index: {}]
  %s1 = inlined_call_operand.vmem [shape: bf16[192,16], index: 1, kind: input, shape index: {}]
  %s2 = inlined_call_operand.vmem [shape: f32[1,16], index: 2, kind: input, shape index: {}]
  %s3 = inlined_call_operand.vmem [shape: f32[512,16], index: 3, kind: output, shape index: {}]
  %s4 = sld [smem:[#allocation0]]
  $region45: #{rpnv2_forward.11} parent=0
    _
  %s6 = ssub.s32 1, %s4
  %s7 = scalar_select 0, %s6, %s4
  loop: start=0, step=1, limit=4
  $region2: #{rpnv2_forward.11} parent=0 // loop_pre_header
    _
  $region3: #{rpnv2_forward.11} parent=0 // loop_header
    %s9 = sphi 0, %s13
    %p10 = scmp.ge.s32.totalorder %s9, 4
    %s19 = sphi 0, %s21
    %s22 = sphi 0, %s19
    %s23 = sphi 0, %s22
    %s39 = sphi 0, %s23
    %s43 = sphi 0, %s43
    %s45 = sphi 0, %s43
    %s46 = sphi 0, %s45
    %s60 = sphi 0, %s46
    %s64 = sphi 0, %s64
    %s66 = sphi 0, %s64
    %s67 = sphi 0, %s66
    %s81 = sphi 0, %s67
    %s87 = sphi 0, %s89
    %s90 = sphi 0, %s87
    %s91 = sphi 0, %s90
    %s107 = sphi 0, %s91
  $region4: #{rpnv2_forward.11} parent=0 // loop_header_branch
    %12 = sbr.rel (%p10) target = $region8
  $region5: #{rpnv2_forward.11} parent=0 // loop_body
    %s14 = ssub.s32 %s9, 1
    %s15 = ssub.s32 %s9, 2
    %s16 = sadd.s32 %s9, 1
    %s17 = ssub.s32 %s9, %s16
    %p18 = scmp.eq.s32.totalorder %s17, 0
    %s20 = sadd.s32 %s19, 1
    %s21 = scalar_select %p18, %s19, %s20
    %p24 = pneg %p18
    %p25 = scmp.eq.s32.totalorder %s9, 1
    %p26 = por %p24, %p25
    %p27 = scmp.ne.s32.totalorder %s19, %s22
    %p28 = scmp.eq.s32.totalorder %s9, 0
    %p29 = por %p27, %p28
    %p30 = scmp.ne.s32.totalorder %s19, %s22
    %p31 = scmp.eq.s32.totalorder %s14, 1
    %p32 = por %p30, %p31
    %p33 = scmp.ne.s32.totalorder %s22, %s23
    %p34 = scmp.eq.s32.totalorder %s14, 0
    %p35 = por %p33, %p34
    %p36 = scmp.ne.s32.totalorder %s22, %s23
    %p37 = scmp.eq.s32.totalorder %s15, 1
    %p38 = por %p36, %p37
    %p40 = scmp.ne.s32.totalorder %s23, %s39
    %p41 = scmp.eq.s32.totalorder %s15, 0
    %p42 = por %p40, %p41
    %s44 = sadd.s32 %s43, 1
    %p47 = scmp.eq.s32.totalorder %s9, 1
    %p48 = scmp.ne.s32.totalorder %s43, %s45
    %p49 = scmp.eq.s32.totalorder %s9, 0
    %p50 = por %p48, %p49
    %p51 = scmp.ne.s32.totalorder %s43, %s45
    %p52 = scmp.eq.s32.totalorder %s14, 1
    %p53 = por %p51, %p52
    %p54 = scmp.ne.s32.totalorder %s45, %s46
    %p55 = scmp.eq.s32.totalorder %s14, 0
    %p56 = por %p54, %p55
    %p57 = scmp.ne.s32.totalorder %s45, %s46
    %p58 = scmp.eq.s32.totalorder %s15, 1
    %p59 = por %p57, %p58
    %p61 = scmp.ne.s32.totalorder %s46, %s60
    %p62 = scmp.eq.s32.totalorder %s15, 0
    %p63 = por %p61, %p62
    %s65 = sadd.s32 %s64, 1
    %p68 = scmp.eq.s32.totalorder %s9, 1
    %p69 = scmp.ne.s32.totalorder %s64, %s66
    %p70 = scmp.eq.s32.totalorder %s9, 0
    %p71 = por %p69, %p70
    %p72 = scmp.ne.s32.totalorder %s64, %s66
    %p73 = scmp.eq.s32.totalorder %s14, 1
    %p74 = por %p72, %p73
    %p75 = scmp.ne.s32.totalorder %s66, %s67
    %p76 = scmp.eq.s32.totalorder %s14, 0
    %p77 = por %p75, %p76
    %p78 = scmp.ne.s32.totalorder %s66, %s67
    %p79 = scmp.eq.s32.totalorder %s15, 1
    %p80 = por %p78, %p79
    %p82 = scmp.ne.s32.totalorder %s67, %s81
    %p83 = scmp.eq.s32.totalorder %s15, 0
    %p84 = por %p82, %p83
    %s85 = ssub.s32 %s9, %s16
    %p86 = scmp.eq.s32.totalorder %s85, 0
    %s88 = sadd.s32 %s87, 1
    %s89 = scalar_select %p86, %s87, %s88
    %p92 = pneg %p86
    %p93 = scmp.eq.s32.totalorder %s9, 1
    %p94 = por %p92, %p93
    %p95 = scmp.ne.s32.totalorder %s87, %s90
    %p96 = scmp.eq.s32.totalorder %s9, 0
    %p97 = por %p95, %p96
    %p98 = scmp.ne.s32.totalorder %s87, %s90
    %p99 = scmp.eq.s32.totalorder %s14, 1
    %p100 = por %p98, %p99
    %p101 = scmp.ne.s32.totalorder %s90, %s91
    %p102 = scmp.eq.s32.totalorder %s14, 0
    %p103 = por %p101, %p102
    %p104 = scmp.ne.s32.totalorder %s90, %s91
    %p105 = scmp.eq.s32.totalorder %s15, 1
    %p106 = por %p104, %p105
    %p108 = scmp.ne.s32.totalorder %s91, %s107
    %p109 = scmp.eq.s32.totalorder %s15, 0
    %p110 = por %p108, %p109
    %p111 = scmp.le.s32.totalorder 1, %s9
    %p112 = scmp.lt.s32.totalorder %s9, 3
    %p113 = pnand %p111, %p112
    %p114 = pneg %p113
    // Predicated region
    $region9: #{rpnv2_forward.11} parent=5 // pred_check
      _
    $region10: #{rpnv2_forward.11} parent=5 // pred_check_branch
      %116 = sbr.rel (%p113) target = $region12
    $region11: #{rpnv2_forward.11} parent=5 // pred_region
      %s117 = ssub.s32 %s9, 1
      // Predicated region
      $region13: #{rpnv2_forward.11} parent=11 // pred_check
        %p118 = pneg %p56
      $region14: #{rpnv2_forward.11} parent=11 // pred_check_branch
        %120 = sbr.rel (%p118) target = $region16
      $region15: #{rpnv2_forward.11} parent=11 // pred_region
        _
      $region16: #{rpnv2_forward.11} parent=11 // pred_fallthru
        _
      // Predicated region
      $region17: #{rpnv2_forward.11} parent=11 // pred_check
        %p121 = pneg %p77
      $region18: #{rpnv2_forward.11} parent=11 // pred_check_branch
        %123 = sbr.rel (%p121) target = $region20
      $region19: #{rpnv2_forward.11} parent=11 // pred_region
        _
      $region20: #{rpnv2_forward.11} parent=11 // pred_fallthru
        _
    $region12: #{rpnv2_forward.11} parent=5 // pred_fallthru
      _
    %p124 = scmp.lt.s32.totalorder %s9, 2
    // Predicated region
    $region21: #{rpnv2_forward.11} parent=5 // pred_check
      %p125 = pneg %p124
    $region22: #{rpnv2_forward.11} parent=5 // pred_check_branch
      %127 = sbr.rel (%p125) target = $region24
    $region23: #{rpnv2_forward.11} parent=5 // pred_region
      // Predicated region
      $region25: #{rpnv2_forward.11} parent=23 // pred_check
        %p128 = pneg %p29
      $region26: #{rpnv2_forward.11} parent=23 // pred_check_branch
        %130 = sbr.rel (%p128) target = $region28
      $region27: #{rpnv2_forward.11} parent=23 // pred_region
        %s131 = smul.u32 32, %s9
        %p132 = scmp.lt.s32.totalorder %s131, 63
        %s133 = scalar_select %p132, %s131, 63
        %s134 = smul.addr %s133, 2
        %s135 = smul.addr %s134, 4
        %s136 = scalar_lea.vmem %s0, %s135
        %s137 = smul.u32 32, %s9
      $region28: #{rpnv2_forward.11} parent=23 // pred_fallthru
        _
    $region24: #{rpnv2_forward.11} parent=5 // pred_fallthru
      _
    %p138 = scmp.le.s32.totalorder 1, %s9
    %p139 = scmp.lt.s32.totalorder %s9, 3
    %p140 = pnand %p138, %p139
    %p141 = pneg %p140
    // Predicated region
    $region29: #{rpnv2_forward.11} parent=5 // pred_check
      _
    $region30: #{rpnv2_forward.11} parent=5 // pred_check_branch
      %143 = sbr.rel (%p140) target = $region32
    $region31: #{rpnv2_forward.11} parent=5 // pred_region
      %s144 = ssub.s32 %s9, 1
      %s145 = smul.u32 32, %s14
      %p146 = scmp.lt.s32.totalorder %s145, 63
      %s147 = scalar_select %p146, %s145, 63
      %s148 = smul.addr %s147, 2
      %s149 = smul.addr %s148, 4
      %s150 = scalar_lea.vmem %s0, %s149
      %p151 = pneg %p35
      %p152 = pneg %p32
      %p153 = pneg %p56
      %p154 = pneg %p53
      %p155 = pneg %p77
      %p156 = pneg %p74
      %p157 = pneg %p103
      %p158 = pneg %p100
      %s159 = smul.u32 32, %s14
      %p160 = scmp.lt.s32.totalorder %s159, 63
      %s161 = scalar_select %p160, %s159, 63
      %s162 = smul.addr %s161, 8
      %s163 = scalar_lea.vmem %s3, %s162
      %s164 = smul.u32 32, %s14
      %p165 = scmp.lt.s32.totalorder %s164, 63
      %s166 = scalar_select %p165, %s164, 63
      %s167 = smul.addr %s166, 2
      %s168 = smul.addr %s167, 4
      %s169 = scalar_lea.vmem %s0, %s168
      %s170 = smul.u32 32, %s14
      %s171 = smul.u32 32, %s14
      %p172 = scmp.lt.s32.totalorder %s171, 63
      %s173 = scalar_select %p172, %s171, 63
      %s174 = smul.addr %s173, 8
      %s175 = scalar_lea.vmem %s3, %s174
      %s176 = smul.u32 32, %s14
      %v178 = vld [vmem:[%s169] sm:$0xff]
      %v179 = vld [vmem:[%s169 + $0x8] sm:$0xff]
      %v180 = vld [vmem:[%s169 + $0x10] sm:$0xff]
      %v181 = vld [vmem:[%s169 + $0x18] sm:$0xff]
      %v182 = vld [vmem:[%s169 + $0x20] sm:$0xff]
      %v183 = vld [vmem:[%s169 + $0x28] sm:$0xff]
      %v184 = vld [vmem:[%s169 + $0x30] sm:$0xff]
      %v185 = vld [vmem:[%s169 + $0x38] sm:$0xff]
      %v186 = vld [vmem:[%s169 + $0x40] sm:$0xff]
      %v187 = vld [vmem:[%s169 + $0x48] sm:$0xff]
      %v188 = vld [vmem:[%s169 + $0x50] sm:$0xff]
      %v189 = vld [vmem:[%s169 + $0x58] sm:$0xff]
      %v190 = vld [vmem:[%s169 + $0x60] sm:$0xff]
      %v191 = vld [vmem:[%s169 + $0x68] sm:$0xff]
      %v192 = vld [vmem:[%s169 + $0x70] sm:$0xff]
      %v193 = vld [vmem:[%s169 + $0x78] sm:$0xff]
      %v194 = vld [vmem:[%s169 + $0x80] sm:$0xff]
      %v195 = vld [vmem:[%s169 + $0x88] sm:$0xff]
      %v196 = vld [vmem:[%s169 + $0x90] sm:$0xff]
      %v197 = vld [vmem:[%s169 + $0x98] sm:$0xff]
      %v198 = vld [vmem:[%s169 + $0xa0] sm:$0xff]
      %v199 = vld [vmem:[%s169 + $0xa8] sm:$0xff]
      %v200 = vld [vmem:[%s169 + $0xb0] sm:$0xff]
      %v201 = vld [vmem:[%s169 + $0xb8] sm:$0xff]
      %v202 = vld [vmem:[%s169 + $0xc0] sm:$0xff]
      %v203 = vld [vmem:[%s169 + $0xc8] sm:$0xff]
      %v204 = vld [vmem:[%s169 + $0xd0] sm:$0xff]
      %v205 = vld [vmem:[%s169 + $0xd8] sm:$0xff]
      %v206 = vld [vmem:[%s169 + $0xe0] sm:$0xff]
      %v207 = vld [vmem:[%s169 + $0xe8] sm:$0xff]
      %v208 = vld [vmem:[%s169 + $0xf0] sm:$0xff]
      %v209 = vld [vmem:[%s169 + $0xf8] sm:$0xff]
      %v210 = vld [vmem:[%s1] sm:$0xf]
      %v211 = vld [vmem:[%s1 + $0x4] sm:$0xf]
      %v212 = vld [vmem:[%s1 + $0x8] sm:$0xf]
      %v213 = vld [vmem:[%s1 + $0xc] sm:$0xf]
      %v214 = vld [vmem:[%s1 + $0x10] sm:$0xf]
      %v215 = vld [vmem:[%s1 + $0x14] sm:$0xf]
      %v216 = vld [vmem:[%s1 + $0x18] sm:$0xf]
      %v217 = vld [vmem:[%s1 + $0x1c] sm:$0xf]
      %v218 = vld [vmem:[%s1 + $0x20] sm:$0xf]
      %v219 = vld [vmem:[%s1 + $0x24] sm:$0xf]
      %v220 = vld [vmem:[%s1 + $0x28] sm:$0xf]
      %v221 = vld [vmem:[%s1 + $0x2c] sm:$0xf]
      %v222 = vld [vmem:[%s1 + $0x30] sm:$0xf]
      %v223 = vld [vmem:[%s1 + $0x34] sm:$0xf]
      %v224 = vld [vmem:[%s1 + $0x38] sm:$0xf]
      %v225 = vld [vmem:[%s1 + $0x3c] sm:$0xf]
      %v226 = vld [vmem:[%s1 + $0x40] sm:$0xf]
      %v227 = vld [vmem:[%s1 + $0x44] sm:$0xf]
      %v228 = vld [vmem:[%s1 + $0x48] sm:$0xf]
      %v229 = vld [vmem:[%s1 + $0x4c] sm:$0xf]
      %v230 = vld [vmem:[%s1 + $0x50] sm:$0xf]
      %v231 = vld [vmem:[%s1 + $0x54] sm:$0xf]
      %v232 = vld [vmem:[%s1 + $0x58] sm:$0xf]
      %v233 = vld [vmem:[%s1 + $0x5c] sm:$0xf]
      %v234 = vld [vmem:[%s2] sm:$0x1]
      %v236 = vlaneseq
      %v237 = vshrl.u32 %v236, 7
      %v238 = vsub.s32 0, %v237
      %v239 = vrot.slane %v234, %v238
      %v273 = vunpack.c.l.b16 %v178
      %v274 = vunpack.c.h.b16 %v178
      %v275 = vunpack.c.l.b16 %v179
      %v276 = vunpack.c.h.b16 %v179
      %v277 = vunpack.c.l.b16 %v180
      %v278 = vunpack.c.h.b16 %v180
      %v279 = vunpack.c.l.b16 %v181
      %v280 = vunpack.c.h.b16 %v181
      %v281 = vunpack.c.l.b16 %v182
      %v282 = vunpack.c.h.b16 %v182
      %v283 = vunpack.c.l.b16 %v183
      %v284 = vunpack.c.h.b16 %v183
      %v285 = vunpack.c.l.b16 %v184
      %v286 = vunpack.c.h.b16 %v184
      %v287 = vunpack.c.l.b16 %v185
      %v288 = vunpack.c.h.b16 %v185
      %v289 = vunpack.c.l.b16 %v186
      %v290 = vunpack.c.h.b16 %v186
      %v291 = vunpack.c.l.b16 %v187
      %v292 = vunpack.c.h.b16 %v187
      %v293 = vunpack.c.l.b16 %v188
      %v294 = vunpack.c.h.b16 %v188
      %v295 = vunpack.c.l.b16 %v189
      %v296 = vunpack.c.h.b16 %v189
      %v297 = vunpack.c.l.b16 %v190
      %v298 = vunpack.c.h.b16 %v190
      %v299 = vunpack.c.l.b16 %v191
      %v300 = vunpack.c.h.b16 %v191
      %v301 = vunpack.c.l.b16 %v192
      %v302 = vunpack.c.h.b16 %v192
      %v303 = vunpack.c.l.b16 %v193
      %v304 = vunpack.c.h.b16 %v193
      %v305 = vunpack.c.l.b16 %v194
      %v306 = vunpack.c.h.b16 %v194
      %v307 = vunpack.c.l.b16 %v195
      %v308 = vunpack.c.h.b16 %v195
      %v309 = vunpack.c.l.b16 %v196
      %v310 = vunpack.c.h.b16 %v196
      %v311 = vunpack.c.l.b16 %v197
      %v312 = vunpack.c.h.b16 %v197
      %v313 = vunpack.c.l.b16 %v198
      %v314 = vunpack.c.h.b16 %v198
      %v315 = vunpack.c.l.b16 %v199
      %v316 = vunpack.c.h.b16 %v199
      %v317 = vunpack.c.l.b16 %v200
      %v318 = vunpack.c.h.b16 %v200
      %v319 = vunpack.c.l.b16 %v201
      %v320 = vunpack.c.h.b16 %v201
      %v321 = vunpack.c.l.b16 %v202
      %v322 = vunpack.c.h.b16 %v202
      %v323 = vunpack.c.l.b16 %v203
      %v324 = vunpack.c.h.b16 %v203
      %v325 = vunpack.c.l.b16 %v204
      %v326 = vunpack.c.h.b16 %v204
      %v327 = vunpack.c.l.b16 %v205
      %v328 = vunpack.c.h.b16 %v205
      %v329 = vunpack.c.l.b16 %v206
      %v330 = vunpack.c.h.b16 %v206
      %v331 = vunpack.c.l.b16 %v207
      %v332 = vunpack.c.h.b16 %v207
      %v333 = vunpack.c.l.b16 %v208
      %v334 = vunpack.c.h.b16 %v208
      %v335 = vunpack.c.l.b16 %v209
      %v336 = vunpack.c.h.b16 %v209
      %v337 = vpack.c.b16 %v275, %v273
      %v338 = vpack.c.b16 %v276, %v274
      %v339 = vpack.c.b16 %v279, %v277
      %v340 = vpack.c.b16 %v280, %v278
      %v341 = vpack.c.b16 %v283, %v281
      %v342 = vpack.c.b16 %v284, %v282
      %v343 = vpack.c.b16 %v287, %v285
      %v344 = vpack.c.b16 %v288, %v286
      %v345 = vpack.c.b16 %v291, %v289
      %v346 = vpack.c.b16 %v292, %v290
      %v347 = vpack.c.b16 %v295, %v293
      %v348 = vpack.c.b16 %v296, %v294
      %v349 = vpack.c.b16 %v299, %v297
      %v350 = vpack.c.b16 %v300, %v298
      %v351 = vpack.c.b16 %v303, %v301
      %v352 = vpack.c.b16 %v304, %v302
      %v353 = vpack.c.b16 %v307, %v305
      %v354 = vpack.c.b16 %v308, %v306
      %v355 = vpack.c.b16 %v311, %v309
      %v356 = vpack.c.b16 %v312, %v310
      %v357 = vpack.c.b16 %v315, %v313
      %v358 = vpack.c.b16 %v316, %v314
      %v359 = vpack.c.b16 %v319, %v317
      %v360 = vpack.c.b16 %v320, %v318
      %v361 = vpack.c.b16 %v323, %v321
      %v362 = vpack.c.b16 %v324, %v322
      %v363 = vpack.c.b16 %v327, %v325
      %v364 = vpack.c.b16 %v328, %v326
      %v365 = vpack.c.b16 %v331, %v329
      %v366 = vpack.c.b16 %v332, %v330
      %v367 = vpack.c.b16 %v335, %v333
      %v368 = vpack.c.b16 %v336, %v334
      %v409 = vunpack.c.l.b16 %v210
      %v410 = vunpack.c.l.b16 %v211
      %v411 = vunpack.c.l.b16 %v212
      %v412 = vunpack.c.l.b16 %v213
      %v413 = vunpack.c.l.b16 %v214
      %v414 = vunpack.c.l.b16 %v215
      %v415 = vunpack.c.l.b16 %v216
      %v416 = vunpack.c.l.b16 %v217
      %v417 = vunpack.c.l.b16 %v218
      %v418 = vunpack.c.l.b16 %v219
      %v419 = vunpack.c.l.b16 %v220
      %v420 = vunpack.c.l.b16 %v221
      %v421 = vunpack.c.l.b16 %v222
      %v422 = vunpack.c.l.b16 %v223
      %v423 = vunpack.c.l.b16 %v224
      %v424 = vunpack.c.l.b16 %v225
      %v425 = vunpack.c.l.b16 %v226
      %v426 = vunpack.c.l.b16 %v227
      %v427 = vunpack.c.l.b16 %v228
      %v428 = vunpack.c.l.b16 %v229
      %v429 = vunpack.c.l.b16 %v230
      %v430 = vunpack.c.l.b16 %v231
      %v431 = vunpack.c.l.b16 %v232
      %v432 = vunpack.c.l.b16 %v233
      %v433 = vpack.c.b16 %v410, %v409
      %v434 = vpack.c.b16 %v412, %v411
      %v435 = vpack.c.b16 %v414, %v413
      %v436 = vpack.c.b16 %v416, %v415
      %v437 = vpack.c.b16 %v418, %v417
      %v438 = vpack.c.b16 %v420, %v419
      %v439 = vpack.c.b16 %v422, %v421
      %v440 = vpack.c.b16 %v424, %v423
      %v441 = vpack.c.b16 %v426, %v425
      %v442 = vpack.c.b16 %v428, %v427
      %v443 = vpack.c.b16 %v430, %v429
      %v444 = vpack.c.b16 %v432, %v431
      %vm457 = vcmask 523264
      %v459 = vsel %vm457, %v338, 0
      %v462 = vsel %vm457, %v340, 0
      %v465 = vsel %vm457, %v342, 0
      %v468 = vsel %vm457, %v344, 0
      %v471 = vsel %vm457, %v346, 0
      %v474 = vsel %vm457, %v348, 0
      %v477 = vsel %vm457, %v350, 0
      %v480 = vsel %vm457, %v352, 0
      %v483 = vsel %vm457, %v354, 0
      %v486 = vsel %vm457, %v356, 0
      %v489 = vsel %vm457, %v358, 0
      %v492 = vsel %vm457, %v360, 0
      %v495 = vsel %vm457, %v362, 0
      %v498 = vsel %vm457, %v364, 0
      %v501 = vsel %vm457, %v366, 0
      %v504 = vsel %vm457, %v368, 0
      %506 = vmatprep.subr.bf16.mxu0 0
      %507 = vmatpush1.bf16.msra.mxu0 %v440
      %508 = vmatprep.subr.bf16.mxu0 0
      %509 = vmatpush1.bf16.msra.mxu0 %v439
      %510 = vmatprep.subr.bf16.mxu0 0
      %511 = vmatpush1.bf16.msra.mxu0 %v438
      %512 = vmatprep.subr.bf16.mxu0 0
      %513 = vmatpush1.bf16.msra.mxu0 %v437
      %514 = vmatprep.subr.bf16.mxu0 0
      %515 = vmatpush1.bf16.msra.mxu0 %v436
      %516 = vmatprep.subr.bf16.mxu0 0
      %517 = vmatpush1.bf16.msra.mxu0 %v435
      %518 = vmatprep.subr.bf16.mxu0 0
      %519 = vmatpush1.bf16.msra.mxu0 %v434
      %520 = vmatprep.subr.bf16.mxu0 0
      %521 = vmatpush1.bf16.msra.mxu0 %v433
      %522 = vmatprep.subr.bf16.mxu0 0
      %523 = vmatpush2.bf16.msra.mxu0 0
      %524 = vmatprep.subr.bf16.mxu0 0
      %525 = vmatpush2.bf16.msra.mxu0 0
      %526 = vmatprep.subr.bf16.mxu0 0
      %527 = vmatpush2.bf16.msra.mxu0 0
      %528 = vmatprep.subr.bf16.mxu0 0
      %529 = vmatpush2.bf16.msra.mxu0 0
      %530 = vmatprep.subr.bf16.mxu0 0
      %531 = vmatpush2.bf16.msra.mxu0 %v444
      %532 = vmatprep.subr.bf16.mxu0 0
      %533 = vmatpush2.bf16.msra.mxu0 %v443
      %534 = vmatprep.subr.bf16.mxu0 0
      %535 = vmatpush2.bf16.msra.mxu0 %v442
      %536 = vmatprep.subr.bf16.mxu0 0
      %537 = vmatpush2.bf16.msra.mxu0 %v441
      %538 = vmatprep.mubr.bf16.mxu0 %v459
      %539 = vmatmul.mubr.bf16.gmra.mxu0 %v337
      %v540 = vpop.f32.mrf.mxu0
      %v541 = vadd.f32 %v239, %v540
      %v542 = vpop.f32.mrf.mxu0
      %v543 = vpop.f32.mrf.mxu0
      %v544 = vadd.f32 %v239, %v543
      %v545 = vpop.f32.mrf.mxu0
      %546 = vmatprep.mubr.bf16.mxu0 %v462
      %547 = vmatmul.mubr.bf16.gmra.mxu0 %v339
      %v548 = vpop.f32.mrf.mxu0
      %v549 = vadd.f32 %v239, %v548
      %v550 = vpop.f32.mrf.mxu0
      %v551 = vpop.f32.mrf.mxu0
      %v552 = vadd.f32 %v239, %v551
      %v553 = vpop.f32.mrf.mxu0
      %554 = vmatprep.mubr.bf16.mxu0 %v465
      %555 = vmatmul.mubr.bf16.gmra.mxu0 %v341
      %v556 = vpop.f32.mrf.mxu0
      %v557 = vadd.f32 %v239, %v556
      %v558 = vpop.f32.mrf.mxu0
      %v559 = vpop.f32.mrf.mxu0
      %v560 = vadd.f32 %v239, %v559
      %v561 = vpop.f32.mrf.mxu0
      %562 = vmatprep.mubr.bf16.mxu0 %v468
      %563 = vmatmul.mubr.bf16.gmra.mxu0 %v343
      %v564 = vpop.f32.mrf.mxu0
      %v565 = vadd.f32 %v239, %v564
      %v566 = vpop.f32.mrf.mxu0
      %v567 = vpop.f32.mrf.mxu0
      %v568 = vadd.f32 %v239, %v567
      %v569 = vpop.f32.mrf.mxu0
      %570 = vmatprep.mubr.bf16.mxu0 %v471
      %571 = vmatmul.mubr.bf16.gmra.mxu0 %v345
      %v572 = vpop.f32.mrf.mxu0
      %v573 = vadd.f32 %v239, %v572
      %v574 = vpop.f32.mrf.mxu0
      %v575 = vpop.f32.mrf.mxu0
      %v576 = vadd.f32 %v239, %v575
      %v577 = vpop.f32.mrf.mxu0
      %578 = vmatprep.mubr.bf16.mxu0 %v474
      %579 = vmatmul.mubr.bf16.gmra.mxu0 %v347
      %v580 = vpop.f32.mrf.mxu0
      %v581 = vadd.f32 %v239, %v580
      %v582 = vpop.f32.mrf.mxu0
      %v583 = vpop.f32.mrf.mxu0
      %v584 = vadd.f32 %v239, %v583
      %v585 = vpop.f32.mrf.mxu0
      %586 = vmatprep.mubr.bf16.mxu0 %v477
      %587 = vmatmul.mubr.bf16.gmra.mxu0 %v349
      %v588 = vpop.f32.mrf.mxu0
      %v589 = vadd.f32 %v239, %v588
      %v590 = vpop.f32.mrf.mxu0
      %v591 = vpop.f32.mrf.mxu0
      %v592 = vadd.f32 %v239, %v591
      %v593 = vpop.f32.mrf.mxu0
      %594 = vmatprep.mubr.bf16.mxu0 %v480
      %595 = vmatmul.mubr.bf16.gmra.mxu0 %v351
      %v596 = vpop.f32.mrf.mxu0
      %v597 = vadd.f32 %v239, %v596
      %v598 = vpop.f32.mrf.mxu0
      %v599 = vpop.f32.mrf.mxu0
      %v600 = vadd.f32 %v239, %v599
      %v601 = vpop.f32.mrf.mxu0
      %602 = vmatprep.mubr.bf16.mxu0 %v483
      %603 = vmatmul.mubr.bf16.gmra.mxu0 %v353
      %v604 = vpop.f32.mrf.mxu0
      %v605 = vadd.f32 %v239, %v604
      %v606 = vpop.f32.mrf.mxu0
      %v607 = vpop.f32.mrf.mxu0
      %v608 = vadd.f32 %v239, %v607
      %v609 = vpop.f32.mrf.mxu0
      %610 = vmatprep.mubr.bf16.mxu0 %v486
      %611 = vmatmul.mubr.bf16.gmra.mxu0 %v355
      %v612 = vpop.f32.mrf.mxu0
      %v613 = vadd.f32 %v239, %v612
      %v614 = vpop.f32.mrf.mxu0
      %v615 = vpop.f32.mrf.mxu0
      %v616 = vadd.f32 %v239, %v615
      %v617 = vpop.f32.mrf.mxu0
      %618 = vmatprep.mubr.bf16.mxu0 %v489
      %619 = vmatmul.mubr.bf16.gmra.mxu0 %v357
      %v620 = vpop.f32.mrf.mxu0
      %v621 = vadd.f32 %v239, %v620
      %v622 = vpop.f32.mrf.mxu0
      %v623 = vpop.f32.mrf.mxu0
      %v624 = vadd.f32 %v239, %v623
      %v625 = vpop.f32.mrf.mxu0
      %626 = vmatprep.mubr.bf16.mxu0 %v492
      %627 = vmatmul.mubr.bf16.gmra.mxu0 %v359
      %v628 = vpop.f32.mrf.mxu0
      %v629 = vadd.f32 %v239, %v628
      %v630 = vpop.f32.mrf.mxu0
      %v631 = vpop.f32.mrf.mxu0
      %v632 = vadd.f32 %v239, %v631
      %v633 = vpop.f32.mrf.mxu0
      %634 = vmatprep.mubr.bf16.mxu0 %v495
      %635 = vmatmul.mubr.bf16.gmra.mxu0 %v361
      %v636 = vpop.f32.mrf.mxu0
      %v637 = vadd.f32 %v239, %v636
      %v638 = vpop.f32.mrf.mxu0
      %v639 = vpop.f32.mrf.mxu0
      %v640 = vadd.f32 %v239, %v639
      %v641 = vpop.f32.mrf.mxu0
      %642 = vmatprep.mubr.bf16.mxu0 %v498
      %643 = vmatmul.mubr.bf16.gmra.mxu0 %v363
      %v644 = vpop.f32.mrf.mxu0
      %v645 = vadd.f32 %v239, %v644
      %v646 = vpop.f32.mrf.mxu0
      %v647 = vpop.f32.mrf.mxu0
      %v648 = vadd.f32 %v239, %v647
      %v649 = vpop.f32.mrf.mxu0
      %650 = vmatprep.mubr.bf16.mxu0 %v501
      %651 = vmatmul.mubr.bf16.gmra.mxu0 %v365
      %v652 = vpop.f32.mrf.mxu0
      %v653 = vadd.f32 %v239, %v652
      %v654 = vpop.f32.mrf.mxu0
      %v655 = vpop.f32.mrf.mxu0
      %v656 = vadd.f32 %v239, %v655
      %v657 = vpop.f32.mrf.mxu0
      %658 = vmatprep.mubr.bf16.mxu0 %v504
      %659 = vmatmul.mubr.bf16.gmra.mxu0 %v367
      %v660 = vpop.f32.mrf.mxu0
      %v661 = vadd.f32 %v239, %v660
      %v662 = vpop.f32.mrf.mxu0
      %v663 = vpop.f32.mrf.mxu0
      %v664 = vadd.f32 %v239, %v663
      %v665 = vpop.f32.mrf.mxu0
      %666 = vdwg.mxu0
      %vm667 = vcmask 130048
      %668 = vst.msk [vmem:[%s175] sm:$0xff] %vm667, %v541
      %669 = vst.msk [vmem:[%s175 + $0x8] sm:$0xff] %vm667, %v544
      %670 = vst.msk [vmem:[%s175 + $0x10] sm:$0xff] %vm667, %v549
      %671 = vst.msk [vmem:[%s175 + $0x18] sm:$0xff] %vm667, %v552
      %672 = vst.msk [vmem:[%s175 + $0x20] sm:$0xff] %vm667, %v557
      %673 = vst.msk [vmem:[%s175 + $0x28] sm:$0xff] %vm667, %v560
      %674 = vst.msk [vmem:[%s175 + $0x30] sm:$0xff] %vm667, %v565
      %675 = vst.msk [vmem:[%s175 + $0x38] sm:$0xff] %vm667, %v568
      %676 = vst.msk [vmem:[%s175 + $0x40] sm:$0xff] %vm667, %v573
      %677 = vst.msk [vmem:[%s175 + $0x48] sm:$0xff] %vm667, %v576
      %678 = vst.msk [vmem:[%s175 + $0x50] sm:$0xff] %vm667, %v581
      %679 = vst.msk [vmem:[%s175 + $0x58] sm:$0xff] %vm667, %v584
      %680 = vst.msk [vmem:[%s175 + $0x60] sm:$0xff] %vm667, %v589
      %681 = vst.msk [vmem:[%s175 + $0x68] sm:$0xff] %vm667, %v592
      %682 = vst.msk [vmem:[%s175 + $0x70] sm:$0xff] %vm667, %v597
      %683 = vst.msk [vmem:[%s175 + $0x78] sm:$0xff] %vm667, %v600
      %684 = vst.msk [vmem:[%s175 + $0x80] sm:$0xff] %vm667, %v605
      %685 = vst.msk [vmem:[%s175 + $0x88] sm:$0xff] %vm667, %v608
      %686 = vst.msk [vmem:[%s175 + $0x90] sm:$0xff] %vm667, %v613
      %687 = vst.msk [vmem:[%s175 + $0x98] sm:$0xff] %vm667, %v616
      %688 = vst.msk [vmem:[%s175 + $0xa0] sm:$0xff] %vm667, %v621
      %689 = vst.msk [vmem:[%s175 + $0xa8] sm:$0xff] %vm667, %v624
      %690 = vst.msk [vmem:[%s175 + $0xb0] sm:$0xff] %vm667, %v629
      %691 = vst.msk [vmem:[%s175 + $0xb8] sm:$0xff] %vm667, %v632
      %692 = vst.msk [vmem:[%s175 + $0xc0] sm:$0xff] %vm667, %v637
      %693 = vst.msk [vmem:[%s175 + $0xc8] sm:$0xff] %vm667, %v640
      %694 = vst.msk [vmem:[%s175 + $0xd0] sm:$0xff] %vm667, %v645
      %695 = vst.msk [vmem:[%s175 + $0xd8] sm:$0xff] %vm667, %v648
      %696 = vst.msk [vmem:[%s175 + $0xe0] sm:$0xff] %vm667, %v653
      %697 = vst.msk [vmem:[%s175 + $0xe8] sm:$0xff] %vm667, %v656
      %698 = vst.msk [vmem:[%s175 + $0xf0] sm:$0xff] %vm667, %v661
      %699 = vst.msk [vmem:[%s175 + $0xf8] sm:$0xff] %vm667, %v664
      %s700 = smul.u32 32, %s14
      %p701 = scmp.lt.s32.totalorder %s700, 63
      %s702 = scalar_select %p701, %s700, 63
      %s703 = smul.addr %s702, 8
      %s704 = scalar_lea.vmem %s3, %s703
      // Predicated region
      $region33: #{rpnv2_forward.11} parent=31 // pred_check
        %p705 = pneg %p100
      $region34: #{rpnv2_forward.11} parent=31 // pred_check_branch
        %707 = sbr.rel (%p705) target = $region36
      $region35: #{rpnv2_forward.11} parent=31 // pred_region
        %s708 = smul.u32 32, %s14
      $region36: #{rpnv2_forward.11} parent=31 // pred_fallthru
        _
    $region32: #{rpnv2_forward.11} parent=5 // pred_fallthru
      _
    %p709 = scmp.le.s32.totalorder 2, %s9
    // Predicated region
    $region37: #{rpnv2_forward.11} parent=5 // pred_check
      %p710 = pneg %p709
    $region38: #{rpnv2_forward.11} parent=5 // pred_check_branch
      %712 = sbr.rel (%p710) target = $region40
    $region39: #{rpnv2_forward.11} parent=5 // pred_region
      %s713 = ssub.s32 %s9, 2
      // Predicated region
      $region41: #{rpnv2_forward.11} parent=39 // pred_check
        %p714 = pneg %p106
      $region42: #{rpnv2_forward.11} parent=39 // pred_check_branch
        %716 = sbr.rel (%p714) target = $region44
      $region43: #{rpnv2_forward.11} parent=39 // pred_region
        %s717 = smul.u32 32, %s15
        %p718 = scmp.lt.s32.totalorder %s717, 63
        %s719 = scalar_select %p718, %s717, 63
        %s720 = smul.addr %s719, 8
        %s721 = scalar_lea.vmem %s3, %s720
      $region44: #{rpnv2_forward.11} parent=39 // pred_fallthru
        _
    $region40: #{rpnv2_forward.11} parent=5 // pred_fallthru
      _
  $region6: #{rpnv2_forward.11} parent=0 // loop_footer
    %s13 = sadd.s32 1, %s9
  $region7: #{rpnv2_forward.11} parent=0 // loop_footer_branch
    %8 = sbr.rel target = $region3
  $region8: #{rpnv2_forward.11} parent=0 // loop_exit
    _

</llo_original>
